<compile_context>
chip_gen: v5e
topology: v5e:2x2
jax: 0.10.0
libtpu: 0.0.40
codegen_flags: <defaults>
</compile_context>

<pallas_src>
import functools

import jax
import jax.numpy as jnp
from jax.experimental import pallas as pl
from jax.experimental.pallas import tpu as pltpu


# ---------------------------------------------------------------------------
# Fused 3-layer conv stack kernel: (Conv3x3 pad=1 -> BN(eval) -> ReLU) x 3
# ---------------------------------------------------------------------------
def conv_stack_kernel(p1_ref, w1_ref, s1_ref, b1_ref,
                      w2_ref, s2_ref, b2_ref,
                      w3_ref, s3_ref, b3_ref,
                      o_ref, pad_ref, *, H, W):
    # p1_ref : (nblk, H*W, 9*Cin)  bf16  -- layer-1 im2col patches (precomputed)
    # wX_ref : (9*CinX, C)         bf16  -- conv weights in (kh, kw, cin) row order
    # sX/bX  : (1, C)              f32   -- folded BN scale / (conv-bias + BN) shift
    # o_ref  : (nblk, H*W, C)      bf16  -- layer-3 output (NHWC flatten order)
    # pad_ref: (nblk, H+2, W+2, C) bf16  -- VMEM scratch for zero-padded activations
    nblk = p1_ref.shape[0]
    C = w1_ref.shape[1]
    M = nblk * H * W

    def bn_relu(acc_f32, s_ref, b_ref):
        return jnp.maximum(acc_f32 * s_ref[...] + b_ref[...], 0.0)

    # ---- layer 1: single matmul over the precomputed patches (K = 9*Cin) ----
    acc = jnp.dot(p1_ref[...].reshape(M, p1_ref.shape[2]), w1_ref[...],
                  preferred_element_type=jnp.float32)
    y = bn_relu(acc, s1_ref, b1_ref)                        # (M, C) f32

    # ---- layers 2 & 3: in-kernel zero-padding + fused-K (576) im2col matmul ----
    pad_ref[...] = jnp.zeros_like(pad_ref)                  # borders stay zero

    def conv_layer(y_prev, w_ref, s_ref, b_ref):
        pad_ref[:, 1:H + 1, 1:W + 1, :] = (
            y_prev.reshape(nblk, H, W, C).astype(pad_ref.dtype))
        cols = jnp.concatenate(
            [pad_ref[:, kh:kh + H, kw:kw + W, :]
             for kh in range(3) for kw in range(3)], axis=-1)   # (nblk,H,W,9C)
        cols = cols.reshape(M, 9 * C)
        acc = jnp.dot(cols, w_ref[...], preferred_element_type=jnp.float32)
        return bn_relu(acc, s_ref, b_ref)

    y = conv_layer(y, w2_ref, s2_ref, b2_ref)
    y = conv_layer(y, w3_ref, s3_ref, b3_ref)

    # Dropout: identity at inference.
    o_ref[...] = y.reshape(nblk, H * W, C).astype(o_ref.dtype)


def _pick_batch_tile(N, HW, target_rows=512):
    """Largest divisor of N keeping >=2 grid steps (v7x megacore) and a big M."""
    best = None
    for nblk in range(1, N + 1):
        if N % nblk == 0 and N // nblk >= 2 and nblk * HW <= max(target_rows, HW):
            best = nblk
    return best if best is not None else N


def conv_stack(p1, convs, H, W, nblk):
    # p1: (N, H*W, 9*Cin) bf16
    N, HW, K1 = p1.shape
    C = convs[0]["w"].shape[1]
    kernel = functools.partial(conv_stack_kernel, H=H, W=W)
    return pl.pallas_call(
        kernel,
        out_shape=jax.ShapeDtypeStruct((N, H * W, C), jnp.bfloat16),
        grid_spec=pltpu.PrefetchScalarGridSpec(
            num_scalar_prefetch=0,
            grid=(N // nblk,),
            in_specs=[
                pl.BlockSpec((nblk, H * W, K1), lambda n: (n, 0, 0)),
                pl.BlockSpec((K1, C), lambda n: (0, 0)),
                pl.BlockSpec((1, C), lambda n: (0, 0)),
                pl.BlockSpec((1, C), lambda n: (0, 0)),
                pl.BlockSpec((9 * C, C), lambda n: (0, 0)),
                pl.BlockSpec((1, C), lambda n: (0, 0)),
                pl.BlockSpec((1, C), lambda n: (0, 0)),
                pl.BlockSpec((9 * C, C), lambda n: (0, 0)),
                pl.BlockSpec((1, C), lambda n: (0, 0)),
                pl.BlockSpec((1, C), lambda n: (0, 0)),
            ],
            out_specs=pl.BlockSpec((nblk, H * W, C), lambda n: (n, 0, 0)),
            scratch_shapes=[pltpu.VMEM((nblk, H + 2, W + 2, C), jnp.bfloat16)],
        ),
        compiler_params=pltpu.CompilerParams(dimension_semantics=("parallel",)),
    )(p1, convs[0]["w"], convs[0]["scale"], convs[0]["shift"],
      convs[1]["w"], convs[1]["scale"], convs[1]["shift"],
      convs[2]["w"], convs[2]["scale"], convs[2]["shift"])


# ---------------------------------------------------------------------------
# Fused classifier head: Linear -> ReLU -> Linear (dropout = identity)
# ---------------------------------------------------------------------------
def fc_head_kernel(x_ref, w1_ref, b1_ref, w2_ref, b2_ref, o_ref):
    h = jnp.dot(x_ref[...], w1_ref[...], preferred_element_type=jnp.float32)
    h = jnp.maximum(h + b1_ref[...], 0.0)
    logits = jnp.dot(h, w2_ref[...], preferred_element_type=jnp.float32) + b2_ref[...]
    o_ref[...] = logits.astype(o_ref.dtype)


def fc_head(x, fc1_w, fc1_b, fc2_w, fc2_b):
    # x: (N, Fin) bf16, fc1_w: (Fin, Hd) bf16, fc2_w: (Hd, nc) f32 (tiny)
    N, Fin = x.shape
    Hd = fc1_w.shape[1]
    nc = fc2_w.shape[1]
    return pl.pallas_call(
        fc_head_kernel,
        out_shape=jax.ShapeDtypeStruct((N, nc), jnp.float32),
        grid_spec=pltpu.PrefetchScalarGridSpec(
            num_scalar_prefetch=0,
            grid=(1,),
            in_specs=[
                pl.BlockSpec((N, Fin), lambda i: (0, 0)),
                pl.BlockSpec((Fin, Hd), lambda i: (0, 0)),
                pl.BlockSpec((1, Hd), lambda i: (0, 0)),
                pl.BlockSpec((Hd, nc), lambda i: (0, 0)),
                pl.BlockSpec((1, nc), lambda i: (0, 0)),
            ],
            out_specs=pl.BlockSpec((N, nc), lambda i: (0, 0)),
        ),
    )(x, fc1_w, fc1_b, fc2_w, fc2_b)


# ---------------------------------------------------------------------------
# Parameter construction (deterministic, shapes as in VGG('VGG5', ...))
# ---------------------------------------------------------------------------
def make_vgg5_params(key, in_channels, H, W, num_classes):
    cfg5 = [64, 64, 64]
    eps = 1e-5
    params = {"convs": []}
    c_in = in_channels
    for cout in cfg5:
        key, kw_, kb_ = jax.random.split(key, 3)
        fan_out = cout * 3 * 3
        # kaiming_normal_(mode='fan_out', nonlinearity='relu'); PyTorch layout (Cout,Cin,3,3)
        w_pt = jax.random.normal(kw_, (cout, c_in, 3, 3), jnp.float32) * jnp.sqrt(2.0 / fan_out)
        conv_b = jax.random.normal(kb_, (cout,), jnp.float32) * 0.01
        # BatchNorm2d(eval): gamma=1, beta=0, running_mean=0, running_var=1
        gamma = jnp.ones((cout,), jnp.float32)
        beta = jnp.zeros((cout,), jnp.float32)
        mean = jnp.zeros((cout,), jnp.float32)
        var = jnp.ones((cout,), jnp.float32)
        scale = gamma / jnp.sqrt(var + eps)
        shift = beta + (conv_b - mean) * scale           # conv bias folded through BN
        # (Cout,Cin,3,3) -> (kh,kw,Cin,Cout) -> (9*Cin, Cout)  (matches im2col column order)
        w_k = jnp.transpose(w_pt, (2, 3, 1, 0)).reshape(9 * c_in, cout).astype(jnp.bfloat16)
        params["convs"].append(dict(
            w=w_k,
            scale=scale.reshape(1, cout),
            shift=shift.reshape(1, cout),
        ))
        c_in = cout

    key, k1, k2 = jax.random.split(key, 3)
    # fc1: PyTorch Linear(64*H*W, 64); weight logically (out, c, h, w).  Fold the
    # NHWC flatten into the weight by permuting rows to (h, w, c) order.
    fc1_pt = jax.random.normal(k1, (c_in, c_in, H, W), jnp.float32) * 0.02     # (out,c,h,w)
    params["fc1_w"] = (jnp.transpose(fc1_pt, (2, 3, 1, 0))
                       .reshape(H * W * c_in, c_in).astype(jnp.bfloat16))
    params["fc1_b"] = jnp.zeros((1, c_in), jnp.float32)          # nn.init.zeros_
    fc2_pt = jax.random.normal(k2, (num_classes, c_in), jnp.float32) * 0.02    # (out,in)
    params["fc2_w"] = jnp.transpose(fc2_pt, (1, 0))              # tiny; keep f32
    params["fc2_b"] = jnp.zeros((1, num_classes), jnp.float32)   # nn.init.zeros_
    return params


# ---------------------------------------------------------------------------
# Forward pass
# ---------------------------------------------------------------------------
def vgg5_forward(params, x_btchw):
    # x_btchw: (B, T, C, H, W) float32 -- matches the PyTorch module's input
    # (which permutes timesteps to the front and loops over them).  All ops are
    # per-sample in eval mode, so timesteps fold into the batch.
    B, T, C, H, W = x_btchw.shape
    N = B * T
    x = x_btchw.reshape(N, C, H, W)
    x = jnp.transpose(x, (0, 2, 3, 1)).astype(jnp.bfloat16)     # NCHW -> NHWC, bf16

    # Layer-1 im2col on the (tiny) network input, done once in XLA: (N, H*W, 9*C)
    xp = jnp.pad(x, ((0, 0), (1, 1), (1, 1), (0, 0)))
    p1 = jnp.concatenate(
        [xp[:, kh:kh + H, kw:kw + W, :] for kh in range(3) for kw in range(3)],
        axis=-1).reshape(N, H * W, 9 * C)

    nblk = _pick_batch_tile(N, H * W)
    feats = conv_stack(p1, params["convs"], H, W, nblk)         # (N, H*W, 64) bf16
    feats = feats.reshape(N, H * W * feats.shape[-1])           # HWC flatten (folded into fc1_w)

    out = fc_head(feats, params["fc1_w"], params["fc1_b"],
                  params["fc2_w"], params["fc2_b"])             # (N, num_classes) f32

    # mean over timesteps -> (B, num_classes)
    return out.reshape(B, T, -1).mean(axis=1)


if __name__ == "__main__":
    key = jax.random.PRNGKey(0)
    B, T, C, H, W = 2, 2, 3, 8, 8          # args.timesteps = 2, input_shape = 8x8
    num_classes = 10

    kx, kp = jax.random.split(key)
    x = jax.random.normal(kx, (B, T, C, H, W), jnp.float32)
    params = make_vgg5_params(kp, C, H, W, num_classes)

    out = jax.jit(vgg5_forward)(params, x)
    out = jax.block_until_ready(out)
    assert out.shape == (B, num_classes), out.shape
    assert jnp.all(jnp.isfinite(out))
    print("KERNEL_OK")
</pallas_src>

<mosaic_0001>
module attributes {stable_mosaic.version = 11 : i64} {
  func.func @conv_stack_kernel(%arg0: i32, %arg1: memref<2x64x27xbf16, #tpu.memory_space<vmem>>, %arg2: memref<27x64xbf16, #tpu.memory_space<vmem>>, %arg3: memref<1x64xf32, #tpu.memory_space<vmem>>, %arg4: memref<1x64xf32, #tpu.memory_space<vmem>>, %arg5: memref<576x64xbf16, #tpu.memory_space<vmem>>, %arg6: memref<1x64xf32, #tpu.memory_space<vmem>>, %arg7: memref<1x64xf32, #tpu.memory_space<vmem>>, %arg8: memref<576x64xbf16, #tpu.memory_space<vmem>>, %arg9: memref<1x64xf32, #tpu.memory_space<vmem>>, %arg10: memref<1x64xf32, #tpu.memory_space<vmem>>, %arg11: memref<2x64x64xbf16, #tpu.memory_space<vmem>>, %arg12: memref<2x10x10x64xbf16, #tpu.memory_space<vmem>>) attributes {dimension_semantics = [#tpu.dimension_semantics<parallel>], iteration_bounds = array<i64: 2>, scalar_prefetch = 0 : i64, scratch_operands = 1 : i64, tpu.core_type = #tpu.core_type<tc>, window_params = [{transform_indices = @transform_0, window_bounds = array<i64: 2, 64, 27>}, {pipeline_mode = #tpu.pipeline_mode<synchronous>, transform_indices = @transform_1, window_bounds = array<i64: 27, 64>}, {pipeline_mode = #tpu.pipeline_mode<synchronous>, transform_indices = @transform_2, window_bounds = array<i64: 1, 64>}, {pipeline_mode = #tpu.pipeline_mode<synchronous>, transform_indices = @transform_3, window_bounds = array<i64: 1, 64>}, {pipeline_mode = #tpu.pipeline_mode<synchronous>, transform_indices = @transform_4, window_bounds = array<i64: 576, 64>}, {pipeline_mode = #tpu.pipeline_mode<synchronous>, transform_indices = @transform_5, window_bounds = array<i64: 1, 64>}, {pipeline_mode = #tpu.pipeline_mode<synchronous>, transform_indices = @transform_6, window_bounds = array<i64: 1, 64>}, {pipeline_mode = #tpu.pipeline_mode<synchronous>, transform_indices = @transform_7, window_bounds = array<i64: 576, 64>}, {pipeline_mode = #tpu.pipeline_mode<synchronous>, transform_indices = @transform_8, window_bounds = array<i64: 1, 64>}, {pipeline_mode = #tpu.pipeline_mode<synchronous>, transform_indices = @transform_9, window_bounds = array<i64: 1, 64>}, {transform_indices = @transform_10, window_bounds = array<i64: 2, 64, 64>}]} {
    %c0 = arith.constant 0 : index
    %c0_0 = arith.constant 0 : index
    %c0_1 = arith.constant 0 : index
    %0 = vector.load %arg1[%c0, %c0_0, %c0_1] : memref<2x64x27xbf16, #tpu.memory_space<vmem>>, vector<2x64x27xbf16>
    %1 = vector.shape_cast %0 : vector<2x64x27xbf16> to vector<128x27xbf16>
    %c0_2 = arith.constant 0 : index
    %c0_3 = arith.constant 0 : index
    %2 = vector.load %arg2[%c0_2, %c0_3] : memref<27x64xbf16, #tpu.memory_space<vmem>>, vector<27x64xbf16>
    %cst = arith.constant dense<0.000000e+00> : vector<128x64xf32>
    %3 = tpu.matmul %1, %2, %cst {dimension_numbers = #tpu.dot_dimension_numbers<[1], [0], [0], [1], [0, 0, 1, 1], [], []>} : vector<128x27xbf16>, vector<27x64xbf16>, vector<128x64xf32> -> vector<128x64xf32>
    %c0_4 = arith.constant 0 : index
    %c0_5 = arith.constant 0 : index
    %4 = vector.load %arg3[%c0_4, %c0_5] : memref<1x64xf32, #tpu.memory_space<vmem>>, vector<1x64xf32>
    %5 = vector.broadcast %4 : vector<1x64xf32> to vector<128x64xf32>
    %6 = arith.mulf %3, %5 : vector<128x64xf32>
    %c0_6 = arith.constant 0 : index
    %c0_7 = arith.constant 0 : index
    %7 = vector.load %arg4[%c0_6, %c0_7] : memref<1x64xf32, #tpu.memory_space<vmem>>, vector<1x64xf32>
    %8 = vector.broadcast %7 : vector<1x64xf32> to vector<128x64xf32>
    %9 = arith.addf %6, %8 : vector<128x64xf32>
    %cst_8 = arith.constant 0.000000e+00 : f32
    %10 = vector.broadcast %cst_8 : f32 to vector<128x64xf32>
    %11 = arith.maximumf %9, %10 : vector<128x64xf32>
    %cst_9 = arith.constant 0.000000e+00 : bf16
    %12 = vector.broadcast %cst_9 : bf16 to vector<2x10x10x64xbf16>
    %c0_10 = arith.constant 0 : index
    %c0_11 = arith.constant 0 : index
    %c0_12 = arith.constant 0 : index
    %c0_13 = arith.constant 0 : index
    %13 = vector.load %arg12[%c0_10, %c0_11, %c0_12, %c0_13] : memref<2x10x10x64xbf16, #tpu.memory_space<vmem>>, vector<2x10x10x64xbf16>
    tpu.vector_store %arg12[%c0_10, %c0_11, %c0_12, %c0_13], %12 {strides = array<i32>} : memref<2x10x10x64xbf16, #tpu.memory_space<vmem>>, vector<2x10x10x64xbf16>,
    %14 = vector.shape_cast %11 : vector<128x64xf32> to vector<2x8x8x64xf32>
    %15 = arith.truncf %14 : vector<2x8x8x64xf32> to vector<2x8x8x64xbf16>
    %c0_14 = arith.constant 0 : index
    %c1 = arith.constant 1 : index
    %c1_15 = arith.constant 1 : index
    %c0_16 = arith.constant 0 : index
    %16 = vector.load %arg12[%c0_14, %c1, %c1_15, %c0_16] : memref<2x10x10x64xbf16, #tpu.memory_space<vmem>>, vector<2x8x8x64xbf16>
    tpu.vector_store %arg12[%c0_14, %c1, %c1_15, %c0_16], %15 {strides = array<i32>} : memref<2x10x10x64xbf16, #tpu.memory_space<vmem>>, vector<2x8x8x64xbf16>,
    %c0_17 = arith.constant 0 : index
    %c0_18 = arith.constant 0 : index
    %c0_19 = arith.constant 0 : index
    %c0_20 = arith.constant 0 : index
    %17 = vector.load %arg12[%c0_17, %c0_18, %c0_19, %c0_20] : memref<2x10x10x64xbf16, #tpu.memory_space<vmem>>, vector<2x8x8x64xbf16>
    %c0_21 = arith.constant 0 : index
    %c0_22 = arith.constant 0 : index
    %c1_23 = arith.constant 1 : index
    %c0_24 = arith.constant 0 : index
    %18 = vector.load %arg12[%c0_21, %c0_22, %c1_23, %c0_24] : memref<2x10x10x64xbf16, #tpu.memory_space<vmem>>, vector<2x8x8x64xbf16>
    %c0_25 = arith.constant 0 : index
    %c0_26 = arith.constant 0 : index
    %c2 = arith.constant 2 : index
    %c0_27 = arith.constant 0 : index
    %19 = vector.load %arg12[%c0_25, %c0_26, %c2, %c0_27] : memref<2x10x10x64xbf16, #tpu.memory_space<vmem>>, vector<2x8x8x64xbf16>
    %c0_28 = arith.constant 0 : index
    %c1_29 = arith.constant 1 : index
    %c0_30 = arith.constant 0 : index
    %c0_31 = arith.constant 0 : index
    %20 = vector.load %arg12[%c0_28, %c1_29, %c0_30, %c0_31] : memref<2x10x10x64xbf16, #tpu.memory_space<vmem>>, vector<2x8x8x64xbf16>
    %c0_32 = arith.constant 0 : index
    %c1_33 = arith.constant 1 : index
    %c1_34 = arith.constant 1 : index
    %c0_35 = arith.constant 0 : index
    %21 = vector.load %arg12[%c0_32, %c1_33, %c1_34, %c0_35] : memref<2x10x10x64xbf16, #tpu.memory_space<vmem>>, vector<2x8x8x64xbf16>
    %c0_36 = arith.constant 0 : index
    %c1_37 = arith.constant 1 : index
    %c2_38 = arith.constant 2 : index
    %c0_39 = arith.constant 0 : index
    %22 = vector.load %arg12[%c0_36, %c1_37, %c2_38, %c0_39] : memref<2x10x10x64xbf16, #tpu.memory_space<vmem>>, vector<2x8x8x64xbf16>
    %c0_40 = arith.constant 0 : index
    %c2_41 = arith.constant 2 : index
    %c0_42 = arith.constant 0 : index
    %c0_43 = arith.constant 0 : index
    %23 = vector.load %arg12[%c0_40, %c2_41, %c0_42, %c0_43] : memref<2x10x10x64xbf16, #tpu.memory_space<vmem>>, vector<2x8x8x64xbf16>
    %c0_44 = arith.constant 0 : index
    %c2_45 = arith.constant 2 : index
    %c1_46 = arith.constant 1 : index
    %c0_47 = arith.constant 0 : index
    %24 = vector.load %arg12[%c0_44, %c2_45, %c1_46, %c0_47] : memref<2x10x10x64xbf16, #tpu.memory_space<vmem>>, vector<2x8x8x64xbf16>
    %c0_48 = arith.constant 0 : index
    %c2_49 = arith.constant 2 : index
    %c2_50 = arith.constant 2 : index
    %c0_51 = arith.constant 0 : index
    %25 = vector.load %arg12[%c0_48, %c2_49, %c2_50, %c0_51] : memref<2x10x10x64xbf16, #tpu.memory_space<vmem>>, vector<2x8x8x64xbf16>
    %26 = tpu.concatenate %17, %18, %19, %20, %21, %22, %23, %24, %25 in 3 : vector<2x8x8x64xbf16>, vector<2x8x8x64xbf16>, vector<2x8x8x64xbf16>, vector<2x8x8x64xbf16>, vector<2x8x8x64xbf16>, vector<2x8x8x64xbf16>, vector<2x8x8x64xbf16>, vector<2x8x8x64xbf16>, vector<2x8x8x64xbf16> -> vector<2x8x8x576xbf16>
    %27 = vector.shape_cast %26 : vector<2x8x8x576xbf16> to vector<128x576xbf16>
    %c0_52 = arith.constant 0 : index
    %c0_53 = arith.constant 0 : index
    %28 = vector.load %arg5[%c0_52, %c0_53] : memref<576x64xbf16, #tpu.memory_space<vmem>>, vector<576x64xbf16>
    %cst_54 = arith.constant dense<0.000000e+00> : vector<128x64xf32>
    %29 = tpu.matmul %27, %28, %cst_54 {dimension_numbers = #tpu.dot_dimension_numbers<[1], [0], [0], [1], [0, 0, 1, 1], [], []>} : vector<128x576xbf16>, vector<576x64xbf16>, vector<128x64xf32> -> vector<128x64xf32>
    %c0_55 = arith.constant 0 : index
    %c0_56 = arith.constant 0 : index
    %30 = vector.load %arg6[%c0_55, %c0_56] : memref<1x64xf32, #tpu.memory_space<vmem>>, vector<1x64xf32>
    %31 = vector.broadcast %30 : vector<1x64xf32> to vector<128x64xf32>
    %32 = arith.mulf %29, %31 : vector<128x64xf32>
    %c0_57 = arith.constant 0 : index
    %c0_58 = arith.constant 0 : index
    %33 = vector.load %arg7[%c0_57, %c0_58] : memref<1x64xf32, #tpu.memory_space<vmem>>, vector<1x64xf32>
    %34 = vector.broadcast %33 : vector<1x64xf32> to vector<128x64xf32>
    %35 = arith.addf %32, %34 : vector<128x64xf32>
    %cst_59 = arith.constant 0.000000e+00 : f32
    %36 = vector.broadcast %cst_59 : f32 to vector<128x64xf32>
    %37 = arith.maximumf %35, %36 : vector<128x64xf32>
    %38 = vector.shape_cast %37 : vector<128x64xf32> to vector<2x8x8x64xf32>
    %39 = arith.truncf %38 : vector<2x8x8x64xf32> to vector<2x8x8x64xbf16>
    %c0_60 = arith.constant 0 : index
    %c1_61 = arith.constant 1 : index
    %c1_62 = arith.constant 1 : index
    %c0_63 = arith.constant 0 : index
    %40 = vector.load %arg12[%c0_60, %c1_61, %c1_62, %c0_63] : memref<2x10x10x64xbf16, #tpu.memory_space<vmem>>, vector<2x8x8x64xbf16>
    tpu.vector_store %arg12[%c0_60, %c1_61, %c1_62, %c0_63], %39 {strides = array<i32>} : memref<2x10x10x64xbf16, #tpu.memory_space<vmem>>, vector<2x8x8x64xbf16>,
    %c0_64 = arith.constant 0 : index
    %c0_65 = arith.constant 0 : index
    %c0_66 = arith.constant 0 : index
    %c0_67 = arith.constant 0 : index
    %41 = vector.load %arg12[%c0_64, %c0_65, %c0_66, %c0_67] : memref<2x10x10x64xbf16, #tpu.memory_space<vmem>>, vector<2x8x8x64xbf16>
    %c0_68 = arith.constant 0 : index
    %c0_69 = arith.constant 0 : index
    %c1_70 = arith.constant 1 : index
    %c0_71 = arith.constant 0 : index
    %42 = vector.load %arg12[%c0_68, %c0_69, %c1_70, %c0_71] : memref<2x10x10x64xbf16, #tpu.memory_space<vmem>>, vector<2x8x8x64xbf16>
    %c0_72 = arith.constant 0 : index
    %c0_73 = arith.constant 0 : index
    %c2_74 = arith.constant 2 : index
    %c0_75 = arith.constant 0 : index
    %43 = vector.load %arg12[%c0_72, %c0_73, %c2_74, %c0_75] : memref<2x10x10x64xbf16, #tpu.memory_space<vmem>>, vector<2x8x8x64xbf16>
    %c0_76 = arith.constant 0 : index
    %c1_77 = arith.constant 1 : index
    %c0_78 = arith.constant 0 : index
    %c0_79 = arith.constant 0 : index
    %44 = vector.load %arg12[%c0_76, %c1_77, %c0_78, %c0_79] : memref<2x10x10x64xbf16, #tpu.memory_space<vmem>>, vector<2x8x8x64xbf16>
    %c0_80 = arith.constant 0 : index
    %c1_81 = arith.constant 1 : index
    %c1_82 = arith.constant 1 : index
    %c0_83 = arith.constant 0 : index
    %45 = vector.load %arg12[%c0_80, %c1_81, %c1_82, %c0_83] : memref<2x10x10x64xbf16, #tpu.memory_space<vmem>>, vector<2x8x8x64xbf16>
    %c0_84 = arith.constant 0 : index
    %c1_85 = arith.constant 1 : index
    %c2_86 = arith.constant 2 : index
    %c0_87 = arith.constant 0 : index
    %46 = vector.load %arg12[%c0_84, %c1_85, %c2_86, %c0_87] : memref<2x10x10x64xbf16, #tpu.memory_space<vmem>>, vector<2x8x8x64xbf16>
    %c0_88 = arith.constant 0 : index
    %c2_89 = arith.constant 2 : index
    %c0_90 = arith.constant 0 : index
    %c0_91 = arith.constant 0 : index
    %47 = vector.load %arg12[%c0_88, %c2_89, %c0_90, %c0_91] : memref<2x10x10x64xbf16, #tpu.memory_space<vmem>>, vector<2x8x8x64xbf16>
    %c0_92 = arith.constant 0 : index
    %c2_93 = arith.constant 2 : index
    %c1_94 = arith.constant 1 : index
    %c0_95 = arith.constant 0 : index
    %48 = vector.load %arg12[%c0_92, %c2_93, %c1_94, %c0_95] : memref<2x10x10x64xbf16, #tpu.memory_space<vmem>>, vector<2x8x8x64xbf16>
    %c0_96 = arith.constant 0 : index
    %c2_97 = arith.constant 2 : index
    %c2_98 = arith.constant 2 : index
    %c0_99 = arith.constant 0 : index
    %49 = vector.load %arg12[%c0_96, %c2_97, %c2_98, %c0_99] : memref<2x10x10x64xbf16, #tpu.memory_space<vmem>>, vector<2x8x8x64xbf16>
    %50 = tpu.concatenate %41, %42, %43, %44, %45, %46, %47, %48, %49 in 3 : vector<2x8x8x64xbf16>, vector<2x8x8x64xbf16>, vector<2x8x8x64xbf16>, vector<2x8x8x64xbf16>, vector<2x8x8x64xbf16>, vector<2x8x8x64xbf16>, vector<2x8x8x64xbf16>, vector<2x8x8x64xbf16>, vector<2x8x8x64xbf16> -> vector<2x8x8x576xbf16>
    %51 = vector.shape_cast %50 : vector<2x8x8x576xbf16> to vector<128x576xbf16>
    %c0_100 = arith.constant 0 : index
    %c0_101 = arith.constant 0 : index
    %52 = vector.load %arg8[%c0_100, %c0_101] : memref<576x64xbf16, #tpu.memory_space<vmem>>, vector<576x64xbf16>
    %cst_102 = arith.constant dense<0.000000e+00> : vector<128x64xf32>
    %53 = tpu.matmul %51, %52, %cst_102 {dimension_numbers = #tpu.dot_dimension_numbers<[1], [0], [0], [1], [0, 0, 1, 1], [], []>} : vector<128x576xbf16>, vector<576x64xbf16>, vector<128x64xf32> -> vector<128x64xf32>
    %c0_103 = arith.constant 0 : index
    %c0_104 = arith.constant 0 : index
    %54 = vector.load %arg9[%c0_103, %c0_104] : memref<1x64xf32, #tpu.memory_space<vmem>>, vector<1x64xf32>
    %55 = vector.broadcast %54 : vector<1x64xf32> to vector<128x64xf32>
    %56 = arith.mulf %53, %55 : vector<128x64xf32>
    %c0_105 = arith.constant 0 : index
    %c0_106 = arith.constant 0 : index
    %57 = vector.load %arg10[%c0_105, %c0_106] : memref<1x64xf32, #tpu.memory_space<vmem>>, vector<1x64xf32>
    %58 = vector.broadcast %57 : vector<1x64xf32> to vector<128x64xf32>
    %59 = arith.addf %56, %58 : vector<128x64xf32>
    %cst_107 = arith.constant 0.000000e+00 : f32
    %60 = vector.broadcast %cst_107 : f32 to vector<128x64xf32>
    %61 = arith.maximumf %59, %60 : vector<128x64xf32>
    %62 = vector.shape_cast %61 : vector<128x64xf32> to vector<2x64x64xf32>
    %63 = arith.truncf %62 : vector<2x64x64xf32> to vector<2x64x64xbf16>
    %c0_108 = arith.constant 0 : index
    %c0_109 = arith.constant 0 : index
    %c0_110 = arith.constant 0 : index
    %64 = vector.load %arg11[%c0_108, %c0_109, %c0_110] : memref<2x64x64xbf16, #tpu.memory_space<vmem>>, vector<2x64x64xbf16>
    tpu.vector_store %arg11[%c0_108, %c0_109, %c0_110], %63 {strides = array<i32>} : memref<2x64x64xbf16, #tpu.memory_space<vmem>>, vector<2x64x64xbf16>,
    return
  }
  func.func @transform_0(%arg0: i32) -> (i32, i32, i32) {
    %c0_i32 = arith.constant 0 : i32
    %c0_i32_0 = arith.constant 0 : i32
    %c0_i32_1 = arith.constant 0 : i32
    return %arg0, %c0_i32, %c0_i32_0 : i32, i32, i32
  }
  func.func @transform_1(%arg0: i32) -> (i32, i32) {
    %c0_i32 = arith.constant 0 : i32
    %c0_i32_0 = arith.constant 0 : i32
    %c0_i32_1 = arith.constant 0 : i32
    return %c0_i32, %c0_i32_0 : i32, i32
  }
  func.func @transform_2(%arg0: i32) -> (i32, i32) {
    %c0_i32 = arith.constant 0 : i32
    %c0_i32_0 = arith.constant 0 : i32
    %c0_i32_1 = arith.constant 0 : i32
    return %c0_i32, %c0_i32_0 : i32, i32
  }
  func.func @transform_3(%arg0: i32) -> (i32, i32) {
    %c0_i32 = arith.constant 0 : i32
    %c0_i32_0 = arith.constant 0 : i32
    %c0_i32_1 = arith.constant 0 : i32
    return %c0_i32, %c0_i32_0 : i32, i32
  }
  func.func @transform_4(%arg0: i32) -> (i32, i32) {
    %c0_i32 = arith.constant 0 : i32
    %c0_i32_0 = arith.constant 0 : i32
    %c0_i32_1 = arith.constant 0 : i32
    return %c0_i32, %c0_i32_0 : i32, i32
  }
  func.func @transform_5(%arg0: i32) -> (i32, i32) {
    %c0_i32 = arith.constant 0 : i32
    %c0_i32_0 = arith.constant 0 : i32
    %c0_i32_1 = arith.constant 0 : i32
    return %c0_i32, %c0_i32_0 : i32, i32
  }
  func.func @transform_6(%arg0: i32) -> (i32, i32) {
    %c0_i32 = arith.constant 0 : i32
    %c0_i32_0 = arith.constant 0 : i32
    %c0_i32_1 = arith.constant 0 : i32
    return %c0_i32, %c0_i32_0 : i32, i32
  }
  func.func @transform_7(%arg0: i32) -> (i32, i32) {
    %c0_i32 = arith.constant 0 : i32
    %c0_i32_0 = arith.constant 0 : i32
    %c0_i32_1 = arith.constant 0 : i32
    return %c0_i32, %c0_i32_0 : i32, i32
  }
  func.func @transform_8(%arg0: i32) -> (i32, i32) {
    %c0_i32 = arith.constant 0 : i32
    %c0_i32_0 = arith.constant 0 : i32
    %c0_i32_1 = arith.constant 0 : i32
    return %c0_i32, %c0_i32_0 : i32, i32
  }
  func.func @transform_9(%arg0: i32) -> (i32, i32) {
    %c0_i32 = arith.constant 0 : i32
    %c0_i32_0 = arith.constant 0 : i32
    %c0_i32_1 = arith.constant 0 : i32
    return %c0_i32, %c0_i32_0 : i32, i32
  }
  func.func @transform_10(%arg0: i32) -> (i32, i32, i32) {
    %c0_i32 = arith.constant 0 : i32
    %c0_i32_0 = arith.constant 0 : i32
    %c0_i32_1 = arith.constant 0 : i32
    return %arg0, %c0_i32, %c0_i32_0 : i32, i32, i32
  }
}

module attributes {stable_mosaic.version = 11 : i64} {
  func.func @fc_head_kernel(%arg0: i32, %arg1: memref<4x4096xbf16, #tpu.memory_space<vmem>>, %arg2: memref<4096x64xbf16, #tpu.memory_space<vmem>>, %arg3: memref<1x64xf32, #tpu.memory_space<vmem>>, %arg4: memref<64x10xf32, #tpu.memory_space<vmem>>, %arg5: memref<1x10xf32, #tpu.memory_space<vmem>>, %arg6: memref<4x10xf32, #tpu.memory_space<vmem>>) attributes {dimension_semantics = [#tpu.dimension_semantics<arbitrary>], iteration_bounds = array<i64: 1>, scalar_prefetch = 0 : i64, scratch_operands = 0 : i64, tpu.core_type = #tpu.core_type<tc>, window_params = [{pipeline_mode = #tpu.pipeline_mode<synchronous>, transform_indices = @transform_0, window_bounds = array<i64: 4, 4096>}, {pipeline_mode = #tpu.pipeline_mode<synchronous>, transform_indices = @transform_1, window_bounds = array<i64: 4096, 64>}, {pipeline_mode = #tpu.pipeline_mode<synchronous>, transform_indices = @transform_2, window_bounds = array<i64: 1, 64>}, {pipeline_mode = #tpu.pipeline_mode<synchronous>, transform_indices = @transform_3, window_bounds = array<i64: 64, 10>}, {pipeline_mode = #tpu.pipeline_mode<synchronous>, transform_indices = @transform_4, window_bounds = array<i64: 1, 10>}, {pipeline_mode = #tpu.pipeline_mode<synchronous>, transform_indices = @transform_5, window_bounds = array<i64: 4, 10>}]} {
    %c0 = arith.constant 0 : index
    %c0_0 = arith.constant 0 : index
    %0 = vector.load %arg1[%c0, %c0_0] : memref<4x4096xbf16, #tpu.memory_space<vmem>>, vector<4x4096xbf16>
    %c0_1 = arith.constant 0 : index
    %c0_2 = arith.constant 0 : index
    %1 = vector.load %arg2[%c0_1, %c0_2] : memref<4096x64xbf16, #tpu.memory_space<vmem>>, vector<4096x64xbf16>
    %cst = arith.constant dense<0.000000e+00> : vector<4x64xf32>
    %2 = tpu.matmul %0, %1, %cst {dimension_numbers = #tpu.dot_dimension_numbers<[1], [0], [0], [1], [0, 0, 1, 1], [], []>} : vector<4x4096xbf16>, vector<4096x64xbf16>, vector<4x64xf32> -> vector<4x64xf32>
    %c0_3 = arith.constant 0 : index
    %c0_4 = arith.constant 0 : index
    %3 = vector.load %arg3[%c0_3, %c0_4] : memref<1x64xf32, #tpu.memory_space<vmem>>, vector<1x64xf32>
    %4 = vector.broadcast %3 : vector<1x64xf32> to vector<4x64xf32>
    %5 = arith.addf %2, %4 : vector<4x64xf32>
    %cst_5 = arith.constant 0.000000e+00 : f32
    %6 = vector.broadcast %cst_5 : f32 to vector<4x64xf32>
    %7 = arith.maximumf %5, %6 : vector<4x64xf32>
    %c0_6 = arith.constant 0 : index
    %c0_7 = arith.constant 0 : index
    %8 = vector.load %arg4[%c0_6, %c0_7] : memref<64x10xf32, #tpu.memory_space<vmem>>, vector<64x10xf32>
    %cst_8 = arith.constant dense<0.000000e+00> : vector<4x10xf32>
    %9 = tpu.matmul %7, %8, %cst_8 {dimension_numbers = #tpu.dot_dimension_numbers<[1], [0], [0], [1], [0, 0, 1, 1], [], []>} : vector<4x64xf32>, vector<64x10xf32>, vector<4x10xf32> -> vector<4x10xf32>
    %c0_9 = arith.constant 0 : index
    %c0_10 = arith.constant 0 : index
    %10 = vector.load %arg5[%c0_9, %c0_10] : memref<1x10xf32, #tpu.memory_space<vmem>>, vector<1x10xf32>
    %11 = vector.broadcast %10 : vector<1x10xf32> to vector<4x10xf32>
    %12 = arith.addf %9, %11 : vector<4x10xf32>
    %c0_11 = arith.constant 0 : index
    %c0_12 = arith.constant 0 : index
    %13 = vector.load %arg6[%c0_11, %c0_12] : memref<4x10xf32, #tpu.memory_space<vmem>>, vector<4x10xf32>
    tpu.vector_store %arg6[%c0_11, %c0_12], %12 {strides = array<i32>} : memref<4x10xf32, #tpu.memory_space<vmem>>, vector<4x10xf32>,
    return
  }
  func.func @transform_0(%arg0: i32) -> (i32, i32) {
    %c0_i32 = arith.constant 0 : i32
    %c0_i32_0 = arith.constant 0 : i32
    %c0_i32_1 = arith.constant 0 : i32
    return %c0_i32, %c0_i32_0 : i32, i32
  }
  func.func @transform_1(%arg0: i32) -> (i32, i32) {
    %c0_i32 = arith.constant 0 : i32
    %c0_i32_0 = arith.constant 0 : i32
    %c0_i32_1 = arith.constant 0 : i32
    return %c0_i32, %c0_i32_0 : i32, i32
  }
  func.func @transform_2(%arg0: i32) -> (i32, i32) {
    %c0_i32 = arith.constant 0 : i32
    %c0_i32_0 = arith.constant 0 : i32
    %c0_i32_1 = arith.constant 0 : i32
    return %c0_i32, %c0_i32_0 : i32, i32
  }
  func.func @transform_3(%arg0: i32) -> (i32, i32) {
    %c0_i32 = arith.constant 0 : i32
    %c0_i32_0 = arith.constant 0 : i32
    %c0_i32_1 = arith.constant 0 : i32
    return %c0_i32, %c0_i32_0 : i32, i32
  }
  func.func @transform_4(%arg0: i32) -> (i32, i32) {
    %c0_i32 = arith.constant 0 : i32
    %c0_i32_0 = arith.constant 0 : i32
    %c0_i32_1 = arith.constant 0 : i32
    return %c0_i32, %c0_i32_0 : i32, i32
  }
  func.func @transform_5(%arg0: i32) -> (i32, i32) {
    %c0_i32 = arith.constant 0 : i32
    %c0_i32_0 = arith.constant 0 : i32
    %c0_i32_1 = arith.constant 0 : i32
    return %c0_i32, %c0_i32_0 : i32, i32
  }
}

</mosaic_0001>

<llo_original>
// kernel: vgg5_forward.3
$region0: #{vgg5_forward.3}
  #allocation0 [shape = 'u32[]', space=smem, size = 0x4, offset = 0x4, fixed_abs, tag = 'smem constant byte address 0x4 - core index']
  #allocation1 [shape = 'u32[72,128]{1,0:T(1,128)}', space=vmem, size = 0x9000, scoped, tag = 'internal scratch']
  %s0 = inlined_call_operand.vmem [shape: bf16[4,4096], index: 0, kind: input, shape index: {}]
  %s1 = inlined_call_operand.vmem [shape: bf16[4096,64], index: 1, kind: input, shape index: {}]
  %s2 = inlined_call_operand.vmem [shape: f32[1,64], index: 2, kind: input, shape index: {}]
  %s3 = inlined_call_operand.vmem [shape: f32[64,10], index: 3, kind: input, shape index: {}]
  %s4 = inlined_call_operand.vmem [shape: f32[1,10], index: 4, kind: input, shape index: {}]
  %s5 = inlined_call_operand.vmem [shape: f32[4,10], index: 5, kind: output, shape index: {}]
  %s6 = sld [smem:[#allocation0]]
  $region30: #{vgg5_forward.3} parent=0
    _
  %s8 = ssub.s32 1, %s6
  %s9 = scalar_select 0, %s8, %s6
  // Predicated region
  $region2: #{vgg5_forward.3} parent=0 // pred_check
    _
  $region3: #{vgg5_forward.3} parent=0 // pred_check_branch
    %11 = sbr.rel (0) target = $region5
  $region4: #{vgg5_forward.3} parent=0 // pred_region
    _
  $region5: #{vgg5_forward.3} parent=0 // pred_fallthru
    _
  // Predicated region
  $region6: #{vgg5_forward.3} parent=0 // pred_check
    _
  $region7: #{vgg5_forward.3} parent=0 // pred_check_branch
    %13 = sbr.rel (0) target = $region9
  $region8: #{vgg5_forward.3} parent=0 // pred_region
    _
  $region9: #{vgg5_forward.3} parent=0 // pred_fallthru
    _
  // Predicated region
  $region10: #{vgg5_forward.3} parent=0 // pred_check
    _
  $region11: #{vgg5_forward.3} parent=0 // pred_check_branch
    %15 = sbr.rel (0) target = $region13
  $region12: #{vgg5_forward.3} parent=0 // pred_region
    _
  $region13: #{vgg5_forward.3} parent=0 // pred_fallthru
    _
  // Predicated region
  $region14: #{vgg5_forward.3} parent=0 // pred_check
    _
  $region15: #{vgg5_forward.3} parent=0 // pred_check_branch
    %17 = sbr.rel (0) target = $region17
  $region16: #{vgg5_forward.3} parent=0 // pred_region
    _
  $region17: #{vgg5_forward.3} parent=0 // pred_fallthru
    _
  // Predicated region
  $region18: #{vgg5_forward.3} parent=0 // pred_check
    _
  $region19: #{vgg5_forward.3} parent=0 // pred_check_branch
    %19 = sbr.rel (0) target = $region21
  $region20: #{vgg5_forward.3} parent=0 // pred_region
    _
  $region21: #{vgg5_forward.3} parent=0 // pred_fallthru
    _
  %v20 = vld [vmem:[%s0] sm:$0xff]
  %v21 = vld [vmem:[%s0 + $0x8] sm:$0xff]
  %v22 = vld [vmem:[%s0 + $0x10] sm:$0xff]
  %v23 = vld [vmem:[%s0 + $0x18] sm:$0xff]
  %v24 = vld [vmem:[%s0 + $0x20] sm:$0xff]
  %v25 = vld [vmem:[%s0 + $0x28] sm:$0xff]
  %v26 = vld [vmem:[%s0 + $0x30] sm:$0xff]
  %v27 = vld [vmem:[%s0 + $0x38] sm:$0xff]
  %v28 = vld [vmem:[%s1] sm:$0xf]
  %v29 = vld [vmem:[%s1 + $0x4] sm:$0xf]
  %v30 = vld [vmem:[%s1 + $0x8] sm:$0xf]
  %v31 = vld [vmem:[%s1 + $0xc] sm:$0xf]
  %v32 = vld [vmem:[%s1 + $0x10] sm:$0xf]
  %v33 = vld [vmem:[%s1 + $0x14] sm:$0xf]
  %v34 = vld [vmem:[%s1 + $0x18] sm:$0xf]
  %v35 = vld [vmem:[%s1 + $0x1c] sm:$0xf]
  %v36 = vld [vmem:[%s1 + $0x20] sm:$0xf]
  %v37 = vld [vmem:[%s1 + $0x24] sm:$0xf]
  %v38 = vld [vmem:[%s1 + $0x28] sm:$0xf]
  %v39 = vld [vmem:[%s1 + $0x2c] sm:$0xf]
  %v40 = vld [vmem:[%s1 + $0x30] sm:$0xf]
  %v41 = vld [vmem:[%s1 + $0x34] sm:$0xf]
  %v42 = vld [vmem:[%s1 + $0x38] sm:$0xf]
  %v43 = vld [vmem:[%s1 + $0x3c] sm:$0xf]
  %v44 = vld [vmem:[%s1 + $0x40] sm:$0xf]
  %v45 = vld [vmem:[%s1 + $0x44] sm:$0xf]
  %v46 = vld [vmem:[%s1 + $0x48] sm:$0xf]
  %v47 = vld [vmem:[%s1 + $0x4c] sm:$0xf]
  %v48 = vld [vmem:[%s1 + $0x50] sm:$0xf]
  %v49 = vld [vmem:[%s1 + $0x54] sm:$0xf]
  %v50 = vld [vmem:[%s1 + $0x58] sm:$0xf]
  %v51 = vld [vmem:[%s1 + $0x5c] sm:$0xf]
  %v52 = vld [vmem:[%s1 + $0x60] sm:$0xf]
  %v53 = vld [vmem:[%s1 + $0x64] sm:$0xf]
  %v54 = vld [vmem:[%s1 + $0x68] sm:$0xf]
  %v55 = vld [vmem:[%s1 + $0x6c] sm:$0xf]
  %v56 = vld [vmem:[%s1 + $0x70] sm:$0xf]
  %v57 = vld [vmem:[%s1 + $0x74] sm:$0xf]
  %v58 = vld [vmem:[%s1 + $0x78] sm:$0xf]
  %v59 = vld [vmem:[%s1 + $0x7c] sm:$0xf]
  %v60 = vld [vmem:[%s1 + $0x80] sm:$0xf]
  %v61 = vld [vmem:[%s1 + $0x84] sm:$0xf]
  %v62 = vld [vmem:[%s1 + $0x88] sm:$0xf]
  %v63 = vld [vmem:[%s1 + $0x8c] sm:$0xf]
  %v64 = vld [vmem:[%s1 + $0x90] sm:$0xf]
  %v65 = vld [vmem:[%s1 + $0x94] sm:$0xf]
  %v66 = vld [vmem:[%s1 + $0x98] sm:$0xf]
  %v67 = vld [vmem:[%s1 + $0x9c] sm:$0xf]
  %v68 = vld [vmem:[%s1 + $0xa0] sm:$0xf]
  %v69 = vld [vmem:[%s1 + $0xa4] sm:$0xf]
  %v70 = vld [vmem:[%s1 + $0xa8] sm:$0xf]
  %v71 = vld [vmem:[%s1 + $0xac] sm:$0xf]
  %v72 = vld [vmem:[%s1 + $0xb0] sm:$0xf]
  %v73 = vld [vmem:[%s1 + $0xb4] sm:$0xf]
  %v74 = vld [vmem:[%s1 + $0xb8] sm:$0xf]
  %v75 = vld [vmem:[%s1 + $0xbc] sm:$0xf]
  %v76 = vld [vmem:[%s1 + $0xc0] sm:$0xf]
  %v77 = vld [vmem:[%s1 + $0xc4] sm:$0xf]
  %v78 = vld [vmem:[%s1 + $0xc8] sm:$0xf]
  %v79 = vld [vmem:[%s1 + $0xcc] sm:$0xf]
  %v80 = vld [vmem:[%s1 + $0xd0] sm:$0xf]
  %v81 = vld [vmem:[%s1 + $0xd4] sm:$0xf]
  %v82 = vld [vmem:[%s1 + $0xd8] sm:$0xf]
  %v83 = vld [vmem:[%s1 + $0xdc] sm:$0xf]
  %v84 = vld [vmem:[%s1 + $0xe0] sm:$0xf]
  %v85 = vld [vmem:[%s1 + $0xe4] sm:$0xf]
  %v86 = vld [vmem:[%s1 + $0xe8] sm:$0xf]
  %v87 = vld [vmem:[%s1 + $0xec] sm:$0xf]
  %v88 = vld [vmem:[%s1 + $0xf0] sm:$0xf]
  %v89 = vld [vmem:[%s1 + $0xf4] sm:$0xf]
  %v90 = vld [vmem:[%s1 + $0xf8] sm:$0xf]
  %v91 = vld [vmem:[%s1 + $0xfc] sm:$0xf]
  %v92 = vld [vmem:[%s1 + $0x100] sm:$0xf]
  %v93 = vld [vmem:[%s1 + $0x104] sm:$0xf]
  %v94 = vld [vmem:[%s1 + $0x108] sm:$0xf]
  %v95 = vld [vmem:[%s1 + $0x10c] sm:$0xf]
  %v96 = vld [vmem:[%s1 + $0x110] sm:$0xf]
  %v97 = vld [vmem:[%s1 + $0x114] sm:$0xf]
  %v98 = vld [vmem:[%s1 + $0x118] sm:$0xf]
  %v99 = vld [vmem:[%s1 + $0x11c] sm:$0xf]
  %v100 = vld [vmem:[%s1 + $0x120] sm:$0xf]
  %v101 = vld [vmem:[%s1 + $0x124] sm:$0xf]
  %v102 = vld [vmem:[%s1 + $0x128] sm:$0xf]
  %v103 = vld [vmem:[%s1 + $0x12c] sm:$0xf]
  %v104 = vld [vmem:[%s1 + $0x130] sm:$0xf]
  %v105 = vld [vmem:[%s1 + $0x134] sm:$0xf]
  %v106 = vld [vmem:[%s1 + $0x138] sm:$0xf]
  %v107 = vld [vmem:[%s1 + $0x13c] sm:$0xf]
  %v108 = vld [vmem:[%s1 + $0x140] sm:$0xf]
  %v109 = vld [vmem:[%s1 + $0x144] sm:$0xf]
  %v110 = vld [vmem:[%s1 + $0x148] sm:$0xf]
  %v111 = vld [vmem:[%s1 + $0x14c] sm:$0xf]
  %v112 = vld [vmem:[%s1 + $0x150] sm:$0xf]
  %v113 = vld [vmem:[%s1 + $0x154] sm:$0xf]
  %v114 = vld [vmem:[%s1 + $0x158] sm:$0xf]
  %v115 = vld [vmem:[%s1 + $0x15c] sm:$0xf]
  %v116 = vld [vmem:[%s1 + $0x160] sm:$0xf]
  %v117 = vld [vmem:[%s1 + $0x164] sm:$0xf]
  %v118 = vld [vmem:[%s1 + $0x168] sm:$0xf]
  %v119 = vld [vmem:[%s1 + $0x16c] sm:$0xf]
  %v120 = vld [vmem:[%s1 + $0x170] sm:$0xf]
  %v121 = vld [vmem:[%s1 + $0x174] sm:$0xf]
  %v122 = vld [vmem:[%s1 + $0x178] sm:$0xf]
  %v123 = vld [vmem:[%s1 + $0x17c] sm:$0xf]
  %v124 = vld [vmem:[%s1 + $0x180] sm:$0xf]
  %v125 = vld [vmem:[%s1 + $0x184] sm:$0xf]
  %v126 = vld [vmem:[%s1 + $0x188] sm:$0xf]
  %v127 = vld [vmem:[%s1 + $0x18c] sm:$0xf]
  %v128 = vld [vmem:[%s1 + $0x190] sm:$0xf]
  %v129 = vld [vmem:[%s1 + $0x194] sm:$0xf]
  %v130 = vld [vmem:[%s1 + $0x198] sm:$0xf]
  %v131 = vld [vmem:[%s1 + $0x19c] sm:$0xf]
  %v132 = vld [vmem:[%s1 + $0x1a0] sm:$0xf]
  %v133 = vld [vmem:[%s1 + $0x1a4] sm:$0xf]
  %v134 = vld [vmem:[%s1 + $0x1a8] sm:$0xf]
  %v135 = vld [vmem:[%s1 + $0x1ac] sm:$0xf]
  %v136 = vld [vmem:[%s1 + $0x1b0] sm:$0xf]
  %v137 = vld [vmem:[%s1 + $0x1b4] sm:$0xf]
  %v138 = vld [vmem:[%s1 + $0x1b8] sm:$0xf]
  %v139 = vld [vmem:[%s1 + $0x1bc] sm:$0xf]
  %v140 = vld [vmem:[%s1 + $0x1c0] sm:$0xf]
  %v141 = vld [vmem:[%s1 + $0x1c4] sm:$0xf]
  %v142 = vld [vmem:[%s1 + $0x1c8] sm:$0xf]
  %v143 = vld [vmem:[%s1 + $0x1cc] sm:$0xf]
  %v144 = vld [vmem:[%s1 + $0x1d0] sm:$0xf]
  %v145 = vld [vmem:[%s1 + $0x1d4] sm:$0xf]
  %v146 = vld [vmem:[%s1 + $0x1d8] sm:$0xf]
  %v147 = vld [vmem:[%s1 + $0x1dc] sm:$0xf]
  %v148 = vld [vmem:[%s1 + $0x1e0] sm:$0xf]
  %v149 = vld [vmem:[%s1 + $0x1e4] sm:$0xf]
  %v150 = vld [vmem:[%s1 + $0x1e8] sm:$0xf]
  %v151 = vld [vmem:[%s1 + $0x1ec] sm:$0xf]
  %v152 = vld [vmem:[%s1 + $0x1f0] sm:$0xf]
  %v153 = vld [vmem:[%s1 + $0x1f4] sm:$0xf]
  %v154 = vld [vmem:[%s1 + $0x1f8] sm:$0xf]
  %v155 = vld [vmem:[%s1 + $0x1fc] sm:$0xf]
  %v156 = vld [vmem:[%s1 + $0x200] sm:$0xf]
  %v157 = vld [vmem:[%s1 + $0x204] sm:$0xf]
  %v158 = vld [vmem:[%s1 + $0x208] sm:$0xf]
  %v159 = vld [vmem:[%s1 + $0x20c] sm:$0xf]
  %v160 = vld [vmem:[%s1 + $0x210] sm:$0xf]
  %v161 = vld [vmem:[%s1 + $0x214] sm:$0xf]
  %v162 = vld [vmem:[%s1 + $0x218] sm:$0xf]
  %v163 = vld [vmem:[%s1 + $0x21c] sm:$0xf]
  %v164 = vld [vmem:[%s1 + $0x220] sm:$0xf]
  %v165 = vld [vmem:[%s1 + $0x224] sm:$0xf]
  %v166 = vld [vmem:[%s1 + $0x228] sm:$0xf]
  %v167 = vld [vmem:[%s1 + $0x22c] sm:$0xf]
  %v168 = vld [vmem:[%s1 + $0x230] sm:$0xf]
  %v169 = vld [vmem:[%s1 + $0x234] sm:$0xf]
  %v170 = vld [vmem:[%s1 + $0x238] sm:$0xf]
  %v171 = vld [vmem:[%s1 + $0x23c] sm:$0xf]
  %v172 = vld [vmem:[%s1 + $0x240] sm:$0xf]
  %v173 = vld [vmem:[%s1 + $0x244] sm:$0xf]
  %v174 = vld [vmem:[%s1 + $0x248] sm:$0xf]
  %v175 = vld [vmem:[%s1 + $0x24c] sm:$0xf]
  %v176 = vld [vmem:[%s1 + $0x250] sm:$0xf]
  %v177 = vld [vmem:[%s1 + $0x254] sm:$0xf]
  %v178 = vld [vmem:[%s1 + $0x258] sm:$0xf]
  %v179 = vld [vmem:[%s1 + $0x25c] sm:$0xf]
  %v180 = vld [vmem:[%s1 + $0x260] sm:$0xf]
  %v181 = vld [vmem:[%s1 + $0x264] sm:$0xf]
  %v182 = vld [vmem:[%s1 + $0x268] sm:$0xf]
  %v183 = vld [vmem:[%s1 + $0x26c] sm:$0xf]
  %v184 = vld [vmem:[%s1 + $0x270] sm:$0xf]
  %v185 = vld [vmem:[%s1 + $0x274] sm:$0xf]
  %v186 = vld [vmem:[%s1 + $0x278] sm:$0xf]
  %v187 = vld [vmem:[%s1 + $0x27c] sm:$0xf]
  %v188 = vld [vmem:[%s1 + $0x280] sm:$0xf]
  %v189 = vld [vmem:[%s1 + $0x284] sm:$0xf]
  %v190 = vld [vmem:[%s1 + $0x288] sm:$0xf]
  %v191 = vld [vmem:[%s1 + $0x28c] sm:$0xf]
  %v192 = vld [vmem:[%s1 + $0x290] sm:$0xf]
  %v193 = vld [vmem:[%s1 + $0x294] sm:$0xf]
  %v194 = vld [vmem:[%s1 + $0x298] sm:$0xf]
  %v195 = vld [vmem:[%s1 + $0x29c] sm:$0xf]
  %v196 = vld [vmem:[%s1 + $0x2a0] sm:$0xf]
  %v197 = vld [vmem:[%s1 + $0x2a4] sm:$0xf]
  %v198 = vld [vmem:[%s1 + $0x2a8] sm:$0xf]
  %v199 = vld [vmem:[%s1 + $0x2ac] sm:$0xf]
  %v200 = vld [vmem:[%s1 + $0x2b0] sm:$0xf]
  %v201 = vld [vmem:[%s1 + $0x2b4] sm:$0xf]
  %v202 = vld [vmem:[%s1 + $0x2b8] sm:$0xf]
  %v203 = vld [vmem:[%s1 + $0x2bc] sm:$0xf]
  %v204 = vld [vmem:[%s1 + $0x2c0] sm:$0xf]
  %v205 = vld [vmem:[%s1 + $0x2c4] sm:$0xf]
  %v206 = vld [vmem:[%s1 + $0x2c8] sm:$0xf]
  %v207 = vld [vmem:[%s1 + $0x2cc] sm:$0xf]
  %v208 = vld [vmem:[%s1 + $0x2d0] sm:$0xf]
  %v209 = vld [vmem:[%s1 + $0x2d4] sm:$0xf]
  %v210 = vld [vmem:[%s1 + $0x2d8] sm:$0xf]
  %v211 = vld [vmem:[%s1 + $0x2dc] sm:$0xf]
  %v212 = vld [vmem:[%s1 + $0x2e0] sm:$0xf]
  %v213 = vld [vmem:[%s1 + $0x2e4] sm:$0xf]
  %v214 = vld [vmem:[%s1 + $0x2e8] sm:$0xf]
  %v215 = vld [vmem:[%s1 + $0x2ec] sm:$0xf]
  %v216 = vld [vmem:[%s1 + $0x2f0] sm:$0xf]
  %v217 = vld [vmem:[%s1 + $0x2f4] sm:$0xf]
  %v218 = vld [vmem:[%s1 + $0x2f8] sm:$0xf]
  %v219 = vld [vmem:[%s1 + $0x2fc] sm:$0xf]
  %v220 = vld [vmem:[%s1 + $0x300] sm:$0xf]
  %v221 = vld [vmem:[%s1 + $0x304] sm:$0xf]
  %v222 = vld [vmem:[%s1 + $0x308] sm:$0xf]
  %v223 = vld [vmem:[%s1 + $0x30c] sm:$0xf]
  %v224 = vld [vmem:[%s1 + $0x310] sm:$0xf]
  %v225 = vld [vmem:[%s1 + $0x314] sm:$0xf]
  %v226 = vld [vmem:[%s1 + $0x318] sm:$0xf]
  %v227 = vld [vmem:[%s1 + $0x31c] sm:$0xf]
  %v228 = vld [vmem:[%s1 + $0x320] sm:$0xf]
  %v229 = vld [vmem:[%s1 + $0x324] sm:$0xf]
  %v230 = vld [vmem:[%s1 + $0x328] sm:$0xf]
  %v231 = vld [vmem:[%s1 + $0x32c] sm:$0xf]
  %v232 = vld [vmem:[%s1 + $0x330] sm:$0xf]
  %v233 = vld [vmem:[%s1 + $0x334] sm:$0xf]
  %v234 = vld [vmem:[%s1 + $0x338] sm:$0xf]
  %v235 = vld [vmem:[%s1 + $0x33c] sm:$0xf]
  %v236 = vld [vmem:[%s1 + $0x340] sm:$0xf]
  %v237 = vld [vmem:[%s1 + $0x344] sm:$0xf]
  %v238 = vld [vmem:[%s1 + $0x348] sm:$0xf]
  %v239 = vld [vmem:[%s1 + $0x34c] sm:$0xf]
  %v240 = vld [vmem:[%s1 + $0x350] sm:$0xf]
  %v241 = vld [vmem:[%s1 + $0x354] sm:$0xf]
  %v242 = vld [vmem:[%s1 + $0x358] sm:$0xf]
  %v243 = vld [vmem:[%s1 + $0x35c] sm:$0xf]
  %v244 = vld [vmem:[%s1 + $0x360] sm:$0xf]
  %v245 = vld [vmem:[%s1 + $0x364] sm:$0xf]
  %v246 = vld [vmem:[%s1 + $0x368] sm:$0xf]
  %v247 = vld [vmem:[%s1 + $0x36c] sm:$0xf]
  %v248 = vld [vmem:[%s1 + $0x370] sm:$0xf]
  %v249 = vld [vmem:[%s1 + $0x374] sm:$0xf]
  %v250 = vld [vmem:[%s1 + $0x378] sm:$0xf]
  %v251 = vld [vmem:[%s1 + $0x37c] sm:$0xf]
  %v252 = vld [vmem:[%s1 + $0x380] sm:$0xf]
  %v253 = vld [vmem:[%s1 + $0x384] sm:$0xf]
  %v254 = vld [vmem:[%s1 + $0x388] sm:$0xf]
  %v255 = vld [vmem:[%s1 + $0x38c] sm:$0xf]
  %v256 = vld [vmem:[%s1 + $0x390] sm:$0xf]
  %v257 = vld [vmem:[%s1 + $0x394] sm:$0xf]
  %v258 = vld [vmem:[%s1 + $0x398] sm:$0xf]
  %v259 = vld [vmem:[%s1 + $0x39c] sm:$0xf]
  %v260 = vld [vmem:[%s1 + $0x3a0] sm:$0xf]
  %v261 = vld [vmem:[%s1 + $0x3a4] sm:$0xf]
  %v262 = vld [vmem:[%s1 + $0x3a8] sm:$0xf]
  %v263 = vld [vmem:[%s1 + $0x3ac] sm:$0xf]
  %v264 = vld [vmem:[%s1 + $0x3b0] sm:$0xf]
  %v265 = vld [vmem:[%s1 + $0x3b4] sm:$0xf]
  %v266 = vld [vmem:[%s1 + $0x3b8] sm:$0xf]
  %v267 = vld [vmem:[%s1 + $0x3bc] sm:$0xf]
  %v268 = vld [vmem:[%s1 + $0x3c0] sm:$0xf]
  %v269 = vld [vmem:[%s1 + $0x3c4] sm:$0xf]
  %v270 = vld [vmem:[%s1 + $0x3c8] sm:$0xf]
  %v271 = vld [vmem:[%s1 + $0x3cc] sm:$0xf]
  %v272 = vld [vmem:[%s1 + $0x3d0] sm:$0xf]
  %v273 = vld [vmem:[%s1 + $0x3d4] sm:$0xf]
  %v274 = vld [vmem:[%s1 + $0x3d8] sm:$0xf]
  %v275 = vld [vmem:[%s1 + $0x3dc] sm:$0xf]
  %v276 = vld [vmem:[%s1 + $0x3e0] sm:$0xf]
  %v277 = vld [vmem:[%s1 + $0x3e4] sm:$0xf]
  %v278 = vld [vmem:[%s1 + $0x3e8] sm:$0xf]
  %v279 = vld [vmem:[%s1 + $0x3ec] sm:$0xf]
  %v280 = vld [vmem:[%s1 + $0x3f0] sm:$0xf]
  %v281 = vld [vmem:[%s1 + $0x3f4] sm:$0xf]
  %v282 = vld [vmem:[%s1 + $0x3f8] sm:$0xf]
  %v283 = vld [vmem:[%s1 + $0x3fc] sm:$0xf]
  %v284 = vld [vmem:[%s1 + $0x400] sm:$0xf]
  %v285 = vld [vmem:[%s1 + $0x404] sm:$0xf]
  %v286 = vld [vmem:[%s1 + $0x408] sm:$0xf]
  %v287 = vld [vmem:[%s1 + $0x40c] sm:$0xf]
  %v288 = vld [vmem:[%s1 + $0x410] sm:$0xf]
  %v289 = vld [vmem:[%s1 + $0x414] sm:$0xf]
  %v290 = vld [vmem:[%s1 + $0x418] sm:$0xf]
  %v291 = vld [vmem:[%s1 + $0x41c] sm:$0xf]
  %v292 = vld [vmem:[%s1 + $0x420] sm:$0xf]
  %v293 = vld [vmem:[%s1 + $0x424] sm:$0xf]
  %v294 = vld [vmem:[%s1 + $0x428] sm:$0xf]
  %v295 = vld [vmem:[%s1 + $0x42c] sm:$0xf]
  %v296 = vld [vmem:[%s1 + $0x430] sm:$0xf]
  %v297 = vld [vmem:[%s1 + $0x434] sm:$0xf]
  %v298 = vld [vmem:[%s1 + $0x438] sm:$0xf]
  %v299 = vld [vmem:[%s1 + $0x43c] sm:$0xf]
  %v300 = vld [vmem:[%s1 + $0x440] sm:$0xf]
  %v301 = vld [vmem:[%s1 + $0x444] sm:$0xf]
  %v302 = vld [vmem:[%s1 + $0x448] sm:$0xf]
  %v303 = vld [vmem:[%s1 + $0x44c] sm:$0xf]
  %v304 = vld [vmem:[%s1 + $0x450] sm:$0xf]
  %v305 = vld [vmem:[%s1 + $0x454] sm:$0xf]
  %v306 = vld [vmem:[%s1 + $0x458] sm:$0xf]
  %v307 = vld [vmem:[%s1 + $0x45c] sm:$0xf]
  %v308 = vld [vmem:[%s1 + $0x460] sm:$0xf]
  %v309 = vld [vmem:[%s1 + $0x464] sm:$0xf]
  %v310 = vld [vmem:[%s1 + $0x468] sm:$0xf]
  %v311 = vld [vmem:[%s1 + $0x46c] sm:$0xf]
  %v312 = vld [vmem:[%s1 + $0x470] sm:$0xf]
  %v313 = vld [vmem:[%s1 + $0x474] sm:$0xf]
  %v314 = vld [vmem:[%s1 + $0x478] sm:$0xf]
  %v315 = vld [vmem:[%s1 + $0x47c] sm:$0xf]
  %v316 = vld [vmem:[%s1 + $0x480] sm:$0xf]
  %v317 = vld [vmem:[%s1 + $0x484] sm:$0xf]
  %v318 = vld [vmem:[%s1 + $0x488] sm:$0xf]
  %v319 = vld [vmem:[%s1 + $0x48c] sm:$0xf]
  %v320 = vld [vmem:[%s1 + $0x490] sm:$0xf]
  %v321 = vld [vmem:[%s1 + $0x494] sm:$0xf]
  %v322 = vld [vmem:[%s1 + $0x498] sm:$0xf]
  %v323 = vld [vmem:[%s1 + $0x49c] sm:$0xf]
  %v324 = vld [vmem:[%s1 + $0x4a0] sm:$0xf]
  %v325 = vld [vmem:[%s1 + $0x4a4] sm:$0xf]
  %v326 = vld [vmem:[%s1 + $0x4a8] sm:$0xf]
  %v327 = vld [vmem:[%s1 + $0x4ac] sm:$0xf]
  %v328 = vld [vmem:[%s1 + $0x4b0] sm:$0xf]
  %v329 = vld [vmem:[%s1 + $0x4b4] sm:$0xf]
  %v330 = vld [vmem:[%s1 + $0x4b8] sm:$0xf]
  %v331 = vld [vmem:[%s1 + $0x4bc] sm:$0xf]
  %v332 = vld [vmem:[%s1 + $0x4c0] sm:$0xf]
  %v333 = vld [vmem:[%s1 + $0x4c4] sm:$0xf]
  %v334 = vld [vmem:[%s1 + $0x4c8] sm:$0xf]
  %v335 = vld [vmem:[%s1 + $0x4cc] sm:$0xf]
  %v336 = vld [vmem:[%s1 + $0x4d0] sm:$0xf]
  %v337 = vld [vmem:[%s1 + $0x4d4] sm:$0xf]
  %v338 = vld [vmem:[%s1 + $0x4d8] sm:$0xf]
  %v339 = vld [vmem:[%s1 + $0x4dc] sm:$0xf]
  %v340 = vld [vmem:[%s1 + $0x4e0] sm:$0xf]
  %v341 = vld [vmem:[%s1 + $0x4e4] sm:$0xf]
  %v342 = vld [vmem:[%s1 + $0x4e8] sm:$0xf]
  %v343 = vld [vmem:[%s1 + $0x4ec] sm:$0xf]
  %v344 = vld [vmem:[%s1 + $0x4f0] sm:$0xf]
  %v345 = vld [vmem:[%s1 + $0x4f4] sm:$0xf]
  %v346 = vld [vmem:[%s1 + $0x4f8] sm:$0xf]
  %v347 = vld [vmem:[%s1 + $0x4fc] sm:$0xf]
  %v348 = vld [vmem:[%s1 + $0x500] sm:$0xf]
  %v349 = vld [vmem:[%s1 + $0x504] sm:$0xf]
  %v350 = vld [vmem:[%s1 + $0x508] sm:$0xf]
  %v351 = vld [vmem:[%s1 + $0x50c] sm:$0xf]
  %v352 = vld [vmem:[%s1 + $0x510] sm:$0xf]
  %v353 = vld [vmem:[%s1 + $0x514] sm:$0xf]
  %v354 = vld [vmem:[%s1 + $0x518] sm:$0xf]
  %v355 = vld [vmem:[%s1 + $0x51c] sm:$0xf]
  %v356 = vld [vmem:[%s1 + $0x520] sm:$0xf]
  %v357 = vld [vmem:[%s1 + $0x524] sm:$0xf]
  %v358 = vld [vmem:[%s1 + $0x528] sm:$0xf]
  %v359 = vld [vmem:[%s1 + $0x52c] sm:$0xf]
  %v360 = vld [vmem:[%s1 + $0x530] sm:$0xf]
  %v361 = vld [vmem:[%s1 + $0x534] sm:$0xf]
  %v362 = vld [vmem:[%s1 + $0x538] sm:$0xf]
  %v363 = vld [vmem:[%s1 + $0x53c] sm:$0xf]
  %v364 = vld [vmem:[%s1 + $0x540] sm:$0xf]
  %v365 = vld [vmem:[%s1 + $0x544] sm:$0xf]
  %v366 = vld [vmem:[%s1 + $0x548] sm:$0xf]
  %v367 = vld [vmem:[%s1 + $0x54c] sm:$0xf]
  %v368 = vld [vmem:[%s1 + $0x550] sm:$0xf]
  %v369 = vld [vmem:[%s1 + $0x554] sm:$0xf]
  %v370 = vld [vmem:[%s1 + $0x558] sm:$0xf]
  %v371 = vld [vmem:[%s1 + $0x55c] sm:$0xf]
  %v372 = vld [vmem:[%s1 + $0x560] sm:$0xf]
  %v373 = vld [vmem:[%s1 + $0x564] sm:$0xf]
  %v374 = vld [vmem:[%s1 + $0x568] sm:$0xf]
  %v375 = vld [vmem:[%s1 + $0x56c] sm:$0xf]
  %v376 = vld [vmem:[%s1 + $0x570] sm:$0xf]
  %v377 = vld [vmem:[%s1 + $0x574] sm:$0xf]
  %v378 = vld [vmem:[%s1 + $0x578] sm:$0xf]
  %v379 = vld [vmem:[%s1 + $0x57c] sm:$0xf]
  %v380 = vld [vmem:[%s1 + $0x580] sm:$0xf]
  %v381 = vld [vmem:[%s1 + $0x584] sm:$0xf]
  %v382 = vld [vmem:[%s1 + $0x588] sm:$0xf]
  %v383 = vld [vmem:[%s1 + $0x58c] sm:$0xf]
  %v384 = vld [vmem:[%s1 + $0x590] sm:$0xf]
  %v385 = vld [vmem:[%s1 + $0x594] sm:$0xf]
  %v386 = vld [vmem:[%s1 + $0x598] sm:$0xf]
  %v387 = vld [vmem:[%s1 + $0x59c] sm:$0xf]
  %v388 = vld [vmem:[%s1 + $0x5a0] sm:$0xf]
  %v389 = vld [vmem:[%s1 + $0x5a4] sm:$0xf]
  %v390 = vld [vmem:[%s1 + $0x5a8] sm:$0xf]
  %v391 = vld [vmem:[%s1 + $0x5ac] sm:$0xf]
  %v392 = vld [vmem:[%s1 + $0x5b0] sm:$0xf]
  %v393 = vld [vmem:[%s1 + $0x5b4] sm:$0xf]
  %v394 = vld [vmem:[%s1 + $0x5b8] sm:$0xf]
  %v395 = vld [vmem:[%s1 + $0x5bc] sm:$0xf]
  %v396 = vld [vmem:[%s1 + $0x5c0] sm:$0xf]
  %v397 = vld [vmem:[%s1 + $0x5c4] sm:$0xf]
  %v398 = vld [vmem:[%s1 + $0x5c8] sm:$0xf]
  %v399 = vld [vmem:[%s1 + $0x5cc] sm:$0xf]
  %v400 = vld [vmem:[%s1 + $0x5d0] sm:$0xf]
  %v401 = vld [vmem:[%s1 + $0x5d4] sm:$0xf]
  %v402 = vld [vmem:[%s1 + $0x5d8] sm:$0xf]
  %v403 = vld [vmem:[%s1 + $0x5dc] sm:$0xf]
  %v404 = vld [vmem:[%s1 + $0x5e0] sm:$0xf]
  %v405 = vld [vmem:[%s1 + $0x5e4] sm:$0xf]
  %v406 = vld [vmem:[%s1 + $0x5e8] sm:$0xf]
  %v407 = vld [vmem:[%s1 + $0x5ec] sm:$0xf]
  %v408 = vld [vmem:[%s1 + $0x5f0] sm:$0xf]
  %v409 = vld [vmem:[%s1 + $0x5f4] sm:$0xf]
  %v410 = vld [vmem:[%s1 + $0x5f8] sm:$0xf]
  %v411 = vld [vmem:[%s1 + $0x5fc] sm:$0xf]
  %v412 = vld [vmem:[%s1 + $0x600] sm:$0xf]
  %v413 = vld [vmem:[%s1 + $0x604] sm:$0xf]
  %v414 = vld [vmem:[%s1 + $0x608] sm:$0xf]
  %v415 = vld [vmem:[%s1 + $0x60c] sm:$0xf]
  %v416 = vld [vmem:[%s1 + $0x610] sm:$0xf]
  %v417 = vld [vmem:[%s1 + $0x614] sm:$0xf]
  %v418 = vld [vmem:[%s1 + $0x618] sm:$0xf]
  %v419 = vld [vmem:[%s1 + $0x61c] sm:$0xf]
  %v420 = vld [vmem:[%s1 + $0x620] sm:$0xf]
  %v421 = vld [vmem:[%s1 + $0x624] sm:$0xf]
  %v422 = vld [vmem:[%s1 + $0x628] sm:$0xf]
  %v423 = vld [vmem:[%s1 + $0x62c] sm:$0xf]
  %v424 = vld [vmem:[%s1 + $0x630] sm:$0xf]
  %v425 = vld [vmem:[%s1 + $0x634] sm:$0xf]
  %v426 = vld [vmem:[%s1 + $0x638] sm:$0xf]
  %v427 = vld [vmem:[%s1 + $0x63c] sm:$0xf]
  %v428 = vld [vmem:[%s1 + $0x640] sm:$0xf]
  %v429 = vld [vmem:[%s1 + $0x644] sm:$0xf]
  %v430 = vld [vmem:[%s1 + $0x648] sm:$0xf]
  %v431 = vld [vmem:[%s1 + $0x64c] sm:$0xf]
  %v432 = vld [vmem:[%s1 + $0x650] sm:$0xf]
  %v433 = vld [vmem:[%s1 + $0x654] sm:$0xf]
  %v434 = vld [vmem:[%s1 + $0x658] sm:$0xf]
  %v435 = vld [vmem:[%s1 + $0x65c] sm:$0xf]
  %v436 = vld [vmem:[%s1 + $0x660] sm:$0xf]
  %v437 = vld [vmem:[%s1 + $0x664] sm:$0xf]
  %v438 = vld [vmem:[%s1 + $0x668] sm:$0xf]
  %v439 = vld [vmem:[%s1 + $0x66c] sm:$0xf]
  %v440 = vld [vmem:[%s1 + $0x670] sm:$0xf]
  %v441 = vld [vmem:[%s1 + $0x674] sm:$0xf]
  %v442 = vld [vmem:[%s1 + $0x678] sm:$0xf]
  %v443 = vld [vmem:[%s1 + $0x67c] sm:$0xf]
  %v444 = vld [vmem:[%s1 + $0x680] sm:$0xf]
  %v445 = vld [vmem:[%s1 + $0x684] sm:$0xf]
  %v446 = vld [vmem:[%s1 + $0x688] sm:$0xf]
  %v447 = vld [vmem:[%s1 + $0x68c] sm:$0xf]
  %v448 = vld [vmem:[%s1 + $0x690] sm:$0xf]
  %v449 = vld [vmem:[%s1 + $0x694] sm:$0xf]
  %v450 = vld [vmem:[%s1 + $0x698] sm:$0xf]
  %v451 = vld [vmem:[%s1 + $0x69c] sm:$0xf]
  %v452 = vld [vmem:[%s1 + $0x6a0] sm:$0xf]
  %v453 = vld [vmem:[%s1 + $0x6a4] sm:$0xf]
  %v454 = vld [vmem:[%s1 + $0x6a8] sm:$0xf]
  %v455 = vld [vmem:[%s1 + $0x6ac] sm:$0xf]
  %v456 = vld [vmem:[%s1 + $0x6b0] sm:$0xf]
  %v457 = vld [vmem:[%s1 + $0x6b4] sm:$0xf]
  %v458 = vld [vmem:[%s1 + $0x6b8] sm:$0xf]
  %v459 = vld [vmem:[%s1 + $0x6bc] sm:$0xf]
  %v460 = vld [vmem:[%s1 + $0x6c0] sm:$0xf]
  %v461 = vld [vmem:[%s1 + $0x6c4] sm:$0xf]
  %v462 = vld [vmem:[%s1 + $0x6c8] sm:$0xf]
  %v463 = vld [vmem:[%s1 + $0x6cc] sm:$0xf]
  %v464 = vld [vmem:[%s1 + $0x6d0] sm:$0xf]
  %v465 = vld [vmem:[%s1 + $0x6d4] sm:$0xf]
  %v466 = vld [vmem:[%s1 + $0x6d8] sm:$0xf]
  %v467 = vld [vmem:[%s1 + $0x6dc] sm:$0xf]
  %v468 = vld [vmem:[%s1 + $0x6e0] sm:$0xf]
  %v469 = vld [vmem:[%s1 + $0x6e4] sm:$0xf]
  %v470 = vld [vmem:[%s1 + $0x6e8] sm:$0xf]
  %v471 = vld [vmem:[%s1 + $0x6ec] sm:$0xf]
  %v472 = vld [vmem:[%s1 + $0x6f0] sm:$0xf]
  %v473 = vld [vmem:[%s1 + $0x6f4] sm:$0xf]
  %v474 = vld [vmem:[%s1 + $0x6f8] sm:$0xf]
  %v475 = vld [vmem:[%s1 + $0x6fc] sm:$0xf]
  %v476 = vld [vmem:[%s1 + $0x700] sm:$0xf]
  %v477 = vld [vmem:[%s1 + $0x704] sm:$0xf]
  %v478 = vld [vmem:[%s1 + $0x708] sm:$0xf]
  %v479 = vld [vmem:[%s1 + $0x70c] sm:$0xf]
  %v480 = vld [vmem:[%s1 + $0x710] sm:$0xf]
  %v481 = vld [vmem:[%s1 + $0x714] sm:$0xf]
  %v482 = vld [vmem:[%s1 + $0x718] sm:$0xf]
  %v483 = vld [vmem:[%s1 + $0x71c] sm:$0xf]
  %v484 = vld [vmem:[%s1 + $0x720] sm:$0xf]
  %v485 = vld [vmem:[%s1 + $0x724] sm:$0xf]
  %v486 = vld [vmem:[%s1 + $0x728] sm:$0xf]
  %v487 = vld [vmem:[%s1 + $0x72c] sm:$0xf]
  %v488 = vld [vmem:[%s1 + $0x730] sm:$0xf]
  %v489 = vld [vmem:[%s1 + $0x734] sm:$0xf]
  %v490 = vld [vmem:[%s1 + $0x738] sm:$0xf]
  %v491 = vld [vmem:[%s1 + $0x73c] sm:$0xf]
  %v492 = vld [vmem:[%s1 + $0x740] sm:$0xf]
  %v493 = vld [vmem:[%s1 + $0x744] sm:$0xf]
  %v494 = vld [vmem:[%s1 + $0x748] sm:$0xf]
  %v495 = vld [vmem:[%s1 + $0x74c] sm:$0xf]
  %v496 = vld [vmem:[%s1 + $0x750] sm:$0xf]
  %v497 = vld [vmem:[%s1 + $0x754] sm:$0xf]
  %v498 = vld [vmem:[%s1 + $0x758] sm:$0xf]
  %v499 = vld [vmem:[%s1 + $0x75c] sm:$0xf]
  %v500 = vld [vmem:[%s1 + $0x760] sm:$0xf]
  %v501 = vld [vmem:[%s1 + $0x764] sm:$0xf]
  %v502 = vld [vmem:[%s1 + $0x768] sm:$0xf]
  %v503 = vld [vmem:[%s1 + $0x76c] sm:$0xf]
  %v504 = vld [vmem:[%s1 + $0x770] sm:$0xf]
  %v505 = vld [vmem:[%s1 + $0x774] sm:$0xf]
  %v506 = vld [vmem:[%s1 + $0x778] sm:$0xf]
  %v507 = vld [vmem:[%s1 + $0x77c] sm:$0xf]
  %v508 = vld [vmem:[%s1 + $0x780] sm:$0xf]
  %v509 = vld [vmem:[%s1 + $0x784] sm:$0xf]
  %v510 = vld [vmem:[%s1 + $0x788] sm:$0xf]
  %v511 = vld [vmem:[%s1 + $0x78c] sm:$0xf]
  %v512 = vld [vmem:[%s1 + $0x790] sm:$0xf]
  %v513 = vld [vmem:[%s1 + $0x794] sm:$0xf]
  %v514 = vld [vmem:[%s1 + $0x798] sm:$0xf]
  %v515 = vld [vmem:[%s1 + $0x79c] sm:$0xf]
  %v516 = vld [vmem:[%s1 + $0x7a0] sm:$0xf]
  %v517 = vld [vmem:[%s1 + $0x7a4] sm:$0xf]
  %v518 = vld [vmem:[%s1 + $0x7a8] sm:$0xf]
  %v519 = vld [vmem:[%s1 + $0x7ac] sm:$0xf]
  %v520 = vld [vmem:[%s1 + $0x7b0] sm:$0xf]
  %v521 = vld [vmem:[%s1 + $0x7b4] sm:$0xf]
  %v522 = vld [vmem:[%s1 + $0x7b8] sm:$0xf]
  %v523 = vld [vmem:[%s1 + $0x7bc] sm:$0xf]
  %v524 = vld [vmem:[%s1 + $0x7c0] sm:$0xf]
  %v525 = vld [vmem:[%s1 + $0x7c4] sm:$0xf]
  %v526 = vld [vmem:[%s1 + $0x7c8] sm:$0xf]
  %v527 = vld [vmem:[%s1 + $0x7cc] sm:$0xf]
  %v528 = vld [vmem:[%s1 + $0x7d0] sm:$0xf]
  %v529 = vld [vmem:[%s1 + $0x7d4] sm:$0xf]
  %v530 = vld [vmem:[%s1 + $0x7d8] sm:$0xf]
  %v531 = vld [vmem:[%s1 + $0x7dc] sm:$0xf]
  %v532 = vld [vmem:[%s1 + $0x7e0] sm:$0xf]
  %v533 = vld [vmem:[%s1 + $0x7e4] sm:$0xf]
  %v534 = vld [vmem:[%s1 + $0x7e8] sm:$0xf]
  %v535 = vld [vmem:[%s1 + $0x7ec] sm:$0xf]
  %v536 = vld [vmem:[%s1 + $0x7f0] sm:$0xf]
  %v537 = vld [vmem:[%s1 + $0x7f4] sm:$0xf]
  %v538 = vld [vmem:[%s1 + $0x7f8] sm:$0xf]
  %v539 = vld [vmem:[%s1 + $0x7fc] sm:$0xf]
  %v540 = vld [vmem:[%s2] sm:$0x1]
  %v542 = vperm.slane %v540, 0
  %545 = vst [vmem:[#allocation1] ss:$4 sm:$0xff] %v20
  %s547 = scalar_lea.vmem [#allocation1], 32
  %548 = vst [vmem:[%s547] ss:$4 sm:$0xff] %v21
  %v549 = vld.sshfl [vmem:[#allocation1] sm:$0xff pattern:$0x73625140]
  %v550 = vld.sshfl [vmem:[#allocation1 + $0x8] sm:$0xff pattern:$0x73625140]
  %v551 = vld.sshfl [vmem:[#allocation1 + $0x10] sm:$0xff pattern:$0x73625140]
  %v552 = vld.sshfl [vmem:[#allocation1 + $0x18] sm:$0xff pattern:$0x73625140]
  %v553 = vld.sshfl [vmem:[#allocation1 + $0x20] sm:$0xff pattern:$0x73625140]
  %v554 = vld.sshfl [vmem:[#allocation1 + $0x28] sm:$0xff pattern:$0x73625140]
  %v555 = vld.sshfl [vmem:[#allocation1 + $0x30] sm:$0xff pattern:$0x73625140]
  %v556 = vld.sshfl [vmem:[#allocation1 + $0x38] sm:$0xff pattern:$0x73625140]
  %558 = vst [vmem:[#allocation1] ss:$4 sm:$0xff] %v22
  %560 = vst [vmem:[%s547] ss:$4 sm:$0xff] %v23
  %v561 = vld.sshfl [vmem:[#allocation1] sm:$0xff pattern:$0x73625140]
  %v562 = vld.sshfl [vmem:[#allocation1 + $0x8] sm:$0xff pattern:$0x73625140]
  %v563 = vld.sshfl [vmem:[#allocation1 + $0x10] sm:$0xff pattern:$0x73625140]
  %v564 = vld.sshfl [vmem:[#allocation1 + $0x18] sm:$0xff pattern:$0x73625140]
  %v565 = vld.sshfl [vmem:[#allocation1 + $0x20] sm:$0xff pattern:$0x73625140]
  %v566 = vld.sshfl [vmem:[#allocation1 + $0x28] sm:$0xff pattern:$0x73625140]
  %v567 = vld.sshfl [vmem:[#allocation1 + $0x30] sm:$0xff pattern:$0x73625140]
  %v568 = vld.sshfl [vmem:[#allocation1 + $0x38] sm:$0xff pattern:$0x73625140]
  %570 = vst [vmem:[#allocation1] ss:$4 sm:$0xff] %v24
  %572 = vst [vmem:[%s547] ss:$4 sm:$0xff] %v25
  %v573 = vld.sshfl [vmem:[#allocation1] sm:$0xff pattern:$0x73625140]
  %v574 = vld.sshfl [vmem:[#allocation1 + $0x8] sm:$0xff pattern:$0x73625140]
  %v575 = vld.sshfl [vmem:[#allocation1 + $0x10] sm:$0xff pattern:$0x73625140]
  %v576 = vld.sshfl [vmem:[#allocation1 + $0x18] sm:$0xff pattern:$0x73625140]
  %v577 = vld.sshfl [vmem:[#allocation1 + $0x20] sm:$0xff pattern:$0x73625140]
  %v578 = vld.sshfl [vmem:[#allocation1 + $0x28] sm:$0xff pattern:$0x73625140]
  %v579 = vld.sshfl [vmem:[#allocation1 + $0x30] sm:$0xff pattern:$0x73625140]
  %v580 = vld.sshfl [vmem:[#allocation1 + $0x38] sm:$0xff pattern:$0x73625140]
  %582 = vst [vmem:[#allocation1] ss:$4 sm:$0xff] %v26
  %584 = vst [vmem:[%s547] ss:$4 sm:$0xff] %v27
  %v585 = vld.sshfl [vmem:[#allocation1] sm:$0xff pattern:$0x73625140]
  %v586 = vld.sshfl [vmem:[#allocation1 + $0x8] sm:$0xff pattern:$0x73625140]
  %v587 = vld.sshfl [vmem:[#allocation1 + $0x10] sm:$0xff pattern:$0x73625140]
  %v588 = vld.sshfl [vmem:[#allocation1 + $0x18] sm:$0xff pattern:$0x73625140]
  %v589 = vld.sshfl [vmem:[#allocation1 + $0x20] sm:$0xff pattern:$0x73625140]
  %v590 = vld.sshfl [vmem:[#allocation1 + $0x28] sm:$0xff pattern:$0x73625140]
  %v591 = vld.sshfl [vmem:[#allocation1 + $0x30] sm:$0xff pattern:$0x73625140]
  %v592 = vld.sshfl [vmem:[#allocation1 + $0x38] sm:$0xff pattern:$0x73625140]
  %v1137 = vunpack.c.l.b16 %v28
  %v1138 = vunpack.c.l.b16 %v29
  %v1139 = vunpack.c.l.b16 %v30
  %v1140 = vunpack.c.l.b16 %v31
  %v1141 = vunpack.c.l.b16 %v32
  %v1142 = vunpack.c.l.b16 %v33
  %v1143 = vunpack.c.l.b16 %v34
  %v1144 = vunpack.c.l.b16 %v35
  %v1145 = vunpack.c.l.b16 %v36
  %v1146 = vunpack.c.l.b16 %v37
  %v1147 = vunpack.c.l.b16 %v38
  %v1148 = vunpack.c.l.b16 %v39
  %v1149 = vunpack.c.l.b16 %v40
  %v1150 = vunpack.c.l.b16 %v41
  %v1151 = vunpack.c.l.b16 %v42
  %v1152 = vunpack.c.l.b16 %v43
  %v1153 = vunpack.c.l.b16 %v44
  %v1154 = vunpack.c.l.b16 %v45
  %v1155 = vunpack.c.l.b16 %v46
  %v1156 = vunpack.c.l.b16 %v47
  %v1157 = vunpack.c.l.b16 %v48
  %v1158 = vunpack.c.l.b16 %v49
  %v1159 = vunpack.c.l.b16 %v50
  %v1160 = vunpack.c.l.b16 %v51
  %v1161 = vunpack.c.l.b16 %v52
  %v1162 = vunpack.c.l.b16 %v53
  %v1163 = vunpack.c.l.b16 %v54
  %v1164 = vunpack.c.l.b16 %v55
  %v1165 = vunpack.c.l.b16 %v56
  %v1166 = vunpack.c.l.b16 %v57
  %v1167 = vunpack.c.l.b16 %v58
  %v1168 = vunpack.c.l.b16 %v59
  %v1169 = vunpack.c.l.b16 %v60
  %v1170 = vunpack.c.l.b16 %v61
  %v1171 = vunpack.c.l.b16 %v62
  %v1172 = vunpack.c.l.b16 %v63
  %v1173 = vunpack.c.l.b16 %v64
  %v1174 = vunpack.c.l.b16 %v65
  %v1175 = vunpack.c.l.b16 %v66
  %v1176 = vunpack.c.l.b16 %v67
  %v1177 = vunpack.c.l.b16 %v68
  %v1178 = vunpack.c.l.b16 %v69
  %v1179 = vunpack.c.l.b16 %v70
  %v1180 = vunpack.c.l.b16 %v71
  %v1181 = vunpack.c.l.b16 %v72
  %v1182 = vunpack.c.l.b16 %v73
  %v1183 = vunpack.c.l.b16 %v74
  %v1184 = vunpack.c.l.b16 %v75
  %v1185 = vunpack.c.l.b16 %v76
  %v1186 = vunpack.c.l.b16 %v77
  %v1187 = vunpack.c.l.b16 %v78
  %v1188 = vunpack.c.l.b16 %v79
  %v1189 = vunpack.c.l.b16 %v80
  %v1190 = vunpack.c.l.b16 %v81
  %v1191 = vunpack.c.l.b16 %v82
  %v1192 = vunpack.c.l.b16 %v83
  %v1193 = vunpack.c.l.b16 %v84
  %v1194 = vunpack.c.l.b16 %v85
  %v1195 = vunpack.c.l.b16 %v86
  %v1196 = vunpack.c.l.b16 %v87
  %v1197 = vunpack.c.l.b16 %v88
  %v1198 = vunpack.c.l.b16 %v89
  %v1199 = vunpack.c.l.b16 %v90
  %v1200 = vunpack.c.l.b16 %v91
  %v1201 = vunpack.c.l.b16 %v92
  %v1202 = vunpack.c.l.b16 %v93
  %v1203 = vunpack.c.l.b16 %v94
  %v1204 = vunpack.c.l.b16 %v95
  %v1205 = vunpack.c.l.b16 %v96
  %v1206 = vunpack.c.l.b16 %v97
  %v1207 = vunpack.c.l.b16 %v98
  %v1208 = vunpack.c.l.b16 %v99
  %v1209 = vunpack.c.l.b16 %v100
  %v1210 = vunpack.c.l.b16 %v101
  %v1211 = vunpack.c.l.b16 %v102
  %v1212 = vunpack.c.l.b16 %v103
  %v1213 = vunpack.c.l.b16 %v104
  %v1214 = vunpack.c.l.b16 %v105
  %v1215 = vunpack.c.l.b16 %v106
  %v1216 = vunpack.c.l.b16 %v107
  %v1217 = vunpack.c.l.b16 %v108
  %v1218 = vunpack.c.l.b16 %v109
  %v1219 = vunpack.c.l.b16 %v110
  %v1220 = vunpack.c.l.b16 %v111
  %v1221 = vunpack.c.l.b16 %v112
  %v1222 = vunpack.c.l.b16 %v113
  %v1223 = vunpack.c.l.b16 %v114
  %v1224 = vunpack.c.l.b16 %v115
  %v1225 = vunpack.c.l.b16 %v116
  %v1226 = vunpack.c.l.b16 %v117
  %v1227 = vunpack.c.l.b16 %v118
  %v1228 = vunpack.c.l.b16 %v119
  %v1229 = vunpack.c.l.b16 %v120
  %v1230 = vunpack.c.l.b16 %v121
  %v1231 = vunpack.c.l.b16 %v122
  %v1232 = vunpack.c.l.b16 %v123
  %v1233 = vunpack.c.l.b16 %v124
  %v1234 = vunpack.c.l.b16 %v125
  %v1235 = vunpack.c.l.b16 %v126
  %v1236 = vunpack.c.l.b16 %v127
  %v1237 = vunpack.c.l.b16 %v128
  %v1238 = vunpack.c.l.b16 %v129
  %v1239 = vunpack.c.l.b16 %v130
  %v1240 = vunpack.c.l.b16 %v131
  %v1241 = vunpack.c.l.b16 %v132
  %v1242 = vunpack.c.l.b16 %v133
  %v1243 = vunpack.c.l.b16 %v134
  %v1244 = vunpack.c.l.b16 %v135
  %v1245 = vunpack.c.l.b16 %v136
  %v1246 = vunpack.c.l.b16 %v137
  %v1247 = vunpack.c.l.b16 %v138
  %v1248 = vunpack.c.l.b16 %v139
  %v1249 = vunpack.c.l.b16 %v140
  %v1250 = vunpack.c.l.b16 %v141
  %v1251 = vunpack.c.l.b16 %v142
  %v1252 = vunpack.c.l.b16 %v143
  %v1253 = vunpack.c.l.b16 %v144
  %v1254 = vunpack.c.l.b16 %v145
  %v1255 = vunpack.c.l.b16 %v146
  %v1256 = vunpack.c.l.b16 %v147
  %v1257 = vunpack.c.l.b16 %v148
  %v1258 = vunpack.c.l.b16 %v149
  %v1259 = vunpack.c.l.b16 %v150
  %v1260 = vunpack.c.l.b16 %v151
  %v1261 = vunpack.c.l.b16 %v152
  %v1262 = vunpack.c.l.b16 %v153
  %v1263 = vunpack.c.l.b16 %v154
  %v1264 = vunpack.c.l.b16 %v155
  %v1265 = vunpack.c.l.b16 %v156
  %v1266 = vunpack.c.l.b16 %v157
  %v1267 = vunpack.c.l.b16 %v158
  %v1268 = vunpack.c.l.b16 %v159
  %v1269 = vunpack.c.l.b16 %v160
  %v1270 = vunpack.c.l.b16 %v161
  %v1271 = vunpack.c.l.b16 %v162
  %v1272 = vunpack.c.l.b16 %v163
  %v1273 = vunpack.c.l.b16 %v164
  %v1274 = vunpack.c.l.b16 %v165
  %v1275 = vunpack.c.l.b16 %v166
  %v1276 = vunpack.c.l.b16 %v167
  %v1277 = vunpack.c.l.b16 %v168
  %v1278 = vunpack.c.l.b16 %v169
  %v1279 = vunpack.c.l.b16 %v170
  %v1280 = vunpack.c.l.b16 %v171
  %v1281 = vunpack.c.l.b16 %v172
  %v1282 = vunpack.c.l.b16 %v173
  %v1283 = vunpack.c.l.b16 %v174
  %v1284 = vunpack.c.l.b16 %v175
  %v1285 = vunpack.c.l.b16 %v176
  %v1286 = vunpack.c.l.b16 %v177
  %v1287 = vunpack.c.l.b16 %v178
  %v1288 = vunpack.c.l.b16 %v179
  %v1289 = vunpack.c.l.b16 %v180
  %v1290 = vunpack.c.l.b16 %v181
  %v1291 = vunpack.c.l.b16 %v182
  %v1292 = vunpack.c.l.b16 %v183
  %v1293 = vunpack.c.l.b16 %v184
  %v1294 = vunpack.c.l.b16 %v185
  %v1295 = vunpack.c.l.b16 %v186
  %v1296 = vunpack.c.l.b16 %v187
  %v1297 = vunpack.c.l.b16 %v188
  %v1298 = vunpack.c.l.b16 %v189
  %v1299 = vunpack.c.l.b16 %v190
  %v1300 = vunpack.c.l.b16 %v191
  %v1301 = vunpack.c.l.b16 %v192
  %v1302 = vunpack.c.l.b16 %v193
  %v1303 = vunpack.c.l.b16 %v194
  %v1304 = vunpack.c.l.b16 %v195
  %v1305 = vunpack.c.l.b16 %v196
  %v1306 = vunpack.c.l.b16 %v197
  %v1307 = vunpack.c.l.b16 %v198
  %v1308 = vunpack.c.l.b16 %v199
  %v1309 = vunpack.c.l.b16 %v200
  %v1310 = vunpack.c.l.b16 %v201
  %v1311 = vunpack.c.l.b16 %v202
  %v1312 = vunpack.c.l.b16 %v203
  %v1313 = vunpack.c.l.b16 %v204
  %v1314 = vunpack.c.l.b16 %v205
  %v1315 = vunpack.c.l.b16 %v206
  %v1316 = vunpack.c.l.b16 %v207
  %v1317 = vunpack.c.l.b16 %v208
  %v1318 = vunpack.c.l.b16 %v209
  %v1319 = vunpack.c.l.b16 %v210
  %v1320 = vunpack.c.l.b16 %v211
  %v1321 = vunpack.c.l.b16 %v212
  %v1322 = vunpack.c.l.b16 %v213
  %v1323 = vunpack.c.l.b16 %v214
  %v1324 = vunpack.c.l.b16 %v215
  %v1325 = vunpack.c.l.b16 %v216
  %v1326 = vunpack.c.l.b16 %v217
  %v1327 = vunpack.c.l.b16 %v218
  %v1328 = vunpack.c.l.b16 %v219
  %v1329 = vunpack.c.l.b16 %v220
  %v1330 = vunpack.c.l.b16 %v221
  %v1331 = vunpack.c.l.b16 %v222
  %v1332 = vunpack.c.l.b16 %v223
  %v1333 = vunpack.c.l.b16 %v224
  %v1334 = vunpack.c.l.b16 %v225
  %v1335 = vunpack.c.l.b16 %v226
  %v1336 = vunpack.c.l.b16 %v227
  %v1337 = vunpack.c.l.b16 %v228
  %v1338 = vunpack.c.l.b16 %v229
  %v1339 = vunpack.c.l.b16 %v230
  %v1340 = vunpack.c.l.b16 %v231
  %v1341 = vunpack.c.l.b16 %v232
  %v1342 = vunpack.c.l.b16 %v233
  %v1343 = vunpack.c.l.b16 %v234
  %v1344 = vunpack.c.l.b16 %v235
  %v1345 = vunpack.c.l.b16 %v236
  %v1346 = vunpack.c.l.b16 %v237
  %v1347 = vunpack.c.l.b16 %v238
  %v1348 = vunpack.c.l.b16 %v239
  %v1349 = vunpack.c.l.b16 %v240
  %v1350 = vunpack.c.l.b16 %v241
  %v1351 = vunpack.c.l.b16 %v242
  %v1352 = vunpack.c.l.b16 %v243
  %v1353 = vunpack.c.l.b16 %v244
  %v1354 = vunpack.c.l.b16 %v245
  %v1355 = vunpack.c.l.b16 %v246
  %v1356 = vunpack.c.l.b16 %v247
  %v1357 = vunpack.c.l.b16 %v248
  %v1358 = vunpack.c.l.b16 %v249
  %v1359 = vunpack.c.l.b16 %v250
  %v1360 = vunpack.c.l.b16 %v251
  %v1361 = vunpack.c.l.b16 %v252
  %v1362 = vunpack.c.l.b16 %v253
  %v1363 = vunpack.c.l.b16 %v254
  %v1364 = vunpack.c.l.b16 %v255
  %v1365 = vunpack.c.l.b16 %v256
  %v1366 = vunpack.c.l.b16 %v257
  %v1367 = vunpack.c.l.b16 %v258
  %v1368 = vunpack.c.l.b16 %v259
  %v1369 = vunpack.c.l.b16 %v260
  %v1370 = vunpack.c.l.b16 %v261
  %v1371 = vunpack.c.l.b16 %v262
  %v1372 = vunpack.c.l.b16 %v263
  %v1373 = vunpack.c.l.b16 %v264
  %v1374 = vunpack.c.l.b16 %v265
  %v1375 = vunpack.c.l.b16 %v266
  %v1376 = vunpack.c.l.b16 %v267
  %v1377 = vunpack.c.l.b16 %v268
  %v1378 = vunpack.c.l.b16 %v269
  %v1379 = vunpack.c.l.b16 %v270
  %v1380 = vunpack.c.l.b16 %v271
  %v1381 = vunpack.c.l.b16 %v272
  %v1382 = vunpack.c.l.b16 %v273
  %v1383 = vunpack.c.l.b16 %v274
  %v1384 = vunpack.c.l.b16 %v275
  %v1385 = vunpack.c.l.b16 %v276
  %v1386 = vunpack.c.l.b16 %v277
  %v1387 = vunpack.c.l.b16 %v278
  %v1388 = vunpack.c.l.b16 %v279
  %v1389 = vunpack.c.l.b16 %v280
  %v1390 = vunpack.c.l.b16 %v281
  %v1391 = vunpack.c.l.b16 %v282
  %v1392 = vunpack.c.l.b16 %v283
  %v1393 = vunpack.c.l.b16 %v284
  %v1394 = vunpack.c.l.b16 %v285
  %v1395 = vunpack.c.l.b16 %v286
  %v1396 = vunpack.c.l.b16 %v287
  %v1397 = vunpack.c.l.b16 %v288
  %v1398 = vunpack.c.l.b16 %v289
  %v1399 = vunpack.c.l.b16 %v290
  %v1400 = vunpack.c.l.b16 %v291
  %v1401 = vunpack.c.l.b16 %v292
  %v1402 = vunpack.c.l.b16 %v293
  %v1403 = vunpack.c.l.b16 %v294
  %v1404 = vunpack.c.l.b16 %v295
  %v1405 = vunpack.c.l.b16 %v296
  %v1406 = vunpack.c.l.b16 %v297
  %v1407 = vunpack.c.l.b16 %v298
  %v1408 = vunpack.c.l.b16 %v299
  %v1409 = vunpack.c.l.b16 %v300
  %v1410 = vunpack.c.l.b16 %v301
  %v1411 = vunpack.c.l.b16 %v302
  %v1412 = vunpack.c.l.b16 %v303
  %v1413 = vunpack.c.l.b16 %v304
  %v1414 = vunpack.c.l.b16 %v305
  %v1415 = vunpack.c.l.b16 %v306
  %v1416 = vunpack.c.l.b16 %v307
  %v1417 = vunpack.c.l.b16 %v308
  %v1418 = vunpack.c.l.b16 %v309
  %v1419 = vunpack.c.l.b16 %v310
  %v1420 = vunpack.c.l.b16 %v311
  %v1421 = vunpack.c.l.b16 %v312
  %v1422 = vunpack.c.l.b16 %v313
  %v1423 = vunpack.c.l.b16 %v314
  %v1424 = vunpack.c.l.b16 %v315
  %v1425 = vunpack.c.l.b16 %v316
  %v1426 = vunpack.c.l.b16 %v317
  %v1427 = vunpack.c.l.b16 %v318
  %v1428 = vunpack.c.l.b16 %v319
  %v1429 = vunpack.c.l.b16 %v320
  %v1430 = vunpack.c.l.b16 %v321
  %v1431 = vunpack.c.l.b16 %v322
  %v1432 = vunpack.c.l.b16 %v323
  %v1433 = vunpack.c.l.b16 %v324
  %v1434 = vunpack.c.l.b16 %v325
  %v1435 = vunpack.c.l.b16 %v326
  %v1436 = vunpack.c.l.b16 %v327
  %v1437 = vunpack.c.l.b16 %v328
  %v1438 = vunpack.c.l.b16 %v329
  %v1439 = vunpack.c.l.b16 %v330
  %v1440 = vunpack.c.l.b16 %v331
  %v1441 = vunpack.c.l.b16 %v332
  %v1442 = vunpack.c.l.b16 %v333
  %v1443 = vunpack.c.l.b16 %v334
  %v1444 = vunpack.c.l.b16 %v335
  %v1445 = vunpack.c.l.b16 %v336
  %v1446 = vunpack.c.l.b16 %v337
  %v1447 = vunpack.c.l.b16 %v338
  %v1448 = vunpack.c.l.b16 %v339
  %v1449 = vunpack.c.l.b16 %v340
  %v1450 = vunpack.c.l.b16 %v341
  %v1451 = vunpack.c.l.b16 %v342
  %v1452 = vunpack.c.l.b16 %v343
  %v1453 = vunpack.c.l.b16 %v344
  %v1454 = vunpack.c.l.b16 %v345
  %v1455 = vunpack.c.l.b16 %v346
  %v1456 = vunpack.c.l.b16 %v347
  %v1457 = vunpack.c.l.b16 %v348
  %v1458 = vunpack.c.l.b16 %v349
  %v1459 = vunpack.c.l.b16 %v350
  %v1460 = vunpack.c.l.b16 %v351
  %v1461 = vunpack.c.l.b16 %v352
  %v1462 = vunpack.c.l.b16 %v353
  %v1463 = vunpack.c.l.b16 %v354
  %v1464 = vunpack.c.l.b16 %v355
  %v1465 = vunpack.c.l.b16 %v356
  %v1466 = vunpack.c.l.b16 %v357
  %v1467 = vunpack.c.l.b16 %v358
  %v1468 = vunpack.c.l.b16 %v359
  %v1469 = vunpack.c.l.b16 %v360
  %v1470 = vunpack.c.l.b16 %v361
  %v1471 = vunpack.c.l.b16 %v362
  %v1472 = vunpack.c.l.b16 %v363
  %v1473 = vunpack.c.l.b16 %v364
  %v1474 = vunpack.c.l.b16 %v365
  %v1475 = vunpack.c.l.b16 %v366
  %v1476 = vunpack.c.l.b16 %v367
  %v1477 = vunpack.c.l.b16 %v368
  %v1478 = vunpack.c.l.b16 %v369
  %v1479 = vunpack.c.l.b16 %v370
  %v1480 = vunpack.c.l.b16 %v371
  %v1481 = vunpack.c.l.b16 %v372
  %v1482 = vunpack.c.l.b16 %v373
  %v1483 = vunpack.c.l.b16 %v374
  %v1484 = vunpack.c.l.b16 %v375
  %v1485 = vunpack.c.l.b16 %v376
  %v1486 = vunpack.c.l.b16 %v377
  %v1487 = vunpack.c.l.b16 %v378
  %v1488 = vunpack.c.l.b16 %v379
  %v1489 = vunpack.c.l.b16 %v380
  %v1490 = vunpack.c.l.b16 %v381
  %v1491 = vunpack.c.l.b16 %v382
  %v1492 = vunpack.c.l.b16 %v383
  %v1493 = vunpack.c.l.b16 %v384
  %v1494 = vunpack.c.l.b16 %v385
  %v1495 = vunpack.c.l.b16 %v386
  %v1496 = vunpack.c.l.b16 %v387
  %v1497 = vunpack.c.l.b16 %v388
  %v1498 = vunpack.c.l.b16 %v389
  %v1499 = vunpack.c.l.b16 %v390
  %v1500 = vunpack.c.l.b16 %v391
  %v1501 = vunpack.c.l.b16 %v392
  %v1502 = vunpack.c.l.b16 %v393
  %v1503 = vunpack.c.l.b16 %v394
  %v1504 = vunpack.c.l.b16 %v395
  %v1505 = vunpack.c.l.b16 %v396
  %v1506 = vunpack.c.l.b16 %v397
  %v1507 = vunpack.c.l.b16 %v398
  %v1508 = vunpack.c.l.b16 %v399
  %v1509 = vunpack.c.l.b16 %v400
  %v1510 = vunpack.c.l.b16 %v401
  %v1511 = vunpack.c.l.b16 %v402
  %v1512 = vunpack.c.l.b16 %v403
  %v1513 = vunpack.c.l.b16 %v404
  %v1514 = vunpack.c.l.b16 %v405
  %v1515 = vunpack.c.l.b16 %v406
  %v1516 = vunpack.c.l.b16 %v407
  %v1517 = vunpack.c.l.b16 %v408
  %v1518 = vunpack.c.l.b16 %v409
  %v1519 = vunpack.c.l.b16 %v410
  %v1520 = vunpack.c.l.b16 %v411
  %v1521 = vunpack.c.l.b16 %v412
  %v1522 = vunpack.c.l.b16 %v413
  %v1523 = vunpack.c.l.b16 %v414
  %v1524 = vunpack.c.l.b16 %v415
  %v1525 = vunpack.c.l.b16 %v416
  %v1526 = vunpack.c.l.b16 %v417
  %v1527 = vunpack.c.l.b16 %v418
  %v1528 = vunpack.c.l.b16 %v419
  %v1529 = vunpack.c.l.b16 %v420
  %v1530 = vunpack.c.l.b16 %v421
  %v1531 = vunpack.c.l.b16 %v422
  %v1532 = vunpack.c.l.b16 %v423
  %v1533 = vunpack.c.l.b16 %v424
  %v1534 = vunpack.c.l.b16 %v425
  %v1535 = vunpack.c.l.b16 %v426
  %v1536 = vunpack.c.l.b16 %v427
  %v1537 = vunpack.c.l.b16 %v428
  %v1538 = vunpack.c.l.b16 %v429
  %v1539 = vunpack.c.l.b16 %v430
  %v1540 = vunpack.c.l.b16 %v431
  %v1541 = vunpack.c.l.b16 %v432
  %v1542 = vunpack.c.l.b16 %v433
  %v1543 = vunpack.c.l.b16 %v434
  %v1544 = vunpack.c.l.b16 %v435
  %v1545 = vunpack.c.l.b16 %v436
  %v1546 = vunpack.c.l.b16 %v437
  %v1547 = vunpack.c.l.b16 %v438
  %v1548 = vunpack.c.l.b16 %v439
  %v1549 = vunpack.c.l.b16 %v440
  %v1550 = vunpack.c.l.b16 %v441
  %v1551 = vunpack.c.l.b16 %v442
  %v1552 = vunpack.c.l.b16 %v443
  %v1553 = vunpack.c.l.b16 %v444
  %v1554 = vunpack.c.l.b16 %v445
  %v1555 = vunpack.c.l.b16 %v446
  %v1556 = vunpack.c.l.b16 %v447
  %v1557 = vunpack.c.l.b16 %v448
  %v1558 = vunpack.c.l.b16 %v449
  %v1559 = vunpack.c.l.b16 %v450
  %v1560 = vunpack.c.l.b16 %v451
  %v1561 = vunpack.c.l.b16 %v452
  %v1562 = vunpack.c.l.b16 %v453
  %v1563 = vunpack.c.l.b16 %v454
  %v1564 = vunpack.c.l.b16 %v455
  %v1565 = vunpack.c.l.b16 %v456
  %v1566 = vunpack.c.l.b16 %v457
  %v1567 = vunpack.c.l.b16 %v458
  %v1568 = vunpack.c.l.b16 %v459
  %v1569 = vunpack.c.l.b16 %v460
  %v1570 = vunpack.c.l.b16 %v461
  %v1571 = vunpack.c.l.b16 %v462
  %v1572 = vunpack.c.l.b16 %v463
  %v1573 = vunpack.c.l.b16 %v464
  %v1574 = vunpack.c.l.b16 %v465
  %v1575 = vunpack.c.l.b16 %v466
  %v1576 = vunpack.c.l.b16 %v467
  %v1577 = vunpack.c.l.b16 %v468
  %v1578 = vunpack.c.l.b16 %v469
  %v1579 = vunpack.c.l.b16 %v470
  %v1580 = vunpack.c.l.b16 %v471
  %v1581 = vunpack.c.l.b16 %v472
  %v1582 = vunpack.c.l.b16 %v473
  %v1583 = vunpack.c.l.b16 %v474
  %v1584 = vunpack.c.l.b16 %v475
  %v1585 = vunpack.c.l.b16 %v476
  %v1586 = vunpack.c.l.b16 %v477
  %v1587 = vunpack.c.l.b16 %v478
  %v1588 = vunpack.c.l.b16 %v479
  %v1589 = vunpack.c.l.b16 %v480
  %v1590 = vunpack.c.l.b16 %v481
  %v1591 = vunpack.c.l.b16 %v482
  %v1592 = vunpack.c.l.b16 %v483
  %v1593 = vunpack.c.l.b16 %v484
  %v1594 = vunpack.c.l.b16 %v485
  %v1595 = vunpack.c.l.b16 %v486
  %v1596 = vunpack.c.l.b16 %v487
  %v1597 = vunpack.c.l.b16 %v488
  %v1598 = vunpack.c.l.b16 %v489
  %v1599 = vunpack.c.l.b16 %v490
  %v1600 = vunpack.c.l.b16 %v491
  %v1601 = vunpack.c.l.b16 %v492
  %v1602 = vunpack.c.l.b16 %v493
  %v1603 = vunpack.c.l.b16 %v494
  %v1604 = vunpack.c.l.b16 %v495
  %v1605 = vunpack.c.l.b16 %v496
  %v1606 = vunpack.c.l.b16 %v497
  %v1607 = vunpack.c.l.b16 %v498
  %v1608 = vunpack.c.l.b16 %v499
  %v1609 = vunpack.c.l.b16 %v500
  %v1610 = vunpack.c.l.b16 %v501
  %v1611 = vunpack.c.l.b16 %v502
  %v1612 = vunpack.c.l.b16 %v503
  %v1613 = vunpack.c.l.b16 %v504
  %v1614 = vunpack.c.l.b16 %v505
  %v1615 = vunpack.c.l.b16 %v506
  %v1616 = vunpack.c.l.b16 %v507
  %v1617 = vunpack.c.l.b16 %v508
  %v1618 = vunpack.c.l.b16 %v509
  %v1619 = vunpack.c.l.b16 %v510
  %v1620 = vunpack.c.l.b16 %v511
  %v1621 = vunpack.c.l.b16 %v512
  %v1622 = vunpack.c.l.b16 %v513
  %v1623 = vunpack.c.l.b16 %v514
  %v1624 = vunpack.c.l.b16 %v515
  %v1625 = vunpack.c.l.b16 %v516
  %v1626 = vunpack.c.l.b16 %v517
  %v1627 = vunpack.c.l.b16 %v518
  %v1628 = vunpack.c.l.b16 %v519
  %v1629 = vunpack.c.l.b16 %v520
  %v1630 = vunpack.c.l.b16 %v521
  %v1631 = vunpack.c.l.b16 %v522
  %v1632 = vunpack.c.l.b16 %v523
  %v1633 = vunpack.c.l.b16 %v524
  %v1634 = vunpack.c.l.b16 %v525
  %v1635 = vunpack.c.l.b16 %v526
  %v1636 = vunpack.c.l.b16 %v527
  %v1637 = vunpack.c.l.b16 %v528
  %v1638 = vunpack.c.l.b16 %v529
  %v1639 = vunpack.c.l.b16 %v530
  %v1640 = vunpack.c.l.b16 %v531
  %v1641 = vunpack.c.l.b16 %v532
  %v1642 = vunpack.c.l.b16 %v533
  %v1643 = vunpack.c.l.b16 %v534
  %v1644 = vunpack.c.l.b16 %v535
  %v1645 = vunpack.c.l.b16 %v536
  %v1646 = vunpack.c.l.b16 %v537
  %v1647 = vunpack.c.l.b16 %v538
  %v1648 = vunpack.c.l.b16 %v539
  %v1649 = vpack.c.b16 %v1138, %v1137
  %v1650 = vpack.c.b16 %v1140, %v1139
  %v1651 = vpack.c.b16 %v1142, %v1141
  %v1652 = vpack.c.b16 %v1144, %v1143
  %v1653 = vpack.c.b16 %v1146, %v1145
  %v1654 = vpack.c.b16 %v1148, %v1147
  %v1655 = vpack.c.b16 %v1150, %v1149
  %v1656 = vpack.c.b16 %v1152, %v1151
  %v1657 = vpack.c.b16 %v1154, %v1153
  %v1658 = vpack.c.b16 %v1156, %v1155
  %v1659 = vpack.c.b16 %v1158, %v1157
  %v1660 = vpack.c.b16 %v1160, %v1159
  %v1661 = vpack.c.b16 %v1162, %v1161
  %v1662 = vpack.c.b16 %v1164, %v1163
  %v1663 = vpack.c.b16 %v1166, %v1165
  %v1664 = vpack.c.b16 %v1168, %v1167
  %v1665 = vpack.c.b16 %v1170, %v1169
  %v1666 = vpack.c.b16 %v1172, %v1171
  %v1667 = vpack.c.b16 %v1174, %v1173
  %v1668 = vpack.c.b16 %v1176, %v1175
  %v1669 = vpack.c.b16 %v1178, %v1177
  %v1670 = vpack.c.b16 %v1180, %v1179
  %v1671 = vpack.c.b16 %v1182, %v1181
  %v1672 = vpack.c.b16 %v1184, %v1183
  %v1673 = vpack.c.b16 %v1186, %v1185
  %v1674 = vpack.c.b16 %v1188, %v1187
  %v1675 = vpack.c.b16 %v1190, %v1189
  %v1676 = vpack.c.b16 %v1192, %v1191
  %v1677 = vpack.c.b16 %v1194, %v1193
  %v1678 = vpack.c.b16 %v1196, %v1195
  %v1679 = vpack.c.b16 %v1198, %v1197
  %v1680 = vpack.c.b16 %v1200, %v1199
  %v1681 = vpack.c.b16 %v1202, %v1201
  %v1682 = vpack.c.b16 %v1204, %v1203
  %v1683 = vpack.c.b16 %v1206, %v1205
  %v1684 = vpack.c.b16 %v1208, %v1207
  %v1685 = vpack.c.b16 %v1210, %v1209
  %v1686 = vpack.c.b16 %v1212, %v1211
  %v1687 = vpack.c.b16 %v1214, %v1213
  %v1688 = vpack.c.b16 %v1216, %v1215
  %v1689 = vpack.c.b16 %v1218, %v1217
  %v1690 = vpack.c.b16 %v1220, %v1219
  %v1691 = vpack.c.b16 %v1222, %v1221
  %v1692 = vpack.c.b16 %v1224, %v1223
  %v1693 = vpack.c.b16 %v1226, %v1225
  %v1694 = vpack.c.b16 %v1228, %v1227
  %v1695 = vpack.c.b16 %v1230, %v1229
  %v1696 = vpack.c.b16 %v1232, %v1231
  %v1697 = vpack.c.b16 %v1234, %v1233
  %v1698 = vpack.c.b16 %v1236, %v1235
  %v1699 = vpack.c.b16 %v1238, %v1237
  %v1700 = vpack.c.b16 %v1240, %v1239
  %v1701 = vpack.c.b16 %v1242, %v1241
  %v1702 = vpack.c.b16 %v1244, %v1243
  %v1703 = vpack.c.b16 %v1246, %v1245
  %v1704 = vpack.c.b16 %v1248, %v1247
  %v1705 = vpack.c.b16 %v1250, %v1249
  %v1706 = vpack.c.b16 %v1252, %v1251
  %v1707 = vpack.c.b16 %v1254, %v1253
  %v1708 = vpack.c.b16 %v1256, %v1255
  %v1709 = vpack.c.b16 %v1258, %v1257
  %v1710 = vpack.c.b16 %v1260, %v1259
  %v1711 = vpack.c.b16 %v1262, %v1261
  %v1712 = vpack.c.b16 %v1264, %v1263
  %v1713 = vpack.c.b16 %v1266, %v1265
  %v1714 = vpack.c.b16 %v1268, %v1267
  %v1715 = vpack.c.b16 %v1270, %v1269
  %v1716 = vpack.c.b16 %v1272, %v1271
  %v1717 = vpack.c.b16 %v1274, %v1273
  %v1718 = vpack.c.b16 %v1276, %v1275
  %v1719 = vpack.c.b16 %v1278, %v1277
  %v1720 = vpack.c.b16 %v1280, %v1279
  %v1721 = vpack.c.b16 %v1282, %v1281
  %v1722 = vpack.c.b16 %v1284, %v1283
  %v1723 = vpack.c.b16 %v1286, %v1285
  %v1724 = vpack.c.b16 %v1288, %v1287
  %v1725 = vpack.c.b16 %v1290, %v1289
  %v1726 = vpack.c.b16 %v1292, %v1291
  %v1727 = vpack.c.b16 %v1294, %v1293
  %v1728 = vpack.c.b16 %v1296, %v1295
  %v1729 = vpack.c.b16 %v1298, %v1297
  %v1730 = vpack.c.b16 %v1300, %v1299
  %v1731 = vpack.c.b16 %v1302, %v1301
  %v1732 = vpack.c.b16 %v1304, %v1303
  %v1733 = vpack.c.b16 %v1306, %v1305
  %v1734 = vpack.c.b16 %v1308, %v1307
  %v1735 = vpack.c.b16 %v1310, %v1309
  %v1736 = vpack.c.b16 %v1312, %v1311
  %v1737 = vpack.c.b16 %v1314, %v1313
  %v1738 = vpack.c.b16 %v1316, %v1315
  %v1739 = vpack.c.b16 %v1318, %v1317
  %v1740 = vpack.c.b16 %v1320, %v1319
  %v1741 = vpack.c.b16 %v1322, %v1321
  %v1742 = vpack.c.b16 %v1324, %v1323
  %v1743 = vpack.c.b16 %v1326, %v1325
  %v1744 = vpack.c.b16 %v1328, %v1327
  %v1745 = vpack.c.b16 %v1330, %v1329
  %v1746 = vpack.c.b16 %v1332, %v1331
  %v1747 = vpack.c.b16 %v1334, %v1333
  %v1748 = vpack.c.b16 %v1336, %v1335
  %v1749 = vpack.c.b16 %v1338, %v1337
  %v1750 = vpack.c.b16 %v1340, %v1339
  %v1751 = vpack.c.b16 %v1342, %v1341
  %v1752 = vpack.c.b16 %v1344, %v1343
  %v1753 = vpack.c.b16 %v1346, %v1345
  %v1754 = vpack.c.b16 %v1348, %v1347
  %v1755 = vpack.c.b16 %v1350, %v1349
  %v1756 = vpack.c.b16 %v1352, %v1351
  %v1757 = vpack.c.b16 %v1354, %v1353
  %v1758 = vpack.c.b16 %v1356, %v1355
  %v1759 = vpack.c.b16 %v1358, %v1357
  %v1760 = vpack.c.b16 %v1360, %v1359
  %v1761 = vpack.c.b16 %v1362, %v1361
  %v1762 = vpack.c.b16 %v1364, %v1363
  %v1763 = vpack.c.b16 %v1366, %v1365
  %v1764 = vpack.c.b16 %v1368, %v1367
  %v1765 = vpack.c.b16 %v1370, %v1369
  %v1766 = vpack.c.b16 %v1372, %v1371
  %v1767 = vpack.c.b16 %v1374, %v1373
  %v1768 = vpack.c.b16 %v1376, %v1375
  %v1769 = vpack.c.b16 %v1378, %v1377
  %v1770 = vpack.c.b16 %v1380, %v1379
  %v1771 = vpack.c.b16 %v1382, %v1381
  %v1772 = vpack.c.b16 %v1384, %v1383
  %v1773 = vpack.c.b16 %v1386, %v1385
  %v1774 = vpack.c.b16 %v1388, %v1387
  %v1775 = vpack.c.b16 %v1390, %v1389
  %v1776 = vpack.c.b16 %v1392, %v1391
  %v1777 = vpack.c.b16 %v1394, %v1393
  %v1778 = vpack.c.b16 %v1396, %v1395
  %v1779 = vpack.c.b16 %v1398, %v1397
  %v1780 = vpack.c.b16 %v1400, %v1399
  %v1781 = vpack.c.b16 %v1402, %v1401
  %v1782 = vpack.c.b16 %v1404, %v1403
  %v1783 = vpack.c.b16 %v1406, %v1405
  %v1784 = vpack.c.b16 %v1408, %v1407
  %v1785 = vpack.c.b16 %v1410, %v1409
  %v1786 = vpack.c.b16 %v1412, %v1411
  %v1787 = vpack.c.b16 %v1414, %v1413
  %v1788 = vpack.c.b16 %v1416, %v1415
  %v1789 = vpack.c.b16 %v1418, %v1417
  %v1790 = vpack.c.b16 %v1420, %v1419
  %v1791 = vpack.c.b16 %v1422, %v1421
  %v1792 = vpack.c.b16 %v1424, %v1423
  %v1793 = vpack.c.b16 %v1426, %v1425
  %v1794 = vpack.c.b16 %v1428, %v1427
  %v1795 = vpack.c.b16 %v1430, %v1429
  %v1796 = vpack.c.b16 %v1432, %v1431
  %v1797 = vpack.c.b16 %v1434, %v1433
  %v1798 = vpack.c.b16 %v1436, %v1435
  %v1799 = vpack.c.b16 %v1438, %v1437
  %v1800 = vpack.c.b16 %v1440, %v1439
  %v1801 = vpack.c.b16 %v1442, %v1441
  %v1802 = vpack.c.b16 %v1444, %v1443
  %v1803 = vpack.c.b16 %v1446, %v1445
  %v1804 = vpack.c.b16 %v1448, %v1447
  %v1805 = vpack.c.b16 %v1450, %v1449
  %v1806 = vpack.c.b16 %v1452, %v1451
  %v1807 = vpack.c.b16 %v1454, %v1453
  %v1808 = vpack.c.b16 %v1456, %v1455
  %v1809 = vpack.c.b16 %v1458, %v1457
  %v1810 = vpack.c.b16 %v1460, %v1459
  %v1811 = vpack.c.b16 %v1462, %v1461
  %v1812 = vpack.c.b16 %v1464, %v1463
  %v1813 = vpack.c.b16 %v1466, %v1465
  %v1814 = vpack.c.b16 %v1468, %v1467
  %v1815 = vpack.c.b16 %v1470, %v1469
  %v1816 = vpack.c.b16 %v1472, %v1471
  %v1817 = vpack.c.b16 %v1474, %v1473
  %v1818 = vpack.c.b16 %v1476, %v1475
  %v1819 = vpack.c.b16 %v1478, %v1477
  %v1820 = vpack.c.b16 %v1480, %v1479
  %v1821 = vpack.c.b16 %v1482, %v1481
  %v1822 = vpack.c.b16 %v1484, %v1483
  %v1823 = vpack.c.b16 %v1486, %v1485
  %v1824 = vpack.c.b16 %v1488, %v1487
  %v1825 = vpack.c.b16 %v1490, %v1489
  %v1826 = vpack.c.b16 %v1492, %v1491
  %v1827 = vpack.c.b16 %v1494, %v1493
  %v1828 = vpack.c.b16 %v1496, %v1495
  %v1829 = vpack.c.b16 %v1498, %v1497
  %v1830 = vpack.c.b16 %v1500, %v1499
  %v1831 = vpack.c.b16 %v1502, %v1501
  %v1832 = vpack.c.b16 %v1504, %v1503
  %v1833 = vpack.c.b16 %v1506, %v1505
  %v1834 = vpack.c.b16 %v1508, %v1507
  %v1835 = vpack.c.b16 %v1510, %v1509
  %v1836 = vpack.c.b16 %v1512, %v1511
  %v1837 = vpack.c.b16 %v1514, %v1513
  %v1838 = vpack.c.b16 %v1516, %v1515
  %v1839 = vpack.c.b16 %v1518, %v1517
  %v1840 = vpack.c.b16 %v1520, %v1519
  %v1841 = vpack.c.b16 %v1522, %v1521
  %v1842 = vpack.c.b16 %v1524, %v1523
  %v1843 = vpack.c.b16 %v1526, %v1525
  %v1844 = vpack.c.b16 %v1528, %v1527
  %v1845 = vpack.c.b16 %v1530, %v1529
  %v1846 = vpack.c.b16 %v1532, %v1531
  %v1847 = vpack.c.b16 %v1534, %v1533
  %v1848 = vpack.c.b16 %v1536, %v1535
  %v1849 = vpack.c.b16 %v1538, %v1537
  %v1850 = vpack.c.b16 %v1540, %v1539
  %v1851 = vpack.c.b16 %v1542, %v1541
  %v1852 = vpack.c.b16 %v1544, %v1543
  %v1853 = vpack.c.b16 %v1546, %v1545
  %v1854 = vpack.c.b16 %v1548, %v1547
  %v1855 = vpack.c.b16 %v1550, %v1549
  %v1856 = vpack.c.b16 %v1552, %v1551
  %v1857 = vpack.c.b16 %v1554, %v1553
  %v1858 = vpack.c.b16 %v1556, %v1555
  %v1859 = vpack.c.b16 %v1558, %v1557
  %v1860 = vpack.c.b16 %v1560, %v1559
  %v1861 = vpack.c.b16 %v1562, %v1561
  %v1862 = vpack.c.b16 %v1564, %v1563
  %v1863 = vpack.c.b16 %v1566, %v1565
  %v1864 = vpack.c.b16 %v1568, %v1567
  %v1865 = vpack.c.b16 %v1570, %v1569
  %v1866 = vpack.c.b16 %v1572, %v1571
  %v1867 = vpack.c.b16 %v1574, %v1573
  %v1868 = vpack.c.b16 %v1576, %v1575
  %v1869 = vpack.c.b16 %v1578, %v1577
  %v1870 = vpack.c.b16 %v1580, %v1579
  %v1871 = vpack.c.b16 %v1582, %v1581
  %v1872 = vpack.c.b16 %v1584, %v1583
  %v1873 = vpack.c.b16 %v1586, %v1585
  %v1874 = vpack.c.b16 %v1588, %v1587
  %v1875 = vpack.c.b16 %v1590, %v1589
  %v1876 = vpack.c.b16 %v1592, %v1591
  %v1877 = vpack.c.b16 %v1594, %v1593
  %v1878 = vpack.c.b16 %v1596, %v1595
  %v1879 = vpack.c.b16 %v1598, %v1597
  %v1880 = vpack.c.b16 %v1600, %v1599
  %v1881 = vpack.c.b16 %v1602, %v1601
  %v1882 = vpack.c.b16 %v1604, %v1603
  %v1883 = vpack.c.b16 %v1606, %v1605
  %v1884 = vpack.c.b16 %v1608, %v1607
  %v1885 = vpack.c.b16 %v1610, %v1609
  %v1886 = vpack.c.b16 %v1612, %v1611
  %v1887 = vpack.c.b16 %v1614, %v1613
  %v1888 = vpack.c.b16 %v1616, %v1615
  %v1889 = vpack.c.b16 %v1618, %v1617
  %v1890 = vpack.c.b16 %v1620, %v1619
  %v1891 = vpack.c.b16 %v1622, %v1621
  %v1892 = vpack.c.b16 %v1624, %v1623
  %v1893 = vpack.c.b16 %v1626, %v1625
  %v1894 = vpack.c.b16 %v1628, %v1627
  %v1895 = vpack.c.b16 %v1630, %v1629
  %v1896 = vpack.c.b16 %v1632, %v1631
  %v1897 = vpack.c.b16 %v1634, %v1633
  %v1898 = vpack.c.b16 %v1636, %v1635
  %v1899 = vpack.c.b16 %v1638, %v1637
  %v1900 = vpack.c.b16 %v1640, %v1639
  %v1901 = vpack.c.b16 %v1642, %v1641
  %v1902 = vpack.c.b16 %v1644, %v1643
  %v1903 = vpack.c.b16 %v1646, %v1645
  %v1904 = vpack.c.b16 %v1648, %v1647
  %2161 = vmatpush.bf16.msra.mxu0 %v1656
  %2162 = vmatpush.bf16.msra.mxu0 %v1655
  %2163 = vmatpush.bf16.msra.mxu0 %v1654
  %2164 = vmatpush.bf16.msra.mxu0 %v1653
  %2165 = vmatpush.bf16.msra.mxu0 %v1652
  %2166 = vmatpush.bf16.msra.mxu0 %v1651
  %2167 = vmatpush.bf16.msra.mxu0 %v1650
  %2168 = vmatpush.bf16.msra.mxu0 %v1649
  %2169 = vmatmul.bf16.gmra.mxu0 %v549
  %v2170 = vpop.f32.mrf.mxu0
  %v2171 = vadd.f32 %v542, %v2170
  %v2172 = vpop.f32.mrf.mxu0
  %2173 = vdwg.mxu0
  %2174 = vmatpush.bf16.msra.mxu0 %v1664
  %2175 = vmatpush.bf16.msra.mxu0 %v1663
  %2176 = vmatpush.bf16.msra.mxu0 %v1662
  %2177 = vmatpush.bf16.msra.mxu0 %v1661
  %2178 = vmatpush.bf16.msra.mxu0 %v1660
  %2179 = vmatpush.bf16.msra.mxu0 %v1659
  %2180 = vmatpush.bf16.msra.mxu0 %v1658
  %2181 = vmatpush.bf16.msra.mxu0 %v1657
  %2182 = vmatmul.bf16.gmra.mxu0 %v550
  %v2183 = vpop.f32.mrf.mxu0
  %v2184 = vadd.f32 %v2171, %v2183
  %v2185 = vpop.f32.mrf.mxu0
  %2186 = vdwg.mxu0
  %2187 = vmatpush.bf16.msra.mxu0 %v1672
  %2188 = vmatpush.bf16.msra.mxu0 %v1671
  %2189 = vmatpush.bf16.msra.mxu0 %v1670
  %2190 = vmatpush.bf16.msra.mxu0 %v1669
  %2191 = vmatpush.bf16.msra.mxu0 %v1668
  %2192 = vmatpush.bf16.msra.mxu0 %v1667
  %2193 = vmatpush.bf16.msra.mxu0 %v1666
  %2194 = vmatpush.bf16.msra.mxu0 %v1665
  %2195 = vmatmul.bf16.gmra.mxu0 %v551
  %v2196 = vpop.f32.mrf.mxu0
  %v2197 = vadd.f32 %v2184, %v2196
  %v2198 = vpop.f32.mrf.mxu0
  %2199 = vdwg.mxu0
  %2200 = vmatpush.bf16.msra.mxu0 %v1680
  %2201 = vmatpush.bf16.msra.mxu0 %v1679
  %2202 = vmatpush.bf16.msra.mxu0 %v1678
  %2203 = vmatpush.bf16.msra.mxu0 %v1677
  %2204 = vmatpush.bf16.msra.mxu0 %v1676
  %2205 = vmatpush.bf16.msra.mxu0 %v1675
  %2206 = vmatpush.bf16.msra.mxu0 %v1674
  %2207 = vmatpush.bf16.msra.mxu0 %v1673
  %2208 = vmatmul.bf16.gmra.mxu0 %v552
  %v2209 = vpop.f32.mrf.mxu0
  %v2210 = vadd.f32 %v2197, %v2209
  %v2211 = vpop.f32.mrf.mxu0
  %2212 = vdwg.mxu0
  %2213 = vmatpush.bf16.msra.mxu0 %v1688
  %2214 = vmatpush.bf16.msra.mxu0 %v1687
  %2215 = vmatpush.bf16.msra.mxu0 %v1686
  %2216 = vmatpush.bf16.msra.mxu0 %v1685
  %2217 = vmatpush.bf16.msra.mxu0 %v1684
  %2218 = vmatpush.bf16.msra.mxu0 %v1683
  %2219 = vmatpush.bf16.msra.mxu0 %v1682
  %2220 = vmatpush.bf16.msra.mxu0 %v1681
  %2221 = vmatmul.bf16.gmra.mxu0 %v553
  %v2222 = vpop.f32.mrf.mxu0
  %v2223 = vadd.f32 %v2210, %v2222
  %v2224 = vpop.f32.mrf.mxu0
  %2225 = vdwg.mxu0
  %2226 = vmatpush.bf16.msra.mxu0 %v1696
  %2227 = vmatpush.bf16.msra.mxu0 %v1695
  %2228 = vmatpush.bf16.msra.mxu0 %v1694
  %2229 = vmatpush.bf16.msra.mxu0 %v1693
  %2230 = vmatpush.bf16.msra.mxu0 %v1692
  %2231 = vmatpush.bf16.msra.mxu0 %v1691
  %2232 = vmatpush.bf16.msra.mxu0 %v1690
  %2233 = vmatpush.bf16.msra.mxu0 %v1689
  %2234 = vmatmul.bf16.gmra.mxu0 %v554
  %v2235 = vpop.f32.mrf.mxu0
  %v2236 = vadd.f32 %v2223, %v2235
  %v2237 = vpop.f32.mrf.mxu0
  %2238 = vdwg.mxu0
  %2239 = vmatpush.bf16.msra.mxu0 %v1704
  %2240 = vmatpush.bf16.msra.mxu0 %v1703
  %2241 = vmatpush.bf16.msra.mxu0 %v1702
  %2242 = vmatpush.bf16.msra.mxu0 %v1701
  %2243 = vmatpush.bf16.msra.mxu0 %v1700
  %2244 = vmatpush.bf16.msra.mxu0 %v1699
  %2245 = vmatpush.bf16.msra.mxu0 %v1698
  %2246 = vmatpush.bf16.msra.mxu0 %v1697
  %2247 = vmatmul.bf16.gmra.mxu0 %v555
  %v2248 = vpop.f32.mrf.mxu0
  %v2249 = vadd.f32 %v2236, %v2248
  %v2250 = vpop.f32.mrf.mxu0
  %2251 = vdwg.mxu0
  %2252 = vmatpush.bf16.msra.mxu0 %v1712
  %2253 = vmatpush.bf16.msra.mxu0 %v1711
  %2254 = vmatpush.bf16.msra.mxu0 %v1710
  %2255 = vmatpush.bf16.msra.mxu0 %v1709
  %2256 = vmatpush.bf16.msra.mxu0 %v1708
  %2257 = vmatpush.bf16.msra.mxu0 %v1707
  %2258 = vmatpush.bf16.msra.mxu0 %v1706
  %2259 = vmatpush.bf16.msra.mxu0 %v1705
  %2260 = vmatmul.bf16.gmra.mxu0 %v556
  %v2261 = vpop.f32.mrf.mxu0
  %v2262 = vadd.f32 %v2249, %v2261
  %v2263 = vpop.f32.mrf.mxu0
  %2264 = vdwg.mxu0
  %2265 = vmatpush.bf16.msra.mxu0 %v1720
  %2266 = vmatpush.bf16.msra.mxu0 %v1719
  %2267 = vmatpush.bf16.msra.mxu0 %v1718
  %2268 = vmatpush.bf16.msra.mxu0 %v1717
  %2269 = vmatpush.bf16.msra.mxu0 %v1716
  %2270 = vmatpush.bf16.msra.mxu0 %v1715
  %2271 = vmatpush.bf16.msra.mxu0 %v1714
  %2272 = vmatpush.bf16.msra.mxu0 %v1713
  %2273 = vmatmul.bf16.gmra.mxu0 %v561
  %v2274 = vpop.f32.mrf.mxu0
  %v2275 = vadd.f32 %v2262, %v2274
  %v2276 = vpop.f32.mrf.mxu0
  %2277 = vdwg.mxu0
  %2278 = vmatpush.bf16.msra.mxu0 %v1728
  %2279 = vmatpush.bf16.msra.mxu0 %v1727
  %2280 = vmatpush.bf16.msra.mxu0 %v1726
  %2281 = vmatpush.bf16.msra.mxu0 %v1725
  %2282 = vmatpush.bf16.msra.mxu0 %v1724
  %2283 = vmatpush.bf16.msra.mxu0 %v1723
  %2284 = vmatpush.bf16.msra.mxu0 %v1722
  %2285 = vmatpush.bf16.msra.mxu0 %v1721
  %2286 = vmatmul.bf16.gmra.mxu0 %v562
  %v2287 = vpop.f32.mrf.mxu0
  %v2288 = vadd.f32 %v2275, %v2287
  %v2289 = vpop.f32.mrf.mxu0
  %2290 = vdwg.mxu0
  %2291 = vmatpush.bf16.msra.mxu0 %v1736
  %2292 = vmatpush.bf16.msra.mxu0 %v1735
  %2293 = vmatpush.bf16.msra.mxu0 %v1734
  %2294 = vmatpush.bf16.msra.mxu0 %v1733
  %2295 = vmatpush.bf16.msra.mxu0 %v1732
  %2296 = vmatpush.bf16.msra.mxu0 %v1731
  %2297 = vmatpush.bf16.msra.mxu0 %v1730
  %2298 = vmatpush.bf16.msra.mxu0 %v1729
  %2299 = vmatmul.bf16.gmra.mxu0 %v563
  %v2300 = vpop.f32.mrf.mxu0
  %v2301 = vadd.f32 %v2288, %v2300
  %v2302 = vpop.f32.mrf.mxu0
  %2303 = vdwg.mxu0
  %2304 = vmatpush.bf16.msra.mxu0 %v1744
  %2305 = vmatpush.bf16.msra.mxu0 %v1743
  %2306 = vmatpush.bf16.msra.mxu0 %v1742
  %2307 = vmatpush.bf16.msra.mxu0 %v1741
  %2308 = vmatpush.bf16.msra.mxu0 %v1740
  %2309 = vmatpush.bf16.msra.mxu0 %v1739
  %2310 = vmatpush.bf16.msra.mxu0 %v1738
  %2311 = vmatpush.bf16.msra.mxu0 %v1737
  %2312 = vmatmul.bf16.gmra.mxu0 %v564
  %v2313 = vpop.f32.mrf.mxu0
  %v2314 = vadd.f32 %v2301, %v2313
  %v2315 = vpop.f32.mrf.mxu0
  %2316 = vdwg.mxu0
  %2317 = vmatpush.bf16.msra.mxu0 %v1752
  %2318 = vmatpush.bf16.msra.mxu0 %v1751
  %2319 = vmatpush.bf16.msra.mxu0 %v1750
  %2320 = vmatpush.bf16.msra.mxu0 %v1749
  %2321 = vmatpush.bf16.msra.mxu0 %v1748
  %2322 = vmatpush.bf16.msra.mxu0 %v1747
  %2323 = vmatpush.bf16.msra.mxu0 %v1746
  %2324 = vmatpush.bf16.msra.mxu0 %v1745
  %2325 = vmatmul.bf16.gmra.mxu0 %v565
  %v2326 = vpop.f32.mrf.mxu0
  %v2327 = vadd.f32 %v2314, %v2326
  %v2328 = vpop.f32.mrf.mxu0
  %2329 = vdwg.mxu0
  %2330 = vmatpush.bf16.msra.mxu0 %v1760
  %2331 = vmatpush.bf16.msra.mxu0 %v1759
  %2332 = vmatpush.bf16.msra.mxu0 %v1758
  %2333 = vmatpush.bf16.msra.mxu0 %v1757
  %2334 = vmatpush.bf16.msra.mxu0 %v1756
  %2335 = vmatpush.bf16.msra.mxu0 %v1755
  %2336 = vmatpush.bf16.msra.mxu0 %v1754
  %2337 = vmatpush.bf16.msra.mxu0 %v1753
  %2338 = vmatmul.bf16.gmra.mxu0 %v566
  %v2339 = vpop.f32.mrf.mxu0
  %v2340 = vadd.f32 %v2327, %v2339
  %v2341 = vpop.f32.mrf.mxu0
  %2342 = vdwg.mxu0
  %2343 = vmatpush.bf16.msra.mxu0 %v1768
  %2344 = vmatpush.bf16.msra.mxu0 %v1767
  %2345 = vmatpush.bf16.msra.mxu0 %v1766
  %2346 = vmatpush.bf16.msra.mxu0 %v1765
  %2347 = vmatpush.bf16.msra.mxu0 %v1764
  %2348 = vmatpush.bf16.msra.mxu0 %v1763
  %2349 = vmatpush.bf16.msra.mxu0 %v1762
  %2350 = vmatpush.bf16.msra.mxu0 %v1761
  %2351 = vmatmul.bf16.gmra.mxu0 %v567
  %v2352 = vpop.f32.mrf.mxu0
  %v2353 = vadd.f32 %v2340, %v2352
  %v2354 = vpop.f32.mrf.mxu0
  %2355 = vdwg.mxu0
  %2356 = vmatpush.bf16.msra.mxu0 %v1776
  %2357 = vmatpush.bf16.msra.mxu0 %v1775
  %2358 = vmatpush.bf16.msra.mxu0 %v1774
  %2359 = vmatpush.bf16.msra.mxu0 %v1773
  %2360 = vmatpush.bf16.msra.mxu0 %v1772
  %2361 = vmatpush.bf16.msra.mxu0 %v1771
  %2362 = vmatpush.bf16.msra.mxu0 %v1770
  %2363 = vmatpush.bf16.msra.mxu0 %v1769
  %2364 = vmatmul.bf16.gmra.mxu0 %v568
  %v2365 = vpop.f32.mrf.mxu0
  %v2366 = vadd.f32 %v2353, %v2365
  %v2367 = vpop.f32.mrf.mxu0
  %2368 = vdwg.mxu0
  %2369 = vmatpush.bf16.msra.mxu0 %v1784
  %2370 = vmatpush.bf16.msra.mxu0 %v1783
  %2371 = vmatpush.bf16.msra.mxu0 %v1782
  %2372 = vmatpush.bf16.msra.mxu0 %v1781
  %2373 = vmatpush.bf16.msra.mxu0 %v1780
  %2374 = vmatpush.bf16.msra.mxu0 %v1779
  %2375 = vmatpush.bf16.msra.mxu0 %v1778
  %2376 = vmatpush.bf16.msra.mxu0 %v1777
  %2377 = vmatmul.bf16.gmra.mxu0 %v573
  %v2378 = vpop.f32.mrf.mxu0
  %v2379 = vadd.f32 %v2366, %v2378
  %v2380 = vpop.f32.mrf.mxu0
  %2381 = vdwg.mxu0
  %2382 = vmatpush.bf16.msra.mxu0 %v1792
  %2383 = vmatpush.bf16.msra.mxu0 %v1791
  %2384 = vmatpush.bf16.msra.mxu0 %v1790
  %2385 = vmatpush.bf16.msra.mxu0 %v1789
  %2386 = vmatpush.bf16.msra.mxu0 %v1788
  %2387 = vmatpush.bf16.msra.mxu0 %v1787
  %2388 = vmatpush.bf16.msra.mxu0 %v1786
  %2389 = vmatpush.bf16.msra.mxu0 %v1785
  %2390 = vmatmul.bf16.gmra.mxu0 %v574
  %v2391 = vpop.f32.mrf.mxu0
  %v2392 = vadd.f32 %v2379, %v2391
  %v2393 = vpop.f32.mrf.mxu0
  %2394 = vdwg.mxu0
  %2395 = vmatpush.bf16.msra.mxu0 %v1800
  %2396 = vmatpush.bf16.msra.mxu0 %v1799
  %2397 = vmatpush.bf16.msra.mxu0 %v1798
  %2398 = vmatpush.bf16.msra.mxu0 %v1797
  %2399 = vmatpush.bf16.msra.mxu0 %v1796
  %2400 = vmatpush.bf16.msra.mxu0 %v1795
  %2401 = vmatpush.bf16.msra.mxu0 %v1794
  %2402 = vmatpush.bf16.msra.mxu0 %v1793
  %2403 = vmatmul.bf16.gmra.mxu0 %v575
  %v2404 = vpop.f32.mrf.mxu0
  %v2405 = vadd.f32 %v2392, %v2404
  %v2406 = vpop.f32.mrf.mxu0
  %2407 = vdwg.mxu0
  %2408 = vmatpush.bf16.msra.mxu0 %v1808
  %2409 = vmatpush.bf16.msra.mxu0 %v1807
  %2410 = vmatpush.bf16.msra.mxu0 %v1806
  %2411 = vmatpush.bf16.msra.mxu0 %v1805
  %2412 = vmatpush.bf16.msra.mxu0 %v1804
  %2413 = vmatpush.bf16.msra.mxu0 %v1803
  %2414 = vmatpush.bf16.msra.mxu0 %v1802
  %2415 = vmatpush.bf16.msra.mxu0 %v1801
  %2416 = vmatmul.bf16.gmra.mxu0 %v576
  %v2417 = vpop.f32.mrf.mxu0
  %v2418 = vadd.f32 %v2405, %v2417
  %v2419 = vpop.f32.mrf.mxu0
  %2420 = vdwg.mxu0
  %2421 = vmatpush.bf16.msra.mxu0 %v1816
  %2422 = vmatpush.bf16.msra.mxu0 %v1815
  %2423 = vmatpush.bf16.msra.mxu0 %v1814
  %2424 = vmatpush.bf16.msra.mxu0 %v1813
  %2425 = vmatpush.bf16.msra.mxu0 %v1812
  %2426 = vmatpush.bf16.msra.mxu0 %v1811
  %2427 = vmatpush.bf16.msra.mxu0 %v1810
  %2428 = vmatpush.bf16.msra.mxu0 %v1809
  %2429 = vmatmul.bf16.gmra.mxu0 %v577
  %v2430 = vpop.f32.mrf.mxu0
  %v2431 = vadd.f32 %v2418, %v2430
  %v2432 = vpop.f32.mrf.mxu0
  %2433 = vdwg.mxu0
  %2434 = vmatpush.bf16.msra.mxu0 %v1824
  %2435 = vmatpush.bf16.msra.mxu0 %v1823
  %2436 = vmatpush.bf16.msra.mxu0 %v1822
  %2437 = vmatpush.bf16.msra.mxu0 %v1821
  %2438 = vmatpush.bf16.msra.mxu0 %v1820
  %2439 = vmatpush.bf16.msra.mxu0 %v1819
  %2440 = vmatpush.bf16.msra.mxu0 %v1818
  %2441 = vmatpush.bf16.msra.mxu0 %v1817
  %2442 = vmatmul.bf16.gmra.mxu0 %v578
  %v2443 = vpop.f32.mrf.mxu0
  %v2444 = vadd.f32 %v2431, %v2443
  %v2445 = vpop.f32.mrf.mxu0
  %2446 = vdwg.mxu0
  %2447 = vmatpush.bf16.msra.mxu0 %v1832
  %2448 = vmatpush.bf16.msra.mxu0 %v1831
  %2449 = vmatpush.bf16.msra.mxu0 %v1830
  %2450 = vmatpush.bf16.msra.mxu0 %v1829
  %2451 = vmatpush.bf16.msra.mxu0 %v1828
  %2452 = vmatpush.bf16.msra.mxu0 %v1827
  %2453 = vmatpush.bf16.msra.mxu0 %v1826
  %2454 = vmatpush.bf16.msra.mxu0 %v1825
  %2455 = vmatmul.bf16.gmra.mxu0 %v579
  %v2456 = vpop.f32.mrf.mxu0
  %v2457 = vadd.f32 %v2444, %v2456
  %v2458 = vpop.f32.mrf.mxu0
  %2459 = vdwg.mxu0
  %2460 = vmatpush.bf16.msra.mxu0 %v1840
  %2461 = vmatpush.bf16.msra.mxu0 %v1839
  %2462 = vmatpush.bf16.msra.mxu0 %v1838
  %2463 = vmatpush.bf16.msra.mxu0 %v1837
  %2464 = vmatpush.bf16.msra.mxu0 %v1836
  %2465 = vmatpush.bf16.msra.mxu0 %v1835
  %2466 = vmatpush.bf16.msra.mxu0 %v1834
  %2467 = vmatpush.bf16.msra.mxu0 %v1833
  %2468 = vmatmul.bf16.gmra.mxu0 %v580
  %v2469 = vpop.f32.mrf.mxu0
  %v2470 = vadd.f32 %v2457, %v2469
  %v2471 = vpop.f32.mrf.mxu0
  %2472 = vdwg.mxu0
  %2473 = vmatpush.bf16.msra.mxu0 %v1848
  %2474 = vmatpush.bf16.msra.mxu0 %v1847
  %2475 = vmatpush.bf16.msra.mxu0 %v1846
  %2476 = vmatpush.bf16.msra.mxu0 %v1845
  %2477 = vmatpush.bf16.msra.mxu0 %v1844
  %2478 = vmatpush.bf16.msra.mxu0 %v1843
  %2479 = vmatpush.bf16.msra.mxu0 %v1842
  %2480 = vmatpush.bf16.msra.mxu0 %v1841
  %2481 = vmatmul.bf16.gmra.mxu0 %v585
  %v2482 = vpop.f32.mrf.mxu0
  %v2483 = vadd.f32 %v2470, %v2482
  %v2484 = vpop.f32.mrf.mxu0
  %2485 = vdwg.mxu0
  %2486 = vmatpush.bf16.msra.mxu0 %v1856
  %2487 = vmatpush.bf16.msra.mxu0 %v1855
  %2488 = vmatpush.bf16.msra.mxu0 %v1854
  %2489 = vmatpush.bf16.msra.mxu0 %v1853
  %2490 = vmatpush.bf16.msra.mxu0 %v1852
  %2491 = vmatpush.bf16.msra.mxu0 %v1851
  %2492 = vmatpush.bf16.msra.mxu0 %v1850
  %2493 = vmatpush.bf16.msra.mxu0 %v1849
  %2494 = vmatmul.bf16.gmra.mxu0 %v586
  %v2495 = vpop.f32.mrf.mxu0
  %v2496 = vadd.f32 %v2483, %v2495
  %v2497 = vpop.f32.mrf.mxu0
  %2498 = vdwg.mxu0
  %2499 = vmatpush.bf16.msra.mxu0 %v1864
  %2500 = vmatpush.bf16.msra.mxu0 %v1863
  %2501 = vmatpush.bf16.msra.mxu0 %v1862
  %2502 = vmatpush.bf16.msra.mxu0 %v1861
  %2503 = vmatpush.bf16.msra.mxu0 %v1860
  %2504 = vmatpush.bf16.msra.mxu0 %v1859
  %2505 = vmatpush.bf16.msra.mxu0 %v1858
  %2506 = vmatpush.bf16.msra.mxu0 %v1857
  %2507 = vmatmul.bf16.gmra.mxu0 %v587
  %v2508 = vpop.f32.mrf.mxu0
  %v2509 = vadd.f32 %v2496, %v2508
  %v2510 = vpop.f32.mrf.mxu0
  %2511 = vdwg.mxu0
  %2512 = vmatpush.bf16.msra.mxu0 %v1872
  %2513 = vmatpush.bf16.msra.mxu0 %v1871
  %2514 = vmatpush.bf16.msra.mxu0 %v1870
  %2515 = vmatpush.bf16.msra.mxu0 %v1869
  %2516 = vmatpush.bf16.msra.mxu0 %v1868
  %2517 = vmatpush.bf16.msra.mxu0 %v1867
  %2518 = vmatpush.bf16.msra.mxu0 %v1866
  %2519 = vmatpush.bf16.msra.mxu0 %v1865
  %2520 = vmatmul.bf16.gmra.mxu0 %v588
  %v2521 = vpop.f32.mrf.mxu0
  %v2522 = vadd.f32 %v2509, %v2521
  %v2523 = vpop.f32.mrf.mxu0
  %2524 = vdwg.mxu0
  %2525 = vmatpush.bf16.msra.mxu0 %v1880
  %2526 = vmatpush.bf16.msra.mxu0 %v1879
  %2527 = vmatpush.bf16.msra.mxu0 %v1878
  %2528 = vmatpush.bf16.msra.mxu0 %v1877
  %2529 = vmatpush.bf16.msra.mxu0 %v1876
  %2530 = vmatpush.bf16.msra.mxu0 %v1875
  %2531 = vmatpush.bf16.msra.mxu0 %v1874
  %2532 = vmatpush.bf16.msra.mxu0 %v1873
  %2533 = vmatmul.bf16.gmra.mxu0 %v589
  %v2534 = vpop.f32.mrf.mxu0
  %v2535 = vadd.f32 %v2522, %v2534
  %v2536 = vpop.f32.mrf.mxu0
  %2537 = vdwg.mxu0
  %2538 = vmatpush.bf16.msra.mxu0 %v1888
  %2539 = vmatpush.bf16.msra.mxu0 %v1887
  %2540 = vmatpush.bf16.msra.mxu0 %v1886
  %2541 = vmatpush.bf16.msra.mxu0 %v1885
  %2542 = vmatpush.bf16.msra.mxu0 %v1884
  %2543 = vmatpush.bf16.msra.mxu0 %v1883
  %2544 = vmatpush.bf16.msra.mxu0 %v1882
  %2545 = vmatpush.bf16.msra.mxu0 %v1881
  %2546 = vmatmul.bf16.gmra.mxu0 %v590
  %v2547 = vpop.f32.mrf.mxu0
  %v2548 = vadd.f32 %v2535, %v2547
  %v2549 = vpop.f32.mrf.mxu0
  %2550 = vdwg.mxu0
  %2551 = vmatpush.bf16.msra.mxu0 %v1896
  %2552 = vmatpush.bf16.msra.mxu0 %v1895
  %2553 = vmatpush.bf16.msra.mxu0 %v1894
  %2554 = vmatpush.bf16.msra.mxu0 %v1893
  %2555 = vmatpush.bf16.msra.mxu0 %v1892
  %2556 = vmatpush.bf16.msra.mxu0 %v1891
  %2557 = vmatpush.bf16.msra.mxu0 %v1890
  %2558 = vmatpush.bf16.msra.mxu0 %v1889
  %2559 = vmatmul.bf16.gmra.mxu0 %v591
  %v2560 = vpop.f32.mrf.mxu0
  %v2561 = vadd.f32 %v2548, %v2560
  %v2562 = vpop.f32.mrf.mxu0
  %2563 = vdwg.mxu0
  %2564 = vmatpush.bf16.msra.mxu0 %v1904
  %2565 = vmatpush.bf16.msra.mxu0 %v1903
  %2566 = vmatpush.bf16.msra.mxu0 %v1902
  %2567 = vmatpush.bf16.msra.mxu0 %v1901
  %2568 = vmatpush.bf16.msra.mxu0 %v1900
  %2569 = vmatpush.bf16.msra.mxu0 %v1899
  %2570 = vmatpush.bf16.msra.mxu0 %v1898
  %2571 = vmatpush.bf16.msra.mxu0 %v1897
  %2572 = vmatmul.bf16.gmra.mxu0 %v592
  %v2573 = vpop.f32.mrf.mxu0
  %v2574 = vadd.f32 %v2561, %v2573
  %v2575 = vpop.f32.mrf.mxu0
  %2576 = vdwg.mxu0
  %v2577 = vmax.f32 %v2574, 0.0
  %v2578 = vld [vmem:[%s3] sm:$0xff]
  %v2579 = vld [vmem:[%s3 + $0x8] sm:$0xff]
  %v2580 = vld [vmem:[%s3 + $0x10] sm:$0xff]
  %v2581 = vld [vmem:[%s3 + $0x18] sm:$0xff]
  %v2582 = vld [vmem:[%s3 + $0x20] sm:$0xff]
  %v2583 = vld [vmem:[%s3 + $0x28] sm:$0xff]
  %v2584 = vld [vmem:[%s3 + $0x30] sm:$0xff]
  %v2585 = vld [vmem:[%s3 + $0x38] sm:$0xff]
  %v2586 = vld [vmem:[%s4] sm:$0x1]
  %v2588 = vperm.slane %v2586, 0
  %vm2590 = vcmask 523264
  %v2592 = vsel %vm2590, %v2577, 0
  %2594 = vmatpush.msra.mxu0 0.0
  %2595 = vmatpush.msra.mxu0 0.0
  %2596 = vmatpush.msra.mxu0 0.0
  %2597 = vmatpush.msra.mxu0 0.0
  %2598 = vmatpush.msra.mxu0 0.0
  %2599 = vmatpush.msra.mxu0 0.0
  %2600 = vmatpush.msra.mxu0 0.0
  %2601 = vmatpush.msra.mxu0 0.0
  %2602 = vmatpush.msra.mxu0 %v2585
  %2603 = vmatpush.msra.mxu0 %v2584
  %2604 = vmatpush.msra.mxu0 %v2583
  %2605 = vmatpush.msra.mxu0 %v2582
  %2606 = vmatpush.msra.mxu0 %v2581
  %2607 = vmatpush.msra.mxu0 %v2580
  %2608 = vmatpush.msra.mxu0 %v2579
  %2609 = vmatpush.msra.mxu0 %v2578
  %2610 = vmatmul.f32.gmra.mxu0 %v2592
  %v2611 = vpop.f32.mrf.mxu0
  %v2612 = vadd.f32 %v2588, %v2611
  %2613 = vdwg.mxu0
  %vm2614 = vcmask 76800
  %2615 = vst.msk [vmem:[%s5] sm:$0xf] %vm2614, %v2612
  // Predicated region
  $region22: #{vgg5_forward.3} parent=0 // pred_check
    _
  $region23: #{vgg5_forward.3} parent=0 // pred_check_branch
    %2617 = sbr.rel (0) target = $region25
  $region24: #{vgg5_forward.3} parent=0 // pred_region
    _
  $region25: #{vgg5_forward.3} parent=0 // pred_fallthru
    _
  // Predicated region
  $region26: #{vgg5_forward.3} parent=0 // pred_check
    _
  $region27: #{vgg5_forward.3} parent=0 // pred_check_branch
    %2619 = sbr.rel (0) target = $region29
  $region28: #{vgg5_forward.3} parent=0 // pred_region
    _
  $region29: #{vgg5_forward.3} parent=0 // pred_fallthru
    _

// kernel: vgg5_forward.2
$region0: #{vgg5_forward.2}
  #allocation0 [shape = 'u32[]', space=smem, size = 0x4, offset = 0x4, fixed_abs, tag = 'smem constant byte address 0x4 - core index']
  #allocation1 [shape = 'u32[72,128]{1,0:T(1,128)}', space=vmem, size = 0x9000, scoped, tag = 'internal scratch']
  #allocation2 [shape = 'bf16[2,10,10,64]{3,2,1,0:T(8,128)(2,1)}', space=vmem, size = 0x14000, scoped, tag = 'scratch operand']
  %s0 = inlined_call_operand.vmem [shape: bf16[4,64,27], index: 0, kind: input, shape index: {}]
  %s1 = inlined_call_operand.vmem [shape: bf16[27,64], index: 1, kind: input, shape index: {}]
  %s2 = inlined_call_operand.vmem [shape: f32[1,64], index: 2, kind: input, shape index: {}]
  %s3 = inlined_call_operand.vmem [shape: f32[1,64], index: 3, kind: input, shape index: {}]
  %s4 = inlined_call_operand.vmem [shape: bf16[576,64], index: 4, kind: input, shape index: {}]
  %s5 = inlined_call_operand.vmem [shape: f32[1,64], index: 5, kind: input, shape index: {}]
  %s6 = inlined_call_operand.vmem [shape: f32[1,64], index: 6, kind: input, shape index: {}]
  %s7 = inlined_call_operand.vmem [shape: bf16[576,64], index: 7, kind: input, shape index: {}]
  %s8 = inlined_call_operand.vmem [shape: f32[1,64], index: 8, kind: input, shape index: {}]
  %s9 = inlined_call_operand.vmem [shape: f32[1,64], index: 9, kind: input, shape index: {}]
  %s10 = inlined_call_operand.vmem [shape: bf16[4,64,64], index: 10, kind: output, shape index: {}]
  %s11 = sld [smem:[#allocation0]]
  $region73: #{vgg5_forward.2} parent=0
    _
  %s13 = ssub.s32 1, %s11
  %s14 = scalar_select 0, %s13, %s11
  loop: start=0, step=1, limit=4
  $region2: #{vgg5_forward.2} parent=0 // loop_pre_header
    _
  $region3: #{vgg5_forward.2} parent=0 // loop_header
    %s16 = sphi 0, %s20
    %p17 = scmp.ge.s32.totalorder %s16, 4
    %s26 = sphi 0, %s28
    %s29 = sphi 0, %s26
    %s30 = sphi 0, %s29
    %s46 = sphi 0, %s30
    %s50 = sphi 0, %s50
    %s52 = sphi 0, %s50
    %s53 = sphi 0, %s52
    %s67 = sphi 0, %s53
    %s71 = sphi 0, %s71
    %s73 = sphi 0, %s71
    %s74 = sphi 0, %s73
    %s88 = sphi 0, %s74
    %s92 = sphi 0, %s92
    %s94 = sphi 0, %s92
    %s95 = sphi 0, %s94
    %s109 = sphi 0, %s95
    %s113 = sphi 0, %s113
    %s115 = sphi 0, %s113
    %s116 = sphi 0, %s115
    %s130 = sphi 0, %s116
    %s134 = sphi 0, %s134
    %s136 = sphi 0, %s134
    %s137 = sphi 0, %s136
    %s151 = sphi 0, %s137
    %s155 = sphi 0, %s155
    %s157 = sphi 0, %s155
    %s158 = sphi 0, %s157
    %s172 = sphi 0, %s158
    %s176 = sphi 0, %s176
    %s178 = sphi 0, %s176
    %s179 = sphi 0, %s178
    %s193 = sphi 0, %s179
    %s197 = sphi 0, %s197
    %s199 = sphi 0, %s197
    %s200 = sphi 0, %s199
    %s214 = sphi 0, %s200
    %s218 = sphi 0, %s218
    %s220 = sphi 0, %s218
    %s221 = sphi 0, %s220
    %s235 = sphi 0, %s221
    %s241 = sphi 0, %s243
    %s244 = sphi 0, %s241
    %s245 = sphi 0, %s244
    %s261 = sphi 0, %s245
  $region4: #{vgg5_forward.2} parent=0 // loop_header_branch
    %19 = sbr.rel (%p17) target = $region8
  $region5: #{vgg5_forward.2} parent=0 // loop_body
    %s21 = ssub.s32 %s16, 1
    %s22 = ssub.s32 %s16, 2
    %s23 = sadd.s32 %s16, 1
    %s24 = ssub.s32 %s16, %s23
    %p25 = scmp.eq.s32.totalorder %s24, 0
    %s27 = sadd.s32 %s26, 1
    %s28 = scalar_select %p25, %s26, %s27
    %p31 = pneg %p25
    %p32 = scmp.eq.s32.totalorder %s16, 1
    %p33 = por %p31, %p32
    %p34 = scmp.ne.s32.totalorder %s26, %s29
    %p35 = scmp.eq.s32.totalorder %s16, 0
    %p36 = por %p34, %p35
    %p37 = scmp.ne.s32.totalorder %s26, %s29
    %p38 = scmp.eq.s32.totalorder %s21, 1
    %p39 = por %p37, %p38
    %p40 = scmp.ne.s32.totalorder %s29, %s30
    %p41 = scmp.eq.s32.totalorder %s21, 0
    %p42 = por %p40, %p41
    %p43 = scmp.ne.s32.totalorder %s29, %s30
    %p44 = scmp.eq.s32.totalorder %s22, 1
    %p45 = por %p43, %p44
    %p47 = scmp.ne.s32.totalorder %s30, %s46
    %p48 = scmp.eq.s32.totalorder %s22, 0
    %p49 = por %p47, %p48
    %s51 = sadd.s32 %s50, 1
    %p54 = scmp.eq.s32.totalorder %s16, 1
    %p55 = scmp.ne.s32.totalorder %s50, %s52
    %p56 = scmp.eq.s32.totalorder %s16, 0
    %p57 = por %p55, %p56
    %p58 = scmp.ne.s32.totalorder %s50, %s52
    %p59 = scmp.eq.s32.totalorder %s21, 1
    %p60 = por %p58, %p59
    %p61 = scmp.ne.s32.totalorder %s52, %s53
    %p62 = scmp.eq.s32.totalorder %s21, 0
    %p63 = por %p61, %p62
    %p64 = scmp.ne.s32.totalorder %s52, %s53
    %p65 = scmp.eq.s32.totalorder %s22, 1
    %p66 = por %p64, %p65
    %p68 = scmp.ne.s32.totalorder %s53, %s67
    %p69 = scmp.eq.s32.totalorder %s22, 0
    %p70 = por %p68, %p69
    %s72 = sadd.s32 %s71, 1
    %p75 = scmp.eq.s32.totalorder %s16, 1
    %p76 = scmp.ne.s32.totalorder %s71, %s73
    %p77 = scmp.eq.s32.totalorder %s16, 0
    %p78 = por %p76, %p77
    %p79 = scmp.ne.s32.totalorder %s71, %s73
    %p80 = scmp.eq.s32.totalorder %s21, 1
    %p81 = por %p79, %p80
    %p82 = scmp.ne.s32.totalorder %s73, %s74
    %p83 = scmp.eq.s32.totalorder %s21, 0
    %p84 = por %p82, %p83
    %p85 = scmp.ne.s32.totalorder %s73, %s74
    %p86 = scmp.eq.s32.totalorder %s22, 1
    %p87 = por %p85, %p86
    %p89 = scmp.ne.s32.totalorder %s74, %s88
    %p90 = scmp.eq.s32.totalorder %s22, 0
    %p91 = por %p89, %p90
    %s93 = sadd.s32 %s92, 1
    %p96 = scmp.eq.s32.totalorder %s16, 1
    %p97 = scmp.ne.s32.totalorder %s92, %s94
    %p98 = scmp.eq.s32.totalorder %s16, 0
    %p99 = por %p97, %p98
    %p100 = scmp.ne.s32.totalorder %s92, %s94
    %p101 = scmp.eq.s32.totalorder %s21, 1
    %p102 = por %p100, %p101
    %p103 = scmp.ne.s32.totalorder %s94, %s95
    %p104 = scmp.eq.s32.totalorder %s21, 0
    %p105 = por %p103, %p104
    %p106 = scmp.ne.s32.totalorder %s94, %s95
    %p107 = scmp.eq.s32.totalorder %s22, 1
    %p108 = por %p106, %p107
    %p110 = scmp.ne.s32.totalorder %s95, %s109
    %p111 = scmp.eq.s32.totalorder %s22, 0
    %p112 = por %p110, %p111
    %s114 = sadd.s32 %s113, 1
    %p117 = scmp.eq.s32.totalorder %s16, 1
    %p118 = scmp.ne.s32.totalorder %s113, %s115
    %p119 = scmp.eq.s32.totalorder %s16, 0
    %p120 = por %p118, %p119
    %p121 = scmp.ne.s32.totalorder %s113, %s115
    %p122 = scmp.eq.s32.totalorder %s21, 1
    %p123 = por %p121, %p122
    %p124 = scmp.ne.s32.totalorder %s115, %s116
    %p125 = scmp.eq.s32.totalorder %s21, 0
    %p126 = por %p124, %p125
    %p127 = scmp.ne.s32.totalorder %s115, %s116
    %p128 = scmp.eq.s32.totalorder %s22, 1
    %p129 = por %p127, %p128
    %p131 = scmp.ne.s32.totalorder %s116, %s130
    %p132 = scmp.eq.s32.totalorder %s22, 0
    %p133 = por %p131, %p132
    %s135 = sadd.s32 %s134, 1
    %p138 = scmp.eq.s32.totalorder %s16, 1
    %p139 = scmp.ne.s32.totalorder %s134, %s136
    %p140 = scmp.eq.s32.totalorder %s16, 0
    %p141 = por %p139, %p140
    %p142 = scmp.ne.s32.totalorder %s134, %s136
    %p143 = scmp.eq.s32.totalorder %s21, 1
    %p144 = por %p142, %p143
    %p145 = scmp.ne.s32.totalorder %s136, %s137
    %p146 = scmp.eq.s32.totalorder %s21, 0
    %p147 = por %p145, %p146
    %p148 = scmp.ne.s32.totalorder %s136, %s137
    %p149 = scmp.eq.s32.totalorder %s22, 1
    %p150 = por %p148, %p149
    %p152 = scmp.ne.s32.totalorder %s137, %s151
    %p153 = scmp.eq.s32.totalorder %s22, 0
    %p154 = por %p152, %p153
    %s156 = sadd.s32 %s155, 1
    %p159 = scmp.eq.s32.totalorder %s16, 1
    %p160 = scmp.ne.s32.totalorder %s155, %s157
    %p161 = scmp.eq.s32.totalorder %s16, 0
    %p162 = por %p160, %p161
    %p163 = scmp.ne.s32.totalorder %s155, %s157
    %p164 = scmp.eq.s32.totalorder %s21, 1
    %p165 = por %p163, %p164
    %p166 = scmp.ne.s32.totalorder %s157, %s158
    %p167 = scmp.eq.s32.totalorder %s21, 0
    %p168 = por %p166, %p167
    %p169 = scmp.ne.s32.totalorder %s157, %s158
    %p170 = scmp.eq.s32.totalorder %s22, 1
    %p171 = por %p169, %p170
    %p173 = scmp.ne.s32.totalorder %s158, %s172
    %p174 = scmp.eq.s32.totalorder %s22, 0
    %p175 = por %p173, %p174
    %s177 = sadd.s32 %s176, 1
    %p180 = scmp.eq.s32.totalorder %s16, 1
    %p181 = scmp.ne.s32.totalorder %s176, %s178
    %p182 = scmp.eq.s32.totalorder %s16, 0
    %p183 = por %p181, %p182
    %p184 = scmp.ne.s32.totalorder %s176, %s178
    %p185 = scmp.eq.s32.totalorder %s21, 1
    %p186 = por %p184, %p185
    %p187 = scmp.ne.s32.totalorder %s178, %s179
    %p188 = scmp.eq.s32.totalorder %s21, 0
    %p189 = por %p187, %p188
    %p190 = scmp.ne.s32.totalorder %s178, %s179
    %p191 = scmp.eq.s32.totalorder %s22, 1
    %p192 = por %p190, %p191
    %p194 = scmp.ne.s32.totalorder %s179, %s193
    %p195 = scmp.eq.s32.totalorder %s22, 0
    %p196 = por %p194, %p195
    %s198 = sadd.s32 %s197, 1
    %p201 = scmp.eq.s32.totalorder %s16, 1
    %p202 = scmp.ne.s32.totalorder %s197, %s199
    %p203 = scmp.eq.s32.totalorder %s16, 0
    %p204 = por %p202, %p203
    %p205 = scmp.ne.s32.totalorder %s197, %s199
    %p206 = scmp.eq.s32.totalorder %s21, 1
    %p207 = por %p205, %p206
    %p208 = scmp.ne.s32.totalorder %s199, %s200
    %p209 = scmp.eq.s32.totalorder %s21, 0
    %p210 = por %p208, %p209
    %p211 = scmp.ne.s32.totalorder %s199, %s200
    %p212 = scmp.eq.s32.totalorder %s22, 1
    %p213 = por %p211, %p212
    %p215 = scmp.ne.s32.totalorder %s200, %s214
    %p216 = scmp.eq.s32.totalorder %s22, 0
    %p217 = por %p215, %p216
    %s219 = sadd.s32 %s218, 1
    %p222 = scmp.eq.s32.totalorder %s16, 1
    %p223 = scmp.ne.s32.totalorder %s218, %s220
    %p224 = scmp.eq.s32.totalorder %s16, 0
    %p225 = por %p223, %p224
    %p226 = scmp.ne.s32.totalorder %s218, %s220
    %p227 = scmp.eq.s32.totalorder %s21, 1
    %p228 = por %p226, %p227
    %p229 = scmp.ne.s32.totalorder %s220, %s221
    %p230 = scmp.eq.s32.totalorder %s21, 0
    %p231 = por %p229, %p230
    %p232 = scmp.ne.s32.totalorder %s220, %s221
    %p233 = scmp.eq.s32.totalorder %s22, 1
    %p234 = por %p232, %p233
    %p236 = scmp.ne.s32.totalorder %s221, %s235
    %p237 = scmp.eq.s32.totalorder %s22, 0
    %p238 = por %p236, %p237
    %s239 = ssub.s32 %s16, %s23
    %p240 = scmp.eq.s32.totalorder %s239, 0
    %s242 = sadd.s32 %s241, 1
    %s243 = scalar_select %p240, %s241, %s242
    %p246 = pneg %p240
    %p247 = scmp.eq.s32.totalorder %s16, 1
    %p248 = por %p246, %p247
    %p249 = scmp.ne.s32.totalorder %s241, %s244
    %p250 = scmp.eq.s32.totalorder %s16, 0
    %p251 = por %p249, %p250
    %p252 = scmp.ne.s32.totalorder %s241, %s244
    %p253 = scmp.eq.s32.totalorder %s21, 1
    %p254 = por %p252, %p253
    %p255 = scmp.ne.s32.totalorder %s244, %s245
    %p256 = scmp.eq.s32.totalorder %s21, 0
    %p257 = por %p255, %p256
    %p258 = scmp.ne.s32.totalorder %s244, %s245
    %p259 = scmp.eq.s32.totalorder %s22, 1
    %p260 = por %p258, %p259
    %p262 = scmp.ne.s32.totalorder %s245, %s261
    %p263 = scmp.eq.s32.totalorder %s22, 0
    %p264 = por %p262, %p263
    %p265 = scmp.le.s32.totalorder 1, %s16
    %p266 = scmp.lt.s32.totalorder %s16, 3
    %p267 = pnand %p265, %p266
    %p268 = pneg %p267
    // Predicated region
    $region9: #{vgg5_forward.2} parent=5 // pred_check
      _
    $region10: #{vgg5_forward.2} parent=5 // pred_check_branch
      %270 = sbr.rel (%p267) target = $region12
    $region11: #{vgg5_forward.2} parent=5 // pred_region
      %s271 = ssub.s32 %s16, 1
      // Predicated region
      $region13: #{vgg5_forward.2} parent=11 // pred_check
        %p272 = pneg %p63
      $region14: #{vgg5_forward.2} parent=11 // pred_check_branch
        %274 = sbr.rel (%p272) target = $region16
      $region15: #{vgg5_forward.2} parent=11 // pred_region
        _
      $region16: #{vgg5_forward.2} parent=11 // pred_fallthru
        _
      // Predicated region
      $region17: #{vgg5_forward.2} parent=11 // pred_check
        %p275 = pneg %p84
      $region18: #{vgg5_forward.2} parent=11 // pred_check_branch
        %277 = sbr.rel (%p275) target = $region20
      $region19: #{vgg5_forward.2} parent=11 // pred_region
        _
      $region20: #{vgg5_forward.2} parent=11 // pred_fallthru
        _
      // Predicated region
      $region21: #{vgg5_forward.2} parent=11 // pred_check
        %p278 = pneg %p105
      $region22: #{vgg5_forward.2} parent=11 // pred_check_branch
        %280 = sbr.rel (%p278) target = $region24
      $region23: #{vgg5_forward.2} parent=11 // pred_region
        _
      $region24: #{vgg5_forward.2} parent=11 // pred_fallthru
        _
      // Predicated region
      $region25: #{vgg5_forward.2} parent=11 // pred_check
        %p281 = pneg %p126
      $region26: #{vgg5_forward.2} parent=11 // pred_check_branch
        %283 = sbr.rel (%p281) target = $region28
      $region27: #{vgg5_forward.2} parent=11 // pred_region
        _
      $region28: #{vgg5_forward.2} parent=11 // pred_fallthru
        _
      // Predicated region
      $region29: #{vgg5_forward.2} parent=11 // pred_check
        %p284 = pneg %p147
      $region30: #{vgg5_forward.2} parent=11 // pred_check_branch
        %286 = sbr.rel (%p284) target = $region32
      $region31: #{vgg5_forward.2} parent=11 // pred_region
        _
      $region32: #{vgg5_forward.2} parent=11 // pred_fallthru
        _
      // Predicated region
      $region33: #{vgg5_forward.2} parent=11 // pred_check
        %p287 = pneg %p168
      $region34: #{vgg5_forward.2} parent=11 // pred_check_branch
        %289 = sbr.rel (%p287) target = $region36
      $region35: #{vgg5_forward.2} parent=11 // pred_region
        _
      $region36: #{vgg5_forward.2} parent=11 // pred_fallthru
        _
      // Predicated region
      $region37: #{vgg5_forward.2} parent=11 // pred_check
        %p290 = pneg %p189
      $region38: #{vgg5_forward.2} parent=11 // pred_check_branch
        %292 = sbr.rel (%p290) target = $region40
      $region39: #{vgg5_forward.2} parent=11 // pred_region
        _
      $region40: #{vgg5_forward.2} parent=11 // pred_fallthru
        _
      // Predicated region
      $region41: #{vgg5_forward.2} parent=11 // pred_check
        %p293 = pneg %p210
      $region42: #{vgg5_forward.2} parent=11 // pred_check_branch
        %295 = sbr.rel (%p293) target = $region44
      $region43: #{vgg5_forward.2} parent=11 // pred_region
        _
      $region44: #{vgg5_forward.2} parent=11 // pred_fallthru
        _
      // Predicated region
      $region45: #{vgg5_forward.2} parent=11 // pred_check
        %p296 = pneg %p231
      $region46: #{vgg5_forward.2} parent=11 // pred_check_branch
        %298 = sbr.rel (%p296) target = $region48
      $region47: #{vgg5_forward.2} parent=11 // pred_region
        _
      $region48: #{vgg5_forward.2} parent=11 // pred_fallthru
        _
    $region12: #{vgg5_forward.2} parent=5 // pred_fallthru
      _
    %p299 = scmp.lt.s32.totalorder %s16, 2
    // Predicated region
    $region49: #{vgg5_forward.2} parent=5 // pred_check
      %p300 = pneg %p299
    $region50: #{vgg5_forward.2} parent=5 // pred_check_branch
      %302 = sbr.rel (%p300) target = $region52
    $region51: #{vgg5_forward.2} parent=5 // pred_region
      // Predicated region
      $region53: #{vgg5_forward.2} parent=51 // pred_check
        %p303 = pneg %p36
      $region54: #{vgg5_forward.2} parent=51 // pred_check_branch
        %305 = sbr.rel (%p303) target = $region56
      $region55: #{vgg5_forward.2} parent=51 // pred_region
        %s306 = smul.u32 2, %s16
        %p307 = scmp.lt.s32.totalorder %s306, 3
        %s308 = scalar_select %p307, %s306, 3
        %s309 = smul.addr %s308, 8
        %s310 = smul.addr %s309, 4
        %s311 = scalar_lea.vmem %s0, %s310
        %s312 = smul.u32 2, %s16
      $region56: #{vgg5_forward.2} parent=51 // pred_fallthru
        _
    $region52: #{vgg5_forward.2} parent=5 // pred_fallthru
      _
    %p313 = scmp.le.s32.totalorder 1, %s16
    %p314 = scmp.lt.s32.totalorder %s16, 3
    %p315 = pnand %p313, %p314
    %p316 = pneg %p315
    // Predicated region
    $region57: #{vgg5_forward.2} parent=5 // pred_check
      _
    $region58: #{vgg5_forward.2} parent=5 // pred_check_branch
      %318 = sbr.rel (%p315) target = $region60
    $region59: #{vgg5_forward.2} parent=5 // pred_region
      %s319 = ssub.s32 %s16, 1
      %s320 = smul.u32 2, %s21
      %p321 = scmp.lt.s32.totalorder %s320, 3
      %s322 = scalar_select %p321, %s320, 3
      %s323 = smul.addr %s322, 8
      %s324 = smul.addr %s323, 4
      %s325 = scalar_lea.vmem %s0, %s324
      %p326 = pneg %p42
      %p327 = pneg %p39
      %p328 = pneg %p63
      %p329 = pneg %p60
      %p330 = pneg %p84
      %p331 = pneg %p81
      %p332 = pneg %p105
      %p333 = pneg %p102
      %p334 = pneg %p126
      %p335 = pneg %p123
      %p336 = pneg %p147
      %p337 = pneg %p144
      %p338 = pneg %p168
      %p339 = pneg %p165
      %p340 = pneg %p189
      %p341 = pneg %p186
      %p342 = pneg %p210
      %p343 = pneg %p207
      %p344 = pneg %p231
      %p345 = pneg %p228
      %p346 = pneg %p257
      %p347 = pneg %p254
      %s348 = smul.u32 2, %s21
      %p349 = scmp.lt.s32.totalorder %s348, 3
      %s350 = scalar_select %p349, %s348, 3
      %s351 = smul.addr %s350, 8
      %s352 = smul.addr %s351, 4
      %s353 = scalar_lea.vmem %s10, %s352
      %s354 = smul.u32 2, %s21
      %p355 = scmp.lt.s32.totalorder %s354, 3
      %s356 = scalar_select %p355, %s354, 3
      %s357 = smul.addr %s356, 8
      %s358 = smul.addr %s357, 4
      %s359 = scalar_lea.vmem %s0, %s358
      %s360 = smul.u32 2, %s21
      %s361 = smul.u32 2, %s21
      %p362 = scmp.lt.s32.totalorder %s361, 3
      %s363 = scalar_select %p362, %s361, 3
      %s364 = smul.addr %s363, 8
      %s365 = smul.addr %s364, 4
      %s366 = scalar_lea.vmem %s10, %s365
      %s367 = smul.u32 2, %s21
      %v369 = vld [vmem:[%s359] sm:$0xf]
      %v370 = vld [vmem:[%s359 + $0x4] sm:$0xf]
      %v371 = vld [vmem:[%s359 + $0x8] sm:$0xf]
      %v372 = vld [vmem:[%s359 + $0xc] sm:$0xf]
      %v373 = vld [vmem:[%s359 + $0x10] sm:$0xf]
      %v374 = vld [vmem:[%s359 + $0x14] sm:$0xf]
      %v375 = vld [vmem:[%s359 + $0x18] sm:$0xf]
      %v376 = vld [vmem:[%s359 + $0x1c] sm:$0xf]
      %v377 = vld [vmem:[%s359 + $0x20] sm:$0xf]
      %v378 = vld [vmem:[%s359 + $0x24] sm:$0xf]
      %v379 = vld [vmem:[%s359 + $0x28] sm:$0xf]
      %v380 = vld [vmem:[%s359 + $0x2c] sm:$0xf]
      %v381 = vld [vmem:[%s359 + $0x30] sm:$0xf]
      %v382 = vld [vmem:[%s359 + $0x34] sm:$0xf]
      %v383 = vld [vmem:[%s359 + $0x38] sm:$0xf]
      %v384 = vld [vmem:[%s359 + $0x3c] sm:$0xf]
      %v385 = vld [vmem:[%s1] sm:$0xf]
      %v386 = vld [vmem:[%s1 + $0x4] sm:$0xf]
      %v387 = vld [vmem:[%s1 + $0x8] sm:$0xf]
      %v388 = vld [vmem:[%s1 + $0xc] sm:$0x3]
      %v405 = vunpack.c.l.b16 %v369
      %v406 = vunpack.c.l.b16 %v370
      %v407 = vunpack.c.l.b16 %v371
      %v408 = vunpack.c.l.b16 %v372
      %v409 = vunpack.c.l.b16 %v373
      %v410 = vunpack.c.l.b16 %v374
      %v411 = vunpack.c.l.b16 %v375
      %v412 = vunpack.c.l.b16 %v376
      %v413 = vunpack.c.l.b16 %v377
      %v414 = vunpack.c.l.b16 %v378
      %v415 = vunpack.c.l.b16 %v379
      %v416 = vunpack.c.l.b16 %v380
      %v417 = vunpack.c.l.b16 %v381
      %v418 = vunpack.c.l.b16 %v382
      %v419 = vunpack.c.l.b16 %v383
      %v420 = vunpack.c.l.b16 %v384
      %v421 = vpack.c.b16 %v406, %v405
      %v422 = vpack.c.b16 %v408, %v407
      %v423 = vpack.c.b16 %v410, %v409
      %v424 = vpack.c.b16 %v412, %v411
      %v425 = vpack.c.b16 %v414, %v413
      %v426 = vpack.c.b16 %v416, %v415
      %v427 = vpack.c.b16 %v418, %v417
      %v428 = vpack.c.b16 %v420, %v419
      %v433 = vunpack.c.l.b16 %v385
      %v434 = vunpack.c.l.b16 %v386
      %v435 = vunpack.c.l.b16 %v387
      %v436 = vunpack.c.l.b16 %v388
      %v437 = vpack.c.b16 %v434, %v433
      %v438 = vpack.c.b16 %v436, %v435
      %vm440 = vcmask 220160
      %v442 = vsel %vm440, %v421, 0
      %v445 = vsel %vm440, %v422, 0
      %v448 = vsel %vm440, %v423, 0
      %v451 = vsel %vm440, %v424, 0
      %v454 = vsel %vm440, %v425, 0
      %v457 = vsel %vm440, %v426, 0
      %v460 = vsel %vm440, %v427, 0
      %v463 = vsel %vm440, %v428, 0
      %vm465 = vcmask 1044480
      %vm466 = vcmask 1045504
      %v467 = vsel %vm465, 4294967295, 65535
      %v468 = vsel %vm466, %v467, 0
      %v470 = vand.u32 %v438, %v468
      %472 = vmatpush.bf16.msra.mxu0 0
      %473 = vmatpush.bf16.msra.mxu0 0
      %474 = vmatpush.bf16.msra.mxu0 0
      %475 = vmatpush.bf16.msra.mxu0 0
      %476 = vmatpush.bf16.msra.mxu0 0
      %477 = vmatpush.bf16.msra.mxu0 0
      %478 = vmatpush.bf16.msra.mxu0 %v470
      %479 = vmatpush.bf16.msra.mxu0 %v437
      %480 = vmatmul.bf16.gmra.mxu0 %v442
      %v481 = vpop.f32.mrf.mxu0
      %v482 = vadd.f32 0.0, %v481
      %v483 = vpop.f32.mrf.mxu0
      %v484 = vadd.f32 0.0, %v483
      %485 = vmatmul.bf16.gmra.mxu0 %v445
      %v486 = vpop.f32.mrf.mxu0
      %v487 = vadd.f32 0.0, %v486
      %v488 = vpop.f32.mrf.mxu0
      %v489 = vadd.f32 0.0, %v488
      %490 = vmatmul.bf16.gmra.mxu0 %v448
      %v491 = vpop.f32.mrf.mxu0
      %v492 = vadd.f32 0.0, %v491
      %v493 = vpop.f32.mrf.mxu0
      %v494 = vadd.f32 0.0, %v493
      %495 = vmatmul.bf16.gmra.mxu0 %v451
      %v496 = vpop.f32.mrf.mxu0
      %v497 = vadd.f32 0.0, %v496
      %v498 = vpop.f32.mrf.mxu0
      %v499 = vadd.f32 0.0, %v498
      %500 = vmatmul.bf16.gmra.mxu0 %v454
      %v501 = vpop.f32.mrf.mxu0
      %v502 = vadd.f32 0.0, %v501
      %v503 = vpop.f32.mrf.mxu0
      %v504 = vadd.f32 0.0, %v503
      %505 = vmatmul.bf16.gmra.mxu0 %v457
      %v506 = vpop.f32.mrf.mxu0
      %v507 = vadd.f32 0.0, %v506
      %v508 = vpop.f32.mrf.mxu0
      %v509 = vadd.f32 0.0, %v508
      %510 = vmatmul.bf16.gmra.mxu0 %v460
      %v511 = vpop.f32.mrf.mxu0
      %v512 = vadd.f32 0.0, %v511
      %v513 = vpop.f32.mrf.mxu0
      %v514 = vadd.f32 0.0, %v513
      %515 = vmatmul.bf16.gmra.mxu0 %v463
      %v516 = vpop.f32.mrf.mxu0
      %v517 = vadd.f32 0.0, %v516
      %v518 = vpop.f32.mrf.mxu0
      %v519 = vadd.f32 0.0, %v518
      %520 = vdwg.mxu0
      %v521 = vld [vmem:[%s2] sm:$0x1]
      %v523 = vperm.slane %v521, 0
      %v525 = vmul.f32 %v482, %v523
      %v526 = vmul.f32 %v484, %v523
      %v527 = vmul.f32 %v487, %v523
      %v528 = vmul.f32 %v489, %v523
      %v529 = vmul.f32 %v492, %v523
      %v530 = vmul.f32 %v494, %v523
      %v531 = vmul.f32 %v497, %v523
      %v532 = vmul.f32 %v499, %v523
      %v533 = vmul.f32 %v502, %v523
      %v534 = vmul.f32 %v504, %v523
      %v535 = vmul.f32 %v507, %v523
      %v536 = vmul.f32 %v509, %v523
      %v537 = vmul.f32 %v512, %v523
      %v538 = vmul.f32 %v514, %v523
      %v539 = vmul.f32 %v517, %v523
      %v540 = vmul.f32 %v519, %v523
      %v541 = vld [vmem:[%s3] sm:$0x1]
      %v543 = vperm.slane %v541, 0
      %v545 = vadd.f32 %v525, %v543
      %v546 = vadd.f32 %v526, %v543
      %v547 = vadd.f32 %v527, %v543
      %v548 = vadd.f32 %v528, %v543
      %v549 = vadd.f32 %v529, %v543
      %v550 = vadd.f32 %v530, %v543
      %v551 = vadd.f32 %v531, %v543
      %v552 = vadd.f32 %v532, %v543
      %v553 = vadd.f32 %v533, %v543
      %v554 = vadd.f32 %v534, %v543
      %v555 = vadd.f32 %v535, %v543
      %v556 = vadd.f32 %v536, %v543
      %v557 = vadd.f32 %v537, %v543
      %v558 = vadd.f32 %v538, %v543
      %v559 = vadd.f32 %v539, %v543
      %v560 = vadd.f32 %v540, %v543
      %v561 = vmax.f32 %v545, 0.0
      %v562 = vmax.f32 %v546, 0.0
      %v563 = vmax.f32 %v547, 0.0
      %v564 = vmax.f32 %v548, 0.0
      %v565 = vmax.f32 %v549, 0.0
      %v566 = vmax.f32 %v550, 0.0
      %v567 = vmax.f32 %v551, 0.0
      %v568 = vmax.f32 %v552, 0.0
      %v569 = vmax.f32 %v553, 0.0
      %v570 = vmax.f32 %v554, 0.0
      %v571 = vmax.f32 %v555, 0.0
      %v572 = vmax.f32 %v556, 0.0
      %v573 = vmax.f32 %v557, 0.0
      %v574 = vmax.f32 %v558, 0.0
      %v575 = vmax.f32 %v559, 0.0
      %v576 = vmax.f32 %v560, 0.0
      %vm577 = vcmask 519168
      %578 = vst.msk [vmem:[#allocation2] sm:$0xf] %vm577, 0
      %vm579 = vcmask 516096
      %580 = vst.msk [vmem:[#allocation2 + $0x4] sm:$0x1] %vm579, 0
      %581 = vst.msk [vmem:[#allocation2 + $0x8] sm:$0xf] %vm577, 0
      %582 = vst.msk [vmem:[#allocation2 + $0xc] sm:$0x1] %vm579, 0
      %583 = vst.msk [vmem:[#allocation2 + $0x10] sm:$0xf] %vm577, 0
      %584 = vst.msk [vmem:[#allocation2 + $0x14] sm:$0x1] %vm579, 0
      %585 = vst.msk [vmem:[#allocation2 + $0x18] sm:$0xf] %vm577, 0
      %586 = vst.msk [vmem:[#allocation2 + $0x1c] sm:$0x1] %vm579, 0
      %587 = vst.msk [vmem:[#allocation2 + $0x20] sm:$0xf] %vm577, 0
      %588 = vst.msk [vmem:[#allocation2 + $0x24] sm:$0x1] %vm579, 0
      %589 = vst.msk [vmem:[#allocation2 + $0x28] sm:$0xf] %vm577, 0
      %590 = vst.msk [vmem:[#allocation2 + $0x2c] sm:$0x1] %vm579, 0
      %591 = vst.msk [vmem:[#allocation2 + $0x30] sm:$0xf] %vm577, 0
      %592 = vst.msk [vmem:[#allocation2 + $0x34] sm:$0x1] %vm579, 0
      %593 = vst.msk [vmem:[#allocation2 + $0x38] sm:$0xf] %vm577, 0
      %594 = vst.msk [vmem:[#allocation2 + $0x3c] sm:$0x1] %vm579, 0
      %595 = vst.msk [vmem:[#allocation2 + $0x40] sm:$0xf] %vm577, 0
      %596 = vst.msk [vmem:[#allocation2 + $0x44] sm:$0x1] %vm579, 0
      %597 = vst.msk [vmem:[#allocation2 + $0x48] sm:$0xf] %vm577, 0
      %598 = vst.msk [vmem:[#allocation2 + $0x4c] sm:$0x1] %vm579, 0
      %599 = vst.msk [vmem:[#allocation2 + $0x50] sm:$0xf] %vm577, 0
      %600 = vst.msk [vmem:[#allocation2 + $0x54] sm:$0x1] %vm579, 0
      %601 = vst.msk [vmem:[#allocation2 + $0x58] sm:$0xf] %vm577, 0
      %602 = vst.msk [vmem:[#allocation2 + $0x5c] sm:$0x1] %vm579, 0
      %603 = vst.msk [vmem:[#allocation2 + $0x60] sm:$0xf] %vm577, 0
      %604 = vst.msk [vmem:[#allocation2 + $0x64] sm:$0x1] %vm579, 0
      %605 = vst.msk [vmem:[#allocation2 + $0x68] sm:$0xf] %vm577, 0
      %606 = vst.msk [vmem:[#allocation2 + $0x6c] sm:$0x1] %vm579, 0
      %607 = vst.msk [vmem:[#allocation2 + $0x70] sm:$0xf] %vm577, 0
      %608 = vst.msk [vmem:[#allocation2 + $0x74] sm:$0x1] %vm579, 0
      %609 = vst.msk [vmem:[#allocation2 + $0x78] sm:$0xf] %vm577, 0
      %610 = vst.msk [vmem:[#allocation2 + $0x7c] sm:$0x1] %vm579, 0
      %611 = vst.msk [vmem:[#allocation2 + $0x80] sm:$0xf] %vm577, 0
      %612 = vst.msk [vmem:[#allocation2 + $0x84] sm:$0x1] %vm579, 0
      %613 = vst.msk [vmem:[#allocation2 + $0x88] sm:$0xf] %vm577, 0
      %614 = vst.msk [vmem:[#allocation2 + $0x8c] sm:$0x1] %vm579, 0
      %615 = vst.msk [vmem:[#allocation2 + $0x90] sm:$0xf] %vm577, 0
      %616 = vst.msk [vmem:[#allocation2 + $0x94] sm:$0x1] %vm579, 0
      %617 = vst.msk [vmem:[#allocation2 + $0x98] sm:$0xf] %vm577, 0
      %618 = vst.msk [vmem:[#allocation2 + $0x9c] sm:$0x1] %vm579, 0
      %v619 = vpack.c.bf16 %v561, %v561
      %v620 = vpack.c.bf16 %v562, %v562
      %v621 = vpack.c.bf16 %v563, %v563
      %v622 = vpack.c.bf16 %v564, %v564
      %v623 = vpack.c.bf16 %v565, %v565
      %v624 = vpack.c.bf16 %v566, %v566
      %v625 = vpack.c.bf16 %v567, %v567
      %v626 = vpack.c.bf16 %v568, %v568
      %v627 = vpack.c.bf16 %v569, %v569
      %v628 = vpack.c.bf16 %v570, %v570
      %v629 = vpack.c.bf16 %v571, %v571
      %v630 = vpack.c.bf16 %v572, %v572
      %v631 = vpack.c.bf16 %v573, %v573
      %v632 = vpack.c.bf16 %v574, %v574
      %v633 = vpack.c.bf16 %v575, %v575
      %v634 = vpack.c.bf16 %v576, %v576
      %v636 = vshrl.u32 %v619, 16
      %v638 = vrot.slane %v636, 7
      %v639 = vshll.u32 %v619, 16
      %v641 = vor.u32 %v638, %v639
      %v642 = vrot.slane %v638, 4
      %v644 = vshrl.u32 %v620, 16
      %v646 = vrot.slane %v644, 7
      %v647 = vshll.u32 %v620, 16
      %v649 = vor.u32 %v646, %v647
      %v650 = vrot.slane %v646, 4
      %v652 = vshrl.u32 %v621, 16
      %v654 = vrot.slane %v652, 7
      %v655 = vshll.u32 %v621, 16
      %v657 = vor.u32 %v654, %v655
      %v658 = vrot.slane %v654, 4
      %v660 = vshrl.u32 %v622, 16
      %v662 = vrot.slane %v660, 7
      %v663 = vshll.u32 %v622, 16
      %v665 = vor.u32 %v662, %v663
      %v666 = vrot.slane %v662, 4
      %v668 = vshrl.u32 %v623, 16
      %v670 = vrot.slane %v668, 7
      %v671 = vshll.u32 %v623, 16
      %v673 = vor.u32 %v670, %v671
      %v674 = vrot.slane %v670, 4
      %v676 = vshrl.u32 %v624, 16
      %v678 = vrot.slane %v676, 7
      %v679 = vshll.u32 %v624, 16
      %v681 = vor.u32 %v678, %v679
      %v682 = vrot.slane %v678, 4
      %v684 = vshrl.u32 %v625, 16
      %v686 = vrot.slane %v684, 7
      %v687 = vshll.u32 %v625, 16
      %v689 = vor.u32 %v686, %v687
      %v690 = vrot.slane %v686, 4
      %v692 = vshrl.u32 %v626, 16
      %v694 = vrot.slane %v692, 7
      %v695 = vshll.u32 %v626, 16
      %v697 = vor.u32 %v694, %v695
      %v698 = vrot.slane %v694, 4
      %v700 = vshrl.u32 %v627, 16
      %v702 = vrot.slane %v700, 7
      %v703 = vshll.u32 %v627, 16
      %v705 = vor.u32 %v702, %v703
      %v706 = vrot.slane %v702, 4
      %v708 = vshrl.u32 %v628, 16
      %v710 = vrot.slane %v708, 7
      %v711 = vshll.u32 %v628, 16
      %v713 = vor.u32 %v710, %v711
      %v714 = vrot.slane %v710, 4
      %v716 = vshrl.u32 %v629, 16
      %v718 = vrot.slane %v716, 7
      %v719 = vshll.u32 %v629, 16
      %v721 = vor.u32 %v718, %v719
      %v722 = vrot.slane %v718, 4
      %v724 = vshrl.u32 %v630, 16
      %v726 = vrot.slane %v724, 7
      %v727 = vshll.u32 %v630, 16
      %v729 = vor.u32 %v726, %v727
      %v730 = vrot.slane %v726, 4
      %v732 = vshrl.u32 %v631, 16
      %v734 = vrot.slane %v732, 7
      %v735 = vshll.u32 %v631, 16
      %v737 = vor.u32 %v734, %v735
      %v738 = vrot.slane %v734, 4
      %v740 = vshrl.u32 %v632, 16
      %v742 = vrot.slane %v740, 7
      %v743 = vshll.u32 %v632, 16
      %v745 = vor.u32 %v742, %v743
      %v746 = vrot.slane %v742, 4
      %v748 = vshrl.u32 %v633, 16
      %v750 = vrot.slane %v748, 7
      %v751 = vshll.u32 %v633, 16
      %v753 = vor.u32 %v750, %v751
      %v754 = vrot.slane %v750, 4
      %v756 = vshrl.u32 %v634, 16
      %v758 = vrot.slane %v756, 7
      %v759 = vshll.u32 %v634, 16
      %v761 = vor.u32 %v758, %v759
      %v762 = vrot.slane %v758, 4
      %s795 = scalar_lea.vmem [#allocation2], 8
      %vm796 = vcmask 519168
      %vm797 = vsmask.f32 7938
      %vm798 = vmand %vm796, %vm797
      %v799 = vld [vmem:[%s795] sm:$0xf]
      %v800 = vsel %vm798, %v641, %v799
      %801 = vst [vmem:[%s795] sm:$0xf] %v800
      %vm802 = vcmask 516096
      %vm803 = vsmask.f32 256
      %vm804 = vmand %vm802, %vm803
      %v805 = vld [vmem:[%s795 + $0x4] sm:$0x1]
      %v806 = vsel %vm804, %v642, %v805
      %807 = vst [vmem:[%s795 + $0x4] sm:$0x1] %v806
      %v808 = vld [vmem:[%s795 + $0x8] sm:$0xf]
      %v809 = vsel %vm798, %v649, %v808
      %810 = vst [vmem:[%s795 + $0x8] sm:$0xf] %v809
      %v811 = vld [vmem:[%s795 + $0xc] sm:$0x1]
      %v812 = vsel %vm804, %v650, %v811
      %813 = vst [vmem:[%s795 + $0xc] sm:$0x1] %v812
      %v814 = vld [vmem:[%s795 + $0x10] sm:$0xf]
      %v815 = vsel %vm798, %v657, %v814
      %816 = vst [vmem:[%s795 + $0x10] sm:$0xf] %v815
      %v817 = vld [vmem:[%s795 + $0x14] sm:$0x1]
      %v818 = vsel %vm804, %v658, %v817
      %819 = vst [vmem:[%s795 + $0x14] sm:$0x1] %v818
      %v820 = vld [vmem:[%s795 + $0x18] sm:$0xf]
      %v821 = vsel %vm798, %v665, %v820
      %822 = vst [vmem:[%s795 + $0x18] sm:$0xf] %v821
      %v823 = vld [vmem:[%s795 + $0x1c] sm:$0x1]
      %v824 = vsel %vm804, %v666, %v823
      %825 = vst [vmem:[%s795 + $0x1c] sm:$0x1] %v824
      %v826 = vld [vmem:[%s795 + $0x20] sm:$0xf]
      %v827 = vsel %vm798, %v673, %v826
      %828 = vst [vmem:[%s795 + $0x20] sm:$0xf] %v827
      %v829 = vld [vmem:[%s795 + $0x24] sm:$0x1]
      %v830 = vsel %vm804, %v674, %v829
      %831 = vst [vmem:[%s795 + $0x24] sm:$0x1] %v830
      %v832 = vld [vmem:[%s795 + $0x28] sm:$0xf]
      %v833 = vsel %vm798, %v681, %v832
      %834 = vst [vmem:[%s795 + $0x28] sm:$0xf] %v833
      %v835 = vld [vmem:[%s795 + $0x2c] sm:$0x1]
      %v836 = vsel %vm804, %v682, %v835
      %837 = vst [vmem:[%s795 + $0x2c] sm:$0x1] %v836
      %v838 = vld [vmem:[%s795 + $0x30] sm:$0xf]
      %v839 = vsel %vm798, %v689, %v838
      %840 = vst [vmem:[%s795 + $0x30] sm:$0xf] %v839
      %v841 = vld [vmem:[%s795 + $0x34] sm:$0x1]
      %v842 = vsel %vm804, %v690, %v841
      %843 = vst [vmem:[%s795 + $0x34] sm:$0x1] %v842
      %v844 = vld [vmem:[%s795 + $0x38] sm:$0xf]
      %v845 = vsel %vm798, %v697, %v844
      %846 = vst [vmem:[%s795 + $0x38] sm:$0xf] %v845
      %v847 = vld [vmem:[%s795 + $0x3c] sm:$0x1]
      %v848 = vsel %vm804, %v698, %v847
      %849 = vst [vmem:[%s795 + $0x3c] sm:$0x1] %v848
      %v850 = vld [vmem:[%s795 + $0x50] sm:$0xf]
      %v851 = vsel %vm798, %v705, %v850
      %852 = vst [vmem:[%s795 + $0x50] sm:$0xf] %v851
      %v853 = vld [vmem:[%s795 + $0x54] sm:$0x1]
      %v854 = vsel %vm804, %v706, %v853
      %855 = vst [vmem:[%s795 + $0x54] sm:$0x1] %v854
      %v856 = vld [vmem:[%s795 + $0x58] sm:$0xf]
      %v857 = vsel %vm798, %v713, %v856
      %858 = vst [vmem:[%s795 + $0x58] sm:$0xf] %v857
      %v859 = vld [vmem:[%s795 + $0x5c] sm:$0x1]
      %v860 = vsel %vm804, %v714, %v859
      %861 = vst [vmem:[%s795 + $0x5c] sm:$0x1] %v860
      %v862 = vld [vmem:[%s795 + $0x60] sm:$0xf]
      %v863 = vsel %vm798, %v721, %v862
      %864 = vst [vmem:[%s795 + $0x60] sm:$0xf] %v863
      %v865 = vld [vmem:[%s795 + $0x64] sm:$0x1]
      %v866 = vsel %vm804, %v722, %v865
      %867 = vst [vmem:[%s795 + $0x64] sm:$0x1] %v866
      %v868 = vld [vmem:[%s795 + $0x68] sm:$0xf]
      %v869 = vsel %vm798, %v729, %v868
      %870 = vst [vmem:[%s795 + $0x68] sm:$0xf] %v869
      %v871 = vld [vmem:[%s795 + $0x6c] sm:$0x1]
      %v872 = vsel %vm804, %v730, %v871
      %873 = vst [vmem:[%s795 + $0x6c] sm:$0x1] %v872
      %v874 = vld [vmem:[%s795 + $0x70] sm:$0xf]
      %v875 = vsel %vm798, %v737, %v874
      %876 = vst [vmem:[%s795 + $0x70] sm:$0xf] %v875
      %v877 = vld [vmem:[%s795 + $0x74] sm:$0x1]
      %v878 = vsel %vm804, %v738, %v877
      %879 = vst [vmem:[%s795 + $0x74] sm:$0x1] %v878
      %v880 = vld [vmem:[%s795 + $0x78] sm:$0xf]
      %v881 = vsel %vm798, %v745, %v880
      %882 = vst [vmem:[%s795 + $0x78] sm:$0xf] %v881
      %v883 = vld [vmem:[%s795 + $0x7c] sm:$0x1]
      %v884 = vsel %vm804, %v746, %v883
      %885 = vst [vmem:[%s795 + $0x7c] sm:$0x1] %v884
      %v886 = vld [vmem:[%s795 + $0x80] sm:$0xf]
      %v887 = vsel %vm798, %v753, %v886
      %888 = vst [vmem:[%s795 + $0x80] sm:$0xf] %v887
      %v889 = vld [vmem:[%s795 + $0x84] sm:$0x1]
      %v890 = vsel %vm804, %v754, %v889
      %891 = vst [vmem:[%s795 + $0x84] sm:$0x1] %v890
      %v892 = vld [vmem:[%s795 + $0x88] sm:$0xf]
      %v893 = vsel %vm798, %v761, %v892
      %894 = vst [vmem:[%s795 + $0x88] sm:$0xf] %v893
      %v895 = vld [vmem:[%s795 + $0x8c] sm:$0x1]
      %v896 = vsel %vm804, %v762, %v895
      %897 = vst [vmem:[%s795 + $0x8c] sm:$0x1] %v896
      %v898 = vld [vmem:[#allocation2] sm:$0xf]
      %v899 = vld [vmem:[#allocation2 + $0x8] sm:$0xf]
      %v900 = vld [vmem:[#allocation2 + $0x10] sm:$0xf]
      %v901 = vld [vmem:[#allocation2 + $0x18] sm:$0xf]
      %v902 = vld [vmem:[#allocation2 + $0x20] sm:$0xf]
      %v903 = vld [vmem:[#allocation2 + $0x28] sm:$0xf]
      %v904 = vld [vmem:[#allocation2 + $0x30] sm:$0xf]
      %v905 = vld [vmem:[#allocation2 + $0x38] sm:$0xf]
      %v906 = vld [vmem:[#allocation2 + $0x50] sm:$0xf]
      %v907 = vld [vmem:[#allocation2 + $0x58] sm:$0xf]
      %v908 = vld [vmem:[#allocation2 + $0x60] sm:$0xf]
      %v909 = vld [vmem:[#allocation2 + $0x68] sm:$0xf]
      %v910 = vld [vmem:[#allocation2 + $0x70] sm:$0xf]
      %v911 = vld [vmem:[#allocation2 + $0x78] sm:$0xf]
      %v912 = vld [vmem:[#allocation2 + $0x80] sm:$0xf]
      %v913 = vld [vmem:[#allocation2 + $0x88] sm:$0xf]
      %v914 = vld [vmem:[#allocation2 + $0x4] sm:$0x1]
      %v915 = vld [vmem:[#allocation2 + $0xc] sm:$0x1]
      %v916 = vld [vmem:[#allocation2 + $0x14] sm:$0x1]
      %v917 = vld [vmem:[#allocation2 + $0x1c] sm:$0x1]
      %v918 = vld [vmem:[#allocation2 + $0x24] sm:$0x1]
      %v919 = vld [vmem:[#allocation2 + $0x2c] sm:$0x1]
      %v920 = vld [vmem:[#allocation2 + $0x34] sm:$0x1]
      %v921 = vld [vmem:[#allocation2 + $0x3c] sm:$0x1]
      %v922 = vld [vmem:[#allocation2 + $0x54] sm:$0x1]
      %v923 = vld [vmem:[#allocation2 + $0x5c] sm:$0x1]
      %v924 = vld [vmem:[#allocation2 + $0x64] sm:$0x1]
      %v925 = vld [vmem:[#allocation2 + $0x6c] sm:$0x1]
      %v926 = vld [vmem:[#allocation2 + $0x74] sm:$0x1]
      %v927 = vld [vmem:[#allocation2 + $0x7c] sm:$0x1]
      %v928 = vld [vmem:[#allocation2 + $0x84] sm:$0x1]
      %v929 = vld [vmem:[#allocation2 + $0x8c] sm:$0x1]
      %v930 = vld [vmem:[#allocation2] sm:$0xe]
      %v931 = vld [vmem:[#allocation2 + $0x8] sm:$0xe]
      %v932 = vld [vmem:[#allocation2 + $0x10] sm:$0xe]
      %v933 = vld [vmem:[#allocation2 + $0x18] sm:$0xe]
      %v934 = vld [vmem:[#allocation2 + $0x20] sm:$0xe]
      %v935 = vld [vmem:[#allocation2 + $0x28] sm:$0xe]
      %v936 = vld [vmem:[#allocation2 + $0x30] sm:$0xe]
      %v937 = vld [vmem:[#allocation2 + $0x38] sm:$0xe]
      %v938 = vld [vmem:[#allocation2 + $0x50] sm:$0xe]
      %v939 = vld [vmem:[#allocation2 + $0x58] sm:$0xe]
      %v940 = vld [vmem:[#allocation2 + $0x60] sm:$0xe]
      %v941 = vld [vmem:[#allocation2 + $0x68] sm:$0xe]
      %v942 = vld [vmem:[#allocation2 + $0x70] sm:$0xe]
      %v943 = vld [vmem:[#allocation2 + $0x78] sm:$0xe]
      %v944 = vld [vmem:[#allocation2 + $0x80] sm:$0xe]
      %v945 = vld [vmem:[#allocation2 + $0x88] sm:$0xe]
      %v946 = vld [vmem:[%s795] sm:$0xf]
      %v947 = vld [vmem:[%s795 + $0x8] sm:$0xf]
      %v948 = vld [vmem:[%s795 + $0x10] sm:$0xf]
      %v949 = vld [vmem:[%s795 + $0x18] sm:$0xf]
      %v950 = vld [vmem:[%s795 + $0x20] sm:$0xf]
      %v951 = vld [vmem:[%s795 + $0x28] sm:$0xf]
      %v952 = vld [vmem:[%s795 + $0x30] sm:$0xf]
      %v953 = vld [vmem:[%s795 + $0x38] sm:$0xf]
      %v954 = vld [vmem:[%s795 + $0x50] sm:$0xf]
      %v955 = vld [vmem:[%s795 + $0x58] sm:$0xf]
      %v956 = vld [vmem:[%s795 + $0x60] sm:$0xf]
      %v957 = vld [vmem:[%s795 + $0x68] sm:$0xf]
      %v958 = vld [vmem:[%s795 + $0x70] sm:$0xf]
      %v959 = vld [vmem:[%s795 + $0x78] sm:$0xf]
      %v960 = vld [vmem:[%s795 + $0x80] sm:$0xf]
      %v961 = vld [vmem:[%s795 + $0x88] sm:$0xf]
      %v962 = vld [vmem:[%s795 + $0x4] sm:$0x1]
      %v963 = vld [vmem:[%s795 + $0xc] sm:$0x1]
      %v964 = vld [vmem:[%s795 + $0x14] sm:$0x1]
      %v965 = vld [vmem:[%s795 + $0x1c] sm:$0x1]
      %v966 = vld [vmem:[%s795 + $0x24] sm:$0x1]
      %v967 = vld [vmem:[%s795 + $0x2c] sm:$0x1]
      %v968 = vld [vmem:[%s795 + $0x34] sm:$0x1]
      %v969 = vld [vmem:[%s795 + $0x3c] sm:$0x1]
      %v970 = vld [vmem:[%s795 + $0x54] sm:$0x1]
      %v971 = vld [vmem:[%s795 + $0x5c] sm:$0x1]
      %v972 = vld [vmem:[%s795 + $0x64] sm:$0x1]
      %v973 = vld [vmem:[%s795 + $0x6c] sm:$0x1]
      %v974 = vld [vmem:[%s795 + $0x74] sm:$0x1]
      %v975 = vld [vmem:[%s795 + $0x7c] sm:$0x1]
      %v976 = vld [vmem:[%s795 + $0x84] sm:$0x1]
      %v977 = vld [vmem:[%s795 + $0x8c] sm:$0x1]
      %v978 = vld [vmem:[%s795] sm:$0xe]
      %v979 = vld [vmem:[%s795 + $0x8] sm:$0xe]
      %v980 = vld [vmem:[%s795 + $0x10] sm:$0xe]
      %v981 = vld [vmem:[%s795 + $0x18] sm:$0xe]
      %v982 = vld [vmem:[%s795 + $0x20] sm:$0xe]
      %v983 = vld [vmem:[%s795 + $0x28] sm:$0xe]
      %v984 = vld [vmem:[%s795 + $0x30] sm:$0xe]
      %v985 = vld [vmem:[%s795 + $0x38] sm:$0xe]
      %v986 = vld [vmem:[%s795 + $0x50] sm:$0xe]
      %v987 = vld [vmem:[%s795 + $0x58] sm:$0xe]
      %v988 = vld [vmem:[%s795 + $0x60] sm:$0xe]
      %v989 = vld [vmem:[%s795 + $0x68] sm:$0xe]
      %v990 = vld [vmem:[%s795 + $0x70] sm:$0xe]
      %v991 = vld [vmem:[%s795 + $0x78] sm:$0xe]
      %v992 = vld [vmem:[%s795 + $0x80] sm:$0xe]
      %v993 = vld [vmem:[%s795 + $0x88] sm:$0xe]
      %s994 = scalar_lea.vmem [#allocation2], 16
      %v995 = vld [vmem:[%s994] sm:$0xf]
      %v996 = vld [vmem:[%s994 + $0x8] sm:$0xf]
      %v997 = vld [vmem:[%s994 + $0x10] sm:$0xf]
      %v998 = vld [vmem:[%s994 + $0x18] sm:$0xf]
      %v999 = vld [vmem:[%s994 + $0x20] sm:$0xf]
      %v1000 = vld [vmem:[%s994 + $0x28] sm:$0xf]
      %v1001 = vld [vmem:[%s994 + $0x30] sm:$0xf]
      %v1002 = vld [vmem:[%s994 + $0x38] sm:$0xf]
      %v1003 = vld [vmem:[%s994 + $0x50] sm:$0xf]
      %v1004 = vld [vmem:[%s994 + $0x58] sm:$0xf]
      %v1005 = vld [vmem:[%s994 + $0x60] sm:$0xf]
      %v1006 = vld [vmem:[%s994 + $0x68] sm:$0xf]
      %v1007 = vld [vmem:[%s994 + $0x70] sm:$0xf]
      %v1008 = vld [vmem:[%s994 + $0x78] sm:$0xf]
      %v1009 = vld [vmem:[%s994 + $0x80] sm:$0xf]
      %v1010 = vld [vmem:[%s994 + $0x88] sm:$0xf]
      %v1011 = vld [vmem:[%s994 + $0x4] sm:$0x1]
      %v1012 = vld [vmem:[%s994 + $0xc] sm:$0x1]
      %v1013 = vld [vmem:[%s994 + $0x14] sm:$0x1]
      %v1014 = vld [vmem:[%s994 + $0x1c] sm:$0x1]
      %v1015 = vld [vmem:[%s994 + $0x24] sm:$0x1]
      %v1016 = vld [vmem:[%s994 + $0x2c] sm:$0x1]
      %v1017 = vld [vmem:[%s994 + $0x34] sm:$0x1]
      %v1018 = vld [vmem:[%s994 + $0x3c] sm:$0x1]
      %v1019 = vld [vmem:[%s994 + $0x54] sm:$0x1]
      %v1020 = vld [vmem:[%s994 + $0x5c] sm:$0x1]
      %v1021 = vld [vmem:[%s994 + $0x64] sm:$0x1]
      %v1022 = vld [vmem:[%s994 + $0x6c] sm:$0x1]
      %v1023 = vld [vmem:[%s994 + $0x74] sm:$0x1]
      %v1024 = vld [vmem:[%s994 + $0x7c] sm:$0x1]
      %v1025 = vld [vmem:[%s994 + $0x84] sm:$0x1]
      %v1026 = vld [vmem:[%s994 + $0x8c] sm:$0x1]
      %v1027 = vld [vmem:[%s994] sm:$0xe]
      %v1028 = vld [vmem:[%s994 + $0x8] sm:$0xe]
      %v1029 = vld [vmem:[%s994 + $0x10] sm:$0xe]
      %v1030 = vld [vmem:[%s994 + $0x18] sm:$0xe]
      %v1031 = vld [vmem:[%s994 + $0x20] sm:$0xe]
      %v1032 = vld [vmem:[%s994 + $0x28] sm:$0xe]
      %v1033 = vld [vmem:[%s994 + $0x30] sm:$0xe]
      %v1034 = vld [vmem:[%s994 + $0x38] sm:$0xe]
      %v1035 = vld [vmem:[%s994 + $0x50] sm:$0xe]
      %v1036 = vld [vmem:[%s994 + $0x58] sm:$0xe]
      %v1037 = vld [vmem:[%s994 + $0x60] sm:$0xe]
      %v1038 = vld [vmem:[%s994 + $0x68] sm:$0xe]
      %v1039 = vld [vmem:[%s994 + $0x70] sm:$0xe]
      %v1040 = vld [vmem:[%s994 + $0x78] sm:$0xe]
      %v1041 = vld [vmem:[%s994 + $0x80] sm:$0xe]
      %v1042 = vld [vmem:[%s994 + $0x88] sm:$0xe]
      %v1075 = vunpack.c.l.b16 %v898
      %v1076 = vunpack.c.l.b16 %v914
      %v1077 = vunpack.c.l.b16 %v899
      %v1078 = vunpack.c.l.b16 %v915
      %v1079 = vunpack.c.l.b16 %v900
      %v1080 = vunpack.c.l.b16 %v916
      %v1081 = vunpack.c.l.b16 %v901
      %v1082 = vunpack.c.l.b16 %v917
      %v1083 = vunpack.c.l.b16 %v902
      %v1084 = vunpack.c.l.b16 %v918
      %v1085 = vunpack.c.l.b16 %v903
      %v1086 = vunpack.c.l.b16 %v919
      %v1087 = vunpack.c.l.b16 %v904
      %v1088 = vunpack.c.l.b16 %v920
      %v1089 = vunpack.c.l.b16 %v905
      %v1090 = vunpack.c.l.b16 %v921
      %v1091 = vunpack.c.l.b16 %v906
      %v1092 = vunpack.c.l.b16 %v922
      %v1093 = vunpack.c.l.b16 %v907
      %v1094 = vunpack.c.l.b16 %v923
      %v1095 = vunpack.c.l.b16 %v908
      %v1096 = vunpack.c.l.b16 %v924
      %v1097 = vunpack.c.l.b16 %v909
      %v1098 = vunpack.c.l.b16 %v925
      %v1099 = vunpack.c.l.b16 %v910
      %v1100 = vunpack.c.l.b16 %v926
      %v1101 = vunpack.c.l.b16 %v911
      %v1102 = vunpack.c.l.b16 %v927
      %v1103 = vunpack.c.l.b16 %v912
      %v1104 = vunpack.c.l.b16 %v928
      %v1105 = vunpack.c.l.b16 %v913
      %v1106 = vunpack.c.l.b16 %v929
      %v1107 = vpack.c.b16 %v1076, %v1075
      %v1108 = vpack.c.b16 %v1078, %v1077
      %v1109 = vpack.c.b16 %v1080, %v1079
      %v1110 = vpack.c.b16 %v1082, %v1081
      %v1111 = vpack.c.b16 %v1084, %v1083
      %v1112 = vpack.c.b16 %v1086, %v1085
      %v1113 = vpack.c.b16 %v1088, %v1087
      %v1114 = vpack.c.b16 %v1090, %v1089
      %v1115 = vpack.c.b16 %v1092, %v1091
      %v1116 = vpack.c.b16 %v1094, %v1093
      %v1117 = vpack.c.b16 %v1096, %v1095
      %v1118 = vpack.c.b16 %v1098, %v1097
      %v1119 = vpack.c.b16 %v1100, %v1099
      %v1120 = vpack.c.b16 %v1102, %v1101
      %v1121 = vpack.c.b16 %v1104, %v1103
      %v1122 = vpack.c.b16 %v1106, %v1105
      %v1124 = vshrl.u32 %v1107, 16
      %v1126 = vshll.u32 %v1107, 16
      %v1128 = vrot.slane %v1126, 1
      %v1129 = vor.u32 %v1124, %v1128
      %v1131 = vshrl.u32 %v1108, 16
      %v1133 = vshll.u32 %v1108, 16
      %v1135 = vrot.slane %v1133, 1
      %v1136 = vor.u32 %v1131, %v1135
      %v1138 = vshrl.u32 %v1109, 16
      %v1140 = vshll.u32 %v1109, 16
      %v1142 = vrot.slane %v1140, 1
      %v1143 = vor.u32 %v1138, %v1142
      %v1145 = vshrl.u32 %v1110, 16
      %v1147 = vshll.u32 %v1110, 16
      %v1149 = vrot.slane %v1147, 1
      %v1150 = vor.u32 %v1145, %v1149
      %v1152 = vshrl.u32 %v1111, 16
      %v1154 = vshll.u32 %v1111, 16
      %v1156 = vrot.slane %v1154, 1
      %v1157 = vor.u32 %v1152, %v1156
      %v1159 = vshrl.u32 %v1112, 16
      %v1161 = vshll.u32 %v1112, 16
      %v1163 = vrot.slane %v1161, 1
      %v1164 = vor.u32 %v1159, %v1163
      %v1166 = vshrl.u32 %v1113, 16
      %v1168 = vshll.u32 %v1113, 16
      %v1170 = vrot.slane %v1168, 1
      %v1171 = vor.u32 %v1166, %v1170
      %v1173 = vshrl.u32 %v1114, 16
      %v1175 = vshll.u32 %v1114, 16
      %v1177 = vrot.slane %v1175, 1
      %v1178 = vor.u32 %v1173, %v1177
      %v1180 = vshrl.u32 %v1115, 16
      %v1182 = vshll.u32 %v1115, 16
      %v1184 = vrot.slane %v1182, 1
      %v1185 = vor.u32 %v1180, %v1184
      %v1187 = vshrl.u32 %v1116, 16
      %v1189 = vshll.u32 %v1116, 16
      %v1191 = vrot.slane %v1189, 1
      %v1192 = vor.u32 %v1187, %v1191
      %v1194 = vshrl.u32 %v1117, 16
      %v1196 = vshll.u32 %v1117, 16
      %v1198 = vrot.slane %v1196, 1
      %v1199 = vor.u32 %v1194, %v1198
      %v1201 = vshrl.u32 %v1118, 16
      %v1203 = vshll.u32 %v1118, 16
      %v1205 = vrot.slane %v1203, 1
      %v1206 = vor.u32 %v1201, %v1205
      %v1208 = vshrl.u32 %v1119, 16
      %v1210 = vshll.u32 %v1119, 16
      %v1212 = vrot.slane %v1210, 1
      %v1213 = vor.u32 %v1208, %v1212
      %v1215 = vshrl.u32 %v1120, 16
      %v1217 = vshll.u32 %v1120, 16
      %v1219 = vrot.slane %v1217, 1
      %v1220 = vor.u32 %v1215, %v1219
      %v1222 = vshrl.u32 %v1121, 16
      %v1224 = vshll.u32 %v1121, 16
      %v1226 = vrot.slane %v1224, 1
      %v1227 = vor.u32 %v1222, %v1226
      %v1229 = vshrl.u32 %v1122, 16
      %v1231 = vshll.u32 %v1122, 16
      %v1233 = vrot.slane %v1231, 1
      %v1234 = vor.u32 %v1229, %v1233
      %1235 = vrot.lane.b32.xlu0 %v1129, 64
      %v1236 = vpop.permute.xlu0 %1235
      %1237 = vrot.lane.b32.xlu0 %v1136, 64
      %v1238 = vpop.permute.xlu0 %1237
      %1239 = vrot.lane.b32.xlu0 %v1143, 64
      %v1240 = vpop.permute.xlu0 %1239
      %1241 = vrot.lane.b32.xlu0 %v1150, 64
      %v1242 = vpop.permute.xlu0 %1241
      %1243 = vrot.lane.b32.xlu0 %v1157, 64
      %v1244 = vpop.permute.xlu0 %1243
      %1245 = vrot.lane.b32.xlu0 %v1164, 64
      %v1246 = vpop.permute.xlu0 %1245
      %1247 = vrot.lane.b32.xlu0 %v1171, 64
      %v1248 = vpop.permute.xlu0 %1247
      %1249 = vrot.lane.b32.xlu0 %v1178, 64
      %v1250 = vpop.permute.xlu0 %1249
      %1251 = vrot.lane.b32.xlu0 %v1185, 64
      %v1252 = vpop.permute.xlu0 %1251
      %1253 = vrot.lane.b32.xlu0 %v1192, 64
      %v1254 = vpop.permute.xlu0 %1253
      %1255 = vrot.lane.b32.xlu0 %v1199, 64
      %v1256 = vpop.permute.xlu0 %1255
      %1257 = vrot.lane.b32.xlu0 %v1206, 64
      %v1258 = vpop.permute.xlu0 %1257
      %1259 = vrot.lane.b32.xlu0 %v1213, 64
      %v1260 = vpop.permute.xlu0 %1259
      %1261 = vrot.lane.b32.xlu0 %v1220, 64
      %v1262 = vpop.permute.xlu0 %1261
      %1263 = vrot.lane.b32.xlu0 %v1227, 64
      %v1264 = vpop.permute.xlu0 %1263
      %1265 = vrot.lane.b32.xlu0 %v1234, 64
      %v1266 = vpop.permute.xlu0 %1265
      %v1283 = vunpack.c.l.b16 %v930
      %v1284 = vunpack.c.l.b16 %v931
      %v1285 = vunpack.c.l.b16 %v932
      %v1286 = vunpack.c.l.b16 %v933
      %v1287 = vunpack.c.l.b16 %v934
      %v1288 = vunpack.c.l.b16 %v935
      %v1289 = vunpack.c.l.b16 %v936
      %v1290 = vunpack.c.l.b16 %v937
      %v1291 = vunpack.c.l.b16 %v938
      %v1292 = vunpack.c.l.b16 %v939
      %v1293 = vunpack.c.l.b16 %v940
      %v1294 = vunpack.c.l.b16 %v941
      %v1295 = vunpack.c.l.b16 %v942
      %v1296 = vunpack.c.l.b16 %v943
      %v1297 = vunpack.c.l.b16 %v944
      %v1298 = vunpack.c.l.b16 %v945
      %v1299 = vpack.c.b16 %v1076, %v1283
      %v1300 = vpack.c.b16 %v1078, %v1284
      %v1301 = vpack.c.b16 %v1080, %v1285
      %v1302 = vpack.c.b16 %v1082, %v1286
      %v1303 = vpack.c.b16 %v1084, %v1287
      %v1304 = vpack.c.b16 %v1086, %v1288
      %v1305 = vpack.c.b16 %v1088, %v1289
      %v1306 = vpack.c.b16 %v1090, %v1290
      %v1307 = vpack.c.b16 %v1092, %v1291
      %v1308 = vpack.c.b16 %v1094, %v1292
      %v1309 = vpack.c.b16 %v1096, %v1293
      %v1310 = vpack.c.b16 %v1098, %v1294
      %v1311 = vpack.c.b16 %v1100, %v1295
      %v1312 = vpack.c.b16 %v1102, %v1296
      %v1313 = vpack.c.b16 %v1104, %v1297
      %v1314 = vpack.c.b16 %v1106, %v1298
      %v1315 = vrot.slane %v1299, 1
      %v1316 = vrot.slane %v1300, 1
      %v1317 = vrot.slane %v1301, 1
      %v1318 = vrot.slane %v1302, 1
      %v1319 = vrot.slane %v1303, 1
      %v1320 = vrot.slane %v1304, 1
      %v1321 = vrot.slane %v1305, 1
      %v1322 = vrot.slane %v1306, 1
      %v1323 = vrot.slane %v1307, 1
      %v1324 = vrot.slane %v1308, 1
      %v1325 = vrot.slane %v1309, 1
      %v1326 = vrot.slane %v1310, 1
      %v1327 = vrot.slane %v1311, 1
      %v1328 = vrot.slane %v1312, 1
      %v1329 = vrot.slane %v1313, 1
      %v1330 = vrot.slane %v1314, 1
      %v1347 = vunpack.c.l.b16 %v946
      %v1348 = vunpack.c.l.b16 %v947
      %v1349 = vunpack.c.l.b16 %v948
      %v1350 = vunpack.c.l.b16 %v949
      %v1351 = vunpack.c.l.b16 %v950
      %v1352 = vunpack.c.l.b16 %v951
      %v1353 = vunpack.c.l.b16 %v952
      %v1354 = vunpack.c.l.b16 %v953
      %v1355 = vunpack.c.l.b16 %v954
      %v1356 = vunpack.c.l.b16 %v955
      %v1357 = vunpack.c.l.b16 %v956
      %v1358 = vunpack.c.l.b16 %v957
      %v1359 = vunpack.c.l.b16 %v958
      %v1360 = vunpack.c.l.b16 %v959
      %v1361 = vunpack.c.l.b16 %v960
      %v1362 = vunpack.c.l.b16 %v961
      %v1363 = vpack.c.b16 %v1347, %v1347
      %v1364 = vpack.c.b16 %v1348, %v1348
      %v1365 = vpack.c.b16 %v1349, %v1349
      %v1366 = vpack.c.b16 %v1350, %v1350
      %v1367 = vpack.c.b16 %v1351, %v1351
      %v1368 = vpack.c.b16 %v1352, %v1352
      %v1369 = vpack.c.b16 %v1353, %v1353
      %v1370 = vpack.c.b16 %v1354, %v1354
      %v1371 = vpack.c.b16 %v1355, %v1355
      %v1372 = vpack.c.b16 %v1356, %v1356
      %v1373 = vpack.c.b16 %v1357, %v1357
      %v1374 = vpack.c.b16 %v1358, %v1358
      %v1375 = vpack.c.b16 %v1359, %v1359
      %v1376 = vpack.c.b16 %v1360, %v1360
      %v1377 = vpack.c.b16 %v1361, %v1361
      %v1378 = vpack.c.b16 %v1362, %v1362
      %1379 = vrot.lane.b32.xlu0 %v1363, 64
      %v1380 = vpop.permute.xlu0 %1379
      %1381 = vrot.lane.b32.xlu0 %v1364, 64
      %v1382 = vpop.permute.xlu0 %1381
      %1383 = vrot.lane.b32.xlu0 %v1365, 64
      %v1384 = vpop.permute.xlu0 %1383
      %1385 = vrot.lane.b32.xlu0 %v1366, 64
      %v1386 = vpop.permute.xlu0 %1385
      %1387 = vrot.lane.b32.xlu0 %v1367, 64
      %v1388 = vpop.permute.xlu0 %1387
      %1389 = vrot.lane.b32.xlu0 %v1368, 64
      %v1390 = vpop.permute.xlu0 %1389
      %1391 = vrot.lane.b32.xlu0 %v1369, 64
      %v1392 = vpop.permute.xlu0 %1391
      %1393 = vrot.lane.b32.xlu0 %v1370, 64
      %v1394 = vpop.permute.xlu0 %1393
      %1395 = vrot.lane.b32.xlu0 %v1371, 64
      %v1396 = vpop.permute.xlu0 %1395
      %1397 = vrot.lane.b32.xlu0 %v1372, 64
      %v1398 = vpop.permute.xlu0 %1397
      %1399 = vrot.lane.b32.xlu0 %v1373, 64
      %v1400 = vpop.permute.xlu0 %1399
      %1401 = vrot.lane.b32.xlu0 %v1374, 64
      %v1402 = vpop.permute.xlu0 %1401
      %1403 = vrot.lane.b32.xlu0 %v1375, 64
      %v1404 = vpop.permute.xlu0 %1403
      %1405 = vrot.lane.b32.xlu0 %v1376, 64
      %v1406 = vpop.permute.xlu0 %1405
      %1407 = vrot.lane.b32.xlu0 %v1377, 64
      %v1408 = vpop.permute.xlu0 %1407
      %1409 = vrot.lane.b32.xlu0 %v1378, 64
      %v1410 = vpop.permute.xlu0 %1409
      %v1427 = vunpack.c.l.b16 %v962
      %v1428 = vunpack.c.l.b16 %v963
      %v1429 = vunpack.c.l.b16 %v964
      %v1430 = vunpack.c.l.b16 %v965
      %v1431 = vunpack.c.l.b16 %v966
      %v1432 = vunpack.c.l.b16 %v967
      %v1433 = vunpack.c.l.b16 %v968
      %v1434 = vunpack.c.l.b16 %v969
      %v1435 = vunpack.c.l.b16 %v970
      %v1436 = vunpack.c.l.b16 %v971
      %v1437 = vunpack.c.l.b16 %v972
      %v1438 = vunpack.c.l.b16 %v973
      %v1439 = vunpack.c.l.b16 %v974
      %v1440 = vunpack.c.l.b16 %v975
      %v1441 = vunpack.c.l.b16 %v976
      %v1442 = vunpack.c.l.b16 %v977
      %v1443 = vpack.c.b16 %v1427, %v1347
      %v1444 = vpack.c.b16 %v1428, %v1348
      %v1445 = vpack.c.b16 %v1429, %v1349
      %v1446 = vpack.c.b16 %v1430, %v1350
      %v1447 = vpack.c.b16 %v1431, %v1351
      %v1448 = vpack.c.b16 %v1432, %v1352
      %v1449 = vpack.c.b16 %v1433, %v1353
      %v1450 = vpack.c.b16 %v1434, %v1354
      %v1451 = vpack.c.b16 %v1435, %v1355
      %v1452 = vpack.c.b16 %v1436, %v1356
      %v1453 = vpack.c.b16 %v1437, %v1357
      %v1454 = vpack.c.b16 %v1438, %v1358
      %v1455 = vpack.c.b16 %v1439, %v1359
      %v1456 = vpack.c.b16 %v1440, %v1360
      %v1457 = vpack.c.b16 %v1441, %v1361
      %v1458 = vpack.c.b16 %v1442, %v1362
      %v1460 = vshrl.u32 %v1443, 16
      %v1462 = vshll.u32 %v1443, 16
      %v1464 = vrot.slane %v1462, 1
      %v1465 = vor.u32 %v1460, %v1464
      %v1467 = vshrl.u32 %v1444, 16
      %v1469 = vshll.u32 %v1444, 16
      %v1471 = vrot.slane %v1469, 1
      %v1472 = vor.u32 %v1467, %v1471
      %v1474 = vshrl.u32 %v1445, 16
      %v1476 = vshll.u32 %v1445, 16
      %v1478 = vrot.slane %v1476, 1
      %v1479 = vor.u32 %v1474, %v1478
      %v1481 = vshrl.u32 %v1446, 16
      %v1483 = vshll.u32 %v1446, 16
      %v1485 = vrot.slane %v1483, 1
      %v1486 = vor.u32 %v1481, %v1485
      %v1488 = vshrl.u32 %v1447, 16
      %v1490 = vshll.u32 %v1447, 16
      %v1492 = vrot.slane %v1490, 1
      %v1493 = vor.u32 %v1488, %v1492
      %v1495 = vshrl.u32 %v1448, 16
      %v1497 = vshll.u32 %v1448, 16
      %v1499 = vrot.slane %v1497, 1
      %v1500 = vor.u32 %v1495, %v1499
      %v1502 = vshrl.u32 %v1449, 16
      %v1504 = vshll.u32 %v1449, 16
      %v1506 = vrot.slane %v1504, 1
      %v1507 = vor.u32 %v1502, %v1506
      %v1509 = vshrl.u32 %v1450, 16
      %v1511 = vshll.u32 %v1450, 16
      %v1513 = vrot.slane %v1511, 1
      %v1514 = vor.u32 %v1509, %v1513
      %v1516 = vshrl.u32 %v1451, 16
      %v1518 = vshll.u32 %v1451, 16
      %v1520 = vrot.slane %v1518, 1
      %v1521 = vor.u32 %v1516, %v1520
      %v1523 = vshrl.u32 %v1452, 16
      %v1525 = vshll.u32 %v1452, 16
      %v1527 = vrot.slane %v1525, 1
      %v1528 = vor.u32 %v1523, %v1527
      %v1530 = vshrl.u32 %v1453, 16
      %v1532 = vshll.u32 %v1453, 16
      %v1534 = vrot.slane %v1532, 1
      %v1535 = vor.u32 %v1530, %v1534
      %v1537 = vshrl.u32 %v1454, 16
      %v1539 = vshll.u32 %v1454, 16
      %v1541 = vrot.slane %v1539, 1
      %v1542 = vor.u32 %v1537, %v1541
      %v1544 = vshrl.u32 %v1455, 16
      %v1546 = vshll.u32 %v1455, 16
      %v1548 = vrot.slane %v1546, 1
      %v1549 = vor.u32 %v1544, %v1548
      %v1551 = vshrl.u32 %v1456, 16
      %v1553 = vshll.u32 %v1456, 16
      %v1555 = vrot.slane %v1553, 1
      %v1556 = vor.u32 %v1551, %v1555
      %v1558 = vshrl.u32 %v1457, 16
      %v1560 = vshll.u32 %v1457, 16
      %v1562 = vrot.slane %v1560, 1
      %v1563 = vor.u32 %v1558, %v1562
      %v1565 = vshrl.u32 %v1458, 16
      %v1567 = vshll.u32 %v1458, 16
      %v1569 = vrot.slane %v1567, 1
      %v1570 = vor.u32 %v1565, %v1569
      %v1587 = vunpack.c.l.b16 %v978
      %v1588 = vunpack.c.l.b16 %v979
      %v1589 = vunpack.c.l.b16 %v980
      %v1590 = vunpack.c.l.b16 %v981
      %v1591 = vunpack.c.l.b16 %v982
      %v1592 = vunpack.c.l.b16 %v983
      %v1593 = vunpack.c.l.b16 %v984
      %v1594 = vunpack.c.l.b16 %v985
      %v1595 = vunpack.c.l.b16 %v986
      %v1596 = vunpack.c.l.b16 %v987
      %v1597 = vunpack.c.l.b16 %v988
      %v1598 = vunpack.c.l.b16 %v989
      %v1599 = vunpack.c.l.b16 %v990
      %v1600 = vunpack.c.l.b16 %v991
      %v1601 = vunpack.c.l.b16 %v992
      %v1602 = vunpack.c.l.b16 %v993
      %v1603 = vpack.c.b16 %v1427, %v1587
      %v1604 = vpack.c.b16 %v1428, %v1588
      %v1605 = vpack.c.b16 %v1429, %v1589
      %v1606 = vpack.c.b16 %v1430, %v1590
      %v1607 = vpack.c.b16 %v1431, %v1591
      %v1608 = vpack.c.b16 %v1432, %v1592
      %v1609 = vpack.c.b16 %v1433, %v1593
      %v1610 = vpack.c.b16 %v1434, %v1594
      %v1611 = vpack.c.b16 %v1435, %v1595
      %v1612 = vpack.c.b16 %v1436, %v1596
      %v1613 = vpack.c.b16 %v1437, %v1597
      %v1614 = vpack.c.b16 %v1438, %v1598
      %v1615 = vpack.c.b16 %v1439, %v1599
      %v1616 = vpack.c.b16 %v1440, %v1600
      %v1617 = vpack.c.b16 %v1441, %v1601
      %v1618 = vpack.c.b16 %v1442, %v1602
      %v1619 = vrot.slane %v1603, 1
      %v1620 = vrot.slane %v1604, 1
      %v1621 = vrot.slane %v1605, 1
      %v1622 = vrot.slane %v1606, 1
      %v1623 = vrot.slane %v1607, 1
      %v1624 = vrot.slane %v1608, 1
      %v1625 = vrot.slane %v1609, 1
      %v1626 = vrot.slane %v1610, 1
      %v1627 = vrot.slane %v1611, 1
      %v1628 = vrot.slane %v1612, 1
      %v1629 = vrot.slane %v1613, 1
      %v1630 = vrot.slane %v1614, 1
      %v1631 = vrot.slane %v1615, 1
      %v1632 = vrot.slane %v1616, 1
      %v1633 = vrot.slane %v1617, 1
      %v1634 = vrot.slane %v1618, 1
      %1635 = vrot.lane.b32.xlu0 %v1619, 64
      %v1636 = vpop.permute.xlu0 %1635
      %1637 = vrot.lane.b32.xlu0 %v1620, 64
      %v1638 = vpop.permute.xlu0 %1637
      %1639 = vrot.lane.b32.xlu0 %v1621, 64
      %v1640 = vpop.permute.xlu0 %1639
      %1641 = vrot.lane.b32.xlu0 %v1622, 64
      %v1642 = vpop.permute.xlu0 %1641
      %1643 = vrot.lane.b32.xlu0 %v1623, 64
      %v1644 = vpop.permute.xlu0 %1643
      %1645 = vrot.lane.b32.xlu0 %v1624, 64
      %v1646 = vpop.permute.xlu0 %1645
      %1647 = vrot.lane.b32.xlu0 %v1625, 64
      %v1648 = vpop.permute.xlu0 %1647
      %1649 = vrot.lane.b32.xlu0 %v1626, 64
      %v1650 = vpop.permute.xlu0 %1649
      %1651 = vrot.lane.b32.xlu0 %v1627, 64
      %v1652 = vpop.permute.xlu0 %1651
      %1653 = vrot.lane.b32.xlu0 %v1628, 64
      %v1654 = vpop.permute.xlu0 %1653
      %1655 = vrot.lane.b32.xlu0 %v1629, 64
      %v1656 = vpop.permute.xlu0 %1655
      %1657 = vrot.lane.b32.xlu0 %v1630, 64
      %v1658 = vpop.permute.xlu0 %1657
      %1659 = vrot.lane.b32.xlu0 %v1631, 64
      %v1660 = vpop.permute.xlu0 %1659
      %1661 = vrot.lane.b32.xlu0 %v1632, 64
      %v1662 = vpop.permute.xlu0 %1661
      %1663 = vrot.lane.b32.xlu0 %v1633, 64
      %v1664 = vpop.permute.xlu0 %1663
      %1665 = vrot.lane.b32.xlu0 %v1634, 64
      %v1666 = vpop.permute.xlu0 %1665
      %v1699 = vunpack.c.l.b16 %v995
      %v1700 = vunpack.c.l.b16 %v1011
      %v1701 = vunpack.c.l.b16 %v996
      %v1702 = vunpack.c.l.b16 %v1012
      %v1703 = vunpack.c.l.b16 %v997
      %v1704 = vunpack.c.l.b16 %v1013
      %v1705 = vunpack.c.l.b16 %v998
      %v1706 = vunpack.c.l.b16 %v1014
      %v1707 = vunpack.c.l.b16 %v999
      %v1708 = vunpack.c.l.b16 %v1015
      %v1709 = vunpack.c.l.b16 %v1000
      %v1710 = vunpack.c.l.b16 %v1016
      %v1711 = vunpack.c.l.b16 %v1001
      %v1712 = vunpack.c.l.b16 %v1017
      %v1713 = vunpack.c.l.b16 %v1002
      %v1714 = vunpack.c.l.b16 %v1018
      %v1715 = vunpack.c.l.b16 %v1003
      %v1716 = vunpack.c.l.b16 %v1019
      %v1717 = vunpack.c.l.b16 %v1004
      %v1718 = vunpack.c.l.b16 %v1020
      %v1719 = vunpack.c.l.b16 %v1005
      %v1720 = vunpack.c.l.b16 %v1021
      %v1721 = vunpack.c.l.b16 %v1006
      %v1722 = vunpack.c.l.b16 %v1022
      %v1723 = vunpack.c.l.b16 %v1007
      %v1724 = vunpack.c.l.b16 %v1023
      %v1725 = vunpack.c.l.b16 %v1008
      %v1726 = vunpack.c.l.b16 %v1024
      %v1727 = vunpack.c.l.b16 %v1009
      %v1728 = vunpack.c.l.b16 %v1025
      %v1729 = vunpack.c.l.b16 %v1010
      %v1730 = vunpack.c.l.b16 %v1026
      %v1731 = vpack.c.b16 %v1700, %v1699
      %v1732 = vpack.c.b16 %v1702, %v1701
      %v1733 = vpack.c.b16 %v1704, %v1703
      %v1734 = vpack.c.b16 %v1706, %v1705
      %v1735 = vpack.c.b16 %v1708, %v1707
      %v1736 = vpack.c.b16 %v1710, %v1709
      %v1737 = vpack.c.b16 %v1712, %v1711
      %v1738 = vpack.c.b16 %v1714, %v1713
      %v1739 = vpack.c.b16 %v1716, %v1715
      %v1740 = vpack.c.b16 %v1718, %v1717
      %v1741 = vpack.c.b16 %v1720, %v1719
      %v1742 = vpack.c.b16 %v1722, %v1721
      %v1743 = vpack.c.b16 %v1724, %v1723
      %v1744 = vpack.c.b16 %v1726, %v1725
      %v1745 = vpack.c.b16 %v1728, %v1727
      %v1746 = vpack.c.b16 %v1730, %v1729
      %v1748 = vshrl.u32 %v1731, 16
      %v1750 = vshll.u32 %v1731, 16
      %v1752 = vrot.slane %v1750, 1
      %v1753 = vor.u32 %v1748, %v1752
      %v1755 = vshrl.u32 %v1732, 16
      %v1757 = vshll.u32 %v1732, 16
      %v1759 = vrot.slane %v1757, 1
      %v1760 = vor.u32 %v1755, %v1759
      %v1762 = vshrl.u32 %v1733, 16
      %v1764 = vshll.u32 %v1733, 16
      %v1766 = vrot.slane %v1764, 1
      %v1767 = vor.u32 %v1762, %v1766
      %v1769 = vshrl.u32 %v1734, 16
      %v1771 = vshll.u32 %v1734, 16
      %v1773 = vrot.slane %v1771, 1
      %v1774 = vor.u32 %v1769, %v1773
      %v1776 = vshrl.u32 %v1735, 16
      %v1778 = vshll.u32 %v1735, 16
      %v1780 = vrot.slane %v1778, 1
      %v1781 = vor.u32 %v1776, %v1780
      %v1783 = vshrl.u32 %v1736, 16
      %v1785 = vshll.u32 %v1736, 16
      %v1787 = vrot.slane %v1785, 1
      %v1788 = vor.u32 %v1783, %v1787
      %v1790 = vshrl.u32 %v1737, 16
      %v1792 = vshll.u32 %v1737, 16
      %v1794 = vrot.slane %v1792, 1
      %v1795 = vor.u32 %v1790, %v1794
      %v1797 = vshrl.u32 %v1738, 16
      %v1799 = vshll.u32 %v1738, 16
      %v1801 = vrot.slane %v1799, 1
      %v1802 = vor.u32 %v1797, %v1801
      %v1804 = vshrl.u32 %v1739, 16
      %v1806 = vshll.u32 %v1739, 16
      %v1808 = vrot.slane %v1806, 1
      %v1809 = vor.u32 %v1804, %v1808
      %v1811 = vshrl.u32 %v1740, 16
      %v1813 = vshll.u32 %v1740, 16
      %v1815 = vrot.slane %v1813, 1
      %v1816 = vor.u32 %v1811, %v1815
      %v1818 = vshrl.u32 %v1741, 16
      %v1820 = vshll.u32 %v1741, 16
      %v1822 = vrot.slane %v1820, 1
      %v1823 = vor.u32 %v1818, %v1822
      %v1825 = vshrl.u32 %v1742, 16
      %v1827 = vshll.u32 %v1742, 16
      %v1829 = vrot.slane %v1827, 1
      %v1830 = vor.u32 %v1825, %v1829
      %v1832 = vshrl.u32 %v1743, 16
      %v1834 = vshll.u32 %v1743, 16
      %v1836 = vrot.slane %v1834, 1
      %v1837 = vor.u32 %v1832, %v1836
      %v1839 = vshrl.u32 %v1744, 16
      %v1841 = vshll.u32 %v1744, 16
      %v1843 = vrot.slane %v1841, 1
      %v1844 = vor.u32 %v1839, %v1843
      %v1846 = vshrl.u32 %v1745, 16
      %v1848 = vshll.u32 %v1745, 16
      %v1850 = vrot.slane %v1848, 1
      %v1851 = vor.u32 %v1846, %v1850
      %v1853 = vshrl.u32 %v1746, 16
      %v1855 = vshll.u32 %v1746, 16
      %v1857 = vrot.slane %v1855, 1
      %v1858 = vor.u32 %v1853, %v1857
      %1859 = vrot.lane.b32.xlu0 %v1753, 64
      %v1860 = vpop.permute.xlu0 %1859
      %1861 = vrot.lane.b32.xlu0 %v1760, 64
      %v1862 = vpop.permute.xlu0 %1861
      %1863 = vrot.lane.b32.xlu0 %v1767, 64
      %v1864 = vpop.permute.xlu0 %1863
      %1865 = vrot.lane.b32.xlu0 %v1774, 64
      %v1866 = vpop.permute.xlu0 %1865
      %1867 = vrot.lane.b32.xlu0 %v1781, 64
      %v1868 = vpop.permute.xlu0 %1867
      %1869 = vrot.lane.b32.xlu0 %v1788, 64
      %v1870 = vpop.permute.xlu0 %1869
      %1871 = vrot.lane.b32.xlu0 %v1795, 64
      %v1872 = vpop.permute.xlu0 %1871
      %1873 = vrot.lane.b32.xlu0 %v1802, 64
      %v1874 = vpop.permute.xlu0 %1873
      %1875 = vrot.lane.b32.xlu0 %v1809, 64
      %v1876 = vpop.permute.xlu0 %1875
      %1877 = vrot.lane.b32.xlu0 %v1816, 64
      %v1878 = vpop.permute.xlu0 %1877
      %1879 = vrot.lane.b32.xlu0 %v1823, 64
      %v1880 = vpop.permute.xlu0 %1879
      %1881 = vrot.lane.b32.xlu0 %v1830, 64
      %v1882 = vpop.permute.xlu0 %1881
      %1883 = vrot.lane.b32.xlu0 %v1837, 64
      %v1884 = vpop.permute.xlu0 %1883
      %1885 = vrot.lane.b32.xlu0 %v1844, 64
      %v1886 = vpop.permute.xlu0 %1885
      %1887 = vrot.lane.b32.xlu0 %v1851, 64
      %v1888 = vpop.permute.xlu0 %1887
      %1889 = vrot.lane.b32.xlu0 %v1858, 64
      %v1890 = vpop.permute.xlu0 %1889
      %v1907 = vunpack.c.l.b16 %v1027
      %v1908 = vunpack.c.l.b16 %v1028
      %v1909 = vunpack.c.l.b16 %v1029
      %v1910 = vunpack.c.l.b16 %v1030
      %v1911 = vunpack.c.l.b16 %v1031
      %v1912 = vunpack.c.l.b16 %v1032
      %v1913 = vunpack.c.l.b16 %v1033
      %v1914 = vunpack.c.l.b16 %v1034
      %v1915 = vunpack.c.l.b16 %v1035
      %v1916 = vunpack.c.l.b16 %v1036
      %v1917 = vunpack.c.l.b16 %v1037
      %v1918 = vunpack.c.l.b16 %v1038
      %v1919 = vunpack.c.l.b16 %v1039
      %v1920 = vunpack.c.l.b16 %v1040
      %v1921 = vunpack.c.l.b16 %v1041
      %v1922 = vunpack.c.l.b16 %v1042
      %v1923 = vpack.c.b16 %v1700, %v1907
      %v1924 = vpack.c.b16 %v1702, %v1908
      %v1925 = vpack.c.b16 %v1704, %v1909
      %v1926 = vpack.c.b16 %v1706, %v1910
      %v1927 = vpack.c.b16 %v1708, %v1911
      %v1928 = vpack.c.b16 %v1710, %v1912
      %v1929 = vpack.c.b16 %v1712, %v1913
      %v1930 = vpack.c.b16 %v1714, %v1914
      %v1931 = vpack.c.b16 %v1716, %v1915
      %v1932 = vpack.c.b16 %v1718, %v1916
      %v1933 = vpack.c.b16 %v1720, %v1917
      %v1934 = vpack.c.b16 %v1722, %v1918
      %v1935 = vpack.c.b16 %v1724, %v1919
      %v1936 = vpack.c.b16 %v1726, %v1920
      %v1937 = vpack.c.b16 %v1728, %v1921
      %v1938 = vpack.c.b16 %v1730, %v1922
      %v1939 = vrot.slane %v1923, 1
      %v1940 = vrot.slane %v1924, 1
      %v1941 = vrot.slane %v1925, 1
      %v1942 = vrot.slane %v1926, 1
      %v1943 = vrot.slane %v1927, 1
      %v1944 = vrot.slane %v1928, 1
      %v1945 = vrot.slane %v1929, 1
      %v1946 = vrot.slane %v1930, 1
      %v1947 = vrot.slane %v1931, 1
      %v1948 = vrot.slane %v1932, 1
      %v1949 = vrot.slane %v1933, 1
      %v1950 = vrot.slane %v1934, 1
      %v1951 = vrot.slane %v1935, 1
      %v1952 = vrot.slane %v1936, 1
      %v1953 = vrot.slane %v1937, 1
      %v1954 = vrot.slane %v1938, 1
      %vm1955 = vcmask 523264
      %v1958 = vsel %vm1955, %v898, %v1236
      %v1961 = vsel %vm1955, %v899, %v1238
      %v1964 = vsel %vm1955, %v900, %v1240
      %v1967 = vsel %vm1955, %v901, %v1242
      %v1970 = vsel %vm1955, %v902, %v1244
      %v1973 = vsel %vm1955, %v903, %v1246
      %v1976 = vsel %vm1955, %v904, %v1248
      %v1979 = vsel %vm1955, %v905, %v1250
      %v1982 = vsel %vm1955, %v906, %v1252
      %v1985 = vsel %vm1955, %v907, %v1254
      %v1988 = vsel %vm1955, %v908, %v1256
      %v1991 = vsel %vm1955, %v909, %v1258
      %v1994 = vsel %vm1955, %v910, %v1260
      %v1997 = vsel %vm1955, %v911, %v1262
      %v2000 = vsel %vm1955, %v912, %v1264
      %v2003 = vsel %vm1955, %v913, %v1266
      %v2006 = vsel %vm1955, %v1315, %v1380
      %v2009 = vsel %vm1955, %v1316, %v1382
      %v2012 = vsel %vm1955, %v1317, %v1384
      %v2015 = vsel %vm1955, %v1318, %v1386
      %v2018 = vsel %vm1955, %v1319, %v1388
      %v2021 = vsel %vm1955, %v1320, %v1390
      %v2024 = vsel %vm1955, %v1321, %v1392
      %v2027 = vsel %vm1955, %v1322, %v1394
      %v2030 = vsel %vm1955, %v1323, %v1396
      %v2033 = vsel %vm1955, %v1324, %v1398
      %v2036 = vsel %vm1955, %v1325, %v1400
      %v2039 = vsel %vm1955, %v1326, %v1402
      %v2042 = vsel %vm1955, %v1327, %v1404
      %v2045 = vsel %vm1955, %v1328, %v1406
      %v2048 = vsel %vm1955, %v1329, %v1408
      %v2051 = vsel %vm1955, %v1330, %v1410
      %v2054 = vsel %vm1955, %v1465, %v1636
      %v2057 = vsel %vm1955, %v1472, %v1638
      %v2060 = vsel %vm1955, %v1479, %v1640
      %v2063 = vsel %vm1955, %v1486, %v1642
      %v2066 = vsel %vm1955, %v1493, %v1644
      %v2069 = vsel %vm1955, %v1500, %v1646
      %v2072 = vsel %vm1955, %v1507, %v1648
      %v2075 = vsel %vm1955, %v1514, %v1650
      %v2078 = vsel %vm1955, %v1521, %v1652
      %v2081 = vsel %vm1955, %v1528, %v1654
      %v2084 = vsel %vm1955, %v1535, %v1656
      %v2087 = vsel %vm1955, %v1542, %v1658
      %v2090 = vsel %vm1955, %v1549, %v1660
      %v2093 = vsel %vm1955, %v1556, %v1662
      %v2096 = vsel %vm1955, %v1563, %v1664
      %v2099 = vsel %vm1955, %v1570, %v1666
      %v2102 = vsel %vm1955, %v995, %v1860
      %v2105 = vsel %vm1955, %v996, %v1862
      %v2108 = vsel %vm1955, %v997, %v1864
      %v2111 = vsel %vm1955, %v998, %v1866
      %v2114 = vsel %vm1955, %v999, %v1868
      %v2117 = vsel %vm1955, %v1000, %v1870
      %v2120 = vsel %vm1955, %v1001, %v1872
      %v2123 = vsel %vm1955, %v1002, %v1874
      %v2126 = vsel %vm1955, %v1003, %v1876
      %v2129 = vsel %vm1955, %v1004, %v1878
      %v2132 = vsel %vm1955, %v1005, %v1880
      %v2135 = vsel %vm1955, %v1006, %v1882
      %v2138 = vsel %vm1955, %v1007, %v1884
      %v2141 = vsel %vm1955, %v1008, %v1886
      %v2144 = vsel %vm1955, %v1009, %v1888
      %v2147 = vsel %vm1955, %v1010, %v1890
      %v2212 = vunpack.c.l.b16 %v1958
      %v2213 = vunpack.c.l.b16 %v2006
      %v2214 = vunpack.c.l.b16 %v2054
      %v2215 = vunpack.c.l.b16 %v2102
      %v2216 = vunpack.c.l.b16 %v1939
      %v2217 = vunpack.c.l.b16 %v1961
      %v2218 = vunpack.c.l.b16 %v2009
      %v2219 = vunpack.c.l.b16 %v2057
      %v2220 = vunpack.c.l.b16 %v2105
      %v2221 = vunpack.c.l.b16 %v1940
      %v2222 = vunpack.c.l.b16 %v1964
      %v2223 = vunpack.c.l.b16 %v2012
      %v2224 = vunpack.c.l.b16 %v2060
      %v2225 = vunpack.c.l.b16 %v2108
      %v2226 = vunpack.c.l.b16 %v1941
      %v2227 = vunpack.c.l.b16 %v1967
      %v2228 = vunpack.c.l.b16 %v2015
      %v2229 = vunpack.c.l.b16 %v2063
      %v2230 = vunpack.c.l.b16 %v2111
      %v2231 = vunpack.c.l.b16 %v1942
      %v2232 = vunpack.c.l.b16 %v1970
      %v2233 = vunpack.c.l.b16 %v2018
      %v2234 = vunpack.c.l.b16 %v2066
      %v2235 = vunpack.c.l.b16 %v2114
      %v2236 = vunpack.c.l.b16 %v1943
      %v2237 = vunpack.c.l.b16 %v1973
      %v2238 = vunpack.c.l.b16 %v2021
      %v2239 = vunpack.c.l.b16 %v2069
      %v2240 = vunpack.c.l.b16 %v2117
      %v2241 = vunpack.c.l.b16 %v1944
      %v2242 = vunpack.c.l.b16 %v1976
      %v2243 = vunpack.c.l.b16 %v2024
      %v2244 = vunpack.c.l.b16 %v2072
      %v2245 = vunpack.c.l.b16 %v2120
      %v2246 = vunpack.c.l.b16 %v1945
      %v2247 = vunpack.c.l.b16 %v1979
      %v2248 = vunpack.c.l.b16 %v2027
      %v2249 = vunpack.c.l.b16 %v2075
      %v2250 = vunpack.c.l.b16 %v2123
      %v2251 = vunpack.c.l.b16 %v1946
      %v2252 = vunpack.c.l.b16 %v1982
      %v2253 = vunpack.c.l.b16 %v2030
      %v2254 = vunpack.c.l.b16 %v2078
      %v2255 = vunpack.c.l.b16 %v2126
      %v2256 = vunpack.c.l.b16 %v1947
      %v2257 = vunpack.c.l.b16 %v1985
      %v2258 = vunpack.c.l.b16 %v2033
      %v2259 = vunpack.c.l.b16 %v2081
      %v2260 = vunpack.c.l.b16 %v2129
      %v2261 = vunpack.c.l.b16 %v1948
      %v2262 = vunpack.c.l.b16 %v1988
      %v2263 = vunpack.c.l.b16 %v2036
      %v2264 = vunpack.c.l.b16 %v2084
      %v2265 = vunpack.c.l.b16 %v2132
      %v2266 = vunpack.c.l.b16 %v1949
      %v2267 = vunpack.c.l.b16 %v1991
      %v2268 = vunpack.c.l.b16 %v2039
      %v2269 = vunpack.c.l.b16 %v2087
      %v2270 = vunpack.c.l.b16 %v2135
      %v2271 = vunpack.c.l.b16 %v1950
      %v2272 = vunpack.c.l.b16 %v1994
      %v2273 = vunpack.c.l.b16 %v2042
      %v2274 = vunpack.c.l.b16 %v2090
      %v2275 = vunpack.c.l.b16 %v2138
      %v2276 = vunpack.c.l.b16 %v1951
      %v2277 = vunpack.c.l.b16 %v1997
      %v2278 = vunpack.c.l.b16 %v2045
      %v2279 = vunpack.c.l.b16 %v2093
      %v2280 = vunpack.c.l.b16 %v2141
      %v2281 = vunpack.c.l.b16 %v1952
      %v2282 = vunpack.c.l.b16 %v2000
      %v2283 = vunpack.c.l.b16 %v2048
      %v2284 = vunpack.c.l.b16 %v2096
      %v2285 = vunpack.c.l.b16 %v2144
      %v2286 = vunpack.c.l.b16 %v1953
      %v2287 = vunpack.c.l.b16 %v2003
      %v2288 = vunpack.c.l.b16 %v2051
      %v2289 = vunpack.c.l.b16 %v2099
      %v2290 = vunpack.c.l.b16 %v2147
      %v2291 = vunpack.c.l.b16 %v1954
      %v2292 = vld [vmem:[%s4] sm:$0xf]
      %v2293 = vld [vmem:[%s4 + $0x4] sm:$0xf]
      %v2294 = vld [vmem:[%s4 + $0x8] sm:$0xf]
      %v2295 = vld [vmem:[%s4 + $0xc] sm:$0xf]
      %v2296 = vld [vmem:[%s4 + $0x10] sm:$0xf]
      %v2297 = vld [vmem:[%s4 + $0x14] sm:$0xf]
      %v2298 = vld [vmem:[%s4 + $0x18] sm:$0xf]
      %v2299 = vld [vmem:[%s4 + $0x1c] sm:$0xf]
      %v2300 = vld [vmem:[%s4 + $0x20] sm:$0xf]
      %v2301 = vld [vmem:[%s4 + $0x24] sm:$0xf]
      %v2302 = vld [vmem:[%s4 + $0x28] sm:$0xf]
      %v2303 = vld [vmem:[%s4 + $0x2c] sm:$0xf]
      %v2304 = vld [vmem:[%s4 + $0x30] sm:$0xf]
      %v2305 = vld [vmem:[%s4 + $0x34] sm:$0xf]
      %v2306 = vld [vmem:[%s4 + $0x38] sm:$0xf]
      %v2307 = vld [vmem:[%s4 + $0x3c] sm:$0xf]
      %v2308 = vld [vmem:[%s4 + $0x40] sm:$0xf]
      %v2309 = vld [vmem:[%s4 + $0x44] sm:$0xf]
      %v2310 = vld [vmem:[%s4 + $0x48] sm:$0xf]
      %v2311 = vld [vmem:[%s4 + $0x4c] sm:$0xf]
      %v2312 = vld [vmem:[%s4 + $0x50] sm:$0xf]
      %v2313 = vld [vmem:[%s4 + $0x54] sm:$0xf]
      %v2314 = vld [vmem:[%s4 + $0x58] sm:$0xf]
      %v2315 = vld [vmem:[%s4 + $0x5c] sm:$0xf]
      %v2316 = vld [vmem:[%s4 + $0x60] sm:$0xf]
      %v2317 = vld [vmem:[%s4 + $0x64] sm:$0xf]
      %v2318 = vld [vmem:[%s4 + $0x68] sm:$0xf]
      %v2319 = vld [vmem:[%s4 + $0x6c] sm:$0xf]
      %v2320 = vld [vmem:[%s4 + $0x70] sm:$0xf]
      %v2321 = vld [vmem:[%s4 + $0x74] sm:$0xf]
      %v2322 = vld [vmem:[%s4 + $0x78] sm:$0xf]
      %v2323 = vld [vmem:[%s4 + $0x7c] sm:$0xf]
      %v2324 = vld [vmem:[%s4 + $0x80] sm:$0xf]
      %v2325 = vld [vmem:[%s4 + $0x84] sm:$0xf]
      %v2326 = vld [vmem:[%s4 + $0x88] sm:$0xf]
      %v2327 = vld [vmem:[%s4 + $0x8c] sm:$0xf]
      %v2328 = vld [vmem:[%s4 + $0x90] sm:$0xf]
      %v2329 = vld [vmem:[%s4 + $0x94] sm:$0xf]
      %v2330 = vld [vmem:[%s4 + $0x98] sm:$0xf]
      %v2331 = vld [vmem:[%s4 + $0x9c] sm:$0xf]
      %v2332 = vld [vmem:[%s4 + $0xa0] sm:$0xf]
      %v2333 = vld [vmem:[%s4 + $0xa4] sm:$0xf]
      %v2334 = vld [vmem:[%s4 + $0xa8] sm:$0xf]
      %v2335 = vld [vmem:[%s4 + $0xac] sm:$0xf]
      %v2336 = vld [vmem:[%s4 + $0xb0] sm:$0xf]
      %v2337 = vld [vmem:[%s4 + $0xb4] sm:$0xf]
      %v2338 = vld [vmem:[%s4 + $0xb8] sm:$0xf]
      %v2339 = vld [vmem:[%s4 + $0xbc] sm:$0xf]
      %v2340 = vld [vmem:[%s4 + $0xc0] sm:$0xf]
      %v2341 = vld [vmem:[%s4 + $0xc4] sm:$0xf]
      %v2342 = vld [vmem:[%s4 + $0xc8] sm:$0xf]
      %v2343 = vld [vmem:[%s4 + $0xcc] sm:$0xf]
      %v2344 = vld [vmem:[%s4 + $0xd0] sm:$0xf]
      %v2345 = vld [vmem:[%s4 + $0xd4] sm:$0xf]
      %v2346 = vld [vmem:[%s4 + $0xd8] sm:$0xf]
      %v2347 = vld [vmem:[%s4 + $0xdc] sm:$0xf]
      %v2348 = vld [vmem:[%s4 + $0xe0] sm:$0xf]
      %v2349 = vld [vmem:[%s4 + $0xe4] sm:$0xf]
      %v2350 = vld [vmem:[%s4 + $0xe8] sm:$0xf]
      %v2351 = vld [vmem:[%s4 + $0xec] sm:$0xf]
      %v2352 = vld [vmem:[%s4 + $0xf0] sm:$0xf]
      %v2353 = vld [vmem:[%s4 + $0xf4] sm:$0xf]
      %v2354 = vld [vmem:[%s4 + $0xf8] sm:$0xf]
      %v2355 = vld [vmem:[%s4 + $0xfc] sm:$0xf]
      %v2356 = vld [vmem:[%s4 + $0x100] sm:$0xf]
      %v2357 = vld [vmem:[%s4 + $0x104] sm:$0xf]
      %v2358 = vld [vmem:[%s4 + $0x108] sm:$0xf]
      %v2359 = vld [vmem:[%s4 + $0x10c] sm:$0xf]
      %v2360 = vld [vmem:[%s4 + $0x110] sm:$0xf]
      %v2361 = vld [vmem:[%s4 + $0x114] sm:$0xf]
      %v2362 = vld [vmem:[%s4 + $0x118] sm:$0xf]
      %v2363 = vld [vmem:[%s4 + $0x11c] sm:$0xf]
      %v2364 = vpack.c.b16 %v2217, %v2212
      %v2365 = vpack.c.b16 %v2218, %v2213
      %v2366 = vpack.c.b16 %v2219, %v2214
      %v2367 = vpack.c.b16 %v2220, %v2215
      %v2368 = vpack.c.b16 %v2221, %v2216
      %v2369 = vpack.c.b16 %v2227, %v2222
      %v2370 = vpack.c.b16 %v2228, %v2223
      %v2371 = vpack.c.b16 %v2229, %v2224
      %v2372 = vpack.c.b16 %v2230, %v2225
      %v2373 = vpack.c.b16 %v2231, %v2226
      %v2374 = vpack.c.b16 %v2237, %v2232
      %v2375 = vpack.c.b16 %v2238, %v2233
      %v2376 = vpack.c.b16 %v2239, %v2234
      %v2377 = vpack.c.b16 %v2240, %v2235
      %v2378 = vpack.c.b16 %v2241, %v2236
      %v2379 = vpack.c.b16 %v2247, %v2242
      %v2380 = vpack.c.b16 %v2248, %v2243
      %v2381 = vpack.c.b16 %v2249, %v2244
      %v2382 = vpack.c.b16 %v2250, %v2245
      %v2383 = vpack.c.b16 %v2251, %v2246
      %v2384 = vpack.c.b16 %v2257, %v2252
      %v2385 = vpack.c.b16 %v2258, %v2253
      %v2386 = vpack.c.b16 %v2259, %v2254
      %v2387 = vpack.c.b16 %v2260, %v2255
      %v2388 = vpack.c.b16 %v2261, %v2256
      %v2389 = vpack.c.b16 %v2267, %v2262
      %v2390 = vpack.c.b16 %v2268, %v2263
      %v2391 = vpack.c.b16 %v2269, %v2264
      %v2392 = vpack.c.b16 %v2270, %v2265
      %v2393 = vpack.c.b16 %v2271, %v2266
      %v2394 = vpack.c.b16 %v2277, %v2272
      %v2395 = vpack.c.b16 %v2278, %v2273
      %v2396 = vpack.c.b16 %v2279, %v2274
      %v2397 = vpack.c.b16 %v2280, %v2275
      %v2398 = vpack.c.b16 %v2281, %v2276
      %v2399 = vpack.c.b16 %v2287, %v2282
      %v2400 = vpack.c.b16 %v2288, %v2283
      %v2401 = vpack.c.b16 %v2289, %v2284
      %v2402 = vpack.c.b16 %v2290, %v2285
      %v2403 = vpack.c.b16 %v2291, %v2286
      %v2508 = vunpack.c.l.b16 %v2292
      %v2509 = vunpack.c.l.b16 %v2293
      %v2510 = vunpack.c.l.b16 %v2294
      %v2511 = vunpack.c.l.b16 %v2295
      %v2512 = vunpack.c.l.b16 %v2296
      %v2513 = vunpack.c.l.b16 %v2297
      %v2514 = vunpack.c.l.b16 %v2298
      %v2515 = vunpack.c.l.b16 %v2299
      %v2516 = vunpack.c.l.b16 %v2300
      %v2517 = vunpack.c.l.b16 %v2301
      %v2518 = vunpack.c.l.b16 %v2302
      %v2519 = vunpack.c.l.b16 %v2303
      %v2520 = vunpack.c.l.b16 %v2304
      %v2521 = vunpack.c.l.b16 %v2305
      %v2522 = vunpack.c.l.b16 %v2306
      %v2523 = vunpack.c.l.b16 %v2307
      %v2524 = vunpack.c.l.b16 %v2308
      %v2525 = vunpack.c.l.b16 %v2309
      %v2526 = vunpack.c.l.b16 %v2310
      %v2527 = vunpack.c.l.b16 %v2311
      %v2528 = vunpack.c.l.b16 %v2312
      %v2529 = vunpack.c.l.b16 %v2313
      %v2530 = vunpack.c.l.b16 %v2314
      %v2531 = vunpack.c.l.b16 %v2315
      %v2532 = vunpack.c.l.b16 %v2316
      %v2533 = vunpack.c.l.b16 %v2317
      %v2534 = vunpack.c.l.b16 %v2318
      %v2535 = vunpack.c.l.b16 %v2319
      %v2536 = vunpack.c.l.b16 %v2320
      %v2537 = vunpack.c.l.b16 %v2321
      %v2538 = vunpack.c.l.b16 %v2322
      %v2539 = vunpack.c.l.b16 %v2323
      %v2540 = vunpack.c.l.b16 %v2324
      %v2541 = vunpack.c.l.b16 %v2325
      %v2542 = vunpack.c.l.b16 %v2326
      %v2543 = vunpack.c.l.b16 %v2327
      %v2544 = vunpack.c.l.b16 %v2328
      %v2545 = vunpack.c.l.b16 %v2329
      %v2546 = vunpack.c.l.b16 %v2330
      %v2547 = vunpack.c.l.b16 %v2331
      %v2548 = vunpack.c.l.b16 %v2332
      %v2549 = vunpack.c.l.b16 %v2333
      %v2550 = vunpack.c.l.b16 %v2334
      %v2551 = vunpack.c.l.b16 %v2335
      %v2552 = vunpack.c.l.b16 %v2336
      %v2553 = vunpack.c.l.b16 %v2337
      %v2554 = vunpack.c.l.b16 %v2338
      %v2555 = vunpack.c.l.b16 %v2339
      %v2556 = vunpack.c.l.b16 %v2340
      %v2557 = vunpack.c.l.b16 %v2341
      %v2558 = vunpack.c.l.b16 %v2342
      %v2559 = vunpack.c.l.b16 %v2343
      %v2560 = vunpack.c.l.b16 %v2344
      %v2561 = vunpack.c.l.b16 %v2345
      %v2562 = vunpack.c.l.b16 %v2346
      %v2563 = vunpack.c.l.b16 %v2347
      %v2564 = vunpack.c.l.b16 %v2348
      %v2565 = vunpack.c.l.b16 %v2349
      %v2566 = vunpack.c.l.b16 %v2350
      %v2567 = vunpack.c.l.b16 %v2351
      %v2568 = vunpack.c.l.b16 %v2352
      %v2569 = vunpack.c.l.b16 %v2353
      %v2570 = vunpack.c.l.b16 %v2354
      %v2571 = vunpack.c.l.b16 %v2355
      %v2572 = vunpack.c.l.b16 %v2356
      %v2573 = vunpack.c.l.b16 %v2357
      %v2574 = vunpack.c.l.b16 %v2358
      %v2575 = vunpack.c.l.b16 %v2359
      %v2576 = vunpack.c.l.b16 %v2360
      %v2577 = vunpack.c.l.b16 %v2361
      %v2578 = vunpack.c.l.b16 %v2362
      %v2579 = vunpack.c.l.b16 %v2363
      %v2580 = vpack.c.b16 %v2509, %v2508
      %v2581 = vpack.c.b16 %v2511, %v2510
      %v2582 = vpack.c.b16 %v2513, %v2512
      %v2583 = vpack.c.b16 %v2515, %v2514
      %v2584 = vpack.c.b16 %v2517, %v2516
      %v2585 = vpack.c.b16 %v2519, %v2518
      %v2586 = vpack.c.b16 %v2521, %v2520
      %v2587 = vpack.c.b16 %v2523, %v2522
      %v2588 = vpack.c.b16 %v2525, %v2524
      %v2589 = vpack.c.b16 %v2527, %v2526
      %v2590 = vpack.c.b16 %v2529, %v2528
      %v2591 = vpack.c.b16 %v2531, %v2530
      %v2592 = vpack.c.b16 %v2533, %v2532
      %v2593 = vpack.c.b16 %v2535, %v2534
      %v2594 = vpack.c.b16 %v2537, %v2536
      %v2595 = vpack.c.b16 %v2539, %v2538
      %v2596 = vpack.c.b16 %v2541, %v2540
      %v2597 = vpack.c.b16 %v2543, %v2542
      %v2598 = vpack.c.b16 %v2545, %v2544
      %v2599 = vpack.c.b16 %v2547, %v2546
      %v2600 = vpack.c.b16 %v2549, %v2548
      %v2601 = vpack.c.b16 %v2551, %v2550
      %v2602 = vpack.c.b16 %v2553, %v2552
      %v2603 = vpack.c.b16 %v2555, %v2554
      %v2604 = vpack.c.b16 %v2557, %v2556
      %v2605 = vpack.c.b16 %v2559, %v2558
      %v2606 = vpack.c.b16 %v2561, %v2560
      %v2607 = vpack.c.b16 %v2563, %v2562
      %v2608 = vpack.c.b16 %v2565, %v2564
      %v2609 = vpack.c.b16 %v2567, %v2566
      %v2610 = vpack.c.b16 %v2569, %v2568
      %v2611 = vpack.c.b16 %v2571, %v2570
      %v2612 = vpack.c.b16 %v2573, %v2572
      %v2613 = vpack.c.b16 %v2575, %v2574
      %v2614 = vpack.c.b16 %v2577, %v2576
      %v2615 = vpack.c.b16 %v2579, %v2578
      %v2653 = vsel %vm1955, %v2368, 0
      %v2656 = vsel %vm1955, %v2373, 0
      %v2659 = vsel %vm1955, %v2378, 0
      %v2662 = vsel %vm1955, %v2383, 0
      %v2665 = vsel %vm1955, %v2388, 0
      %v2668 = vsel %vm1955, %v2393, 0
      %v2671 = vsel %vm1955, %v2398, 0
      %v2674 = vsel %vm1955, %v2403, 0
      %2676 = vmatpush.bf16.msra.mxu0 %v2587
      %2677 = vmatpush.bf16.msra.mxu0 %v2586
      %2678 = vmatpush.bf16.msra.mxu0 %v2585
      %2679 = vmatpush.bf16.msra.mxu0 %v2584
      %2680 = vmatpush.bf16.msra.mxu0 %v2583
      %2681 = vmatpush.bf16.msra.mxu0 %v2582
      %2682 = vmatpush.bf16.msra.mxu0 %v2581
      %2683 = vmatpush.bf16.msra.mxu0 %v2580
      %2684 = vmatmul.bf16.gmra.mxu0 %v2364
      %v2685 = vpop.f32.mrf.mxu0
      %v2686 = vadd.f32 0.0, %v2685
      %v2687 = vpop.f32.mrf.mxu0
      %v2688 = vadd.f32 0.0, %v2687
      %2689 = vmatmul.bf16.gmra.mxu0 %v2369
      %v2690 = vpop.f32.mrf.mxu0
      %v2691 = vadd.f32 0.0, %v2690
      %v2692 = vpop.f32.mrf.mxu0
      %v2693 = vadd.f32 0.0, %v2692
      %2694 = vmatmul.bf16.gmra.mxu0 %v2374
      %v2695 = vpop.f32.mrf.mxu0
      %v2696 = vadd.f32 0.0, %v2695
      %v2697 = vpop.f32.mrf.mxu0
      %v2698 = vadd.f32 0.0, %v2697
      %2699 = vmatmul.bf16.gmra.mxu0 %v2379
      %v2700 = vpop.f32.mrf.mxu0
      %v2701 = vadd.f32 0.0, %v2700
      %v2702 = vpop.f32.mrf.mxu0
      %v2703 = vadd.f32 0.0, %v2702
      %2704 = vmatmul.bf16.gmra.mxu0 %v2384
      %v2705 = vpop.f32.mrf.mxu0
      %v2706 = vadd.f32 0.0, %v2705
      %v2707 = vpop.f32.mrf.mxu0
      %v2708 = vadd.f32 0.0, %v2707
      %2709 = vmatmul.bf16.gmra.mxu0 %v2389
      %v2710 = vpop.f32.mrf.mxu0
      %v2711 = vadd.f32 0.0, %v2710
      %v2712 = vpop.f32.mrf.mxu0
      %v2713 = vadd.f32 0.0, %v2712
      %2714 = vmatmul.bf16.gmra.mxu0 %v2394
      %v2715 = vpop.f32.mrf.mxu0
      %v2716 = vadd.f32 0.0, %v2715
      %v2717 = vpop.f32.mrf.mxu0
      %v2718 = vadd.f32 0.0, %v2717
      %2719 = vmatmul.bf16.gmra.mxu0 %v2399
      %v2720 = vpop.f32.mrf.mxu0
      %v2721 = vadd.f32 0.0, %v2720
      %v2722 = vpop.f32.mrf.mxu0
      %v2723 = vadd.f32 0.0, %v2722
      %2724 = vdwg.mxu0
      %2725 = vmatpush.bf16.msra.mxu0 %v2595
      %2726 = vmatpush.bf16.msra.mxu0 %v2594
      %2727 = vmatpush.bf16.msra.mxu0 %v2593
      %2728 = vmatpush.bf16.msra.mxu0 %v2592
      %2729 = vmatpush.bf16.msra.mxu0 %v2591
      %2730 = vmatpush.bf16.msra.mxu0 %v2590
      %2731 = vmatpush.bf16.msra.mxu0 %v2589
      %2732 = vmatpush.bf16.msra.mxu0 %v2588
      %2733 = vmatmul.bf16.gmra.mxu0 %v2365
      %v2734 = vpop.f32.mrf.mxu0
      %v2735 = vadd.f32 %v2686, %v2734
      %v2736 = vpop.f32.mrf.mxu0
      %v2737 = vadd.f32 %v2688, %v2736
      %2738 = vmatmul.bf16.gmra.mxu0 %v2370
      %v2739 = vpop.f32.mrf.mxu0
      %v2740 = vadd.f32 %v2691, %v2739
      %v2741 = vpop.f32.mrf.mxu0
      %v2742 = vadd.f32 %v2693, %v2741
      %2743 = vmatmul.bf16.gmra.mxu0 %v2375
      %v2744 = vpop.f32.mrf.mxu0
      %v2745 = vadd.f32 %v2696, %v2744
      %v2746 = vpop.f32.mrf.mxu0
      %v2747 = vadd.f32 %v2698, %v2746
      %2748 = vmatmul.bf16.gmra.mxu0 %v2380
      %v2749 = vpop.f32.mrf.mxu0
      %v2750 = vadd.f32 %v2701, %v2749
      %v2751 = vpop.f32.mrf.mxu0
      %v2752 = vadd.f32 %v2703, %v2751
      %2753 = vmatmul.bf16.gmra.mxu0 %v2385
      %v2754 = vpop.f32.mrf.mxu0
      %v2755 = vadd.f32 %v2706, %v2754
      %v2756 = vpop.f32.mrf.mxu0
      %v2757 = vadd.f32 %v2708, %v2756
      %2758 = vmatmul.bf16.gmra.mxu0 %v2390
      %v2759 = vpop.f32.mrf.mxu0
      %v2760 = vadd.f32 %v2711, %v2759
      %v2761 = vpop.f32.mrf.mxu0
      %v2762 = vadd.f32 %v2713, %v2761
      %2763 = vmatmul.bf16.gmra.mxu0 %v2395
      %v2764 = vpop.f32.mrf.mxu0
      %v2765 = vadd.f32 %v2716, %v2764
      %v2766 = vpop.f32.mrf.mxu0
      %v2767 = vadd.f32 %v2718, %v2766
      %2768 = vmatmul.bf16.gmra.mxu0 %v2400
      %v2769 = vpop.f32.mrf.mxu0
      %v2770 = vadd.f32 %v2721, %v2769
      %v2771 = vpop.f32.mrf.mxu0
      %v2772 = vadd.f32 %v2723, %v2771
      %2773 = vdwg.mxu0
      %2774 = vmatpush.bf16.msra.mxu0 %v2603
      %2775 = vmatpush.bf16.msra.mxu0 %v2602
      %2776 = vmatpush.bf16.msra.mxu0 %v2601
      %2777 = vmatpush.bf16.msra.mxu0 %v2600
      %2778 = vmatpush.bf16.msra.mxu0 %v2599
      %2779 = vmatpush.bf16.msra.mxu0 %v2598
      %2780 = vmatpush.bf16.msra.mxu0 %v2597
      %2781 = vmatpush.bf16.msra.mxu0 %v2596
      %2782 = vmatmul.bf16.gmra.mxu0 %v2366
      %v2783 = vpop.f32.mrf.mxu0
      %v2784 = vadd.f32 %v2735, %v2783
      %v2785 = vpop.f32.mrf.mxu0
      %v2786 = vadd.f32 %v2737, %v2785
      %2787 = vmatmul.bf16.gmra.mxu0 %v2371
      %v2788 = vpop.f32.mrf.mxu0
      %v2789 = vadd.f32 %v2740, %v2788
      %v2790 = vpop.f32.mrf.mxu0
      %v2791 = vadd.f32 %v2742, %v2790
      %2792 = vmatmul.bf16.gmra.mxu0 %v2376
      %v2793 = vpop.f32.mrf.mxu0
      %v2794 = vadd.f32 %v2745, %v2793
      %v2795 = vpop.f32.mrf.mxu0
      %v2796 = vadd.f32 %v2747, %v2795
      %2797 = vmatmul.bf16.gmra.mxu0 %v2381
      %v2798 = vpop.f32.mrf.mxu0
      %v2799 = vadd.f32 %v2750, %v2798
      %v2800 = vpop.f32.mrf.mxu0
      %v2801 = vadd.f32 %v2752, %v2800
      %2802 = vmatmul.bf16.gmra.mxu0 %v2386
      %v2803 = vpop.f32.mrf.mxu0
      %v2804 = vadd.f32 %v2755, %v2803
      %v2805 = vpop.f32.mrf.mxu0
      %v2806 = vadd.f32 %v2757, %v2805
      %2807 = vmatmul.bf16.gmra.mxu0 %v2391
      %v2808 = vpop.f32.mrf.mxu0
      %v2809 = vadd.f32 %v2760, %v2808
      %v2810 = vpop.f32.mrf.mxu0
      %v2811 = vadd.f32 %v2762, %v2810
      %2812 = vmatmul.bf16.gmra.mxu0 %v2396
      %v2813 = vpop.f32.mrf.mxu0
      %v2814 = vadd.f32 %v2765, %v2813
      %v2815 = vpop.f32.mrf.mxu0
      %v2816 = vadd.f32 %v2767, %v2815
      %2817 = vmatmul.bf16.gmra.mxu0 %v2401
      %v2818 = vpop.f32.mrf.mxu0
      %v2819 = vadd.f32 %v2770, %v2818
      %v2820 = vpop.f32.mrf.mxu0
      %v2821 = vadd.f32 %v2772, %v2820
      %2822 = vdwg.mxu0
      %2823 = vmatpush.bf16.msra.mxu0 %v2611
      %2824 = vmatpush.bf16.msra.mxu0 %v2610
      %2825 = vmatpush.bf16.msra.mxu0 %v2609
      %2826 = vmatpush.bf16.msra.mxu0 %v2608
      %2827 = vmatpush.bf16.msra.mxu0 %v2607
      %2828 = vmatpush.bf16.msra.mxu0 %v2606
      %2829 = vmatpush.bf16.msra.mxu0 %v2605
      %2830 = vmatpush.bf16.msra.mxu0 %v2604
      %2831 = vmatmul.bf16.gmra.mxu0 %v2367
      %v2832 = vpop.f32.mrf.mxu0
      %v2833 = vadd.f32 %v2784, %v2832
      %v2834 = vpop.f32.mrf.mxu0
      %v2835 = vadd.f32 %v2786, %v2834
      %2836 = vmatmul.bf16.gmra.mxu0 %v2372
      %v2837 = vpop.f32.mrf.mxu0
      %v2838 = vadd.f32 %v2789, %v2837
      %v2839 = vpop.f32.mrf.mxu0
      %v2840 = vadd.f32 %v2791, %v2839
      %2841 = vmatmul.bf16.gmra.mxu0 %v2377
      %v2842 = vpop.f32.mrf.mxu0
      %v2843 = vadd.f32 %v2794, %v2842
      %v2844 = vpop.f32.mrf.mxu0
      %v2845 = vadd.f32 %v2796, %v2844
      %2846 = vmatmul.bf16.gmra.mxu0 %v2382
      %v2847 = vpop.f32.mrf.mxu0
      %v2848 = vadd.f32 %v2799, %v2847
      %v2849 = vpop.f32.mrf.mxu0
      %v2850 = vadd.f32 %v2801, %v2849
      %2851 = vmatmul.bf16.gmra.mxu0 %v2387
      %v2852 = vpop.f32.mrf.mxu0
      %v2853 = vadd.f32 %v2804, %v2852
      %v2854 = vpop.f32.mrf.mxu0
      %v2855 = vadd.f32 %v2806, %v2854
      %2856 = vmatmul.bf16.gmra.mxu0 %v2392
      %v2857 = vpop.f32.mrf.mxu0
      %v2858 = vadd.f32 %v2809, %v2857
      %v2859 = vpop.f32.mrf.mxu0
      %v2860 = vadd.f32 %v2811, %v2859
      %2861 = vmatmul.bf16.gmra.mxu0 %v2397
      %v2862 = vpop.f32.mrf.mxu0
      %v2863 = vadd.f32 %v2814, %v2862
      %v2864 = vpop.f32.mrf.mxu0
      %v2865 = vadd.f32 %v2816, %v2864
      %2866 = vmatmul.bf16.gmra.mxu0 %v2402
      %v2867 = vpop.f32.mrf.mxu0
      %v2868 = vadd.f32 %v2819, %v2867
      %v2869 = vpop.f32.mrf.mxu0
      %v2870 = vadd.f32 %v2821, %v2869
      %2871 = vdwg.mxu0
      %2872 = vmatpush.bf16.msra.mxu0 0
      %2873 = vmatpush.bf16.msra.mxu0 0
      %2874 = vmatpush.bf16.msra.mxu0 0
      %2875 = vmatpush.bf16.msra.mxu0 0
      %2876 = vmatpush.bf16.msra.mxu0 %v2615
      %2877 = vmatpush.bf16.msra.mxu0 %v2614
      %2878 = vmatpush.bf16.msra.mxu0 %v2613
      %2879 = vmatpush.bf16.msra.mxu0 %v2612
      %2880 = vmatmul.bf16.gmra.mxu0 %v2653
      %v2881 = vpop.f32.mrf.mxu0
      %v2882 = vadd.f32 %v2833, %v2881
      %v2883 = vpop.f32.mrf.mxu0
      %v2884 = vadd.f32 %v2835, %v2883
      %2885 = vmatmul.bf16.gmra.mxu0 %v2656
      %v2886 = vpop.f32.mrf.mxu0
      %v2887 = vadd.f32 %v2838, %v2886
      %v2888 = vpop.f32.mrf.mxu0
      %v2889 = vadd.f32 %v2840, %v2888
      %2890 = vmatmul.bf16.gmra.mxu0 %v2659
      %v2891 = vpop.f32.mrf.mxu0
      %v2892 = vadd.f32 %v2843, %v2891
      %v2893 = vpop.f32.mrf.mxu0
      %v2894 = vadd.f32 %v2845, %v2893
      %2895 = vmatmul.bf16.gmra.mxu0 %v2662
      %v2896 = vpop.f32.mrf.mxu0
      %v2897 = vadd.f32 %v2848, %v2896
      %v2898 = vpop.f32.mrf.mxu0
      %v2899 = vadd.f32 %v2850, %v2898
      %2900 = vmatmul.bf16.gmra.mxu0 %v2665
      %v2901 = vpop.f32.mrf.mxu0
      %v2902 = vadd.f32 %v2853, %v2901
      %v2903 = vpop.f32.mrf.mxu0
      %v2904 = vadd.f32 %v2855, %v2903
      %2905 = vmatmul.bf16.gmra.mxu0 %v2668
      %v2906 = vpop.f32.mrf.mxu0
      %v2907 = vadd.f32 %v2858, %v2906
      %v2908 = vpop.f32.mrf.mxu0
      %v2909 = vadd.f32 %v2860, %v2908
      %2910 = vmatmul.bf16.gmra.mxu0 %v2671
      %v2911 = vpop.f32.mrf.mxu0
      %v2912 = vadd.f32 %v2863, %v2911
      %v2913 = vpop.f32.mrf.mxu0
      %v2914 = vadd.f32 %v2865, %v2913
      %2915 = vmatmul.bf16.gmra.mxu0 %v2674
      %v2916 = vpop.f32.mrf.mxu0
      %v2917 = vadd.f32 %v2868, %v2916
      %v2918 = vpop.f32.mrf.mxu0
      %v2919 = vadd.f32 %v2870, %v2918
      %2920 = vdwg.mxu0
      %v2921 = vld [vmem:[%s5] sm:$0x1]
      %v2923 = vperm.slane %v2921, 0
      %v2925 = vmul.f32 %v2882, %v2923
      %v2926 = vmul.f32 %v2884, %v2923
      %v2927 = vmul.f32 %v2887, %v2923
      %v2928 = vmul.f32 %v2889, %v2923
      %v2929 = vmul.f32 %v2892, %v2923
      %v2930 = vmul.f32 %v2894, %v2923
      %v2931 = vmul.f32 %v2897, %v2923
      %v2932 = vmul.f32 %v2899, %v2923
      %v2933 = vmul.f32 %v2902, %v2923
      %v2934 = vmul.f32 %v2904, %v2923
      %v2935 = vmul.f32 %v2907, %v2923
      %v2936 = vmul.f32 %v2909, %v2923
      %v2937 = vmul.f32 %v2912, %v2923
      %v2938 = vmul.f32 %v2914, %v2923
      %v2939 = vmul.f32 %v2917, %v2923
      %v2940 = vmul.f32 %v2919, %v2923
      %v2941 = vld [vmem:[%s6] sm:$0x1]
      %v2943 = vperm.slane %v2941, 0
      %v2945 = vadd.f32 %v2925, %v2943
      %v2946 = vadd.f32 %v2926, %v2943
      %v2947 = vadd.f32 %v2927, %v2943
      %v2948 = vadd.f32 %v2928, %v2943
      %v2949 = vadd.f32 %v2929, %v2943
      %v2950 = vadd.f32 %v2930, %v2943
      %v2951 = vadd.f32 %v2931, %v2943
      %v2952 = vadd.f32 %v2932, %v2943
      %v2953 = vadd.f32 %v2933, %v2943
      %v2954 = vadd.f32 %v2934, %v2943
      %v2955 = vadd.f32 %v2935, %v2943
      %v2956 = vadd.f32 %v2936, %v2943
      %v2957 = vadd.f32 %v2937, %v2943
      %v2958 = vadd.f32 %v2938, %v2943
      %v2959 = vadd.f32 %v2939, %v2943
      %v2960 = vadd.f32 %v2940, %v2943
      %v2961 = vmax.f32 %v2945, 0.0
      %v2962 = vmax.f32 %v2946, 0.0
      %v2963 = vmax.f32 %v2947, 0.0
      %v2964 = vmax.f32 %v2948, 0.0
      %v2965 = vmax.f32 %v2949, 0.0
      %v2966 = vmax.f32 %v2950, 0.0
      %v2967 = vmax.f32 %v2951, 0.0
      %v2968 = vmax.f32 %v2952, 0.0
      %v2969 = vmax.f32 %v2953, 0.0
      %v2970 = vmax.f32 %v2954, 0.0
      %v2971 = vmax.f32 %v2955, 0.0
      %v2972 = vmax.f32 %v2956, 0.0
      %v2973 = vmax.f32 %v2957, 0.0
      %v2974 = vmax.f32 %v2958, 0.0
      %v2975 = vmax.f32 %v2959, 0.0
      %v2976 = vmax.f32 %v2960, 0.0
      %v2977 = vpack.c.bf16 %v2961, %v2961
      %v2978 = vpack.c.bf16 %v2962, %v2962
      %v2979 = vpack.c.bf16 %v2963, %v2963
      %v2980 = vpack.c.bf16 %v2964, %v2964
      %v2981 = vpack.c.bf16 %v2965, %v2965
      %v2982 = vpack.c.bf16 %v2966, %v2966
      %v2983 = vpack.c.bf16 %v2967, %v2967
      %v2984 = vpack.c.bf16 %v2968, %v2968
      %v2985 = vpack.c.bf16 %v2969, %v2969
      %v2986 = vpack.c.bf16 %v2970, %v2970
      %v2987 = vpack.c.bf16 %v2971, %v2971
      %v2988 = vpack.c.bf16 %v2972, %v2972
      %v2989 = vpack.c.bf16 %v2973, %v2973
      %v2990 = vpack.c.bf16 %v2974, %v2974
      %v2991 = vpack.c.bf16 %v2975, %v2975
      %v2992 = vpack.c.bf16 %v2976, %v2976
      %v2994 = vshrl.u32 %v2977, 16
      %v2996 = vrot.slane %v2994, 7
      %v2997 = vshll.u32 %v2977, 16
      %v2999 = vor.u32 %v2996, %v2997
      %v3000 = vrot.slane %v2996, 4
      %v3002 = vshrl.u32 %v2978, 16
      %v3004 = vrot.slane %v3002, 7
      %v3005 = vshll.u32 %v2978, 16
      %v3007 = vor.u32 %v3004, %v3005
      %v3008 = vrot.slane %v3004, 4
      %v3010 = vshrl.u32 %v2979, 16
      %v3012 = vrot.slane %v3010, 7
      %v3013 = vshll.u32 %v2979, 16
      %v3015 = vor.u32 %v3012, %v3013
      %v3016 = vrot.slane %v3012, 4
      %v3018 = vshrl.u32 %v2980, 16
      %v3020 = vrot.slane %v3018, 7
      %v3021 = vshll.u32 %v2980, 16
      %v3023 = vor.u32 %v3020, %v3021
      %v3024 = vrot.slane %v3020, 4
      %v3026 = vshrl.u32 %v2981, 16
      %v3028 = vrot.slane %v3026, 7
      %v3029 = vshll.u32 %v2981, 16
      %v3031 = vor.u32 %v3028, %v3029
      %v3032 = vrot.slane %v3028, 4
      %v3034 = vshrl.u32 %v2982, 16
      %v3036 = vrot.slane %v3034, 7
      %v3037 = vshll.u32 %v2982, 16
      %v3039 = vor.u32 %v3036, %v3037
      %v3040 = vrot.slane %v3036, 4
      %v3042 = vshrl.u32 %v2983, 16
      %v3044 = vrot.slane %v3042, 7
      %v3045 = vshll.u32 %v2983, 16
      %v3047 = vor.u32 %v3044, %v3045
      %v3048 = vrot.slane %v3044, 4
      %v3050 = vshrl.u32 %v2984, 16
      %v3052 = vrot.slane %v3050, 7
      %v3053 = vshll.u32 %v2984, 16
      %v3055 = vor.u32 %v3052, %v3053
      %v3056 = vrot.slane %v3052, 4
      %v3058 = vshrl.u32 %v2985, 16
      %v3060 = vrot.slane %v3058, 7
      %v3061 = vshll.u32 %v2985, 16
      %v3063 = vor.u32 %v3060, %v3061
      %v3064 = vrot.slane %v3060, 4
      %v3066 = vshrl.u32 %v2986, 16
      %v3068 = vrot.slane %v3066, 7
      %v3069 = vshll.u32 %v2986, 16
      %v3071 = vor.u32 %v3068, %v3069
      %v3072 = vrot.slane %v3068, 4
      %v3074 = vshrl.u32 %v2987, 16
      %v3076 = vrot.slane %v3074, 7
      %v3077 = vshll.u32 %v2987, 16
      %v3079 = vor.u32 %v3076, %v3077
      %v3080 = vrot.slane %v3076, 4
      %v3082 = vshrl.u32 %v2988, 16
      %v3084 = vrot.slane %v3082, 7
      %v3085 = vshll.u32 %v2988, 16
      %v3087 = vor.u32 %v3084, %v3085
      %v3088 = vrot.slane %v3084, 4
      %v3090 = vshrl.u32 %v2989, 16
      %v3092 = vrot.slane %v3090, 7
      %v3093 = vshll.u32 %v2989, 16
      %v3095 = vor.u32 %v3092, %v3093
      %v3096 = vrot.slane %v3092, 4
      %v3098 = vshrl.u32 %v2990, 16
      %v3100 = vrot.slane %v3098, 7
      %v3101 = vshll.u32 %v2990, 16
      %v3103 = vor.u32 %v3100, %v3101
      %v3104 = vrot.slane %v3100, 4
      %v3106 = vshrl.u32 %v2991, 16
      %v3108 = vrot.slane %v3106, 7
      %v3109 = vshll.u32 %v2991, 16
      %v3111 = vor.u32 %v3108, %v3109
      %v3112 = vrot.slane %v3108, 4
      %v3114 = vshrl.u32 %v2992, 16
      %v3116 = vrot.slane %v3114, 7
      %v3117 = vshll.u32 %v2992, 16
      %v3119 = vor.u32 %v3116, %v3117
      %v3120 = vrot.slane %v3116, 4
      %v3153 = vsel %vm798, %v2999, %v946
      %3154 = vst [vmem:[%s795] sm:$0xf] %v3153
      %v3155 = vld [vmem:[%s795 + $0x4] sm:$0x1]
      %v3156 = vsel %vm804, %v3000, %v3155
      %3157 = vst [vmem:[%s795 + $0x4] sm:$0x1] %v3156
      %v3158 = vld [vmem:[%s795 + $0x8] sm:$0xf]
      %v3159 = vsel %vm798, %v3007, %v3158
      %3160 = vst [vmem:[%s795 + $0x8] sm:$0xf] %v3159
      %v3161 = vld [vmem:[%s795 + $0xc] sm:$0x1]
      %v3162 = vsel %vm804, %v3008, %v3161
      %3163 = vst [vmem:[%s795 + $0xc] sm:$0x1] %v3162
      %v3164 = vld [vmem:[%s795 + $0x10] sm:$0xf]
      %v3165 = vsel %vm798, %v3015, %v3164
      %3166 = vst [vmem:[%s795 + $0x10] sm:$0xf] %v3165
      %v3167 = vld [vmem:[%s795 + $0x14] sm:$0x1]
      %v3168 = vsel %vm804, %v3016, %v3167
      %3169 = vst [vmem:[%s795 + $0x14] sm:$0x1] %v3168
      %v3170 = vld [vmem:[%s795 + $0x18] sm:$0xf]
      %v3171 = vsel %vm798, %v3023, %v3170
      %3172 = vst [vmem:[%s795 + $0x18] sm:$0xf] %v3171
      %v3173 = vld [vmem:[%s795 + $0x1c] sm:$0x1]
      %v3174 = vsel %vm804, %v3024, %v3173
      %3175 = vst [vmem:[%s795 + $0x1c] sm:$0x1] %v3174
      %v3176 = vld [vmem:[%s795 + $0x20] sm:$0xf]
      %v3177 = vsel %vm798, %v3031, %v3176
      %3178 = vst [vmem:[%s795 + $0x20] sm:$0xf] %v3177
      %v3179 = vld [vmem:[%s795 + $0x24] sm:$0x1]
      %v3180 = vsel %vm804, %v3032, %v3179
      %3181 = vst [vmem:[%s795 + $0x24] sm:$0x1] %v3180
      %v3182 = vld [vmem:[%s795 + $0x28] sm:$0xf]
      %v3183 = vsel %vm798, %v3039, %v3182
      %3184 = vst [vmem:[%s795 + $0x28] sm:$0xf] %v3183
      %v3185 = vld [vmem:[%s795 + $0x2c] sm:$0x1]
      %v3186 = vsel %vm804, %v3040, %v3185
      %3187 = vst [vmem:[%s795 + $0x2c] sm:$0x1] %v3186
      %v3188 = vld [vmem:[%s795 + $0x30] sm:$0xf]
      %v3189 = vsel %vm798, %v3047, %v3188
      %3190 = vst [vmem:[%s795 + $0x30] sm:$0xf] %v3189
      %v3191 = vld [vmem:[%s795 + $0x34] sm:$0x1]
      %v3192 = vsel %vm804, %v3048, %v3191
      %3193 = vst [vmem:[%s795 + $0x34] sm:$0x1] %v3192
      %v3194 = vld [vmem:[%s795 + $0x38] sm:$0xf]
      %v3195 = vsel %vm798, %v3055, %v3194
      %3196 = vst [vmem:[%s795 + $0x38] sm:$0xf] %v3195
      %v3197 = vld [vmem:[%s795 + $0x3c] sm:$0x1]
      %v3198 = vsel %vm804, %v3056, %v3197
      %3199 = vst [vmem:[%s795 + $0x3c] sm:$0x1] %v3198
      %v3200 = vld [vmem:[%s795 + $0x50] sm:$0xf]
      %v3201 = vsel %vm798, %v3063, %v3200
      %3202 = vst [vmem:[%s795 + $0x50] sm:$0xf] %v3201
      %v3203 = vld [vmem:[%s795 + $0x54] sm:$0x1]
      %v3204 = vsel %vm804, %v3064, %v3203
      %3205 = vst [vmem:[%s795 + $0x54] sm:$0x1] %v3204
      %v3206 = vld [vmem:[%s795 + $0x58] sm:$0xf]
      %v3207 = vsel %vm798, %v3071, %v3206
      %3208 = vst [vmem:[%s795 + $0x58] sm:$0xf] %v3207
      %v3209 = vld [vmem:[%s795 + $0x5c] sm:$0x1]
      %v3210 = vsel %vm804, %v3072, %v3209
      %3211 = vst [vmem:[%s795 + $0x5c] sm:$0x1] %v3210
      %v3212 = vld [vmem:[%s795 + $0x60] sm:$0xf]
      %v3213 = vsel %vm798, %v3079, %v3212
      %3214 = vst [vmem:[%s795 + $0x60] sm:$0xf] %v3213
      %v3215 = vld [vmem:[%s795 + $0x64] sm:$0x1]
      %v3216 = vsel %vm804, %v3080, %v3215
      %3217 = vst [vmem:[%s795 + $0x64] sm:$0x1] %v3216
      %v3218 = vld [vmem:[%s795 + $0x68] sm:$0xf]
      %v3219 = vsel %vm798, %v3087, %v3218
      %3220 = vst [vmem:[%s795 + $0x68] sm:$0xf] %v3219
      %v3221 = vld [vmem:[%s795 + $0x6c] sm:$0x1]
      %v3222 = vsel %vm804, %v3088, %v3221
      %3223 = vst [vmem:[%s795 + $0x6c] sm:$0x1] %v3222
      %v3224 = vld [vmem:[%s795 + $0x70] sm:$0xf]
      %v3225 = vsel %vm798, %v3095, %v3224
      %3226 = vst [vmem:[%s795 + $0x70] sm:$0xf] %v3225
      %v3227 = vld [vmem:[%s795 + $0x74] sm:$0x1]
      %v3228 = vsel %vm804, %v3096, %v3227
      %3229 = vst [vmem:[%s795 + $0x74] sm:$0x1] %v3228
      %v3230 = vld [vmem:[%s795 + $0x78] sm:$0xf]
      %v3231 = vsel %vm798, %v3103, %v3230
      %3232 = vst [vmem:[%s795 + $0x78] sm:$0xf] %v3231
      %v3233 = vld [vmem:[%s795 + $0x7c] sm:$0x1]
      %v3234 = vsel %vm804, %v3104, %v3233
      %3235 = vst [vmem:[%s795 + $0x7c] sm:$0x1] %v3234
      %v3236 = vld [vmem:[%s795 + $0x80] sm:$0xf]
      %v3237 = vsel %vm798, %v3111, %v3236
      %3238 = vst [vmem:[%s795 + $0x80] sm:$0xf] %v3237
      %v3239 = vld [vmem:[%s795 + $0x84] sm:$0x1]
      %v3240 = vsel %vm804, %v3112, %v3239
      %3241 = vst [vmem:[%s795 + $0x84] sm:$0x1] %v3240
      %v3242 = vld [vmem:[%s795 + $0x88] sm:$0xf]
      %v3243 = vsel %vm798, %v3119, %v3242
      %3244 = vst [vmem:[%s795 + $0x88] sm:$0xf] %v3243
      %v3245 = vld [vmem:[%s795 + $0x8c] sm:$0x1]
      %v3246 = vsel %vm804, %v3120, %v3245
      %3247 = vst [vmem:[%s795 + $0x8c] sm:$0x1] %v3246
      %v3248 = vld [vmem:[#allocation2] sm:$0xf]
      %v3249 = vld [vmem:[#allocation2 + $0x8] sm:$0xf]
      %v3250 = vld [vmem:[#allocation2 + $0x10] sm:$0xf]
      %v3251 = vld [vmem:[#allocation2 + $0x18] sm:$0xf]
      %v3252 = vld [vmem:[#allocation2 + $0x20] sm:$0xf]
      %v3253 = vld [vmem:[#allocation2 + $0x28] sm:$0xf]
      %v3254 = vld [vmem:[#allocation2 + $0x30] sm:$0xf]
      %v3255 = vld [vmem:[#allocation2 + $0x38] sm:$0xf]
      %v3256 = vld [vmem:[#allocation2 + $0x50] sm:$0xf]
      %v3257 = vld [vmem:[#allocation2 + $0x58] sm:$0xf]
      %v3258 = vld [vmem:[#allocation2 + $0x60] sm:$0xf]
      %v3259 = vld [vmem:[#allocation2 + $0x68] sm:$0xf]
      %v3260 = vld [vmem:[#allocation2 + $0x70] sm:$0xf]
      %v3261 = vld [vmem:[#allocation2 + $0x78] sm:$0xf]
      %v3262 = vld [vmem:[#allocation2 + $0x80] sm:$0xf]
      %v3263 = vld [vmem:[#allocation2 + $0x88] sm:$0xf]
      %v3264 = vld [vmem:[#allocation2 + $0x4] sm:$0x1]
      %v3265 = vld [vmem:[#allocation2 + $0xc] sm:$0x1]
      %v3266 = vld [vmem:[#allocation2 + $0x14] sm:$0x1]
      %v3267 = vld [vmem:[#allocation2 + $0x1c] sm:$0x1]
      %v3268 = vld [vmem:[#allocation2 + $0x24] sm:$0x1]
      %v3269 = vld [vmem:[#allocation2 + $0x2c] sm:$0x1]
      %v3270 = vld [vmem:[#allocation2 + $0x34] sm:$0x1]
      %v3271 = vld [vmem:[#allocation2 + $0x3c] sm:$0x1]
      %v3272 = vld [vmem:[#allocation2 + $0x54] sm:$0x1]
      %v3273 = vld [vmem:[#allocation2 + $0x5c] sm:$0x1]
      %v3274 = vld [vmem:[#allocation2 + $0x64] sm:$0x1]
      %v3275 = vld [vmem:[#allocation2 + $0x6c] sm:$0x1]
      %v3276 = vld [vmem:[#allocation2 + $0x74] sm:$0x1]
      %v3277 = vld [vmem:[#allocation2 + $0x7c] sm:$0x1]
      %v3278 = vld [vmem:[#allocation2 + $0x84] sm:$0x1]
      %v3279 = vld [vmem:[#allocation2 + $0x8c] sm:$0x1]
      %v3280 = vld [vmem:[#allocation2] sm:$0xe]
      %v3281 = vld [vmem:[#allocation2 + $0x8] sm:$0xe]
      %v3282 = vld [vmem:[#allocation2 + $0x10] sm:$0xe]
      %v3283 = vld [vmem:[#allocation2 + $0x18] sm:$0xe]
      %v3284 = vld [vmem:[#allocation2 + $0x20] sm:$0xe]
      %v3285 = vld [vmem:[#allocation2 + $0x28] sm:$0xe]
      %v3286 = vld [vmem:[#allocation2 + $0x30] sm:$0xe]
      %v3287 = vld [vmem:[#allocation2 + $0x38] sm:$0xe]
      %v3288 = vld [vmem:[#allocation2 + $0x50] sm:$0xe]
      %v3289 = vld [vmem:[#allocation2 + $0x58] sm:$0xe]
      %v3290 = vld [vmem:[#allocation2 + $0x60] sm:$0xe]
      %v3291 = vld [vmem:[#allocation2 + $0x68] sm:$0xe]
      %v3292 = vld [vmem:[#allocation2 + $0x70] sm:$0xe]
      %v3293 = vld [vmem:[#allocation2 + $0x78] sm:$0xe]
      %v3294 = vld [vmem:[#allocation2 + $0x80] sm:$0xe]
      %v3295 = vld [vmem:[#allocation2 + $0x88] sm:$0xe]
      %v3296 = vld [vmem:[%s795] sm:$0xf]
      %v3297 = vld [vmem:[%s795 + $0x8] sm:$0xf]
      %v3298 = vld [vmem:[%s795 + $0x10] sm:$0xf]
      %v3299 = vld [vmem:[%s795 + $0x18] sm:$0xf]
      %v3300 = vld [vmem:[%s795 + $0x20] sm:$0xf]
      %v3301 = vld [vmem:[%s795 + $0x28] sm:$0xf]
      %v3302 = vld [vmem:[%s795 + $0x30] sm:$0xf]
      %v3303 = vld [vmem:[%s795 + $0x38] sm:$0xf]
      %v3304 = vld [vmem:[%s795 + $0x50] sm:$0xf]
      %v3305 = vld [vmem:[%s795 + $0x58] sm:$0xf]
      %v3306 = vld [vmem:[%s795 + $0x60] sm:$0xf]
      %v3307 = vld [vmem:[%s795 + $0x68] sm:$0xf]
      %v3308 = vld [vmem:[%s795 + $0x70] sm:$0xf]
      %v3309 = vld [vmem:[%s795 + $0x78] sm:$0xf]
      %v3310 = vld [vmem:[%s795 + $0x80] sm:$0xf]
      %v3311 = vld [vmem:[%s795 + $0x88] sm:$0xf]
      %v3312 = vld [vmem:[%s795 + $0x4] sm:$0x1]
      %v3313 = vld [vmem:[%s795 + $0xc] sm:$0x1]
      %v3314 = vld [vmem:[%s795 + $0x14] sm:$0x1]
      %v3315 = vld [vmem:[%s795 + $0x1c] sm:$0x1]
      %v3316 = vld [vmem:[%s795 + $0x24] sm:$0x1]
      %v3317 = vld [vmem:[%s795 + $0x2c] sm:$0x1]
      %v3318 = vld [vmem:[%s795 + $0x34] sm:$0x1]
      %v3319 = vld [vmem:[%s795 + $0x3c] sm:$0x1]
      %v3320 = vld [vmem:[%s795 + $0x54] sm:$0x1]
      %v3321 = vld [vmem:[%s795 + $0x5c] sm:$0x1]
      %v3322 = vld [vmem:[%s795 + $0x64] sm:$0x1]
      %v3323 = vld [vmem:[%s795 + $0x6c] sm:$0x1]
      %v3324 = vld [vmem:[%s795 + $0x74] sm:$0x1]
      %v3325 = vld [vmem:[%s795 + $0x7c] sm:$0x1]
      %v3326 = vld [vmem:[%s795 + $0x84] sm:$0x1]
      %v3327 = vld [vmem:[%s795 + $0x8c] sm:$0x1]
      %v3328 = vld [vmem:[%s795] sm:$0xe]
      %v3329 = vld [vmem:[%s795 + $0x8] sm:$0xe]
      %v3330 = vld [vmem:[%s795 + $0x10] sm:$0xe]
      %v3331 = vld [vmem:[%s795 + $0x18] sm:$0xe]
      %v3332 = vld [vmem:[%s795 + $0x20] sm:$0xe]
      %v3333 = vld [vmem:[%s795 + $0x28] sm:$0xe]
      %v3334 = vld [vmem:[%s795 + $0x30] sm:$0xe]
      %v3335 = vld [vmem:[%s795 + $0x38] sm:$0xe]
      %v3336 = vld [vmem:[%s795 + $0x50] sm:$0xe]
      %v3337 = vld [vmem:[%s795 + $0x58] sm:$0xe]
      %v3338 = vld [vmem:[%s795 + $0x60] sm:$0xe]
      %v3339 = vld [vmem:[%s795 + $0x68] sm:$0xe]
      %v3340 = vld [vmem:[%s795 + $0x70] sm:$0xe]
      %v3341 = vld [vmem:[%s795 + $0x78] sm:$0xe]
      %v3342 = vld [vmem:[%s795 + $0x80] sm:$0xe]
      %v3343 = vld [vmem:[%s795 + $0x88] sm:$0xe]
      %v3344 = vld [vmem:[%s994] sm:$0xf]
      %v3345 = vld [vmem:[%s994 + $0x8] sm:$0xf]
      %v3346 = vld [vmem:[%s994 + $0x10] sm:$0xf]
      %v3347 = vld [vmem:[%s994 + $0x18] sm:$0xf]
      %v3348 = vld [vmem:[%s994 + $0x20] sm:$0xf]
      %v3349 = vld [vmem:[%s994 + $0x28] sm:$0xf]
      %v3350 = vld [vmem:[%s994 + $0x30] sm:$0xf]
      %v3351 = vld [vmem:[%s994 + $0x38] sm:$0xf]
      %v3352 = vld [vmem:[%s994 + $0x50] sm:$0xf]
      %v3353 = vld [vmem:[%s994 + $0x58] sm:$0xf]
      %v3354 = vld [vmem:[%s994 + $0x60] sm:$0xf]
      %v3355 = vld [vmem:[%s994 + $0x68] sm:$0xf]
      %v3356 = vld [vmem:[%s994 + $0x70] sm:$0xf]
      %v3357 = vld [vmem:[%s994 + $0x78] sm:$0xf]
      %v3358 = vld [vmem:[%s994 + $0x80] sm:$0xf]
      %v3359 = vld [vmem:[%s994 + $0x88] sm:$0xf]
      %v3360 = vld [vmem:[%s994 + $0x4] sm:$0x1]
      %v3361 = vld [vmem:[%s994 + $0xc] sm:$0x1]
      %v3362 = vld [vmem:[%s994 + $0x14] sm:$0x1]
      %v3363 = vld [vmem:[%s994 + $0x1c] sm:$0x1]
      %v3364 = vld [vmem:[%s994 + $0x24] sm:$0x1]
      %v3365 = vld [vmem:[%s994 + $0x2c] sm:$0x1]
      %v3366 = vld [vmem:[%s994 + $0x34] sm:$0x1]
      %v3367 = vld [vmem:[%s994 + $0x3c] sm:$0x1]
      %v3368 = vld [vmem:[%s994 + $0x54] sm:$0x1]
      %v3369 = vld [vmem:[%s994 + $0x5c] sm:$0x1]
      %v3370 = vld [vmem:[%s994 + $0x64] sm:$0x1]
      %v3371 = vld [vmem:[%s994 + $0x6c] sm:$0x1]
      %v3372 = vld [vmem:[%s994 + $0x74] sm:$0x1]
      %v3373 = vld [vmem:[%s994 + $0x7c] sm:$0x1]
      %v3374 = vld [vmem:[%s994 + $0x84] sm:$0x1]
      %v3375 = vld [vmem:[%s994 + $0x8c] sm:$0x1]
      %v3376 = vld [vmem:[%s994] sm:$0xe]
      %v3377 = vld [vmem:[%s994 + $0x8] sm:$0xe]
      %v3378 = vld [vmem:[%s994 + $0x10] sm:$0xe]
      %v3379 = vld [vmem:[%s994 + $0x18] sm:$0xe]
      %v3380 = vld [vmem:[%s994 + $0x20] sm:$0xe]
      %v3381 = vld [vmem:[%s994 + $0x28] sm:$0xe]
      %v3382 = vld [vmem:[%s994 + $0x30] sm:$0xe]
      %v3383 = vld [vmem:[%s994 + $0x38] sm:$0xe]
      %v3384 = vld [vmem:[%s994 + $0x50] sm:$0xe]
      %v3385 = vld [vmem:[%s994 + $0x58] sm:$0xe]
      %v3386 = vld [vmem:[%s994 + $0x60] sm:$0xe]
      %v3387 = vld [vmem:[%s994 + $0x68] sm:$0xe]
      %v3388 = vld [vmem:[%s994 + $0x70] sm:$0xe]
      %v3389 = vld [vmem:[%s994 + $0x78] sm:$0xe]
      %v3390 = vld [vmem:[%s994 + $0x80] sm:$0xe]
      %v3391 = vld [vmem:[%s994 + $0x88] sm:$0xe]
      %v3424 = vunpack.c.l.b16 %v3248
      %v3425 = vunpack.c.l.b16 %v3264
      %v3426 = vunpack.c.l.b16 %v3249
      %v3427 = vunpack.c.l.b16 %v3265
      %v3428 = vunpack.c.l.b16 %v3250
      %v3429 = vunpack.c.l.b16 %v3266
      %v3430 = vunpack.c.l.b16 %v3251
      %v3431 = vunpack.c.l.b16 %v3267
      %v3432 = vunpack.c.l.b16 %v3252
      %v3433 = vunpack.c.l.b16 %v3268
      %v3434 = vunpack.c.l.b16 %v3253
      %v3435 = vunpack.c.l.b16 %v3269
      %v3436 = vunpack.c.l.b16 %v3254
      %v3437 = vunpack.c.l.b16 %v3270
      %v3438 = vunpack.c.l.b16 %v3255
      %v3439 = vunpack.c.l.b16 %v3271
      %v3440 = vunpack.c.l.b16 %v3256
      %v3441 = vunpack.c.l.b16 %v3272
      %v3442 = vunpack.c.l.b16 %v3257
      %v3443 = vunpack.c.l.b16 %v3273
      %v3444 = vunpack.c.l.b16 %v3258
      %v3445 = vunpack.c.l.b16 %v3274
      %v3446 = vunpack.c.l.b16 %v3259
      %v3447 = vunpack.c.l.b16 %v3275
      %v3448 = vunpack.c.l.b16 %v3260
      %v3449 = vunpack.c.l.b16 %v3276
      %v3450 = vunpack.c.l.b16 %v3261
      %v3451 = vunpack.c.l.b16 %v3277
      %v3452 = vunpack.c.l.b16 %v3262
      %v3453 = vunpack.c.l.b16 %v3278
      %v3454 = vunpack.c.l.b16 %v3263
      %v3455 = vunpack.c.l.b16 %v3279
      %v3456 = vpack.c.b16 %v3425, %v3424
      %v3457 = vpack.c.b16 %v3427, %v3426
      %v3458 = vpack.c.b16 %v3429, %v3428
      %v3459 = vpack.c.b16 %v3431, %v3430
      %v3460 = vpack.c.b16 %v3433, %v3432
      %v3461 = vpack.c.b16 %v3435, %v3434
      %v3462 = vpack.c.b16 %v3437, %v3436
      %v3463 = vpack.c.b16 %v3439, %v3438
      %v3464 = vpack.c.b16 %v3441, %v3440
      %v3465 = vpack.c.b16 %v3443, %v3442
      %v3466 = vpack.c.b16 %v3445, %v3444
      %v3467 = vpack.c.b16 %v3447, %v3446
      %v3468 = vpack.c.b16 %v3449, %v3448
      %v3469 = vpack.c.b16 %v3451, %v3450
      %v3470 = vpack.c.b16 %v3453, %v3452
      %v3471 = vpack.c.b16 %v3455, %v3454
      %v3473 = vshrl.u32 %v3456, 16
      %v3475 = vshll.u32 %v3456, 16
      %v3477 = vrot.slane %v3475, 1
      %v3478 = vor.u32 %v3473, %v3477
      %v3480 = vshrl.u32 %v3457, 16
      %v3482 = vshll.u32 %v3457, 16
      %v3484 = vrot.slane %v3482, 1
      %v3485 = vor.u32 %v3480, %v3484
      %v3487 = vshrl.u32 %v3458, 16
      %v3489 = vshll.u32 %v3458, 16
      %v3491 = vrot.slane %v3489, 1
      %v3492 = vor.u32 %v3487, %v3491
      %v3494 = vshrl.u32 %v3459, 16
      %v3496 = vshll.u32 %v3459, 16
      %v3498 = vrot.slane %v3496, 1
      %v3499 = vor.u32 %v3494, %v3498
      %v3501 = vshrl.u32 %v3460, 16
      %v3503 = vshll.u32 %v3460, 16
      %v3505 = vrot.slane %v3503, 1
      %v3506 = vor.u32 %v3501, %v3505
      %v3508 = vshrl.u32 %v3461, 16
      %v3510 = vshll.u32 %v3461, 16
      %v3512 = vrot.slane %v3510, 1
      %v3513 = vor.u32 %v3508, %v3512
      %v3515 = vshrl.u32 %v3462, 16
      %v3517 = vshll.u32 %v3462, 16
      %v3519 = vrot.slane %v3517, 1
      %v3520 = vor.u32 %v3515, %v3519
      %v3522 = vshrl.u32 %v3463, 16
      %v3524 = vshll.u32 %v3463, 16
      %v3526 = vrot.slane %v3524, 1
      %v3527 = vor.u32 %v3522, %v3526
      %v3529 = vshrl.u32 %v3464, 16
      %v3531 = vshll.u32 %v3464, 16
      %v3533 = vrot.slane %v3531, 1
      %v3534 = vor.u32 %v3529, %v3533
      %v3536 = vshrl.u32 %v3465, 16
      %v3538 = vshll.u32 %v3465, 16
      %v3540 = vrot.slane %v3538, 1
      %v3541 = vor.u32 %v3536, %v3540
      %v3543 = vshrl.u32 %v3466, 16
      %v3545 = vshll.u32 %v3466, 16
      %v3547 = vrot.slane %v3545, 1
      %v3548 = vor.u32 %v3543, %v3547
      %v3550 = vshrl.u32 %v3467, 16
      %v3552 = vshll.u32 %v3467, 16
      %v3554 = vrot.slane %v3552, 1
      %v3555 = vor.u32 %v3550, %v3554
      %v3557 = vshrl.u32 %v3468, 16
      %v3559 = vshll.u32 %v3468, 16
      %v3561 = vrot.slane %v3559, 1
      %v3562 = vor.u32 %v3557, %v3561
      %v3564 = vshrl.u32 %v3469, 16
      %v3566 = vshll.u32 %v3469, 16
      %v3568 = vrot.slane %v3566, 1
      %v3569 = vor.u32 %v3564, %v3568
      %v3571 = vshrl.u32 %v3470, 16
      %v3573 = vshll.u32 %v3470, 16
      %v3575 = vrot.slane %v3573, 1
      %v3576 = vor.u32 %v3571, %v3575
      %v3578 = vshrl.u32 %v3471, 16
      %v3580 = vshll.u32 %v3471, 16
      %v3582 = vrot.slane %v3580, 1
      %v3583 = vor.u32 %v3578, %v3582
      %3584 = vrot.lane.b32.xlu0 %v3478, 64
      %v3585 = vpop.permute.xlu0 %3584
      %3586 = vrot.lane.b32.xlu0 %v3485, 64
      %v3587 = vpop.permute.xlu0 %3586
      %3588 = vrot.lane.b32.xlu0 %v3492, 64
      %v3589 = vpop.permute.xlu0 %3588
      %3590 = vrot.lane.b32.xlu0 %v3499, 64
      %v3591 = vpop.permute.xlu0 %3590
      %3592 = vrot.lane.b32.xlu0 %v3506, 64
      %v3593 = vpop.permute.xlu0 %3592
      %3594 = vrot.lane.b32.xlu0 %v3513, 64
      %v3595 = vpop.permute.xlu0 %3594
      %3596 = vrot.lane.b32.xlu0 %v3520, 64
      %v3597 = vpop.permute.xlu0 %3596
      %3598 = vrot.lane.b32.xlu0 %v3527, 64
      %v3599 = vpop.permute.xlu0 %3598
      %3600 = vrot.lane.b32.xlu0 %v3534, 64
      %v3601 = vpop.permute.xlu0 %3600
      %3602 = vrot.lane.b32.xlu0 %v3541, 64
      %v3603 = vpop.permute.xlu0 %3602
      %3604 = vrot.lane.b32.xlu0 %v3548, 64
      %v3605 = vpop.permute.xlu0 %3604
      %3606 = vrot.lane.b32.xlu0 %v3555, 64
      %v3607 = vpop.permute.xlu0 %3606
      %3608 = vrot.lane.b32.xlu0 %v3562, 64
      %v3609 = vpop.permute.xlu0 %3608
      %3610 = vrot.lane.b32.xlu0 %v3569, 64
      %v3611 = vpop.permute.xlu0 %3610
      %3612 = vrot.lane.b32.xlu0 %v3576, 64
      %v3613 = vpop.permute.xlu0 %3612
      %3614 = vrot.lane.b32.xlu0 %v3583, 64
      %v3615 = vpop.permute.xlu0 %3614
      %v3632 = vunpack.c.l.b16 %v3280
      %v3633 = vunpack.c.l.b16 %v3281
      %v3634 = vunpack.c.l.b16 %v3282
      %v3635 = vunpack.c.l.b16 %v3283
      %v3636 = vunpack.c.l.b16 %v3284
      %v3637 = vunpack.c.l.b16 %v3285
      %v3638 = vunpack.c.l.b16 %v3286
      %v3639 = vunpack.c.l.b16 %v3287
      %v3640 = vunpack.c.l.b16 %v3288
      %v3641 = vunpack.c.l.b16 %v3289
      %v3642 = vunpack.c.l.b16 %v3290
      %v3643 = vunpack.c.l.b16 %v3291
      %v3644 = vunpack.c.l.b16 %v3292
      %v3645 = vunpack.c.l.b16 %v3293
      %v3646 = vunpack.c.l.b16 %v3294
      %v3647 = vunpack.c.l.b16 %v3295
      %v3648 = vpack.c.b16 %v3425, %v3632
      %v3649 = vpack.c.b16 %v3427, %v3633
      %v3650 = vpack.c.b16 %v3429, %v3634
      %v3651 = vpack.c.b16 %v3431, %v3635
      %v3652 = vpack.c.b16 %v3433, %v3636
      %v3653 = vpack.c.b16 %v3435, %v3637
      %v3654 = vpack.c.b16 %v3437, %v3638
      %v3655 = vpack.c.b16 %v3439, %v3639
      %v3656 = vpack.c.b16 %v3441, %v3640
      %v3657 = vpack.c.b16 %v3443, %v3641
      %v3658 = vpack.c.b16 %v3445, %v3642
      %v3659 = vpack.c.b16 %v3447, %v3643
      %v3660 = vpack.c.b16 %v3449, %v3644
      %v3661 = vpack.c.b16 %v3451, %v3645
      %v3662 = vpack.c.b16 %v3453, %v3646
      %v3663 = vpack.c.b16 %v3455, %v3647
      %v3664 = vrot.slane %v3648, 1
      %v3665 = vrot.slane %v3649, 1
      %v3666 = vrot.slane %v3650, 1
      %v3667 = vrot.slane %v3651, 1
      %v3668 = vrot.slane %v3652, 1
      %v3669 = vrot.slane %v3653, 1
      %v3670 = vrot.slane %v3654, 1
      %v3671 = vrot.slane %v3655, 1
      %v3672 = vrot.slane %v3656, 1
      %v3673 = vrot.slane %v3657, 1
      %v3674 = vrot.slane %v3658, 1
      %v3675 = vrot.slane %v3659, 1
      %v3676 = vrot.slane %v3660, 1
      %v3677 = vrot.slane %v3661, 1
      %v3678 = vrot.slane %v3662, 1
      %v3679 = vrot.slane %v3663, 1
      %v3696 = vunpack.c.l.b16 %v3296
      %v3697 = vunpack.c.l.b16 %v3297
      %v3698 = vunpack.c.l.b16 %v3298
      %v3699 = vunpack.c.l.b16 %v3299
      %v3700 = vunpack.c.l.b16 %v3300
      %v3701 = vunpack.c.l.b16 %v3301
      %v3702 = vunpack.c.l.b16 %v3302
      %v3703 = vunpack.c.l.b16 %v3303
      %v3704 = vunpack.c.l.b16 %v3304
      %v3705 = vunpack.c.l.b16 %v3305
      %v3706 = vunpack.c.l.b16 %v3306
      %v3707 = vunpack.c.l.b16 %v3307
      %v3708 = vunpack.c.l.b16 %v3308
      %v3709 = vunpack.c.l.b16 %v3309
      %v3710 = vunpack.c.l.b16 %v3310
      %v3711 = vunpack.c.l.b16 %v3311
      %v3712 = vpack.c.b16 %v3696, %v3696
      %v3713 = vpack.c.b16 %v3697, %v3697
      %v3714 = vpack.c.b16 %v3698, %v3698
      %v3715 = vpack.c.b16 %v3699, %v3699
      %v3716 = vpack.c.b16 %v3700, %v3700
      %v3717 = vpack.c.b16 %v3701, %v3701
      %v3718 = vpack.c.b16 %v3702, %v3702
      %v3719 = vpack.c.b16 %v3703, %v3703
      %v3720 = vpack.c.b16 %v3704, %v3704
      %v3721 = vpack.c.b16 %v3705, %v3705
      %v3722 = vpack.c.b16 %v3706, %v3706
      %v3723 = vpack.c.b16 %v3707, %v3707
      %v3724 = vpack.c.b16 %v3708, %v3708
      %v3725 = vpack.c.b16 %v3709, %v3709
      %v3726 = vpack.c.b16 %v3710, %v3710
      %v3727 = vpack.c.b16 %v3711, %v3711
      %3728 = vrot.lane.b32.xlu0 %v3712, 64
      %v3729 = vpop.permute.xlu0 %3728
      %3730 = vrot.lane.b32.xlu0 %v3713, 64
      %v3731 = vpop.permute.xlu0 %3730
      %3732 = vrot.lane.b32.xlu0 %v3714, 64
      %v3733 = vpop.permute.xlu0 %3732
      %3734 = vrot.lane.b32.xlu0 %v3715, 64
      %v3735 = vpop.permute.xlu0 %3734
      %3736 = vrot.lane.b32.xlu0 %v3716, 64
      %v3737 = vpop.permute.xlu0 %3736
      %3738 = vrot.lane.b32.xlu0 %v3717, 64
      %v3739 = vpop.permute.xlu0 %3738
      %3740 = vrot.lane.b32.xlu0 %v3718, 64
      %v3741 = vpop.permute.xlu0 %3740
      %3742 = vrot.lane.b32.xlu0 %v3719, 64
      %v3743 = vpop.permute.xlu0 %3742
      %3744 = vrot.lane.b32.xlu0 %v3720, 64
      %v3745 = vpop.permute.xlu0 %3744
      %3746 = vrot.lane.b32.xlu0 %v3721, 64
      %v3747 = vpop.permute.xlu0 %3746
      %3748 = vrot.lane.b32.xlu0 %v3722, 64
      %v3749 = vpop.permute.xlu0 %3748
      %3750 = vrot.lane.b32.xlu0 %v3723, 64
      %v3751 = vpop.permute.xlu0 %3750
      %3752 = vrot.lane.b32.xlu0 %v3724, 64
      %v3753 = vpop.permute.xlu0 %3752
      %3754 = vrot.lane.b32.xlu0 %v3725, 64
      %v3755 = vpop.permute.xlu0 %3754
      %3756 = vrot.lane.b32.xlu0 %v3726, 64
      %v3757 = vpop.permute.xlu0 %3756
      %3758 = vrot.lane.b32.xlu0 %v3727, 64
      %v3759 = vpop.permute.xlu0 %3758
      %v3776 = vunpack.c.l.b16 %v3312
      %v3777 = vunpack.c.l.b16 %v3313
      %v3778 = vunpack.c.l.b16 %v3314
      %v3779 = vunpack.c.l.b16 %v3315
      %v3780 = vunpack.c.l.b16 %v3316
      %v3781 = vunpack.c.l.b16 %v3317
      %v3782 = vunpack.c.l.b16 %v3318
      %v3783 = vunpack.c.l.b16 %v3319
      %v3784 = vunpack.c.l.b16 %v3320
      %v3785 = vunpack.c.l.b16 %v3321
      %v3786 = vunpack.c.l.b16 %v3322
      %v3787 = vunpack.c.l.b16 %v3323
      %v3788 = vunpack.c.l.b16 %v3324
      %v3789 = vunpack.c.l.b16 %v3325
      %v3790 = vunpack.c.l.b16 %v3326
      %v3791 = vunpack.c.l.b16 %v3327
      %v3792 = vpack.c.b16 %v3776, %v3696
      %v3793 = vpack.c.b16 %v3777, %v3697
      %v3794 = vpack.c.b16 %v3778, %v3698
      %v3795 = vpack.c.b16 %v3779, %v3699
      %v3796 = vpack.c.b16 %v3780, %v3700
      %v3797 = vpack.c.b16 %v3781, %v3701
      %v3798 = vpack.c.b16 %v3782, %v3702
      %v3799 = vpack.c.b16 %v3783, %v3703
      %v3800 = vpack.c.b16 %v3784, %v3704
      %v3801 = vpack.c.b16 %v3785, %v3705
      %v3802 = vpack.c.b16 %v3786, %v3706
      %v3803 = vpack.c.b16 %v3787, %v3707
      %v3804 = vpack.c.b16 %v3788, %v3708
      %v3805 = vpack.c.b16 %v3789, %v3709
      %v3806 = vpack.c.b16 %v3790, %v3710
      %v3807 = vpack.c.b16 %v3791, %v3711
      %v3809 = vshrl.u32 %v3792, 16
      %v3811 = vshll.u32 %v3792, 16
      %v3813 = vrot.slane %v3811, 1
      %v3814 = vor.u32 %v3809, %v3813
      %v3816 = vshrl.u32 %v3793, 16
      %v3818 = vshll.u32 %v3793, 16
      %v3820 = vrot.slane %v3818, 1
      %v3821 = vor.u32 %v3816, %v3820
      %v3823 = vshrl.u32 %v3794, 16
      %v3825 = vshll.u32 %v3794, 16
      %v3827 = vrot.slane %v3825, 1
      %v3828 = vor.u32 %v3823, %v3827
      %v3830 = vshrl.u32 %v3795, 16
      %v3832 = vshll.u32 %v3795, 16
      %v3834 = vrot.slane %v3832, 1
      %v3835 = vor.u32 %v3830, %v3834
      %v3837 = vshrl.u32 %v3796, 16
      %v3839 = vshll.u32 %v3796, 16
      %v3841 = vrot.slane %v3839, 1
      %v3842 = vor.u32 %v3837, %v3841
      %v3844 = vshrl.u32 %v3797, 16
      %v3846 = vshll.u32 %v3797, 16
      %v3848 = vrot.slane %v3846, 1
      %v3849 = vor.u32 %v3844, %v3848
      %v3851 = vshrl.u32 %v3798, 16
      %v3853 = vshll.u32 %v3798, 16
      %v3855 = vrot.slane %v3853, 1
      %v3856 = vor.u32 %v3851, %v3855
      %v3858 = vshrl.u32 %v3799, 16
      %v3860 = vshll.u32 %v3799, 16
      %v3862 = vrot.slane %v3860, 1
      %v3863 = vor.u32 %v3858, %v3862
      %v3865 = vshrl.u32 %v3800, 16
      %v3867 = vshll.u32 %v3800, 16
      %v3869 = vrot.slane %v3867, 1
      %v3870 = vor.u32 %v3865, %v3869
      %v3872 = vshrl.u32 %v3801, 16
      %v3874 = vshll.u32 %v3801, 16
      %v3876 = vrot.slane %v3874, 1
      %v3877 = vor.u32 %v3872, %v3876
      %v3879 = vshrl.u32 %v3802, 16
      %v3881 = vshll.u32 %v3802, 16
      %v3883 = vrot.slane %v3881, 1
      %v3884 = vor.u32 %v3879, %v3883
      %v3886 = vshrl.u32 %v3803, 16
      %v3888 = vshll.u32 %v3803, 16
      %v3890 = vrot.slane %v3888, 1
      %v3891 = vor.u32 %v3886, %v3890
      %v3893 = vshrl.u32 %v3804, 16
      %v3895 = vshll.u32 %v3804, 16
      %v3897 = vrot.slane %v3895, 1
      %v3898 = vor.u32 %v3893, %v3897
      %v3900 = vshrl.u32 %v3805, 16
      %v3902 = vshll.u32 %v3805, 16
      %v3904 = vrot.slane %v3902, 1
      %v3905 = vor.u32 %v3900, %v3904
      %v3907 = vshrl.u32 %v3806, 16
      %v3909 = vshll.u32 %v3806, 16
      %v3911 = vrot.slane %v3909, 1
      %v3912 = vor.u32 %v3907, %v3911
      %v3914 = vshrl.u32 %v3807, 16
      %v3916 = vshll.u32 %v3807, 16
      %v3918 = vrot.slane %v3916, 1
      %v3919 = vor.u32 %v3914, %v3918
      %v3936 = vunpack.c.l.b16 %v3328
      %v3937 = vunpack.c.l.b16 %v3329
      %v3938 = vunpack.c.l.b16 %v3330
      %v3939 = vunpack.c.l.b16 %v3331
      %v3940 = vunpack.c.l.b16 %v3332
      %v3941 = vunpack.c.l.b16 %v3333
      %v3942 = vunpack.c.l.b16 %v3334
      %v3943 = vunpack.c.l.b16 %v3335
      %v3944 = vunpack.c.l.b16 %v3336
      %v3945 = vunpack.c.l.b16 %v3337
      %v3946 = vunpack.c.l.b16 %v3338
      %v3947 = vunpack.c.l.b16 %v3339
      %v3948 = vunpack.c.l.b16 %v3340
      %v3949 = vunpack.c.l.b16 %v3341
      %v3950 = vunpack.c.l.b16 %v3342
      %v3951 = vunpack.c.l.b16 %v3343
      %v3952 = vpack.c.b16 %v3776, %v3936
      %v3953 = vpack.c.b16 %v3777, %v3937
      %v3954 = vpack.c.b16 %v3778, %v3938
      %v3955 = vpack.c.b16 %v3779, %v3939
      %v3956 = vpack.c.b16 %v3780, %v3940
      %v3957 = vpack.c.b16 %v3781, %v3941
      %v3958 = vpack.c.b16 %v3782, %v3942
      %v3959 = vpack.c.b16 %v3783, %v3943
      %v3960 = vpack.c.b16 %v3784, %v3944
      %v3961 = vpack.c.b16 %v3785, %v3945
      %v3962 = vpack.c.b16 %v3786, %v3946
      %v3963 = vpack.c.b16 %v3787, %v3947
      %v3964 = vpack.c.b16 %v3788, %v3948
      %v3965 = vpack.c.b16 %v3789, %v3949
      %v3966 = vpack.c.b16 %v3790, %v3950
      %v3967 = vpack.c.b16 %v3791, %v3951
      %v3968 = vrot.slane %v3952, 1
      %v3969 = vrot.slane %v3953, 1
      %v3970 = vrot.slane %v3954, 1
      %v3971 = vrot.slane %v3955, 1
      %v3972 = vrot.slane %v3956, 1
      %v3973 = vrot.slane %v3957, 1
      %v3974 = vrot.slane %v3958, 1
      %v3975 = vrot.slane %v3959, 1
      %v3976 = vrot.slane %v3960, 1
      %v3977 = vrot.slane %v3961, 1
      %v3978 = vrot.slane %v3962, 1
      %v3979 = vrot.slane %v3963, 1
      %v3980 = vrot.slane %v3964, 1
      %v3981 = vrot.slane %v3965, 1
      %v3982 = vrot.slane %v3966, 1
      %v3983 = vrot.slane %v3967, 1
      %3984 = vrot.lane.b32.xlu0 %v3968, 64
      %v3985 = vpop.permute.xlu0 %3984
      %3986 = vrot.lane.b32.xlu0 %v3969, 64
      %v3987 = vpop.permute.xlu0 %3986
      %3988 = vrot.lane.b32.xlu0 %v3970, 64
      %v3989 = vpop.permute.xlu0 %3988
      %3990 = vrot.lane.b32.xlu0 %v3971, 64
      %v3991 = vpop.permute.xlu0 %3990
      %3992 = vrot.lane.b32.xlu0 %v3972, 64
      %v3993 = vpop.permute.xlu0 %3992
      %3994 = vrot.lane.b32.xlu0 %v3973, 64
      %v3995 = vpop.permute.xlu0 %3994
      %3996 = vrot.lane.b32.xlu0 %v3974, 64
      %v3997 = vpop.permute.xlu0 %3996
      %3998 = vrot.lane.b32.xlu0 %v3975, 64
      %v3999 = vpop.permute.xlu0 %3998
      %4000 = vrot.lane.b32.xlu0 %v3976, 64
      %v4001 = vpop.permute.xlu0 %4000
      %4002 = vrot.lane.b32.xlu0 %v3977, 64
      %v4003 = vpop.permute.xlu0 %4002
      %4004 = vrot.lane.b32.xlu0 %v3978, 64
      %v4005 = vpop.permute.xlu0 %4004
      %4006 = vrot.lane.b32.xlu0 %v3979, 64
      %v4007 = vpop.permute.xlu0 %4006
      %4008 = vrot.lane.b32.xlu0 %v3980, 64
      %v4009 = vpop.permute.xlu0 %4008
      %4010 = vrot.lane.b32.xlu0 %v3981, 64
      %v4011 = vpop.permute.xlu0 %4010
      %4012 = vrot.lane.b32.xlu0 %v3982, 64
      %v4013 = vpop.permute.xlu0 %4012
      %4014 = vrot.lane.b32.xlu0 %v3983, 64
      %v4015 = vpop.permute.xlu0 %4014
      %v4048 = vunpack.c.l.b16 %v3344
      %v4049 = vunpack.c.l.b16 %v3360
      %v4050 = vunpack.c.l.b16 %v3345
      %v4051 = vunpack.c.l.b16 %v3361
      %v4052 = vunpack.c.l.b16 %v3346
      %v4053 = vunpack.c.l.b16 %v3362
      %v4054 = vunpack.c.l.b16 %v3347
      %v4055 = vunpack.c.l.b16 %v3363
      %v4056 = vunpack.c.l.b16 %v3348
      %v4057 = vunpack.c.l.b16 %v3364
      %v4058 = vunpack.c.l.b16 %v3349
      %v4059 = vunpack.c.l.b16 %v3365
      %v4060 = vunpack.c.l.b16 %v3350
      %v4061 = vunpack.c.l.b16 %v3366
      %v4062 = vunpack.c.l.b16 %v3351
      %v4063 = vunpack.c.l.b16 %v3367
      %v4064 = vunpack.c.l.b16 %v3352
      %v4065 = vunpack.c.l.b16 %v3368
      %v4066 = vunpack.c.l.b16 %v3353
      %v4067 = vunpack.c.l.b16 %v3369
      %v4068 = vunpack.c.l.b16 %v3354
      %v4069 = vunpack.c.l.b16 %v3370
      %v4070 = vunpack.c.l.b16 %v3355
      %v4071 = vunpack.c.l.b16 %v3371
      %v4072 = vunpack.c.l.b16 %v3356
      %v4073 = vunpack.c.l.b16 %v3372
      %v4074 = vunpack.c.l.b16 %v3357
      %v4075 = vunpack.c.l.b16 %v3373
      %v4076 = vunpack.c.l.b16 %v3358
      %v4077 = vunpack.c.l.b16 %v3374
      %v4078 = vunpack.c.l.b16 %v3359
      %v4079 = vunpack.c.l.b16 %v3375
      %v4080 = vpack.c.b16 %v4049, %v4048
      %v4081 = vpack.c.b16 %v4051, %v4050
      %v4082 = vpack.c.b16 %v4053, %v4052
      %v4083 = vpack.c.b16 %v4055, %v4054
      %v4084 = vpack.c.b16 %v4057, %v4056
      %v4085 = vpack.c.b16 %v4059, %v4058
      %v4086 = vpack.c.b16 %v4061, %v4060
      %v4087 = vpack.c.b16 %v4063, %v4062
      %v4088 = vpack.c.b16 %v4065, %v4064
      %v4089 = vpack.c.b16 %v4067, %v4066
      %v4090 = vpack.c.b16 %v4069, %v4068
      %v4091 = vpack.c.b16 %v4071, %v4070
      %v4092 = vpack.c.b16 %v4073, %v4072
      %v4093 = vpack.c.b16 %v4075, %v4074
      %v4094 = vpack.c.b16 %v4077, %v4076
      %v4095 = vpack.c.b16 %v4079, %v4078
      %v4097 = vshrl.u32 %v4080, 16
      %v4099 = vshll.u32 %v4080, 16
      %v4101 = vrot.slane %v4099, 1
      %v4102 = vor.u32 %v4097, %v4101
      %v4104 = vshrl.u32 %v4081, 16
      %v4106 = vshll.u32 %v4081, 16
      %v4108 = vrot.slane %v4106, 1
      %v4109 = vor.u32 %v4104, %v4108
      %v4111 = vshrl.u32 %v4082, 16
      %v4113 = vshll.u32 %v4082, 16
      %v4115 = vrot.slane %v4113, 1
      %v4116 = vor.u32 %v4111, %v4115
      %v4118 = vshrl.u32 %v4083, 16
      %v4120 = vshll.u32 %v4083, 16
      %v4122 = vrot.slane %v4120, 1
      %v4123 = vor.u32 %v4118, %v4122
      %v4125 = vshrl.u32 %v4084, 16
      %v4127 = vshll.u32 %v4084, 16
      %v4129 = vrot.slane %v4127, 1
      %v4130 = vor.u32 %v4125, %v4129
      %v4132 = vshrl.u32 %v4085, 16
      %v4134 = vshll.u32 %v4085, 16
      %v4136 = vrot.slane %v4134, 1
      %v4137 = vor.u32 %v4132, %v4136
      %v4139 = vshrl.u32 %v4086, 16
      %v4141 = vshll.u32 %v4086, 16
      %v4143 = vrot.slane %v4141, 1
      %v4144 = vor.u32 %v4139, %v4143
      %v4146 = vshrl.u32 %v4087, 16
      %v4148 = vshll.u32 %v4087, 16
      %v4150 = vrot.slane %v4148, 1
      %v4151 = vor.u32 %v4146, %v4150
      %v4153 = vshrl.u32 %v4088, 16
      %v4155 = vshll.u32 %v4088, 16
      %v4157 = vrot.slane %v4155, 1
      %v4158 = vor.u32 %v4153, %v4157
      %v4160 = vshrl.u32 %v4089, 16
      %v4162 = vshll.u32 %v4089, 16
      %v4164 = vrot.slane %v4162, 1
      %v4165 = vor.u32 %v4160, %v4164
      %v4167 = vshrl.u32 %v4090, 16
      %v4169 = vshll.u32 %v4090, 16
      %v4171 = vrot.slane %v4169, 1
      %v4172 = vor.u32 %v4167, %v4171
      %v4174 = vshrl.u32 %v4091, 16
      %v4176 = vshll.u32 %v4091, 16
      %v4178 = vrot.slane %v4176, 1
      %v4179 = vor.u32 %v4174, %v4178
      %v4181 = vshrl.u32 %v4092, 16
      %v4183 = vshll.u32 %v4092, 16
      %v4185 = vrot.slane %v4183, 1
      %v4186 = vor.u32 %v4181, %v4185
      %v4188 = vshrl.u32 %v4093, 16
      %v4190 = vshll.u32 %v4093, 16
      %v4192 = vrot.slane %v4190, 1
      %v4193 = vor.u32 %v4188, %v4192
      %v4195 = vshrl.u32 %v4094, 16
      %v4197 = vshll.u32 %v4094, 16
      %v4199 = vrot.slane %v4197, 1
      %v4200 = vor.u32 %v4195, %v4199
      %v4202 = vshrl.u32 %v4095, 16
      %v4204 = vshll.u32 %v4095, 16
      %v4206 = vrot.slane %v4204, 1
      %v4207 = vor.u32 %v4202, %v4206
      %4208 = vrot.lane.b32.xlu0 %v4102, 64
      %v4209 = vpop.permute.xlu0 %4208
      %4210 = vrot.lane.b32.xlu0 %v4109, 64
      %v4211 = vpop.permute.xlu0 %4210
      %4212 = vrot.lane.b32.xlu0 %v4116, 64
      %v4213 = vpop.permute.xlu0 %4212
      %4214 = vrot.lane.b32.xlu0 %v4123, 64
      %v4215 = vpop.permute.xlu0 %4214
      %4216 = vrot.lane.b32.xlu0 %v4130, 64
      %v4217 = vpop.permute.xlu0 %4216
      %4218 = vrot.lane.b32.xlu0 %v4137, 64
      %v4219 = vpop.permute.xlu0 %4218
      %4220 = vrot.lane.b32.xlu0 %v4144, 64
      %v4221 = vpop.permute.xlu0 %4220
      %4222 = vrot.lane.b32.xlu0 %v4151, 64
      %v4223 = vpop.permute.xlu0 %4222
      %4224 = vrot.lane.b32.xlu0 %v4158, 64
      %v4225 = vpop.permute.xlu0 %4224
      %4226 = vrot.lane.b32.xlu0 %v4165, 64
      %v4227 = vpop.permute.xlu0 %4226
      %4228 = vrot.lane.b32.xlu0 %v4172, 64
      %v4229 = vpop.permute.xlu0 %4228
      %4230 = vrot.lane.b32.xlu0 %v4179, 64
      %v4231 = vpop.permute.xlu0 %4230
      %4232 = vrot.lane.b32.xlu0 %v4186, 64
      %v4233 = vpop.permute.xlu0 %4232
      %4234 = vrot.lane.b32.xlu0 %v4193, 64
      %v4235 = vpop.permute.xlu0 %4234
      %4236 = vrot.lane.b32.xlu0 %v4200, 64
      %v4237 = vpop.permute.xlu0 %4236
      %4238 = vrot.lane.b32.xlu0 %v4207, 64
      %v4239 = vpop.permute.xlu0 %4238
      %v4256 = vunpack.c.l.b16 %v3376
      %v4257 = vunpack.c.l.b16 %v3377
      %v4258 = vunpack.c.l.b16 %v3378
      %v4259 = vunpack.c.l.b16 %v3379
      %v4260 = vunpack.c.l.b16 %v3380
      %v4261 = vunpack.c.l.b16 %v3381
      %v4262 = vunpack.c.l.b16 %v3382
      %v4263 = vunpack.c.l.b16 %v3383
      %v4264 = vunpack.c.l.b16 %v3384
      %v4265 = vunpack.c.l.b16 %v3385
      %v4266 = vunpack.c.l.b16 %v3386
      %v4267 = vunpack.c.l.b16 %v3387
      %v4268 = vunpack.c.l.b16 %v3388
      %v4269 = vunpack.c.l.b16 %v3389
      %v4270 = vunpack.c.l.b16 %v3390
      %v4271 = vunpack.c.l.b16 %v3391
      %v4272 = vpack.c.b16 %v4049, %v4256
      %v4273 = vpack.c.b16 %v4051, %v4257
      %v4274 = vpack.c.b16 %v4053, %v4258
      %v4275 = vpack.c.b16 %v4055, %v4259
      %v4276 = vpack.c.b16 %v4057, %v4260
      %v4277 = vpack.c.b16 %v4059, %v4261
      %v4278 = vpack.c.b16 %v4061, %v4262
      %v4279 = vpack.c.b16 %v4063, %v4263
      %v4280 = vpack.c.b16 %v4065, %v4264
      %v4281 = vpack.c.b16 %v4067, %v4265
      %v4282 = vpack.c.b16 %v4069, %v4266
      %v4283 = vpack.c.b16 %v4071, %v4267
      %v4284 = vpack.c.b16 %v4073, %v4268
      %v4285 = vpack.c.b16 %v4075, %v4269
      %v4286 = vpack.c.b16 %v4077, %v4270
      %v4287 = vpack.c.b16 %v4079, %v4271
      %v4288 = vrot.slane %v4272, 1
      %v4289 = vrot.slane %v4273, 1
      %v4290 = vrot.slane %v4274, 1
      %v4291 = vrot.slane %v4275, 1
      %v4292 = vrot.slane %v4276, 1
      %v4293 = vrot.slane %v4277, 1
      %v4294 = vrot.slane %v4278, 1
      %v4295 = vrot.slane %v4279, 1
      %v4296 = vrot.slane %v4280, 1
      %v4297 = vrot.slane %v4281, 1
      %v4298 = vrot.slane %v4282, 1
      %v4299 = vrot.slane %v4283, 1
      %v4300 = vrot.slane %v4284, 1
      %v4301 = vrot.slane %v4285, 1
      %v4302 = vrot.slane %v4286, 1
      %v4303 = vrot.slane %v4287, 1
      %v4306 = vsel %vm1955, %v3248, %v3585
      %v4309 = vsel %vm1955, %v3249, %v3587
      %v4312 = vsel %vm1955, %v3250, %v3589
      %v4315 = vsel %vm1955, %v3251, %v3591
      %v4318 = vsel %vm1955, %v3252, %v3593
      %v4321 = vsel %vm1955, %v3253, %v3595
      %v4324 = vsel %vm1955, %v3254, %v3597
      %v4327 = vsel %vm1955, %v3255, %v3599
      %v4330 = vsel %vm1955, %v3256, %v3601
      %v4333 = vsel %vm1955, %v3257, %v3603
      %v4336 = vsel %vm1955, %v3258, %v3605
      %v4339 = vsel %vm1955, %v3259, %v3607
      %v4342 = vsel %vm1955, %v3260, %v3609
      %v4345 = vsel %vm1955, %v3261, %v3611
      %v4348 = vsel %vm1955, %v3262, %v3613
      %v4351 = vsel %vm1955, %v3263, %v3615
      %v4354 = vsel %vm1955, %v3664, %v3729
      %v4357 = vsel %vm1955, %v3665, %v3731
      %v4360 = vsel %vm1955, %v3666, %v3733
      %v4363 = vsel %vm1955, %v3667, %v3735
      %v4366 = vsel %vm1955, %v3668, %v3737
      %v4369 = vsel %vm1955, %v3669, %v3739
      %v4372 = vsel %vm1955, %v3670, %v3741
      %v4375 = vsel %vm1955, %v3671, %v3743
      %v4378 = vsel %vm1955, %v3672, %v3745
      %v4381 = vsel %vm1955, %v3673, %v3747
      %v4384 = vsel %vm1955, %v3674, %v3749
      %v4387 = vsel %vm1955, %v3675, %v3751
      %v4390 = vsel %vm1955, %v3676, %v3753
      %v4393 = vsel %vm1955, %v3677, %v3755
      %v4396 = vsel %vm1955, %v3678, %v3757
      %v4399 = vsel %vm1955, %v3679, %v3759
      %v4402 = vsel %vm1955, %v3814, %v3985
      %v4405 = vsel %vm1955, %v3821, %v3987
      %v4408 = vsel %vm1955, %v3828, %v3989
      %v4411 = vsel %vm1955, %v3835, %v3991
      %v4414 = vsel %vm1955, %v3842, %v3993
      %v4417 = vsel %vm1955, %v3849, %v3995
      %v4420 = vsel %vm1955, %v3856, %v3997
      %v4423 = vsel %vm1955, %v3863, %v3999
      %v4426 = vsel %vm1955, %v3870, %v4001
      %v4429 = vsel %vm1955, %v3877, %v4003
      %v4432 = vsel %vm1955, %v3884, %v4005
      %v4435 = vsel %vm1955, %v3891, %v4007
      %v4438 = vsel %vm1955, %v3898, %v4009
      %v4441 = vsel %vm1955, %v3905, %v4011
      %v4444 = vsel %vm1955, %v3912, %v4013
      %v4447 = vsel %vm1955, %v3919, %v4015
      %v4450 = vsel %vm1955, %v3344, %v4209
      %v4453 = vsel %vm1955, %v3345, %v4211
      %v4456 = vsel %vm1955, %v3346, %v4213
      %v4459 = vsel %vm1955, %v3347, %v4215
      %v4462 = vsel %vm1955, %v3348, %v4217
      %v4465 = vsel %vm1955, %v3349, %v4219
      %v4468 = vsel %vm1955, %v3350, %v4221
      %v4471 = vsel %vm1955, %v3351, %v4223
      %v4474 = vsel %vm1955, %v3352, %v4225
      %v4477 = vsel %vm1955, %v3353, %v4227
      %v4480 = vsel %vm1955, %v3354, %v4229
      %v4483 = vsel %vm1955, %v3355, %v4231
      %v4486 = vsel %vm1955, %v3356, %v4233
      %v4489 = vsel %vm1955, %v3357, %v4235
      %v4492 = vsel %vm1955, %v3358, %v4237
      %v4495 = vsel %vm1955, %v3359, %v4239
      %v4560 = vunpack.c.l.b16 %v4306
      %v4561 = vunpack.c.l.b16 %v4354
      %v4562 = vunpack.c.l.b16 %v4402
      %v4563 = vunpack.c.l.b16 %v4450
      %v4564 = vunpack.c.l.b16 %v4288
      %v4565 = vunpack.c.l.b16 %v4309
      %v4566 = vunpack.c.l.b16 %v4357
      %v4567 = vunpack.c.l.b16 %v4405
      %v4568 = vunpack.c.l.b16 %v4453
      %v4569 = vunpack.c.l.b16 %v4289
      %v4570 = vunpack.c.l.b16 %v4312
      %v4571 = vunpack.c.l.b16 %v4360
      %v4572 = vunpack.c.l.b16 %v4408
      %v4573 = vunpack.c.l.b16 %v4456
      %v4574 = vunpack.c.l.b16 %v4290
      %v4575 = vunpack.c.l.b16 %v4315
      %v4576 = vunpack.c.l.b16 %v4363
      %v4577 = vunpack.c.l.b16 %v4411
      %v4578 = vunpack.c.l.b16 %v4459
      %v4579 = vunpack.c.l.b16 %v4291
      %v4580 = vunpack.c.l.b16 %v4318
      %v4581 = vunpack.c.l.b16 %v4366
      %v4582 = vunpack.c.l.b16 %v4414
      %v4583 = vunpack.c.l.b16 %v4462
      %v4584 = vunpack.c.l.b16 %v4292
      %v4585 = vunpack.c.l.b16 %v4321
      %v4586 = vunpack.c.l.b16 %v4369
      %v4587 = vunpack.c.l.b16 %v4417
      %v4588 = vunpack.c.l.b16 %v4465
      %v4589 = vunpack.c.l.b16 %v4293
      %v4590 = vunpack.c.l.b16 %v4324
      %v4591 = vunpack.c.l.b16 %v4372
      %v4592 = vunpack.c.l.b16 %v4420
      %v4593 = vunpack.c.l.b16 %v4468
      %v4594 = vunpack.c.l.b16 %v4294
      %v4595 = vunpack.c.l.b16 %v4327
      %v4596 = vunpack.c.l.b16 %v4375
      %v4597 = vunpack.c.l.b16 %v4423
      %v4598 = vunpack.c.l.b16 %v4471
      %v4599 = vunpack.c.l.b16 %v4295
      %v4600 = vunpack.c.l.b16 %v4330
      %v4601 = vunpack.c.l.b16 %v4378
      %v4602 = vunpack.c.l.b16 %v4426
      %v4603 = vunpack.c.l.b16 %v4474
      %v4604 = vunpack.c.l.b16 %v4296
      %v4605 = vunpack.c.l.b16 %v4333
      %v4606 = vunpack.c.l.b16 %v4381
      %v4607 = vunpack.c.l.b16 %v4429
      %v4608 = vunpack.c.l.b16 %v4477
      %v4609 = vunpack.c.l.b16 %v4297
      %v4610 = vunpack.c.l.b16 %v4336
      %v4611 = vunpack.c.l.b16 %v4384
      %v4612 = vunpack.c.l.b16 %v4432
      %v4613 = vunpack.c.l.b16 %v4480
      %v4614 = vunpack.c.l.b16 %v4298
      %v4615 = vunpack.c.l.b16 %v4339
      %v4616 = vunpack.c.l.b16 %v4387
      %v4617 = vunpack.c.l.b16 %v4435
      %v4618 = vunpack.c.l.b16 %v4483
      %v4619 = vunpack.c.l.b16 %v4299
      %v4620 = vunpack.c.l.b16 %v4342
      %v4621 = vunpack.c.l.b16 %v4390
      %v4622 = vunpack.c.l.b16 %v4438
      %v4623 = vunpack.c.l.b16 %v4486
      %v4624 = vunpack.c.l.b16 %v4300
      %v4625 = vunpack.c.l.b16 %v4345
      %v4626 = vunpack.c.l.b16 %v4393
      %v4627 = vunpack.c.l.b16 %v4441
      %v4628 = vunpack.c.l.b16 %v4489
      %v4629 = vunpack.c.l.b16 %v4301
      %v4630 = vunpack.c.l.b16 %v4348
      %v4631 = vunpack.c.l.b16 %v4396
      %v4632 = vunpack.c.l.b16 %v4444
      %v4633 = vunpack.c.l.b16 %v4492
      %v4634 = vunpack.c.l.b16 %v4302
      %v4635 = vunpack.c.l.b16 %v4351
      %v4636 = vunpack.c.l.b16 %v4399
      %v4637 = vunpack.c.l.b16 %v4447
      %v4638 = vunpack.c.l.b16 %v4495
      %v4639 = vunpack.c.l.b16 %v4303
      %v4640 = vld [vmem:[%s7] sm:$0xf]
      %v4641 = vld [vmem:[%s7 + $0x4] sm:$0xf]
      %v4642 = vld [vmem:[%s7 + $0x8] sm:$0xf]
      %v4643 = vld [vmem:[%s7 + $0xc] sm:$0xf]
      %v4644 = vld [vmem:[%s7 + $0x10] sm:$0xf]
      %v4645 = vld [vmem:[%s7 + $0x14] sm:$0xf]
      %v4646 = vld [vmem:[%s7 + $0x18] sm:$0xf]
      %v4647 = vld [vmem:[%s7 + $0x1c] sm:$0xf]
      %v4648 = vld [vmem:[%s7 + $0x20] sm:$0xf]
      %v4649 = vld [vmem:[%s7 + $0x24] sm:$0xf]
      %v4650 = vld [vmem:[%s7 + $0x28] sm:$0xf]
      %v4651 = vld [vmem:[%s7 + $0x2c] sm:$0xf]
      %v4652 = vld [vmem:[%s7 + $0x30] sm:$0xf]
      %v4653 = vld [vmem:[%s7 + $0x34] sm:$0xf]
      %v4654 = vld [vmem:[%s7 + $0x38] sm:$0xf]
      %v4655 = vld [vmem:[%s7 + $0x3c] sm:$0xf]
      %v4656 = vld [vmem:[%s7 + $0x40] sm:$0xf]
      %v4657 = vld [vmem:[%s7 + $0x44] sm:$0xf]
      %v4658 = vld [vmem:[%s7 + $0x48] sm:$0xf]
      %v4659 = vld [vmem:[%s7 + $0x4c] sm:$0xf]
      %v4660 = vld [vmem:[%s7 + $0x50] sm:$0xf]
      %v4661 = vld [vmem:[%s7 + $0x54] sm:$0xf]
      %v4662 = vld [vmem:[%s7 + $0x58] sm:$0xf]
      %v4663 = vld [vmem:[%s7 + $0x5c] sm:$0xf]
      %v4664 = vld [vmem:[%s7 + $0x60] sm:$0xf]
      %v4665 = vld [vmem:[%s7 + $0x64] sm:$0xf]
      %v4666 = vld [vmem:[%s7 + $0x68] sm:$0xf]
      %v4667 = vld [vmem:[%s7 + $0x6c] sm:$0xf]
      %v4668 = vld [vmem:[%s7 + $0x70] sm:$0xf]
      %v4669 = vld [vmem:[%s7 + $0x74] sm:$0xf]
      %v4670 = vld [vmem:[%s7 + $0x78] sm:$0xf]
      %v4671 = vld [vmem:[%s7 + $0x7c] sm:$0xf]
      %v4672 = vld [vmem:[%s7 + $0x80] sm:$0xf]
      %v4673 = vld [vmem:[%s7 + $0x84] sm:$0xf]
      %v4674 = vld [vmem:[%s7 + $0x88] sm:$0xf]
      %v4675 = vld [vmem:[%s7 + $0x8c] sm:$0xf]
      %v4676 = vld [vmem:[%s7 + $0x90] sm:$0xf]
      %v4677 = vld [vmem:[%s7 + $0x94] sm:$0xf]
      %v4678 = vld [vmem:[%s7 + $0x98] sm:$0xf]
      %v4679 = vld [vmem:[%s7 + $0x9c] sm:$0xf]
      %v4680 = vld [vmem:[%s7 + $0xa0] sm:$0xf]
      %v4681 = vld [vmem:[%s7 + $0xa4] sm:$0xf]
      %v4682 = vld [vmem:[%s7 + $0xa8] sm:$0xf]
      %v4683 = vld [vmem:[%s7 + $0xac] sm:$0xf]
      %v4684 = vld [vmem:[%s7 + $0xb0] sm:$0xf]
      %v4685 = vld [vmem:[%s7 + $0xb4] sm:$0xf]
      %v4686 = vld [vmem:[%s7 + $0xb8] sm:$0xf]
      %v4687 = vld [vmem:[%s7 + $0xbc] sm:$0xf]
      %v4688 = vld [vmem:[%s7 + $0xc0] sm:$0xf]
      %v4689 = vld [vmem:[%s7 + $0xc4] sm:$0xf]
      %v4690 = vld [vmem:[%s7 + $0xc8] sm:$0xf]
      %v4691 = vld [vmem:[%s7 + $0xcc] sm:$0xf]
      %v4692 = vld [vmem:[%s7 + $0xd0] sm:$0xf]
      %v4693 = vld [vmem:[%s7 + $0xd4] sm:$0xf]
      %v4694 = vld [vmem:[%s7 + $0xd8] sm:$0xf]
      %v4695 = vld [vmem:[%s7 + $0xdc] sm:$0xf]
      %v4696 = vld [vmem:[%s7 + $0xe0] sm:$0xf]
      %v4697 = vld [vmem:[%s7 + $0xe4] sm:$0xf]
      %v4698 = vld [vmem:[%s7 + $0xe8] sm:$0xf]
      %v4699 = vld [vmem:[%s7 + $0xec] sm:$0xf]
      %v4700 = vld [vmem:[%s7 + $0xf0] sm:$0xf]
      %v4701 = vld [vmem:[%s7 + $0xf4] sm:$0xf]
      %v4702 = vld [vmem:[%s7 + $0xf8] sm:$0xf]
      %v4703 = vld [vmem:[%s7 + $0xfc] sm:$0xf]
      %v4704 = vld [vmem:[%s7 + $0x100] sm:$0xf]
      %v4705 = vld [vmem:[%s7 + $0x104] sm:$0xf]
      %v4706 = vld [vmem:[%s7 + $0x108] sm:$0xf]
      %v4707 = vld [vmem:[%s7 + $0x10c] sm:$0xf]
      %v4708 = vld [vmem:[%s7 + $0x110] sm:$0xf]
      %v4709 = vld [vmem:[%s7 + $0x114] sm:$0xf]
      %v4710 = vld [vmem:[%s7 + $0x118] sm:$0xf]
      %v4711 = vld [vmem:[%s7 + $0x11c] sm:$0xf]
      %v4712 = vpack.c.b16 %v4565, %v4560
      %v4713 = vpack.c.b16 %v4566, %v4561
      %v4714 = vpack.c.b16 %v4567, %v4562
      %v4715 = vpack.c.b16 %v4568, %v4563
      %v4716 = vpack.c.b16 %v4569, %v4564
      %v4717 = vpack.c.b16 %v4575, %v4570
      %v4718 = vpack.c.b16 %v4576, %v4571
      %v4719 = vpack.c.b16 %v4577, %v4572
      %v4720 = vpack.c.b16 %v4578, %v4573
      %v4721 = vpack.c.b16 %v4579, %v4574
      %v4722 = vpack.c.b16 %v4585, %v4580
      %v4723 = vpack.c.b16 %v4586, %v4581
      %v4724 = vpack.c.b16 %v4587, %v4582
      %v4725 = vpack.c.b16 %v4588, %v4583
      %v4726 = vpack.c.b16 %v4589, %v4584
      %v4727 = vpack.c.b16 %v4595, %v4590
      %v4728 = vpack.c.b16 %v4596, %v4591
      %v4729 = vpack.c.b16 %v4597, %v4592
      %v4730 = vpack.c.b16 %v4598, %v4593
      %v4731 = vpack.c.b16 %v4599, %v4594
      %v4732 = vpack.c.b16 %v4605, %v4600
      %v4733 = vpack.c.b16 %v4606, %v4601
      %v4734 = vpack.c.b16 %v4607, %v4602
      %v4735 = vpack.c.b16 %v4608, %v4603
      %v4736 = vpack.c.b16 %v4609, %v4604
      %v4737 = vpack.c.b16 %v4615, %v4610
      %v4738 = vpack.c.b16 %v4616, %v4611
      %v4739 = vpack.c.b16 %v4617, %v4612
      %v4740 = vpack.c.b16 %v4618, %v4613
      %v4741 = vpack.c.b16 %v4619, %v4614
      %v4742 = vpack.c.b16 %v4625, %v4620
      %v4743 = vpack.c.b16 %v4626, %v4621
      %v4744 = vpack.c.b16 %v4627, %v4622
      %v4745 = vpack.c.b16 %v4628, %v4623
      %v4746 = vpack.c.b16 %v4629, %v4624
      %v4747 = vpack.c.b16 %v4635, %v4630
      %v4748 = vpack.c.b16 %v4636, %v4631
      %v4749 = vpack.c.b16 %v4637, %v4632
      %v4750 = vpack.c.b16 %v4638, %v4633
      %v4751 = vpack.c.b16 %v4639, %v4634
      %v4856 = vunpack.c.l.b16 %v4640
      %v4857 = vunpack.c.l.b16 %v4641
      %v4858 = vunpack.c.l.b16 %v4642
      %v4859 = vunpack.c.l.b16 %v4643
      %v4860 = vunpack.c.l.b16 %v4644
      %v4861 = vunpack.c.l.b16 %v4645
      %v4862 = vunpack.c.l.b16 %v4646
      %v4863 = vunpack.c.l.b16 %v4647
      %v4864 = vunpack.c.l.b16 %v4648
      %v4865 = vunpack.c.l.b16 %v4649
      %v4866 = vunpack.c.l.b16 %v4650
      %v4867 = vunpack.c.l.b16 %v4651
      %v4868 = vunpack.c.l.b16 %v4652
      %v4869 = vunpack.c.l.b16 %v4653
      %v4870 = vunpack.c.l.b16 %v4654
      %v4871 = vunpack.c.l.b16 %v4655
      %v4872 = vunpack.c.l.b16 %v4656
      %v4873 = vunpack.c.l.b16 %v4657
      %v4874 = vunpack.c.l.b16 %v4658
      %v4875 = vunpack.c.l.b16 %v4659
      %v4876 = vunpack.c.l.b16 %v4660
      %v4877 = vunpack.c.l.b16 %v4661
      %v4878 = vunpack.c.l.b16 %v4662
      %v4879 = vunpack.c.l.b16 %v4663
      %v4880 = vunpack.c.l.b16 %v4664
      %v4881 = vunpack.c.l.b16 %v4665
      %v4882 = vunpack.c.l.b16 %v4666
      %v4883 = vunpack.c.l.b16 %v4667
      %v4884 = vunpack.c.l.b16 %v4668
      %v4885 = vunpack.c.l.b16 %v4669
      %v4886 = vunpack.c.l.b16 %v4670
      %v4887 = vunpack.c.l.b16 %v4671
      %v4888 = vunpack.c.l.b16 %v4672
      %v4889 = vunpack.c.l.b16 %v4673
      %v4890 = vunpack.c.l.b16 %v4674
      %v4891 = vunpack.c.l.b16 %v4675
      %v4892 = vunpack.c.l.b16 %v4676
      %v4893 = vunpack.c.l.b16 %v4677
      %v4894 = vunpack.c.l.b16 %v4678
      %v4895 = vunpack.c.l.b16 %v4679
      %v4896 = vunpack.c.l.b16 %v4680
      %v4897 = vunpack.c.l.b16 %v4681
      %v4898 = vunpack.c.l.b16 %v4682
      %v4899 = vunpack.c.l.b16 %v4683
      %v4900 = vunpack.c.l.b16 %v4684
      %v4901 = vunpack.c.l.b16 %v4685
      %v4902 = vunpack.c.l.b16 %v4686
      %v4903 = vunpack.c.l.b16 %v4687
      %v4904 = vunpack.c.l.b16 %v4688
      %v4905 = vunpack.c.l.b16 %v4689
      %v4906 = vunpack.c.l.b16 %v4690
      %v4907 = vunpack.c.l.b16 %v4691
      %v4908 = vunpack.c.l.b16 %v4692
      %v4909 = vunpack.c.l.b16 %v4693
      %v4910 = vunpack.c.l.b16 %v4694
      %v4911 = vunpack.c.l.b16 %v4695
      %v4912 = vunpack.c.l.b16 %v4696
      %v4913 = vunpack.c.l.b16 %v4697
      %v4914 = vunpack.c.l.b16 %v4698
      %v4915 = vunpack.c.l.b16 %v4699
      %v4916 = vunpack.c.l.b16 %v4700
      %v4917 = vunpack.c.l.b16 %v4701
      %v4918 = vunpack.c.l.b16 %v4702
      %v4919 = vunpack.c.l.b16 %v4703
      %v4920 = vunpack.c.l.b16 %v4704
      %v4921 = vunpack.c.l.b16 %v4705
      %v4922 = vunpack.c.l.b16 %v4706
      %v4923 = vunpack.c.l.b16 %v4707
      %v4924 = vunpack.c.l.b16 %v4708
      %v4925 = vunpack.c.l.b16 %v4709
      %v4926 = vunpack.c.l.b16 %v4710
      %v4927 = vunpack.c.l.b16 %v4711
      %v4928 = vpack.c.b16 %v4857, %v4856
      %v4929 = vpack.c.b16 %v4859, %v4858
      %v4930 = vpack.c.b16 %v4861, %v4860
      %v4931 = vpack.c.b16 %v4863, %v4862
      %v4932 = vpack.c.b16 %v4865, %v4864
      %v4933 = vpack.c.b16 %v4867, %v4866
      %v4934 = vpack.c.b16 %v4869, %v4868
      %v4935 = vpack.c.b16 %v4871, %v4870
      %v4936 = vpack.c.b16 %v4873, %v4872
      %v4937 = vpack.c.b16 %v4875, %v4874
      %v4938 = vpack.c.b16 %v4877, %v4876
      %v4939 = vpack.c.b16 %v4879, %v4878
      %v4940 = vpack.c.b16 %v4881, %v4880
      %v4941 = vpack.c.b16 %v4883, %v4882
      %v4942 = vpack.c.b16 %v4885, %v4884
      %v4943 = vpack.c.b16 %v4887, %v4886
      %v4944 = vpack.c.b16 %v4889, %v4888
      %v4945 = vpack.c.b16 %v4891, %v4890
      %v4946 = vpack.c.b16 %v4893, %v4892
      %v4947 = vpack.c.b16 %v4895, %v4894
      %v4948 = vpack.c.b16 %v4897, %v4896
      %v4949 = vpack.c.b16 %v4899, %v4898
      %v4950 = vpack.c.b16 %v4901, %v4900
      %v4951 = vpack.c.b16 %v4903, %v4902
      %v4952 = vpack.c.b16 %v4905, %v4904
      %v4953 = vpack.c.b16 %v4907, %v4906
      %v4954 = vpack.c.b16 %v4909, %v4908
      %v4955 = vpack.c.b16 %v4911, %v4910
      %v4956 = vpack.c.b16 %v4913, %v4912
      %v4957 = vpack.c.b16 %v4915, %v4914
      %v4958 = vpack.c.b16 %v4917, %v4916
      %v4959 = vpack.c.b16 %v4919, %v4918
      %v4960 = vpack.c.b16 %v4921, %v4920
      %v4961 = vpack.c.b16 %v4923, %v4922
      %v4962 = vpack.c.b16 %v4925, %v4924
      %v4963 = vpack.c.b16 %v4927, %v4926
      %v5001 = vsel %vm1955, %v4716, 0
      %v5004 = vsel %vm1955, %v4721, 0
      %v5007 = vsel %vm1955, %v4726, 0
      %v5010 = vsel %vm1955, %v4731, 0
      %v5013 = vsel %vm1955, %v4736, 0
      %v5016 = vsel %vm1955, %v4741, 0
      %v5019 = vsel %vm1955, %v4746, 0
      %v5022 = vsel %vm1955, %v4751, 0
      %5024 = vmatpush.bf16.msra.mxu0 %v4935
      %5025 = vmatpush.bf16.msra.mxu0 %v4934
      %5026 = vmatpush.bf16.msra.mxu0 %v4933
      %5027 = vmatpush.bf16.msra.mxu0 %v4932
      %5028 = vmatpush.bf16.msra.mxu0 %v4931
      %5029 = vmatpush.bf16.msra.mxu0 %v4930
      %5030 = vmatpush.bf16.msra.mxu0 %v4929
      %5031 = vmatpush.bf16.msra.mxu0 %v4928
      %5032 = vmatmul.bf16.gmra.mxu0 %v4712
      %v5033 = vpop.f32.mrf.mxu0
      %v5034 = vadd.f32 0.0, %v5033
      %v5035 = vpop.f32.mrf.mxu0
      %v5036 = vadd.f32 0.0, %v5035
      %5037 = vmatmul.bf16.gmra.mxu0 %v4717
      %v5038 = vpop.f32.mrf.mxu0
      %v5039 = vadd.f32 0.0, %v5038
      %v5040 = vpop.f32.mrf.mxu0
      %v5041 = vadd.f32 0.0, %v5040
      %5042 = vmatmul.bf16.gmra.mxu0 %v4722
      %v5043 = vpop.f32.mrf.mxu0
      %v5044 = vadd.f32 0.0, %v5043
      %v5045 = vpop.f32.mrf.mxu0
      %v5046 = vadd.f32 0.0, %v5045
      %5047 = vmatmul.bf16.gmra.mxu0 %v4727
      %v5048 = vpop.f32.mrf.mxu0
      %v5049 = vadd.f32 0.0, %v5048
      %v5050 = vpop.f32.mrf.mxu0
      %v5051 = vadd.f32 0.0, %v5050
      %5052 = vmatmul.bf16.gmra.mxu0 %v4732
      %v5053 = vpop.f32.mrf.mxu0
      %v5054 = vadd.f32 0.0, %v5053
      %v5055 = vpop.f32.mrf.mxu0
      %v5056 = vadd.f32 0.0, %v5055
      %5057 = vmatmul.bf16.gmra.mxu0 %v4737
      %v5058 = vpop.f32.mrf.mxu0
      %v5059 = vadd.f32 0.0, %v5058
      %v5060 = vpop.f32.mrf.mxu0
      %v5061 = vadd.f32 0.0, %v5060
      %5062 = vmatmul.bf16.gmra.mxu0 %v4742
      %v5063 = vpop.f32.mrf.mxu0
      %v5064 = vadd.f32 0.0, %v5063
      %v5065 = vpop.f32.mrf.mxu0
      %v5066 = vadd.f32 0.0, %v5065
      %5067 = vmatmul.bf16.gmra.mxu0 %v4747
      %v5068 = vpop.f32.mrf.mxu0
      %v5069 = vadd.f32 0.0, %v5068
      %v5070 = vpop.f32.mrf.mxu0
      %v5071 = vadd.f32 0.0, %v5070
      %5072 = vdwg.mxu0
      %5073 = vmatpush.bf16.msra.mxu0 %v4943
      %5074 = vmatpush.bf16.msra.mxu0 %v4942
      %5075 = vmatpush.bf16.msra.mxu0 %v4941
      %5076 = vmatpush.bf16.msra.mxu0 %v4940
      %5077 = vmatpush.bf16.msra.mxu0 %v4939
      %5078 = vmatpush.bf16.msra.mxu0 %v4938
      %5079 = vmatpush.bf16.msra.mxu0 %v4937
      %5080 = vmatpush.bf16.msra.mxu0 %v4936
      %5081 = vmatmul.bf16.gmra.mxu0 %v4713
      %v5082 = vpop.f32.mrf.mxu0
      %v5083 = vadd.f32 %v5034, %v5082
      %v5084 = vpop.f32.mrf.mxu0
      %v5085 = vadd.f32 %v5036, %v5084
      %5086 = vmatmul.bf16.gmra.mxu0 %v4718
      %v5087 = vpop.f32.mrf.mxu0
      %v5088 = vadd.f32 %v5039, %v5087
      %v5089 = vpop.f32.mrf.mxu0
      %v5090 = vadd.f32 %v5041, %v5089
      %5091 = vmatmul.bf16.gmra.mxu0 %v4723
      %v5092 = vpop.f32.mrf.mxu0
      %v5093 = vadd.f32 %v5044, %v5092
      %v5094 = vpop.f32.mrf.mxu0
      %v5095 = vadd.f32 %v5046, %v5094
      %5096 = vmatmul.bf16.gmra.mxu0 %v4728
      %v5097 = vpop.f32.mrf.mxu0
      %v5098 = vadd.f32 %v5049, %v5097
      %v5099 = vpop.f32.mrf.mxu0
      %v5100 = vadd.f32 %v5051, %v5099
      %5101 = vmatmul.bf16.gmra.mxu0 %v4733
      %v5102 = vpop.f32.mrf.mxu0
      %v5103 = vadd.f32 %v5054, %v5102
      %v5104 = vpop.f32.mrf.mxu0
      %v5105 = vadd.f32 %v5056, %v5104
      %5106 = vmatmul.bf16.gmra.mxu0 %v4738
      %v5107 = vpop.f32.mrf.mxu0
      %v5108 = vadd.f32 %v5059, %v5107
      %v5109 = vpop.f32.mrf.mxu0
      %v5110 = vadd.f32 %v5061, %v5109
      %5111 = vmatmul.bf16.gmra.mxu0 %v4743
      %v5112 = vpop.f32.mrf.mxu0
      %v5113 = vadd.f32 %v5064, %v5112
      %v5114 = vpop.f32.mrf.mxu0
      %v5115 = vadd.f32 %v5066, %v5114
      %5116 = vmatmul.bf16.gmra.mxu0 %v4748
      %v5117 = vpop.f32.mrf.mxu0
      %v5118 = vadd.f32 %v5069, %v5117
      %v5119 = vpop.f32.mrf.mxu0
      %v5120 = vadd.f32 %v5071, %v5119
      %5121 = vdwg.mxu0
      %5122 = vmatpush.bf16.msra.mxu0 %v4951
      %5123 = vmatpush.bf16.msra.mxu0 %v4950
      %5124 = vmatpush.bf16.msra.mxu0 %v4949
      %5125 = vmatpush.bf16.msra.mxu0 %v4948
      %5126 = vmatpush.bf16.msra.mxu0 %v4947
      %5127 = vmatpush.bf16.msra.mxu0 %v4946
      %5128 = vmatpush.bf16.msra.mxu0 %v4945
      %5129 = vmatpush.bf16.msra.mxu0 %v4944
      %5130 = vmatmul.bf16.gmra.mxu0 %v4714
      %v5131 = vpop.f32.mrf.mxu0
      %v5132 = vadd.f32 %v5083, %v5131
      %v5133 = vpop.f32.mrf.mxu0
      %v5134 = vadd.f32 %v5085, %v5133
      %5135 = vmatmul.bf16.gmra.mxu0 %v4719
      %v5136 = vpop.f32.mrf.mxu0
      %v5137 = vadd.f32 %v5088, %v5136
      %v5138 = vpop.f32.mrf.mxu0
      %v5139 = vadd.f32 %v5090, %v5138
      %5140 = vmatmul.bf16.gmra.mxu0 %v4724
      %v5141 = vpop.f32.mrf.mxu0
      %v5142 = vadd.f32 %v5093, %v5141
      %v5143 = vpop.f32.mrf.mxu0
      %v5144 = vadd.f32 %v5095, %v5143
      %5145 = vmatmul.bf16.gmra.mxu0 %v4729
      %v5146 = vpop.f32.mrf.mxu0
      %v5147 = vadd.f32 %v5098, %v5146
      %v5148 = vpop.f32.mrf.mxu0
      %v5149 = vadd.f32 %v5100, %v5148
      %5150 = vmatmul.bf16.gmra.mxu0 %v4734
      %v5151 = vpop.f32.mrf.mxu0
      %v5152 = vadd.f32 %v5103, %v5151
      %v5153 = vpop.f32.mrf.mxu0
      %v5154 = vadd.f32 %v5105, %v5153
      %5155 = vmatmul.bf16.gmra.mxu0 %v4739
      %v5156 = vpop.f32.mrf.mxu0
      %v5157 = vadd.f32 %v5108, %v5156
      %v5158 = vpop.f32.mrf.mxu0
      %v5159 = vadd.f32 %v5110, %v5158
      %5160 = vmatmul.bf16.gmra.mxu0 %v4744
      %v5161 = vpop.f32.mrf.mxu0
      %v5162 = vadd.f32 %v5113, %v5161
      %v5163 = vpop.f32.mrf.mxu0
      %v5164 = vadd.f32 %v5115, %v5163
      %5165 = vmatmul.bf16.gmra.mxu0 %v4749
      %v5166 = vpop.f32.mrf.mxu0
      %v5167 = vadd.f32 %v5118, %v5166
      %v5168 = vpop.f32.mrf.mxu0
      %v5169 = vadd.f32 %v5120, %v5168
      %5170 = vdwg.mxu0
      %5171 = vmatpush.bf16.msra.mxu0 %v4959
      %5172 = vmatpush.bf16.msra.mxu0 %v4958
      %5173 = vmatpush.bf16.msra.mxu0 %v4957
      %5174 = vmatpush.bf16.msra.mxu0 %v4956
      %5175 = vmatpush.bf16.msra.mxu0 %v4955
      %5176 = vmatpush.bf16.msra.mxu0 %v4954
      %5177 = vmatpush.bf16.msra.mxu0 %v4953
      %5178 = vmatpush.bf16.msra.mxu0 %v4952
      %5179 = vmatmul.bf16.gmra.mxu0 %v4715
      %v5180 = vpop.f32.mrf.mxu0
      %v5181 = vadd.f32 %v5132, %v5180
      %v5182 = vpop.f32.mrf.mxu0
      %v5183 = vadd.f32 %v5134, %v5182
      %5184 = vmatmul.bf16.gmra.mxu0 %v4720
      %v5185 = vpop.f32.mrf.mxu0
      %v5186 = vadd.f32 %v5137, %v5185
      %v5187 = vpop.f32.mrf.mxu0
      %v5188 = vadd.f32 %v5139, %v5187
      %5189 = vmatmul.bf16.gmra.mxu0 %v4725
      %v5190 = vpop.f32.mrf.mxu0
      %v5191 = vadd.f32 %v5142, %v5190
      %v5192 = vpop.f32.mrf.mxu0
      %v5193 = vadd.f32 %v5144, %v5192
      %5194 = vmatmul.bf16.gmra.mxu0 %v4730
      %v5195 = vpop.f32.mrf.mxu0
      %v5196 = vadd.f32 %v5147, %v5195
      %v5197 = vpop.f32.mrf.mxu0
      %v5198 = vadd.f32 %v5149, %v5197
      %5199 = vmatmul.bf16.gmra.mxu0 %v4735
      %v5200 = vpop.f32.mrf.mxu0
      %v5201 = vadd.f32 %v5152, %v5200
      %v5202 = vpop.f32.mrf.mxu0
      %v5203 = vadd.f32 %v5154, %v5202
      %5204 = vmatmul.bf16.gmra.mxu0 %v4740
      %v5205 = vpop.f32.mrf.mxu0
      %v5206 = vadd.f32 %v5157, %v5205
      %v5207 = vpop.f32.mrf.mxu0
      %v5208 = vadd.f32 %v5159, %v5207
      %5209 = vmatmul.bf16.gmra.mxu0 %v4745
      %v5210 = vpop.f32.mrf.mxu0
      %v5211 = vadd.f32 %v5162, %v5210
      %v5212 = vpop.f32.mrf.mxu0
      %v5213 = vadd.f32 %v5164, %v5212
      %5214 = vmatmul.bf16.gmra.mxu0 %v4750
      %v5215 = vpop.f32.mrf.mxu0
      %v5216 = vadd.f32 %v5167, %v5215
      %v5217 = vpop.f32.mrf.mxu0
      %v5218 = vadd.f32 %v5169, %v5217
      %5219 = vdwg.mxu0
      %5220 = vmatpush.bf16.msra.mxu0 0
      %5221 = vmatpush.bf16.msra.mxu0 0
      %5222 = vmatpush.bf16.msra.mxu0 0
      %5223 = vmatpush.bf16.msra.mxu0 0
      %5224 = vmatpush.bf16.msra.mxu0 %v4963
      %5225 = vmatpush.bf16.msra.mxu0 %v4962
      %5226 = vmatpush.bf16.msra.mxu0 %v4961
      %5227 = vmatpush.bf16.msra.mxu0 %v4960
      %5228 = vmatmul.bf16.gmra.mxu0 %v5001
      %v5229 = vpop.f32.mrf.mxu0
      %v5230 = vadd.f32 %v5181, %v5229
      %v5231 = vpop.f32.mrf.mxu0
      %v5232 = vadd.f32 %v5183, %v5231
      %5233 = vmatmul.bf16.gmra.mxu0 %v5004
      %v5234 = vpop.f32.mrf.mxu0
      %v5235 = vadd.f32 %v5186, %v5234
      %v5236 = vpop.f32.mrf.mxu0
      %v5237 = vadd.f32 %v5188, %v5236
      %5238 = vmatmul.bf16.gmra.mxu0 %v5007
      %v5239 = vpop.f32.mrf.mxu0
      %v5240 = vadd.f32 %v5191, %v5239
      %v5241 = vpop.f32.mrf.mxu0
      %v5242 = vadd.f32 %v5193, %v5241
      %5243 = vmatmul.bf16.gmra.mxu0 %v5010
      %v5244 = vpop.f32.mrf.mxu0
      %v5245 = vadd.f32 %v5196, %v5244
      %v5246 = vpop.f32.mrf.mxu0
      %v5247 = vadd.f32 %v5198, %v5246
      %5248 = vmatmul.bf16.gmra.mxu0 %v5013
      %v5249 = vpop.f32.mrf.mxu0
      %v5250 = vadd.f32 %v5201, %v5249
      %v5251 = vpop.f32.mrf.mxu0
      %v5252 = vadd.f32 %v5203, %v5251
      %5253 = vmatmul.bf16.gmra.mxu0 %v5016
      %v5254 = vpop.f32.mrf.mxu0
      %v5255 = vadd.f32 %v5206, %v5254
      %v5256 = vpop.f32.mrf.mxu0
      %v5257 = vadd.f32 %v5208, %v5256
      %5258 = vmatmul.bf16.gmra.mxu0 %v5019
      %v5259 = vpop.f32.mrf.mxu0
      %v5260 = vadd.f32 %v5211, %v5259
      %v5261 = vpop.f32.mrf.mxu0
      %v5262 = vadd.f32 %v5213, %v5261
      %5263 = vmatmul.bf16.gmra.mxu0 %v5022
      %v5264 = vpop.f32.mrf.mxu0
      %v5265 = vadd.f32 %v5216, %v5264
      %v5266 = vpop.f32.mrf.mxu0
      %v5267 = vadd.f32 %v5218, %v5266
      %5268 = vdwg.mxu0
      %v5269 = vld [vmem:[%s8] sm:$0x1]
      %v5271 = vperm.slane %v5269, 0
      %v5273 = vmul.f32 %v5230, %v5271
      %v5274 = vmul.f32 %v5232, %v5271
      %v5275 = vmul.f32 %v5235, %v5271
      %v5276 = vmul.f32 %v5237, %v5271
      %v5277 = vmul.f32 %v5240, %v5271
      %v5278 = vmul.f32 %v5242, %v5271
      %v5279 = vmul.f32 %v5245, %v5271
      %v5280 = vmul.f32 %v5247, %v5271
      %v5281 = vmul.f32 %v5250, %v5271
      %v5282 = vmul.f32 %v5252, %v5271
      %v5283 = vmul.f32 %v5255, %v5271
      %v5284 = vmul.f32 %v5257, %v5271
      %v5285 = vmul.f32 %v5260, %v5271
      %v5286 = vmul.f32 %v5262, %v5271
      %v5287 = vmul.f32 %v5265, %v5271
      %v5288 = vmul.f32 %v5267, %v5271
      %v5289 = vld [vmem:[%s9] sm:$0x1]
      %v5291 = vperm.slane %v5289, 0
      %v5293 = vadd.f32 %v5273, %v5291
      %v5294 = vadd.f32 %v5274, %v5291
      %v5295 = vadd.f32 %v5275, %v5291
      %v5296 = vadd.f32 %v5276, %v5291
      %v5297 = vadd.f32 %v5277, %v5291
      %v5298 = vadd.f32 %v5278, %v5291
      %v5299 = vadd.f32 %v5279, %v5291
      %v5300 = vadd.f32 %v5280, %v5291
      %v5301 = vadd.f32 %v5281, %v5291
      %v5302 = vadd.f32 %v5282, %v5291
      %v5303 = vadd.f32 %v5283, %v5291
      %v5304 = vadd.f32 %v5284, %v5291
      %v5305 = vadd.f32 %v5285, %v5291
      %v5306 = vadd.f32 %v5286, %v5291
      %v5307 = vadd.f32 %v5287, %v5291
      %v5308 = vadd.f32 %v5288, %v5291
      %v5309 = vmax.f32 %v5293, 0.0
      %v5310 = vmax.f32 %v5294, 0.0
      %v5311 = vmax.f32 %v5295, 0.0
      %v5312 = vmax.f32 %v5296, 0.0
      %v5313 = vmax.f32 %v5297, 0.0
      %v5314 = vmax.f32 %v5298, 0.0
      %v5315 = vmax.f32 %v5299, 0.0
      %v5316 = vmax.f32 %v5300, 0.0
      %v5317 = vmax.f32 %v5301, 0.0
      %v5318 = vmax.f32 %v5302, 0.0
      %v5319 = vmax.f32 %v5303, 0.0
      %v5320 = vmax.f32 %v5304, 0.0
      %v5321 = vmax.f32 %v5305, 0.0
      %v5322 = vmax.f32 %v5306, 0.0
      %v5323 = vmax.f32 %v5307, 0.0
      %v5324 = vmax.f32 %v5308, 0.0
      %v5325 = vpack.c.bf16 %v5309, %v5309
      %v5326 = vpack.c.bf16 %v5310, %v5310
      %v5327 = vpack.c.bf16 %v5311, %v5311
      %v5328 = vpack.c.bf16 %v5312, %v5312
      %v5329 = vpack.c.bf16 %v5313, %v5313
      %v5330 = vpack.c.bf16 %v5314, %v5314
      %v5331 = vpack.c.bf16 %v5315, %v5315
      %v5332 = vpack.c.bf16 %v5316, %v5316
      %v5333 = vpack.c.bf16 %v5317, %v5317
      %v5334 = vpack.c.bf16 %v5318, %v5318
      %v5335 = vpack.c.bf16 %v5319, %v5319
      %v5336 = vpack.c.bf16 %v5320, %v5320
      %v5337 = vpack.c.bf16 %v5321, %v5321
      %v5338 = vpack.c.bf16 %v5322, %v5322
      %v5339 = vpack.c.bf16 %v5323, %v5323
      %v5340 = vpack.c.bf16 %v5324, %v5324
      %5341 = vst.msk [vmem:[%s366] sm:$0xf] %vm577, %v5325
      %5342 = vst.msk [vmem:[%s366 + $0x4] sm:$0xf] %vm577, %v5326
      %5343 = vst.msk [vmem:[%s366 + $0x8] sm:$0xf] %vm577, %v5327
      %5344 = vst.msk [vmem:[%s366 + $0xc] sm:$0xf] %vm577, %v5328
      %5345 = vst.msk [vmem:[%s366 + $0x10] sm:$0xf] %vm577, %v5329
      %5346 = vst.msk [vmem:[%s366 + $0x14] sm:$0xf] %vm577, %v5330
      %5347 = vst.msk [vmem:[%s366 + $0x18] sm:$0xf] %vm577, %v5331
      %5348 = vst.msk [vmem:[%s366 + $0x1c] sm:$0xf] %vm577, %v5332
      %5349 = vst.msk [vmem:[%s366 + $0x20] sm:$0xf] %vm577, %v5333
      %5350 = vst.msk [vmem:[%s366 + $0x24] sm:$0xf] %vm577, %v5334
      %5351 = vst.msk [vmem:[%s366 + $0x28] sm:$0xf] %vm577, %v5335
      %5352 = vst.msk [vmem:[%s366 + $0x2c] sm:$0xf] %vm577, %v5336
      %5353 = vst.msk [vmem:[%s366 + $0x30] sm:$0xf] %vm577, %v5337
      %5354 = vst.msk [vmem:[%s366 + $0x34] sm:$0xf] %vm577, %v5338
      %5355 = vst.msk [vmem:[%s366 + $0x38] sm:$0xf] %vm577, %v5339
      %5356 = vst.msk [vmem:[%s366 + $0x3c] sm:$0xf] %vm577, %v5340
      %s5357 = smul.u32 2, %s21
      %p5358 = scmp.lt.s32.totalorder %s5357, 3
      %s5359 = scalar_select %p5358, %s5357, 3
      %s5360 = smul.addr %s5359, 8
      %s5361 = smul.addr %s5360, 4
      %s5362 = scalar_lea.vmem %s10, %s5361
      // Predicated region
      $region61: #{vgg5_forward.2} parent=59 // pred_check
        %p5363 = pneg %p254
      $region62: #{vgg5_forward.2} parent=59 // pred_check_branch
        %5365 = sbr.rel (%p5363) target = $region64
      $region63: #{vgg5_forward.2} parent=59 // pred_region
        %s5366 = smul.u32 2, %s21
      $region64: #{vgg5_forward.2} parent=59 // pred_fallthru
        _
    $region60: #{vgg5_forward.2} parent=5 // pred_fallthru
      _
    %p5367 = scmp.le.s32.totalorder 2, %s16
    // Predicated region
    $region65: #{vgg5_forward.2} parent=5 // pred_check
      %p5368 = pneg %p5367
    $region66: #{vgg5_forward.2} parent=5 // pred_check_branch
      %5370 = sbr.rel (%p5368) target = $region68
    $region67: #{vgg5_forward.2} parent=5 // pred_region
      %s5371 = ssub.s32 %s16, 2
      // Predicated region
      $region69: #{vgg5_forward.2} parent=67 // pred_check
        %p5372 = pneg %p260
      $region70: #{vgg5_forward.2} parent=67 // pred_check_branch
        %5374 = sbr.rel (%p5372) target = $region72
      $region71: #{vgg5_forward.2} parent=67 // pred_region
        %s5375 = smul.u32 2, %s22
        %p5376 = scmp.lt.s32.totalorder %s5375, 3
        %s5377 = scalar_select %p5376, %s5375, 3
        %s5378 = smul.addr %s5377, 8
        %s5379 = smul.addr %s5378, 4
        %s5380 = scalar_lea.vmem %s10, %s5379
      $region72: #{vgg5_forward.2} parent=67 // pred_fallthru
        _
    $region68: #{vgg5_forward.2} parent=5 // pred_fallthru
      _
  $region6: #{vgg5_forward.2} parent=0 // loop_footer
    %s20 = sadd.s32 1, %s16
  $region7: #{vgg5_forward.2} parent=0 // loop_footer_branch
    %15 = sbr.rel target = $region3
  $region8: #{vgg5_forward.2} parent=0 // loop_exit
    _

</llo_original>
